<compile_context>
chip_gen: v6e
topology: v6e:2x2x1
jax: 0.10.0
libtpu: 0.0.40
codegen_flags: <defaults>
</compile_context>

<pallas_src>
import functools

import jax
import jax.numpy as jnp
from jax import lax
from jax.experimental import pallas as pl
from jax.experimental.pallas import tpu as pltpu

EPS = 1e-5
COMPUTE_DTYPE = jnp.bfloat16
# v7x has 64 MiB physical VMEM per TensorCore (v5e/v6e: 128 MiB); per-block
# working set here is a few MiB, 48 MiB is a safe explicit cap on all chips.
VMEM_LIMIT_BYTES = 48 * 1024 * 1024

# (half_context, dilation, stride) for tdnn0..tdnn6
LAYER_CFGS = (
    dict(half_context=2, dilation=1, stride=1),   # tdnn0
    dict(half_context=2, dilation=2, stride=1),   # tdnn1
    dict(half_context=2, dilation=1, stride=1),   # tdnn2
    dict(half_context=0, dilation=1, stride=3),   # tdnn3 (kernel = stride = 3)
    dict(half_context=2, dilation=2, stride=1),   # tdnn4
    dict(half_context=2, dilation=1, stride=1),   # tdnn5
    dict(half_context=2, dilation=2, stride=1),   # tdnn6
)


def _round_up(x, m):
    return (x + m - 1) // m * m


# ----------------------------------------------------------------------------
# kernels
# ----------------------------------------------------------------------------
def tdnn_conv_kernel(lens_ref, x_ref, w_ref, b_ref, scale_ref, shift_ref,
                     y_ref, ssum_ref, ssq_ref, *, ntaps, dilation, pad):
    """One batch sample per grid step.

    lens_ref : SMEM [N] int32  (output-frame lengths; scalar prefetch)
    x_ref    : [1, Tp, Cin]    pre-BN activation of previous layer, time padded
                               with `pad` zero rows on each side, bf16
    w_ref    : [ntaps, Cin, Cout] bf16
    b_ref    : [1, Cout] f32
    scale_ref/shift_ref : [1, Cin] f32  (BN of the PREVIOUS layer; 1/0 for the
                                         first layer)
    y_ref    : [1, Tout, Cout] bf16   (pre-BN: relu(conv + b))
    ssum_ref/ssq_ref : [1, 1, Cout] f32  per-sample masked partial BN stats
    """
    n = pl.program_id(0)
    tp = x_ref.shape[1]
    t_out = y_ref.shape[1]
    cout = y_ref.shape[2]

    # Apply previous layer's BatchNorm to the real frames; keep the wrapper's
    # zero halo rows at exactly zero (Conv1d zero padding semantics).
    x = x_ref[0].astype(jnp.float32)                              # [Tp, Cin]
    row = lax.broadcasted_iota(jnp.int32, (tp, 1), 0)
    in_real = (row >= pad) & (row < tp - pad)
    xn = jnp.where(in_real, x * scale_ref[...] + shift_ref[...], 0.0)
    xn = xn.astype(x_ref.dtype)                                   # bf16 for MXU

    # Conv1d as ntaps accumulated matmuls over time-shifted slices (no copies
    # of the tile, f32 accumulation on the MXU).
    acc = jnp.zeros((t_out, cout), jnp.float32)
    for k in range(ntaps):
        off = k * dilation
        acc = acc + jnp.dot(xn[off:off + t_out, :], w_ref[k],
                            preferred_element_type=jnp.float32)

    y = jnp.maximum(acc + b_ref[...], 0.0)                        # ReLU, f32
    y_ref[0] = y.astype(y_ref.dtype)

    # Masked partial statistics for this layer's BatchNorm (frames t < ilen).
    orow = lax.broadcasted_iota(jnp.int32, (t_out, 1), 0)
    valid = (orow < lens_ref[n]).astype(jnp.float32)
    ym = y * valid
    ssum_ref[0] = jnp.sum(ym, axis=0, keepdims=True)
    ssq_ref[0] = jnp.sum(ym * y, axis=0, keepdims=True)


def linear_kernel(x_ref, w_ref, b_ref, o_ref):
    # x_ref: [TM, H] bf16, w_ref: [H, Kp] bf16 (BN of the last TDNN folded in),
    # b_ref: [1, Kp] f32, o_ref: [TM, Kp] f32 (lane-dense, Kp % 128 == 0)
    o_ref[...] = (jnp.dot(x_ref[...], w_ref[...],
                          preferred_element_type=jnp.float32)
                  + b_ref[...]).astype(o_ref.dtype)


# ----------------------------------------------------------------------------
# wrappers
# ----------------------------------------------------------------------------
def run_tdnn_conv(x_in, lens_out, w, b, scale, shift, *, ntaps, dilation, pad):
    """x_in: [N, Tp, Cin] (time already zero-padded / windowed), bf16."""
    N, Tp, Cin = x_in.shape
    Cout = w.shape[-1]
    t_out = Tp - (ntaps - 1) * dilation

    kern = functools.partial(tdnn_conv_kernel, ntaps=ntaps, dilation=dilation,
                             pad=pad)
    y, ssum, ssq = pl.pallas_call(
        kern,
        out_shape=(
            jax.ShapeDtypeStruct((N, t_out, Cout), COMPUTE_DTYPE),
            jax.ShapeDtypeStruct((N, 1, Cout), jnp.float32),
            jax.ShapeDtypeStruct((N, 1, Cout), jnp.float32),
        ),
        grid_spec=pltpu.PrefetchScalarGridSpec(
            num_scalar_prefetch=1,
            grid=(N,),
            in_specs=[
                pl.BlockSpec((1, Tp, Cin), lambda n, lens: (n, 0, 0)),
                pl.BlockSpec((ntaps, Cin, Cout), lambda n, lens: (0, 0, 0)),
                pl.BlockSpec((1, Cout), lambda n, lens: (0, 0)),
                pl.BlockSpec((1, Cin), lambda n, lens: (0, 0)),
                pl.BlockSpec((1, Cin), lambda n, lens: (0, 0)),
            ],
            out_specs=[
                pl.BlockSpec((1, t_out, Cout), lambda n, lens: (n, 0, 0)),
                pl.BlockSpec((1, 1, Cout), lambda n, lens: (n, 0, 0)),
                pl.BlockSpec((1, 1, Cout), lambda n, lens: (n, 0, 0)),
            ]),
        compiler_params=pltpu.CompilerParams(
            dimension_semantics=("parallel",),
            vmem_limit_bytes=VMEM_LIMIT_BYTES),
    )(lens_out, x_in, w, b.reshape(1, -1),
      scale.reshape(1, -1), shift.reshape(1, -1))
    return y, ssum, ssq


def _bn_scale_shift(ssum, ssq, cnt, gamma, beta):
    """Finalize MaskedBatchNorm1d from per-sample partial stats (tiny, XLA)."""
    s = jnp.sum(ssum, axis=(0, 1))                                # [C]
    q = jnp.sum(ssq, axis=(0, 1))
    cnt = jnp.maximum(cnt, 1).astype(jnp.float32)                 # guard cnt==0
    mean = s / cnt
    var = jnp.maximum(q / cnt - mean * mean, 0.0)                 # biased var
    scale = gamma * lax.rsqrt(var + EPS)
    shift = beta - mean * scale
    return scale, shift


def run_linear(h, scale, shift, w, b):
    """h: [N, T, H] pre-BN bf16. Fold the last TDNN's BN exactly into W, b."""
    N, T, H = h.shape
    num_classes = w.shape[-1]

    w32 = w.astype(jnp.float32)
    wf = w32 * scale[:, None]                                     # [H, K]
    bf = b + shift @ w32                                          # [K]

    kp = _round_up(num_classes, 128)                              # lane-dense out
    wf = jnp.pad(wf, ((0, 0), (0, kp - num_classes))).astype(COMPUTE_DTYPE)
    bf = jnp.pad(bf, (0, kp - num_classes)).reshape(1, kp)

    rows = N * T
    tm = 512 if rows >= 512 else _round_up(rows, 8)
    rows_p = _round_up(rows, tm)
    x2 = jnp.pad(h.reshape(rows, H), ((0, rows_p - rows), (0, 0)))

    out = pl.pallas_call(
        linear_kernel,
        out_shape=jax.ShapeDtypeStruct((rows_p, kp), jnp.float32),
        grid=(rows_p // tm,),
        in_specs=[pl.BlockSpec((tm, H), lambda i: (i, 0)),
                  pl.BlockSpec((H, kp), lambda i: (0, 0)),
                  pl.BlockSpec((1, kp), lambda i: (0, 0))],
        out_specs=pl.BlockSpec((tm, kp), lambda i: (i, 0)),
        compiler_params=pltpu.CompilerParams(
            dimension_semantics=("parallel",),
            vmem_limit_bytes=VMEM_LIMIT_BYTES),
    )(x2, wf, bf)
    return out[:rows, :num_classes].reshape(N, T, num_classes)


def tdnn_nas_forward(x, ilens, params):
    """x: [N, T, idim] float32 (padded frames arbitrary), ilens: [N] int32."""
    N = x.shape[0]
    h = x.astype(COMPUTE_DTYPE)                                   # pre-BN stream
    lens = ilens.astype(jnp.int32)

    # BN of the "previous" layer, applied inside the next kernel; identity
    # for the raw network input.
    cin = h.shape[-1]
    scale = jnp.ones((cin,), jnp.float32)
    shift = jnp.zeros((cin,), jnp.float32)

    for cfg, p in zip(LAYER_CFGS, params["tdnns"]):
        # dropout before every layer but the last: identity at inference.
        # TODO(synk): training-mode dropout (random mask) not implemented.
        if cfg["stride"] == 1:
            d = cfg["dilation"]
            pad = cfg["half_context"] * d
            ntaps = 2 * cfg["half_context"] + 1
            x_in = jnp.pad(h, ((0, 0), (pad, pad), (0, 0)))       # zero time halo
            w = p["w"]
            s_in, b_in = scale, shift
            lens_out = lens
        else:                                                     # k = stride = 3
            s = cfg["stride"]
            cin = h.shape[-1]
            t_out = (h.shape[1] - s) // s + 1
            # non-overlapping windows -> pre-window in XLA, single big-K GEMM
            x_in = h[:, :t_out * s, :].reshape(N, t_out, s * cin)
            w = p["w"].reshape(1, s * cin, -1)
            ntaps, d, pad = 1, 1, 0
            s_in, b_in = jnp.tile(scale, s), jnp.tile(shift, s)
            lens_out = lens // s

        h, ssum, ssq = run_tdnn_conv(x_in, lens_out, w, p["b"], s_in, b_in,
                                     ntaps=ntaps, dilation=d, pad=pad)
        lens = lens_out
        scale, shift = _bn_scale_shift(ssum, ssq, jnp.sum(lens),
                                       p["gamma"], p["beta"])

    logits = run_linear(h, scale, shift,
                        params["linear"]["w"], params["linear"]["b"])
    return logits, lens


# ----------------------------------------------------------------------------
# deterministic parameter construction
# ----------------------------------------------------------------------------
def init_params(key, idim, hdim, num_classes):
    n_layers = len(LAYER_CFGS)
    keys = jax.random.split(key, 2 * n_layers + 2)
    tdnns = []
    cin = idim
    for i, cfg in enumerate(LAYER_CFGS):
        k = cfg["stride"] if cfg["stride"] > 1 else 2 * cfg["half_context"] + 1
        w = 0.1 * jax.random.normal(keys[2 * i], (k, cin, hdim), jnp.float32)
        b = 0.1 * jax.random.normal(keys[2 * i + 1], (hdim,), jnp.float32)
        tdnns.append(dict(w=w.astype(COMPUTE_DTYPE), b=b,
                          gamma=jnp.ones((hdim,), jnp.float32),
                          beta=jnp.zeros((hdim,), jnp.float32)))
        cin = hdim
    linear = dict(
        w=0.1 * jax.random.normal(keys[-2], (hdim, num_classes), jnp.float32),
        b=0.1 * jax.random.normal(keys[-1], (num_classes,), jnp.float32))
    return dict(tdnns=tdnns, linear=linear)


# ----------------------------------------------------------------------------
if __name__ == "__main__":
    idim, hdim, num_classes = 64, 128, 11
    N, T = 4, 48

    key = jax.random.PRNGKey(0)
    k_param, k_x = jax.random.split(key)
    params = init_params(k_param, idim, hdim, num_classes)

    ilens = jnp.array([48, 37, 25, 16], dtype=jnp.int32)
    x = jax.random.normal(k_x, (N, T, idim), jnp.float32)
    # zero the padded frames of the input, like a padded batch would have
    valid = (jnp.arange(T)[None, :] < ilens[:, None]).astype(jnp.float32)
    x = x * valid[..., None]

    fwd = jax.jit(tdnn_nas_forward)
    logits, olens = fwd(x, ilens, params)
    jax.block_until_ready(logits)

    assert logits.shape == (N, T // 3, num_classes), logits.shape
    assert bool(jnp.all(olens == ilens // 3))
    assert bool(jnp.all(jnp.isfinite(logits)))
    print("KERNEL_OK")
</pallas_src>

<mosaic_0001>
module attributes {stable_mosaic.version = 11 : i64} {
  func.func @tdnn_conv_kernel(%arg0: i32, %arg1: memref<4xi32, #tpu.memory_space<smem>>, %arg2: memref<1x52x64xbf16, #tpu.memory_space<vmem>>, %arg3: memref<5x64x128xbf16, #tpu.memory_space<vmem>>, %arg4: memref<1x128xf32, #tpu.memory_space<vmem>>, %arg5: memref<1x64xf32, #tpu.memory_space<vmem>>, %arg6: memref<1x64xf32, #tpu.memory_space<vmem>>, %arg7: memref<1x48x128xbf16, #tpu.memory_space<vmem>>, %arg8: memref<1x1x128xf32, #tpu.memory_space<vmem>>, %arg9: memref<1x1x128xf32, #tpu.memory_space<vmem>>) attributes {dimension_semantics = [#tpu.dimension_semantics<parallel>], iteration_bounds = array<i64: 4>, scalar_prefetch = 1 : i64, scratch_operands = 0 : i64, tpu.core_type = #tpu.core_type<tc>, window_params = [{transform_indices = @transform_0, window_bounds = array<i64: 1, 52, 64>}, {pipeline_mode = #tpu.pipeline_mode<synchronous>, transform_indices = @transform_1, window_bounds = array<i64: 5, 64, 128>}, {pipeline_mode = #tpu.pipeline_mode<synchronous>, transform_indices = @transform_2, window_bounds = array<i64: 1, 128>}, {pipeline_mode = #tpu.pipeline_mode<synchronous>, transform_indices = @transform_3, window_bounds = array<i64: 1, 64>}, {pipeline_mode = #tpu.pipeline_mode<synchronous>, transform_indices = @transform_4, window_bounds = array<i64: 1, 64>}, {transform_indices = @transform_5, window_bounds = array<i64: 1, 48, 128>}, {transform_indices = @transform_6, window_bounds = array<i64: 1, 1, 128>}, {transform_indices = @transform_7, window_bounds = array<i64: 1, 1, 128>}]} {
    %c0 = arith.constant 0 : index
    %c0_0 = arith.constant 0 : index
    %c0_1 = arith.constant 0 : index
    %0 = vector.load %arg2[%c0, %c0_0, %c0_1] : memref<1x52x64xbf16, #tpu.memory_space<vmem>>, vector<1x52x64xbf16>
    %1 = vector.shape_cast %0 : vector<1x52x64xbf16> to vector<52x64xbf16>
    %2 = arith.extf %1 : vector<52x64xbf16> to vector<52x64xf32>
    %3 = tpu.iota {dimensions = array<i32: 0>} : vector<52x1xi32>
    %c2_i32 = arith.constant 2 : i32
    %4 = vector.broadcast %c2_i32 : i32 to vector<52x1xi32>
    %5 = arith.cmpi sge, %3, %4 : vector<52x1xi32>
    %c50_i32 = arith.constant 50 : i32
    %6 = vector.broadcast %c50_i32 : i32 to vector<52x1xi32>
    %7 = arith.cmpi slt, %3, %6 : vector<52x1xi32>
    %8 = arith.andi %5, %7 : vector<52x1xi1>
    %c0_2 = arith.constant 0 : index
    %c0_3 = arith.constant 0 : index
    %9 = vector.load %arg5[%c0_2, %c0_3] : memref<1x64xf32, #tpu.memory_space<vmem>>, vector<1x64xf32>
    %10 = vector.broadcast %9 : vector<1x64xf32> to vector<52x64xf32>
    %11 = arith.mulf %2, %10 : vector<52x64xf32>
    %c0_4 = arith.constant 0 : index
    %c0_5 = arith.constant 0 : index
    %12 = vector.load %arg6[%c0_4, %c0_5] : memref<1x64xf32, #tpu.memory_space<vmem>>, vector<1x64xf32>
    %13 = vector.broadcast %12 : vector<1x64xf32> to vector<52x64xf32>
    %14 = arith.addf %11, %13 : vector<52x64xf32>
    %cst = arith.constant 0.000000e+00 : f32
    %15 = vector.shape_cast %8 : vector<52x1xi1> to vector<52x1xi1>
    %16 = vector.broadcast %15 : vector<52x1xi1> to vector<52x64xi1>
    %17 = vector.broadcast %cst : f32 to vector<52x64xf32>
    %18 = arith.select %16, %14, %17 : vector<52x64xi1>, vector<52x64xf32>
    %19 = arith.truncf %18 : vector<52x64xf32> to vector<52x64xbf16>
    %cst_6 = arith.constant 0.000000e+00 : f32
    %20 = vector.broadcast %cst_6 : f32 to vector<48x128xf32>
    %21 = vector.extract_strided_slice %19 {offsets = [0, 0], sizes = [48, 64], strides = [1, 1]} : vector<52x64xbf16> to vector<48x64xbf16>
    %c0_7 = arith.constant 0 : index
    %c0_8 = arith.constant 0 : index
    %c0_9 = arith.constant 0 : index
    %22 = vector.load %arg3[%c0_7, %c0_8, %c0_9] : memref<5x64x128xbf16, #tpu.memory_space<vmem>>, vector<1x64x128xbf16>
    %23 = vector.shape_cast %22 : vector<1x64x128xbf16> to vector<64x128xbf16>
    %cst_10 = arith.constant dense<0.000000e+00> : vector<48x128xf32>
    %24 = tpu.matmul %21, %23, %cst_10 {dimension_numbers = #tpu.dot_dimension_numbers<[1], [0], [0], [1], [0, 0, 1, 1], [], []>} : vector<48x64xbf16>, vector<64x128xbf16>, vector<48x128xf32> -> vector<48x128xf32>
    %25 = arith.addf %20, %24 : vector<48x128xf32>
    %26 = vector.extract_strided_slice %19 {offsets = [1, 0], sizes = [48, 64], strides = [1, 1]} : vector<52x64xbf16> to vector<48x64xbf16>
    %c1 = arith.constant 1 : index
    %c0_11 = arith.constant 0 : index
    %c0_12 = arith.constant 0 : index
    %27 = vector.load %arg3[%c1, %c0_11, %c0_12] : memref<5x64x128xbf16, #tpu.memory_space<vmem>>, vector<1x64x128xbf16>
    %28 = vector.shape_cast %27 : vector<1x64x128xbf16> to vector<64x128xbf16>
    %cst_13 = arith.constant dense<0.000000e+00> : vector<48x128xf32>
    %29 = tpu.matmul %26, %28, %cst_13 {dimension_numbers = #tpu.dot_dimension_numbers<[1], [0], [0], [1], [0, 0, 1, 1], [], []>} : vector<48x64xbf16>, vector<64x128xbf16>, vector<48x128xf32> -> vector<48x128xf32>
    %30 = arith.addf %25, %29 : vector<48x128xf32>
    %31 = vector.extract_strided_slice %19 {offsets = [2, 0], sizes = [48, 64], strides = [1, 1]} : vector<52x64xbf16> to vector<48x64xbf16>
    %c2 = arith.constant 2 : index
    %c0_14 = arith.constant 0 : index
    %c0_15 = arith.constant 0 : index
    %32 = vector.load %arg3[%c2, %c0_14, %c0_15] : memref<5x64x128xbf16, #tpu.memory_space<vmem>>, vector<1x64x128xbf16>
    %33 = vector.shape_cast %32 : vector<1x64x128xbf16> to vector<64x128xbf16>
    %cst_16 = arith.constant dense<0.000000e+00> : vector<48x128xf32>
    %34 = tpu.matmul %31, %33, %cst_16 {dimension_numbers = #tpu.dot_dimension_numbers<[1], [0], [0], [1], [0, 0, 1, 1], [], []>} : vector<48x64xbf16>, vector<64x128xbf16>, vector<48x128xf32> -> vector<48x128xf32>
    %35 = arith.addf %30, %34 : vector<48x128xf32>
    %36 = vector.extract_strided_slice %19 {offsets = [3, 0], sizes = [48, 64], strides = [1, 1]} : vector<52x64xbf16> to vector<48x64xbf16>
    %c3 = arith.constant 3 : index
    %c0_17 = arith.constant 0 : index
    %c0_18 = arith.constant 0 : index
    %37 = vector.load %arg3[%c3, %c0_17, %c0_18] : memref<5x64x128xbf16, #tpu.memory_space<vmem>>, vector<1x64x128xbf16>
    %38 = vector.shape_cast %37 : vector<1x64x128xbf16> to vector<64x128xbf16>
    %cst_19 = arith.constant dense<0.000000e+00> : vector<48x128xf32>
    %39 = tpu.matmul %36, %38, %cst_19 {dimension_numbers = #tpu.dot_dimension_numbers<[1], [0], [0], [1], [0, 0, 1, 1], [], []>} : vector<48x64xbf16>, vector<64x128xbf16>, vector<48x128xf32> -> vector<48x128xf32>
    %40 = arith.addf %35, %39 : vector<48x128xf32>
    %41 = vector.extract_strided_slice %19 {offsets = [4, 0], sizes = [48, 64], strides = [1, 1]} : vector<52x64xbf16> to vector<48x64xbf16>
    %c4 = arith.constant 4 : index
    %c0_20 = arith.constant 0 : index
    %c0_21 = arith.constant 0 : index
    %42 = vector.load %arg3[%c4, %c0_20, %c0_21] : memref<5x64x128xbf16, #tpu.memory_space<vmem>>, vector<1x64x128xbf16>
    %43 = vector.shape_cast %42 : vector<1x64x128xbf16> to vector<64x128xbf16>
    %cst_22 = arith.constant dense<0.000000e+00> : vector<48x128xf32>
    %44 = tpu.matmul %41, %43, %cst_22 {dimension_numbers = #tpu.dot_dimension_numbers<[1], [0], [0], [1], [0, 0, 1, 1], [], []>} : vector<48x64xbf16>, vector<64x128xbf16>, vector<48x128xf32> -> vector<48x128xf32>
    %45 = arith.addf %40, %44 : vector<48x128xf32>
    %c0_23 = arith.constant 0 : index
    %c0_24 = arith.constant 0 : index
    %46 = vector.load %arg4[%c0_23, %c0_24] : memref<1x128xf32, #tpu.memory_space<vmem>>, vector<1x128xf32>
    %47 = vector.broadcast %46 : vector<1x128xf32> to vector<48x128xf32>
    %48 = arith.addf %45, %47 : vector<48x128xf32>
    %cst_25 = arith.constant 0.000000e+00 : f32
    %49 = vector.broadcast %cst_25 : f32 to vector<48x128xf32>
    %50 = arith.maximumf %48, %49 : vector<48x128xf32>
    %51 = arith.truncf %50 : vector<48x128xf32> to vector<48x128xbf16>
    %c0_26 = arith.constant 0 : index
    %c0_27 = arith.constant 0 : index
    %c0_28 = arith.constant 0 : index
    %52 = vector.load %arg7[%c0_26, %c0_27, %c0_28] : memref<1x48x128xbf16, #tpu.memory_space<vmem>>, vector<1x48x128xbf16>
    %53 = vector.shape_cast %52 : vector<1x48x128xbf16> to vector<48x128xbf16>
    %54 = vector.shape_cast %51 : vector<48x128xbf16> to vector<1x48x128xbf16>
    tpu.vector_store %arg7[%c0_26, %c0_27, %c0_28], %54 {strides = array<i32>} : memref<1x48x128xbf16, #tpu.memory_space<vmem>>, vector<1x48x128xbf16>,
    %55 = tpu.iota {dimensions = array<i32: 0>} : vector<48x1xi32>
    %56 = arith.index_cast %arg0 : i32 to index
    %57 = memref.load %arg1[%56] : memref<4xi32, #tpu.memory_space<smem>>
    %58 = vector.broadcast %57 : i32 to vector<48x1xi32>
    %59 = arith.cmpi slt, %55, %58 : vector<48x1xi32>
    %60 = arith.extui %59 : vector<48x1xi1> to vector<48x1xi32>
    %61 = arith.sitofp %60 : vector<48x1xi32> to vector<48x1xf32>
    %62 = vector.broadcast %61 : vector<48x1xf32> to vector<48x128xf32>
    %63 = arith.mulf %50, %62 : vector<48x128xf32>
    %cst_29 = arith.constant dense<0.000000e+00> : vector<128xf32>
    %64 = vector.multi_reduction <add>, %63, %cst_29 [0] : vector<48x128xf32> to vector<128xf32>
    %65 = vector.shape_cast %64 : vector<128xf32> to vector<1x128xf32>
    %c0_30 = arith.constant 0 : index
    %c0_31 = arith.constant 0 : index
    %c0_32 = arith.constant 0 : index
    %66 = vector.load %arg8[%c0_30, %c0_31, %c0_32] : memref<1x1x128xf32, #tpu.memory_space<vmem>>, vector<1x1x128xf32>
    %67 = vector.shape_cast %66 : vector<1x1x128xf32> to vector<1x128xf32>
    %68 = vector.shape_cast %65 : vector<1x128xf32> to vector<1x1x128xf32>
    tpu.vector_store %arg8[%c0_30, %c0_31, %c0_32], %68 {strides = array<i32>} : memref<1x1x128xf32, #tpu.memory_space<vmem>>, vector<1x1x128xf32>,
    %69 = arith.mulf %63, %50 : vector<48x128xf32>
    %cst_33 = arith.constant dense<0.000000e+00> : vector<128xf32>
    %70 = vector.multi_reduction <add>, %69, %cst_33 [0] : vector<48x128xf32> to vector<128xf32>
    %71 = vector.shape_cast %70 : vector<128xf32> to vector<1x128xf32>
    %c0_34 = arith.constant 0 : index
    %c0_35 = arith.constant 0 : index
    %c0_36 = arith.constant 0 : index
    %72 = vector.load %arg9[%c0_34, %c0_35, %c0_36] : memref<1x1x128xf32, #tpu.memory_space<vmem>>, vector<1x1x128xf32>
    %73 = vector.shape_cast %72 : vector<1x1x128xf32> to vector<1x128xf32>
    %74 = vector.shape_cast %71 : vector<1x128xf32> to vector<1x1x128xf32>
    tpu.vector_store %arg9[%c0_34, %c0_35, %c0_36], %74 {strides = array<i32>} : memref<1x1x128xf32, #tpu.memory_space<vmem>>, vector<1x1x128xf32>,
    return
  }
  func.func @transform_0(%arg0: i32, %arg1: memref<4xi32, #tpu.memory_space<smem>>) -> (i32, i32, i32) {
    %c0_i32 = arith.constant 0 : i32
    %c0_i32_0 = arith.constant 0 : i32
    %c0_i32_1 = arith.constant 0 : i32
    return %arg0, %c0_i32, %c0_i32_0 : i32, i32, i32
  }
  func.func @transform_1(%arg0: i32, %arg1: memref<4xi32, #tpu.memory_space<smem>>) -> (i32, i32, i32) {
    %c0_i32 = arith.constant 0 : i32
    %c0_i32_0 = arith.constant 0 : i32
    %c0_i32_1 = arith.constant 0 : i32
    %c0_i32_2 = arith.constant 0 : i32
    return %c0_i32, %c0_i32_0, %c0_i32_1 : i32, i32, i32
  }
  func.func @transform_2(%arg0: i32, %arg1: memref<4xi32, #tpu.memory_space<smem>>) -> (i32, i32) {
    %c0_i32 = arith.constant 0 : i32
    %c0_i32_0 = arith.constant 0 : i32
    %c0_i32_1 = arith.constant 0 : i32
    return %c0_i32, %c0_i32_0 : i32, i32
  }
  func.func @transform_3(%arg0: i32, %arg1: memref<4xi32, #tpu.memory_space<smem>>) -> (i32, i32) {
    %c0_i32 = arith.constant 0 : i32
    %c0_i32_0 = arith.constant 0 : i32
    %c0_i32_1 = arith.constant 0 : i32
    return %c0_i32, %c0_i32_0 : i32, i32
  }
  func.func @transform_4(%arg0: i32, %arg1: memref<4xi32, #tpu.memory_space<smem>>) -> (i32, i32) {
    %c0_i32 = arith.constant 0 : i32
    %c0_i32_0 = arith.constant 0 : i32
    %c0_i32_1 = arith.constant 0 : i32
    return %c0_i32, %c0_i32_0 : i32, i32
  }
  func.func @transform_5(%arg0: i32, %arg1: memref<4xi32, #tpu.memory_space<smem>>) -> (i32, i32, i32) {
    %c0_i32 = arith.constant 0 : i32
    %c0_i32_0 = arith.constant 0 : i32
    %c0_i32_1 = arith.constant 0 : i32
    return %arg0, %c0_i32, %c0_i32_0 : i32, i32, i32
  }
  func.func @transform_6(%arg0: i32, %arg1: memref<4xi32, #tpu.memory_space<smem>>) -> (i32, i32, i32) {
    %c0_i32 = arith.constant 0 : i32
    %c0_i32_0 = arith.constant 0 : i32
    %c0_i32_1 = arith.constant 0 : i32
    return %arg0, %c0_i32, %c0_i32_0 : i32, i32, i32
  }
  func.func @transform_7(%arg0: i32, %arg1: memref<4xi32, #tpu.memory_space<smem>>) -> (i32, i32, i32) {
    %c0_i32 = arith.constant 0 : i32
    %c0_i32_0 = arith.constant 0 : i32
    %c0_i32_1 = arith.constant 0 : i32
    return %arg0, %c0_i32, %c0_i32_0 : i32, i32, i32
  }
}

module attributes {stable_mosaic.version = 11 : i64} {
  func.func @tdnn_conv_kernel(%arg0: i32, %arg1: memref<4xi32, #tpu.memory_space<smem>>, %arg2: memref<1x56x128xbf16, #tpu.memory_space<vmem>>, %arg3: memref<5x128x128xbf16, #tpu.memory_space<vmem>>, %arg4: memref<1x128xf32, #tpu.memory_space<vmem>>, %arg5: memref<1x128xf32, #tpu.memory_space<vmem>>, %arg6: memref<1x128xf32, #tpu.memory_space<vmem>>, %arg7: memref<1x48x128xbf16, #tpu.memory_space<vmem>>, %arg8: memref<1x1x128xf32, #tpu.memory_space<vmem>>, %arg9: memref<1x1x128xf32, #tpu.memory_space<vmem>>) attributes {dimension_semantics = [#tpu.dimension_semantics<parallel>], iteration_bounds = array<i64: 4>, scalar_prefetch = 1 : i64, scratch_operands = 0 : i64, tpu.core_type = #tpu.core_type<tc>, window_params = [{transform_indices = @transform_0, window_bounds = array<i64: 1, 56, 128>}, {pipeline_mode = #tpu.pipeline_mode<synchronous>, transform_indices = @transform_1, window_bounds = array<i64: 5, 128, 128>}, {pipeline_mode = #tpu.pipeline_mode<synchronous>, transform_indices = @transform_2, window_bounds = array<i64: 1, 128>}, {pipeline_mode = #tpu.pipeline_mode<synchronous>, transform_indices = @transform_3, window_bounds = array<i64: 1, 128>}, {pipeline_mode = #tpu.pipeline_mode<synchronous>, transform_indices = @transform_4, window_bounds = array<i64: 1, 128>}, {transform_indices = @transform_5, window_bounds = array<i64: 1, 48, 128>}, {transform_indices = @transform_6, window_bounds = array<i64: 1, 1, 128>}, {transform_indices = @transform_7, window_bounds = array<i64: 1, 1, 128>}]} {
    %c0 = arith.constant 0 : index
    %c0_0 = arith.constant 0 : index
    %c0_1 = arith.constant 0 : index
    %0 = vector.load %arg2[%c0, %c0_0, %c0_1] : memref<1x56x128xbf16, #tpu.memory_space<vmem>>, vector<1x56x128xbf16>
    %1 = vector.shape_cast %0 : vector<1x56x128xbf16> to vector<56x128xbf16>
    %2 = arith.extf %1 : vector<56x128xbf16> to vector<56x128xf32>
    %3 = tpu.iota {dimensions = array<i32: 0>} : vector<56x1xi32>
    %c4_i32 = arith.constant 4 : i32
    %4 = vector.broadcast %c4_i32 : i32 to vector<56x1xi32>
    %5 = arith.cmpi sge, %3, %4 : vector<56x1xi32>
    %c52_i32 = arith.constant 52 : i32
    %6 = vector.broadcast %c52_i32 : i32 to vector<56x1xi32>
    %7 = arith.cmpi slt, %3, %6 : vector<56x1xi32>
    %8 = arith.andi %5, %7 : vector<56x1xi1>
    %c0_2 = arith.constant 0 : index
    %c0_3 = arith.constant 0 : index
    %9 = vector.load %arg5[%c0_2, %c0_3] : memref<1x128xf32, #tpu.memory_space<vmem>>, vector<1x128xf32>
    %10 = vector.broadcast %9 : vector<1x128xf32> to vector<56x128xf32>
    %11 = arith.mulf %2, %10 : vector<56x128xf32>
    %c0_4 = arith.constant 0 : index
    %c0_5 = arith.constant 0 : index
    %12 = vector.load %arg6[%c0_4, %c0_5] : memref<1x128xf32, #tpu.memory_space<vmem>>, vector<1x128xf32>
    %13 = vector.broadcast %12 : vector<1x128xf32> to vector<56x128xf32>
    %14 = arith.addf %11, %13 : vector<56x128xf32>
    %cst = arith.constant 0.000000e+00 : f32
    %15 = vector.shape_cast %8 : vector<56x1xi1> to vector<56x1xi1>
    %16 = vector.broadcast %15 : vector<56x1xi1> to vector<56x128xi1>
    %17 = vector.broadcast %cst : f32 to vector<56x128xf32>
    %18 = arith.select %16, %14, %17 : vector<56x128xi1>, vector<56x128xf32>
    %19 = arith.truncf %18 : vector<56x128xf32> to vector<56x128xbf16>
    %cst_6 = arith.constant 0.000000e+00 : f32
    %20 = vector.broadcast %cst_6 : f32 to vector<48x128xf32>
    %21 = vector.extract_strided_slice %19 {offsets = [0, 0], sizes = [48, 128], strides = [1, 1]} : vector<56x128xbf16> to vector<48x128xbf16>
    %c0_7 = arith.constant 0 : index
    %c0_8 = arith.constant 0 : index
    %c0_9 = arith.constant 0 : index
    %22 = vector.load %arg3[%c0_7, %c0_8, %c0_9] : memref<5x128x128xbf16, #tpu.memory_space<vmem>>, vector<1x128x128xbf16>
    %23 = vector.shape_cast %22 : vector<1x128x128xbf16> to vector<128x128xbf16>
    %cst_10 = arith.constant dense<0.000000e+00> : vector<48x128xf32>
    %24 = tpu.matmul %21, %23, %cst_10 {dimension_numbers = #tpu.dot_dimension_numbers<[1], [0], [0], [1], [0, 0, 1, 1], [], []>} : vector<48x128xbf16>, vector<128x128xbf16>, vector<48x128xf32> -> vector<48x128xf32>
    %25 = arith.addf %20, %24 : vector<48x128xf32>
    %26 = vector.extract_strided_slice %19 {offsets = [2, 0], sizes = [48, 128], strides = [1, 1]} : vector<56x128xbf16> to vector<48x128xbf16>
    %c1 = arith.constant 1 : index
    %c0_11 = arith.constant 0 : index
    %c0_12 = arith.constant 0 : index
    %27 = vector.load %arg3[%c1, %c0_11, %c0_12] : memref<5x128x128xbf16, #tpu.memory_space<vmem>>, vector<1x128x128xbf16>
    %28 = vector.shape_cast %27 : vector<1x128x128xbf16> to vector<128x128xbf16>
    %cst_13 = arith.constant dense<0.000000e+00> : vector<48x128xf32>
    %29 = tpu.matmul %26, %28, %cst_13 {dimension_numbers = #tpu.dot_dimension_numbers<[1], [0], [0], [1], [0, 0, 1, 1], [], []>} : vector<48x128xbf16>, vector<128x128xbf16>, vector<48x128xf32> -> vector<48x128xf32>
    %30 = arith.addf %25, %29 : vector<48x128xf32>
    %31 = vector.extract_strided_slice %19 {offsets = [4, 0], sizes = [48, 128], strides = [1, 1]} : vector<56x128xbf16> to vector<48x128xbf16>
    %c2 = arith.constant 2 : index
    %c0_14 = arith.constant 0 : index
    %c0_15 = arith.constant 0 : index
    %32 = vector.load %arg3[%c2, %c0_14, %c0_15] : memref<5x128x128xbf16, #tpu.memory_space<vmem>>, vector<1x128x128xbf16>
    %33 = vector.shape_cast %32 : vector<1x128x128xbf16> to vector<128x128xbf16>
    %cst_16 = arith.constant dense<0.000000e+00> : vector<48x128xf32>
    %34 = tpu.matmul %31, %33, %cst_16 {dimension_numbers = #tpu.dot_dimension_numbers<[1], [0], [0], [1], [0, 0, 1, 1], [], []>} : vector<48x128xbf16>, vector<128x128xbf16>, vector<48x128xf32> -> vector<48x128xf32>
    %35 = arith.addf %30, %34 : vector<48x128xf32>
    %36 = vector.extract_strided_slice %19 {offsets = [6, 0], sizes = [48, 128], strides = [1, 1]} : vector<56x128xbf16> to vector<48x128xbf16>
    %c3 = arith.constant 3 : index
    %c0_17 = arith.constant 0 : index
    %c0_18 = arith.constant 0 : index
    %37 = vector.load %arg3[%c3, %c0_17, %c0_18] : memref<5x128x128xbf16, #tpu.memory_space<vmem>>, vector<1x128x128xbf16>
    %38 = vector.shape_cast %37 : vector<1x128x128xbf16> to vector<128x128xbf16>
    %cst_19 = arith.constant dense<0.000000e+00> : vector<48x128xf32>
    %39 = tpu.matmul %36, %38, %cst_19 {dimension_numbers = #tpu.dot_dimension_numbers<[1], [0], [0], [1], [0, 0, 1, 1], [], []>} : vector<48x128xbf16>, vector<128x128xbf16>, vector<48x128xf32> -> vector<48x128xf32>
    %40 = arith.addf %35, %39 : vector<48x128xf32>
    %41 = vector.extract_strided_slice %19 {offsets = [8, 0], sizes = [48, 128], strides = [1, 1]} : vector<56x128xbf16> to vector<48x128xbf16>
    %c4 = arith.constant 4 : index
    %c0_20 = arith.constant 0 : index
    %c0_21 = arith.constant 0 : index
    %42 = vector.load %arg3[%c4, %c0_20, %c0_21] : memref<5x128x128xbf16, #tpu.memory_space<vmem>>, vector<1x128x128xbf16>
    %43 = vector.shape_cast %42 : vector<1x128x128xbf16> to vector<128x128xbf16>
    %cst_22 = arith.constant dense<0.000000e+00> : vector<48x128xf32>
    %44 = tpu.matmul %41, %43, %cst_22 {dimension_numbers = #tpu.dot_dimension_numbers<[1], [0], [0], [1], [0, 0, 1, 1], [], []>} : vector<48x128xbf16>, vector<128x128xbf16>, vector<48x128xf32> -> vector<48x128xf32>
    %45 = arith.addf %40, %44 : vector<48x128xf32>
    %c0_23 = arith.constant 0 : index
    %c0_24 = arith.constant 0 : index
    %46 = vector.load %arg4[%c0_23, %c0_24] : memref<1x128xf32, #tpu.memory_space<vmem>>, vector<1x128xf32>
    %47 = vector.broadcast %46 : vector<1x128xf32> to vector<48x128xf32>
    %48 = arith.addf %45, %47 : vector<48x128xf32>
    %cst_25 = arith.constant 0.000000e+00 : f32
    %49 = vector.broadcast %cst_25 : f32 to vector<48x128xf32>
    %50 = arith.maximumf %48, %49 : vector<48x128xf32>
    %51 = arith.truncf %50 : vector<48x128xf32> to vector<48x128xbf16>
    %c0_26 = arith.constant 0 : index
    %c0_27 = arith.constant 0 : index
    %c0_28 = arith.constant 0 : index
    %52 = vector.load %arg7[%c0_26, %c0_27, %c0_28] : memref<1x48x128xbf16, #tpu.memory_space<vmem>>, vector<1x48x128xbf16>
    %53 = vector.shape_cast %52 : vector<1x48x128xbf16> to vector<48x128xbf16>
    %54 = vector.shape_cast %51 : vector<48x128xbf16> to vector<1x48x128xbf16>
    tpu.vector_store %arg7[%c0_26, %c0_27, %c0_28], %54 {strides = array<i32>} : memref<1x48x128xbf16, #tpu.memory_space<vmem>>, vector<1x48x128xbf16>,
    %55 = tpu.iota {dimensions = array<i32: 0>} : vector<48x1xi32>
    %56 = arith.index_cast %arg0 : i32 to index
    %57 = memref.load %arg1[%56] : memref<4xi32, #tpu.memory_space<smem>>
    %58 = vector.broadcast %57 : i32 to vector<48x1xi32>
    %59 = arith.cmpi slt, %55, %58 : vector<48x1xi32>
    %60 = arith.extui %59 : vector<48x1xi1> to vector<48x1xi32>
    %61 = arith.sitofp %60 : vector<48x1xi32> to vector<48x1xf32>
    %62 = vector.broadcast %61 : vector<48x1xf32> to vector<48x128xf32>
    %63 = arith.mulf %50, %62 : vector<48x128xf32>
    %cst_29 = arith.constant dense<0.000000e+00> : vector<128xf32>
    %64 = vector.multi_reduction <add>, %63, %cst_29 [0] : vector<48x128xf32> to vector<128xf32>
    %65 = vector.shape_cast %64 : vector<128xf32> to vector<1x128xf32>
    %c0_30 = arith.constant 0 : index
    %c0_31 = arith.constant 0 : index
    %c0_32 = arith.constant 0 : index
    %66 = vector.load %arg8[%c0_30, %c0_31, %c0_32] : memref<1x1x128xf32, #tpu.memory_space<vmem>>, vector<1x1x128xf32>
    %67 = vector.shape_cast %66 : vector<1x1x128xf32> to vector<1x128xf32>
    %68 = vector.shape_cast %65 : vector<1x128xf32> to vector<1x1x128xf32>
    tpu.vector_store %arg8[%c0_30, %c0_31, %c0_32], %68 {strides = array<i32>} : memref<1x1x128xf32, #tpu.memory_space<vmem>>, vector<1x1x128xf32>,
    %69 = arith.mulf %63, %50 : vector<48x128xf32>
    %cst_33 = arith.constant dense<0.000000e+00> : vector<128xf32>
    %70 = vector.multi_reduction <add>, %69, %cst_33 [0] : vector<48x128xf32> to vector<128xf32>
    %71 = vector.shape_cast %70 : vector<128xf32> to vector<1x128xf32>
    %c0_34 = arith.constant 0 : index
    %c0_35 = arith.constant 0 : index
    %c0_36 = arith.constant 0 : index
    %72 = vector.load %arg9[%c0_34, %c0_35, %c0_36] : memref<1x1x128xf32, #tpu.memory_space<vmem>>, vector<1x1x128xf32>
    %73 = vector.shape_cast %72 : vector<1x1x128xf32> to vector<1x128xf32>
    %74 = vector.shape_cast %71 : vector<1x128xf32> to vector<1x1x128xf32>
    tpu.vector_store %arg9[%c0_34, %c0_35, %c0_36], %74 {strides = array<i32>} : memref<1x1x128xf32, #tpu.memory_space<vmem>>, vector<1x1x128xf32>,
    return
  }
  func.func @transform_0(%arg0: i32, %arg1: memref<4xi32, #tpu.memory_space<smem>>) -> (i32, i32, i32) {
    %c0_i32 = arith.constant 0 : i32
    %c0_i32_0 = arith.constant 0 : i32
    %c0_i32_1 = arith.constant 0 : i32
    return %arg0, %c0_i32, %c0_i32_0 : i32, i32, i32
  }
  func.func @transform_1(%arg0: i32, %arg1: memref<4xi32, #tpu.memory_space<smem>>) -> (i32, i32, i32) {
    %c0_i32 = arith.constant 0 : i32
    %c0_i32_0 = arith.constant 0 : i32
    %c0_i32_1 = arith.constant 0 : i32
    %c0_i32_2 = arith.constant 0 : i32
    return %c0_i32, %c0_i32_0, %c0_i32_1 : i32, i32, i32
  }
  func.func @transform_2(%arg0: i32, %arg1: memref<4xi32, #tpu.memory_space<smem>>) -> (i32, i32) {
    %c0_i32 = arith.constant 0 : i32
    %c0_i32_0 = arith.constant 0 : i32
    %c0_i32_1 = arith.constant 0 : i32
    return %c0_i32, %c0_i32_0 : i32, i32
  }
  func.func @transform_3(%arg0: i32, %arg1: memref<4xi32, #tpu.memory_space<smem>>) -> (i32, i32) {
    %c0_i32 = arith.constant 0 : i32
    %c0_i32_0 = arith.constant 0 : i32
    %c0_i32_1 = arith.constant 0 : i32
    return %c0_i32, %c0_i32_0 : i32, i32
  }
  func.func @transform_4(%arg0: i32, %arg1: memref<4xi32, #tpu.memory_space<smem>>) -> (i32, i32) {
    %c0_i32 = arith.constant 0 : i32
    %c0_i32_0 = arith.constant 0 : i32
    %c0_i32_1 = arith.constant 0 : i32
    return %c0_i32, %c0_i32_0 : i32, i32
  }
  func.func @transform_5(%arg0: i32, %arg1: memref<4xi32, #tpu.memory_space<smem>>) -> (i32, i32, i32) {
    %c0_i32 = arith.constant 0 : i32
    %c0_i32_0 = arith.constant 0 : i32
    %c0_i32_1 = arith.constant 0 : i32
    return %arg0, %c0_i32, %c0_i32_0 : i32, i32, i32
  }
  func.func @transform_6(%arg0: i32, %arg1: memref<4xi32, #tpu.memory_space<smem>>) -> (i32, i32, i32) {
    %c0_i32 = arith.constant 0 : i32
    %c0_i32_0 = arith.constant 0 : i32
    %c0_i32_1 = arith.constant 0 : i32
    return %arg0, %c0_i32, %c0_i32_0 : i32, i32, i32
  }
  func.func @transform_7(%arg0: i32, %arg1: memref<4xi32, #tpu.memory_space<smem>>) -> (i32, i32, i32) {
    %c0_i32 = arith.constant 0 : i32
    %c0_i32_0 = arith.constant 0 : i32
    %c0_i32_1 = arith.constant 0 : i32
    return %arg0, %c0_i32, %c0_i32_0 : i32, i32, i32
  }
}

module attributes {stable_mosaic.version = 11 : i64} {
  func.func @tdnn_conv_kernel(%arg0: i32, %arg1: memref<4xi32, #tpu.memory_space<smem>>, %arg2: memref<1x52x128xbf16, #tpu.memory_space<vmem>>, %arg3: memref<5x128x128xbf16, #tpu.memory_space<vmem>>, %arg4: memref<1x128xf32, #tpu.memory_space<vmem>>, %arg5: memref<1x128xf32, #tpu.memory_space<vmem>>, %arg6: memref<1x128xf32, #tpu.memory_space<vmem>>, %arg7: memref<1x48x128xbf16, #tpu.memory_space<vmem>>, %arg8: memref<1x1x128xf32, #tpu.memory_space<vmem>>, %arg9: memref<1x1x128xf32, #tpu.memory_space<vmem>>) attributes {dimension_semantics = [#tpu.dimension_semantics<parallel>], iteration_bounds = array<i64: 4>, scalar_prefetch = 1 : i64, scratch_operands = 0 : i64, tpu.core_type = #tpu.core_type<tc>, window_params = [{transform_indices = @transform_0, window_bounds = array<i64: 1, 52, 128>}, {pipeline_mode = #tpu.pipeline_mode<synchronous>, transform_indices = @transform_1, window_bounds = array<i64: 5, 128, 128>}, {pipeline_mode = #tpu.pipeline_mode<synchronous>, transform_indices = @transform_2, window_bounds = array<i64: 1, 128>}, {pipeline_mode = #tpu.pipeline_mode<synchronous>, transform_indices = @transform_3, window_bounds = array<i64: 1, 128>}, {pipeline_mode = #tpu.pipeline_mode<synchronous>, transform_indices = @transform_4, window_bounds = array<i64: 1, 128>}, {transform_indices = @transform_5, window_bounds = array<i64: 1, 48, 128>}, {transform_indices = @transform_6, window_bounds = array<i64: 1, 1, 128>}, {transform_indices = @transform_7, window_bounds = array<i64: 1, 1, 128>}]} {
    %c0 = arith.constant 0 : index
    %c0_0 = arith.constant 0 : index
    %c0_1 = arith.constant 0 : index
    %0 = vector.load %arg2[%c0, %c0_0, %c0_1] : memref<1x52x128xbf16, #tpu.memory_space<vmem>>, vector<1x52x128xbf16>
    %1 = vector.shape_cast %0 : vector<1x52x128xbf16> to vector<52x128xbf16>
    %2 = arith.extf %1 : vector<52x128xbf16> to vector<52x128xf32>
    %3 = tpu.iota {dimensions = array<i32: 0>} : vector<52x1xi32>
    %c2_i32 = arith.constant 2 : i32
    %4 = vector.broadcast %c2_i32 : i32 to vector<52x1xi32>
    %5 = arith.cmpi sge, %3, %4 : vector<52x1xi32>
    %c50_i32 = arith.constant 50 : i32
    %6 = vector.broadcast %c50_i32 : i32 to vector<52x1xi32>
    %7 = arith.cmpi slt, %3, %6 : vector<52x1xi32>
    %8 = arith.andi %5, %7 : vector<52x1xi1>
    %c0_2 = arith.constant 0 : index
    %c0_3 = arith.constant 0 : index
    %9 = vector.load %arg5[%c0_2, %c0_3] : memref<1x128xf32, #tpu.memory_space<vmem>>, vector<1x128xf32>
    %10 = vector.broadcast %9 : vector<1x128xf32> to vector<52x128xf32>
    %11 = arith.mulf %2, %10 : vector<52x128xf32>
    %c0_4 = arith.constant 0 : index
    %c0_5 = arith.constant 0 : index
    %12 = vector.load %arg6[%c0_4, %c0_5] : memref<1x128xf32, #tpu.memory_space<vmem>>, vector<1x128xf32>
    %13 = vector.broadcast %12 : vector<1x128xf32> to vector<52x128xf32>
    %14 = arith.addf %11, %13 : vector<52x128xf32>
    %cst = arith.constant 0.000000e+00 : f32
    %15 = vector.shape_cast %8 : vector<52x1xi1> to vector<52x1xi1>
    %16 = vector.broadcast %15 : vector<52x1xi1> to vector<52x128xi1>
    %17 = vector.broadcast %cst : f32 to vector<52x128xf32>
    %18 = arith.select %16, %14, %17 : vector<52x128xi1>, vector<52x128xf32>
    %19 = arith.truncf %18 : vector<52x128xf32> to vector<52x128xbf16>
    %cst_6 = arith.constant 0.000000e+00 : f32
    %20 = vector.broadcast %cst_6 : f32 to vector<48x128xf32>
    %21 = vector.extract_strided_slice %19 {offsets = [0, 0], sizes = [48, 128], strides = [1, 1]} : vector<52x128xbf16> to vector<48x128xbf16>
    %c0_7 = arith.constant 0 : index
    %c0_8 = arith.constant 0 : index
    %c0_9 = arith.constant 0 : index
    %22 = vector.load %arg3[%c0_7, %c0_8, %c0_9] : memref<5x128x128xbf16, #tpu.memory_space<vmem>>, vector<1x128x128xbf16>
    %23 = vector.shape_cast %22 : vector<1x128x128xbf16> to vector<128x128xbf16>
    %cst_10 = arith.constant dense<0.000000e+00> : vector<48x128xf32>
    %24 = tpu.matmul %21, %23, %cst_10 {dimension_numbers = #tpu.dot_dimension_numbers<[1], [0], [0], [1], [0, 0, 1, 1], [], []>} : vector<48x128xbf16>, vector<128x128xbf16>, vector<48x128xf32> -> vector<48x128xf32>
    %25 = arith.addf %20, %24 : vector<48x128xf32>
    %26 = vector.extract_strided_slice %19 {offsets = [1, 0], sizes = [48, 128], strides = [1, 1]} : vector<52x128xbf16> to vector<48x128xbf16>
    %c1 = arith.constant 1 : index
    %c0_11 = arith.constant 0 : index
    %c0_12 = arith.constant 0 : index
    %27 = vector.load %arg3[%c1, %c0_11, %c0_12] : memref<5x128x128xbf16, #tpu.memory_space<vmem>>, vector<1x128x128xbf16>
    %28 = vector.shape_cast %27 : vector<1x128x128xbf16> to vector<128x128xbf16>
    %cst_13 = arith.constant dense<0.000000e+00> : vector<48x128xf32>
    %29 = tpu.matmul %26, %28, %cst_13 {dimension_numbers = #tpu.dot_dimension_numbers<[1], [0], [0], [1], [0, 0, 1, 1], [], []>} : vector<48x128xbf16>, vector<128x128xbf16>, vector<48x128xf32> -> vector<48x128xf32>
    %30 = arith.addf %25, %29 : vector<48x128xf32>
    %31 = vector.extract_strided_slice %19 {offsets = [2, 0], sizes = [48, 128], strides = [1, 1]} : vector<52x128xbf16> to vector<48x128xbf16>
    %c2 = arith.constant 2 : index
    %c0_14 = arith.constant 0 : index
    %c0_15 = arith.constant 0 : index
    %32 = vector.load %arg3[%c2, %c0_14, %c0_15] : memref<5x128x128xbf16, #tpu.memory_space<vmem>>, vector<1x128x128xbf16>
    %33 = vector.shape_cast %32 : vector<1x128x128xbf16> to vector<128x128xbf16>
    %cst_16 = arith.constant dense<0.000000e+00> : vector<48x128xf32>
    %34 = tpu.matmul %31, %33, %cst_16 {dimension_numbers = #tpu.dot_dimension_numbers<[1], [0], [0], [1], [0, 0, 1, 1], [], []>} : vector<48x128xbf16>, vector<128x128xbf16>, vector<48x128xf32> -> vector<48x128xf32>
    %35 = arith.addf %30, %34 : vector<48x128xf32>
    %36 = vector.extract_strided_slice %19 {offsets = [3, 0], sizes = [48, 128], strides = [1, 1]} : vector<52x128xbf16> to vector<48x128xbf16>
    %c3 = arith.constant 3 : index
    %c0_17 = arith.constant 0 : index
    %c0_18 = arith.constant 0 : index
    %37 = vector.load %arg3[%c3, %c0_17, %c0_18] : memref<5x128x128xbf16, #tpu.memory_space<vmem>>, vector<1x128x128xbf16>
    %38 = vector.shape_cast %37 : vector<1x128x128xbf16> to vector<128x128xbf16>
    %cst_19 = arith.constant dense<0.000000e+00> : vector<48x128xf32>
    %39 = tpu.matmul %36, %38, %cst_19 {dimension_numbers = #tpu.dot_dimension_numbers<[1], [0], [0], [1], [0, 0, 1, 1], [], []>} : vector<48x128xbf16>, vector<128x128xbf16>, vector<48x128xf32> -> vector<48x128xf32>
    %40 = arith.addf %35, %39 : vector<48x128xf32>
    %41 = vector.extract_strided_slice %19 {offsets = [4, 0], sizes = [48, 128], strides = [1, 1]} : vector<52x128xbf16> to vector<48x128xbf16>
    %c4 = arith.constant 4 : index
    %c0_20 = arith.constant 0 : index
    %c0_21 = arith.constant 0 : index
    %42 = vector.load %arg3[%c4, %c0_20, %c0_21] : memref<5x128x128xbf16, #tpu.memory_space<vmem>>, vector<1x128x128xbf16>
    %43 = vector.shape_cast %42 : vector<1x128x128xbf16> to vector<128x128xbf16>
    %cst_22 = arith.constant dense<0.000000e+00> : vector<48x128xf32>
    %44 = tpu.matmul %41, %43, %cst_22 {dimension_numbers = #tpu.dot_dimension_numbers<[1], [0], [0], [1], [0, 0, 1, 1], [], []>} : vector<48x128xbf16>, vector<128x128xbf16>, vector<48x128xf32> -> vector<48x128xf32>
    %45 = arith.addf %40, %44 : vector<48x128xf32>
    %c0_23 = arith.constant 0 : index
    %c0_24 = arith.constant 0 : index
    %46 = vector.load %arg4[%c0_23, %c0_24] : memref<1x128xf32, #tpu.memory_space<vmem>>, vector<1x128xf32>
    %47 = vector.broadcast %46 : vector<1x128xf32> to vector<48x128xf32>
    %48 = arith.addf %45, %47 : vector<48x128xf32>
    %cst_25 = arith.constant 0.000000e+00 : f32
    %49 = vector.broadcast %cst_25 : f32 to vector<48x128xf32>
    %50 = arith.maximumf %48, %49 : vector<48x128xf32>
    %51 = arith.truncf %50 : vector<48x128xf32> to vector<48x128xbf16>
    %c0_26 = arith.constant 0 : index
    %c0_27 = arith.constant 0 : index
    %c0_28 = arith.constant 0 : index
    %52 = vector.load %arg7[%c0_26, %c0_27, %c0_28] : memref<1x48x128xbf16, #tpu.memory_space<vmem>>, vector<1x48x128xbf16>
    %53 = vector.shape_cast %52 : vector<1x48x128xbf16> to vector<48x128xbf16>
    %54 = vector.shape_cast %51 : vector<48x128xbf16> to vector<1x48x128xbf16>
    tpu.vector_store %arg7[%c0_26, %c0_27, %c0_28], %54 {strides = array<i32>} : memref<1x48x128xbf16, #tpu.memory_space<vmem>>, vector<1x48x128xbf16>,
    %55 = tpu.iota {dimensions = array<i32: 0>} : vector<48x1xi32>
    %56 = arith.index_cast %arg0 : i32 to index
    %57 = memref.load %arg1[%56] : memref<4xi32, #tpu.memory_space<smem>>
    %58 = vector.broadcast %57 : i32 to vector<48x1xi32>
    %59 = arith.cmpi slt, %55, %58 : vector<48x1xi32>
    %60 = arith.extui %59 : vector<48x1xi1> to vector<48x1xi32>
    %61 = arith.sitofp %60 : vector<48x1xi32> to vector<48x1xf32>
    %62 = vector.broadcast %61 : vector<48x1xf32> to vector<48x128xf32>
    %63 = arith.mulf %50, %62 : vector<48x128xf32>
    %cst_29 = arith.constant dense<0.000000e+00> : vector<128xf32>
    %64 = vector.multi_reduction <add>, %63, %cst_29 [0] : vector<48x128xf32> to vector<128xf32>
    %65 = vector.shape_cast %64 : vector<128xf32> to vector<1x128xf32>
    %c0_30 = arith.constant 0 : index
    %c0_31 = arith.constant 0 : index
    %c0_32 = arith.constant 0 : index
    %66 = vector.load %arg8[%c0_30, %c0_31, %c0_32] : memref<1x1x128xf32, #tpu.memory_space<vmem>>, vector<1x1x128xf32>
    %67 = vector.shape_cast %66 : vector<1x1x128xf32> to vector<1x128xf32>
    %68 = vector.shape_cast %65 : vector<1x128xf32> to vector<1x1x128xf32>
    tpu.vector_store %arg8[%c0_30, %c0_31, %c0_32], %68 {strides = array<i32>} : memref<1x1x128xf32, #tpu.memory_space<vmem>>, vector<1x1x128xf32>,
    %69 = arith.mulf %63, %50 : vector<48x128xf32>
    %cst_33 = arith.constant dense<0.000000e+00> : vector<128xf32>
    %70 = vector.multi_reduction <add>, %69, %cst_33 [0] : vector<48x128xf32> to vector<128xf32>
    %71 = vector.shape_cast %70 : vector<128xf32> to vector<1x128xf32>
    %c0_34 = arith.constant 0 : index
    %c0_35 = arith.constant 0 : index
    %c0_36 = arith.constant 0 : index
    %72 = vector.load %arg9[%c0_34, %c0_35, %c0_36] : memref<1x1x128xf32, #tpu.memory_space<vmem>>, vector<1x1x128xf32>
    %73 = vector.shape_cast %72 : vector<1x1x128xf32> to vector<1x128xf32>
    %74 = vector.shape_cast %71 : vector<1x128xf32> to vector<1x1x128xf32>
    tpu.vector_store %arg9[%c0_34, %c0_35, %c0_36], %74 {strides = array<i32>} : memref<1x1x128xf32, #tpu.memory_space<vmem>>, vector<1x1x128xf32>,
    return
  }
  func.func @transform_0(%arg0: i32, %arg1: memref<4xi32, #tpu.memory_space<smem>>) -> (i32, i32, i32) {
    %c0_i32 = arith.constant 0 : i32
    %c0_i32_0 = arith.constant 0 : i32
    %c0_i32_1 = arith.constant 0 : i32
    return %arg0, %c0_i32, %c0_i32_0 : i32, i32, i32
  }
  func.func @transform_1(%arg0: i32, %arg1: memref<4xi32, #tpu.memory_space<smem>>) -> (i32, i32, i32) {
    %c0_i32 = arith.constant 0 : i32
    %c0_i32_0 = arith.constant 0 : i32
    %c0_i32_1 = arith.constant 0 : i32
    %c0_i32_2 = arith.constant 0 : i32
    return %c0_i32, %c0_i32_0, %c0_i32_1 : i32, i32, i32
  }
  func.func @transform_2(%arg0: i32, %arg1: memref<4xi32, #tpu.memory_space<smem>>) -> (i32, i32) {
    %c0_i32 = arith.constant 0 : i32
    %c0_i32_0 = arith.constant 0 : i32
    %c0_i32_1 = arith.constant 0 : i32
    return %c0_i32, %c0_i32_0 : i32, i32
  }
  func.func @transform_3(%arg0: i32, %arg1: memref<4xi32, #tpu.memory_space<smem>>) -> (i32, i32) {
    %c0_i32 = arith.constant 0 : i32
    %c0_i32_0 = arith.constant 0 : i32
    %c0_i32_1 = arith.constant 0 : i32
    return %c0_i32, %c0_i32_0 : i32, i32
  }
  func.func @transform_4(%arg0: i32, %arg1: memref<4xi32, #tpu.memory_space<smem>>) -> (i32, i32) {
    %c0_i32 = arith.constant 0 : i32
    %c0_i32_0 = arith.constant 0 : i32
    %c0_i32_1 = arith.constant 0 : i32
    return %c0_i32, %c0_i32_0 : i32, i32
  }
  func.func @transform_5(%arg0: i32, %arg1: memref<4xi32, #tpu.memory_space<smem>>) -> (i32, i32, i32) {
    %c0_i32 = arith.constant 0 : i32
    %c0_i32_0 = arith.constant 0 : i32
    %c0_i32_1 = arith.constant 0 : i32
    return %arg0, %c0_i32, %c0_i32_0 : i32, i32, i32
  }
  func.func @transform_6(%arg0: i32, %arg1: memref<4xi32, #tpu.memory_space<smem>>) -> (i32, i32, i32) {
    %c0_i32 = arith.constant 0 : i32
    %c0_i32_0 = arith.constant 0 : i32
    %c0_i32_1 = arith.constant 0 : i32
    return %arg0, %c0_i32, %c0_i32_0 : i32, i32, i32
  }
  func.func @transform_7(%arg0: i32, %arg1: memref<4xi32, #tpu.memory_space<smem>>) -> (i32, i32, i32) {
    %c0_i32 = arith.constant 0 : i32
    %c0_i32_0 = arith.constant 0 : i32
    %c0_i32_1 = arith.constant 0 : i32
    return %arg0, %c0_i32, %c0_i32_0 : i32, i32, i32
  }
}

module attributes {stable_mosaic.version = 11 : i64} {
  func.func @tdnn_conv_kernel(%arg0: i32, %arg1: memref<4xi32, #tpu.memory_space<smem>>, %arg2: memref<1x16x384xbf16, #tpu.memory_space<vmem>>, %arg3: memref<1x384x128xbf16, #tpu.memory_space<vmem>>, %arg4: memref<1x128xf32, #tpu.memory_space<vmem>>, %arg5: memref<1x384xf32, #tpu.memory_space<vmem>>, %arg6: memref<1x384xf32, #tpu.memory_space<vmem>>, %arg7: memref<1x16x128xbf16, #tpu.memory_space<vmem>>, %arg8: memref<1x1x128xf32, #tpu.memory_space<vmem>>, %arg9: memref<1x1x128xf32, #tpu.memory_space<vmem>>) attributes {dimension_semantics = [#tpu.dimension_semantics<parallel>], iteration_bounds = array<i64: 4>, scalar_prefetch = 1 : i64, scratch_operands = 0 : i64, tpu.core_type = #tpu.core_type<tc>, window_params = [{transform_indices = @transform_0, window_bounds = array<i64: 1, 16, 384>}, {pipeline_mode = #tpu.pipeline_mode<synchronous>, transform_indices = @transform_1, window_bounds = array<i64: 1, 384, 128>}, {pipeline_mode = #tpu.pipeline_mode<synchronous>, transform_indices = @transform_2, window_bounds = array<i64: 1, 128>}, {pipeline_mode = #tpu.pipeline_mode<synchronous>, transform_indices = @transform_3, window_bounds = array<i64: 1, 384>}, {pipeline_mode = #tpu.pipeline_mode<synchronous>, transform_indices = @transform_4, window_bounds = array<i64: 1, 384>}, {transform_indices = @transform_5, window_bounds = array<i64: 1, 16, 128>}, {transform_indices = @transform_6, window_bounds = array<i64: 1, 1, 128>}, {transform_indices = @transform_7, window_bounds = array<i64: 1, 1, 128>}]} {
    %c0 = arith.constant 0 : index
    %c0_0 = arith.constant 0 : index
    %c0_1 = arith.constant 0 : index
    %0 = vector.load %arg2[%c0, %c0_0, %c0_1] : memref<1x16x384xbf16, #tpu.memory_space<vmem>>, vector<1x16x384xbf16>
    %1 = vector.shape_cast %0 : vector<1x16x384xbf16> to vector<16x384xbf16>
    %2 = arith.extf %1 : vector<16x384xbf16> to vector<16x384xf32>
    %3 = tpu.iota {dimensions = array<i32: 0>} : vector<16x1xi32>
    %c0_i32 = arith.constant 0 : i32
    %4 = vector.broadcast %c0_i32 : i32 to vector<16x1xi32>
    %5 = arith.cmpi sge, %3, %4 : vector<16x1xi32>
    %c16_i32 = arith.constant 16 : i32
    %6 = vector.broadcast %c16_i32 : i32 to vector<16x1xi32>
    %7 = arith.cmpi slt, %3, %6 : vector<16x1xi32>
    %8 = arith.andi %5, %7 : vector<16x1xi1>
    %c0_2 = arith.constant 0 : index
    %c0_3 = arith.constant 0 : index
    %9 = vector.load %arg5[%c0_2, %c0_3] : memref<1x384xf32, #tpu.memory_space<vmem>>, vector<1x384xf32>
    %10 = vector.broadcast %9 : vector<1x384xf32> to vector<16x384xf32>
    %11 = arith.mulf %2, %10 : vector<16x384xf32>
    %c0_4 = arith.constant 0 : index
    %c0_5 = arith.constant 0 : index
    %12 = vector.load %arg6[%c0_4, %c0_5] : memref<1x384xf32, #tpu.memory_space<vmem>>, vector<1x384xf32>
    %13 = vector.broadcast %12 : vector<1x384xf32> to vector<16x384xf32>
    %14 = arith.addf %11, %13 : vector<16x384xf32>
    %cst = arith.constant 0.000000e+00 : f32
    %15 = vector.shape_cast %8 : vector<16x1xi1> to vector<16x1xi1>
    %16 = vector.broadcast %15 : vector<16x1xi1> to vector<16x384xi1>
    %17 = vector.broadcast %cst : f32 to vector<16x384xf32>
    %18 = arith.select %16, %14, %17 : vector<16x384xi1>, vector<16x384xf32>
    %19 = arith.truncf %18 : vector<16x384xf32> to vector<16x384xbf16>
    %cst_6 = arith.constant 0.000000e+00 : f32
    %20 = vector.broadcast %cst_6 : f32 to vector<16x128xf32>
    %c0_7 = arith.constant 0 : index
    %c0_8 = arith.constant 0 : index
    %c0_9 = arith.constant 0 : index
    %21 = vector.load %arg3[%c0_7, %c0_8, %c0_9] : memref<1x384x128xbf16, #tpu.memory_space<vmem>>, vector<1x384x128xbf16>
    %22 = vector.shape_cast %21 : vector<1x384x128xbf16> to vector<384x128xbf16>
    %cst_10 = arith.constant dense<0.000000e+00> : vector<16x128xf32>
    %23 = tpu.matmul %19, %22, %cst_10 {dimension_numbers = #tpu.dot_dimension_numbers<[1], [0], [0], [1], [0, 0, 1, 1], [], []>} : vector<16x384xbf16>, vector<384x128xbf16>, vector<16x128xf32> -> vector<16x128xf32>
    %24 = arith.addf %20, %23 : vector<16x128xf32>
    %c0_11 = arith.constant 0 : index
    %c0_12 = arith.constant 0 : index
    %25 = vector.load %arg4[%c0_11, %c0_12] : memref<1x128xf32, #tpu.memory_space<vmem>>, vector<1x128xf32>
    %26 = vector.broadcast %25 : vector<1x128xf32> to vector<16x128xf32>
    %27 = arith.addf %24, %26 : vector<16x128xf32>
    %cst_13 = arith.constant 0.000000e+00 : f32
    %28 = vector.broadcast %cst_13 : f32 to vector<16x128xf32>
    %29 = arith.maximumf %27, %28 : vector<16x128xf32>
    %30 = arith.truncf %29 : vector<16x128xf32> to vector<16x128xbf16>
    %c0_14 = arith.constant 0 : index
    %c0_15 = arith.constant 0 : index
    %c0_16 = arith.constant 0 : index
    %31 = vector.load %arg7[%c0_14, %c0_15, %c0_16] : memref<1x16x128xbf16, #tpu.memory_space<vmem>>, vector<1x16x128xbf16>
    %32 = vector.shape_cast %31 : vector<1x16x128xbf16> to vector<16x128xbf16>
    %33 = vector.shape_cast %30 : vector<16x128xbf16> to vector<1x16x128xbf16>
    tpu.vector_store %arg7[%c0_14, %c0_15, %c0_16], %33 {strides = array<i32>} : memref<1x16x128xbf16, #tpu.memory_space<vmem>>, vector<1x16x128xbf16>,
    %34 = tpu.iota {dimensions = array<i32: 0>} : vector<16x1xi32>
    %35 = arith.index_cast %arg0 : i32 to index
    %36 = memref.load %arg1[%35] : memref<4xi32, #tpu.memory_space<smem>>
    %37 = vector.broadcast %36 : i32 to vector<16x1xi32>
    %38 = arith.cmpi slt, %34, %37 : vector<16x1xi32>
    %39 = arith.extui %38 : vector<16x1xi1> to vector<16x1xi32>
    %40 = arith.sitofp %39 : vector<16x1xi32> to vector<16x1xf32>
    %41 = vector.broadcast %40 : vector<16x1xf32> to vector<16x128xf32>
    %42 = arith.mulf %29, %41 : vector<16x128xf32>
    %cst_17 = arith.constant dense<0.000000e+00> : vector<128xf32>
    %43 = vector.multi_reduction <add>, %42, %cst_17 [0] : vector<16x128xf32> to vector<128xf32>
    %44 = vector.shape_cast %43 : vector<128xf32> to vector<1x128xf32>
    %c0_18 = arith.constant 0 : index
    %c0_19 = arith.constant 0 : index
    %c0_20 = arith.constant 0 : index
    %45 = vector.load %arg8[%c0_18, %c0_19, %c0_20] : memref<1x1x128xf32, #tpu.memory_space<vmem>>, vector<1x1x128xf32>
    %46 = vector.shape_cast %45 : vector<1x1x128xf32> to vector<1x128xf32>
    %47 = vector.shape_cast %44 : vector<1x128xf32> to vector<1x1x128xf32>
    tpu.vector_store %arg8[%c0_18, %c0_19, %c0_20], %47 {strides = array<i32>} : memref<1x1x128xf32, #tpu.memory_space<vmem>>, vector<1x1x128xf32>,
    %48 = arith.mulf %42, %29 : vector<16x128xf32>
    %cst_21 = arith.constant dense<0.000000e+00> : vector<128xf32>
    %49 = vector.multi_reduction <add>, %48, %cst_21 [0] : vector<16x128xf32> to vector<128xf32>
    %50 = vector.shape_cast %49 : vector<128xf32> to vector<1x128xf32>
    %c0_22 = arith.constant 0 : index
    %c0_23 = arith.constant 0 : index
    %c0_24 = arith.constant 0 : index
    %51 = vector.load %arg9[%c0_22, %c0_23, %c0_24] : memref<1x1x128xf32, #tpu.memory_space<vmem>>, vector<1x1x128xf32>
    %52 = vector.shape_cast %51 : vector<1x1x128xf32> to vector<1x128xf32>
    %53 = vector.shape_cast %50 : vector<1x128xf32> to vector<1x1x128xf32>
    tpu.vector_store %arg9[%c0_22, %c0_23, %c0_24], %53 {strides = array<i32>} : memref<1x1x128xf32, #tpu.memory_space<vmem>>, vector<1x1x128xf32>,
    return
  }
  func.func @transform_0(%arg0: i32, %arg1: memref<4xi32, #tpu.memory_space<smem>>) -> (i32, i32, i32) {
    %c0_i32 = arith.constant 0 : i32
    %c0_i32_0 = arith.constant 0 : i32
    %c0_i32_1 = arith.constant 0 : i32
    return %arg0, %c0_i32, %c0_i32_0 : i32, i32, i32
  }
  func.func @transform_1(%arg0: i32, %arg1: memref<4xi32, #tpu.memory_space<smem>>) -> (i32, i32, i32) {
    %c0_i32 = arith.constant 0 : i32
    %c0_i32_0 = arith.constant 0 : i32
    %c0_i32_1 = arith.constant 0 : i32
    %c0_i32_2 = arith.constant 0 : i32
    return %c0_i32, %c0_i32_0, %c0_i32_1 : i32, i32, i32
  }
  func.func @transform_2(%arg0: i32, %arg1: memref<4xi32, #tpu.memory_space<smem>>) -> (i32, i32) {
    %c0_i32 = arith.constant 0 : i32
    %c0_i32_0 = arith.constant 0 : i32
    %c0_i32_1 = arith.constant 0 : i32
    return %c0_i32, %c0_i32_0 : i32, i32
  }
  func.func @transform_3(%arg0: i32, %arg1: memref<4xi32, #tpu.memory_space<smem>>) -> (i32, i32) {
    %c0_i32 = arith.constant 0 : i32
    %c0_i32_0 = arith.constant 0 : i32
    %c0_i32_1 = arith.constant 0 : i32
    return %c0_i32, %c0_i32_0 : i32, i32
  }
  func.func @transform_4(%arg0: i32, %arg1: memref<4xi32, #tpu.memory_space<smem>>) -> (i32, i32) {
    %c0_i32 = arith.constant 0 : i32
    %c0_i32_0 = arith.constant 0 : i32
    %c0_i32_1 = arith.constant 0 : i32
    return %c0_i32, %c0_i32_0 : i32, i32
  }
  func.func @transform_5(%arg0: i32, %arg1: memref<4xi32, #tpu.memory_space<smem>>) -> (i32, i32, i32) {
    %c0_i32 = arith.constant 0 : i32
    %c0_i32_0 = arith.constant 0 : i32
    %c0_i32_1 = arith.constant 0 : i32
    return %arg0, %c0_i32, %c0_i32_0 : i32, i32, i32
  }
  func.func @transform_6(%arg0: i32, %arg1: memref<4xi32, #tpu.memory_space<smem>>) -> (i32, i32, i32) {
    %c0_i32 = arith.constant 0 : i32
    %c0_i32_0 = arith.constant 0 : i32
    %c0_i32_1 = arith.constant 0 : i32
    return %arg0, %c0_i32, %c0_i32_0 : i32, i32, i32
  }
  func.func @transform_7(%arg0: i32, %arg1: memref<4xi32, #tpu.memory_space<smem>>) -> (i32, i32, i32) {
    %c0_i32 = arith.constant 0 : i32
    %c0_i32_0 = arith.constant 0 : i32
    %c0_i32_1 = arith.constant 0 : i32
    return %arg0, %c0_i32, %c0_i32_0 : i32, i32, i32
  }
}

module attributes {stable_mosaic.version = 11 : i64} {
  func.func @tdnn_conv_kernel(%arg0: i32, %arg1: memref<4xi32, #tpu.memory_space<smem>>, %arg2: memref<1x24x128xbf16, #tpu.memory_space<vmem>>, %arg3: memref<5x128x128xbf16, #tpu.memory_space<vmem>>, %arg4: memref<1x128xf32, #tpu.memory_space<vmem>>, %arg5: memref<1x128xf32, #tpu.memory_space<vmem>>, %arg6: memref<1x128xf32, #tpu.memory_space<vmem>>, %arg7: memref<1x16x128xbf16, #tpu.memory_space<vmem>>, %arg8: memref<1x1x128xf32, #tpu.memory_space<vmem>>, %arg9: memref<1x1x128xf32, #tpu.memory_space<vmem>>) attributes {dimension_semantics = [#tpu.dimension_semantics<parallel>], iteration_bounds = array<i64: 4>, scalar_prefetch = 1 : i64, scratch_operands = 0 : i64, tpu.core_type = #tpu.core_type<tc>, window_params = [{transform_indices = @transform_0, window_bounds = array<i64: 1, 24, 128>}, {pipeline_mode = #tpu.pipeline_mode<synchronous>, transform_indices = @transform_1, window_bounds = array<i64: 5, 128, 128>}, {pipeline_mode = #tpu.pipeline_mode<synchronous>, transform_indices = @transform_2, window_bounds = array<i64: 1, 128>}, {pipeline_mode = #tpu.pipeline_mode<synchronous>, transform_indices = @transform_3, window_bounds = array<i64: 1, 128>}, {pipeline_mode = #tpu.pipeline_mode<synchronous>, transform_indices = @transform_4, window_bounds = array<i64: 1, 128>}, {transform_indices = @transform_5, window_bounds = array<i64: 1, 16, 128>}, {transform_indices = @transform_6, window_bounds = array<i64: 1, 1, 128>}, {transform_indices = @transform_7, window_bounds = array<i64: 1, 1, 128>}]} {
    %c0 = arith.constant 0 : index
    %c0_0 = arith.constant 0 : index
    %c0_1 = arith.constant 0 : index
    %0 = vector.load %arg2[%c0, %c0_0, %c0_1] : memref<1x24x128xbf16, #tpu.memory_space<vmem>>, vector<1x24x128xbf16>
    %1 = vector.shape_cast %0 : vector<1x24x128xbf16> to vector<24x128xbf16>
    %2 = arith.extf %1 : vector<24x128xbf16> to vector<24x128xf32>
    %3 = tpu.iota {dimensions = array<i32: 0>} : vector<24x1xi32>
    %c4_i32 = arith.constant 4 : i32
    %4 = vector.broadcast %c4_i32 : i32 to vector<24x1xi32>
    %5 = arith.cmpi sge, %3, %4 : vector<24x1xi32>
    %c20_i32 = arith.constant 20 : i32
    %6 = vector.broadcast %c20_i32 : i32 to vector<24x1xi32>
    %7 = arith.cmpi slt, %3, %6 : vector<24x1xi32>
    %8 = arith.andi %5, %7 : vector<24x1xi1>
    %c0_2 = arith.constant 0 : index
    %c0_3 = arith.constant 0 : index
    %9 = vector.load %arg5[%c0_2, %c0_3] : memref<1x128xf32, #tpu.memory_space<vmem>>, vector<1x128xf32>
    %10 = vector.broadcast %9 : vector<1x128xf32> to vector<24x128xf32>
    %11 = arith.mulf %2, %10 : vector<24x128xf32>
    %c0_4 = arith.constant 0 : index
    %c0_5 = arith.constant 0 : index
    %12 = vector.load %arg6[%c0_4, %c0_5] : memref<1x128xf32, #tpu.memory_space<vmem>>, vector<1x128xf32>
    %13 = vector.broadcast %12 : vector<1x128xf32> to vector<24x128xf32>
    %14 = arith.addf %11, %13 : vector<24x128xf32>
    %cst = arith.constant 0.000000e+00 : f32
    %15 = vector.shape_cast %8 : vector<24x1xi1> to vector<24x1xi1>
    %16 = vector.broadcast %15 : vector<24x1xi1> to vector<24x128xi1>
    %17 = vector.broadcast %cst : f32 to vector<24x128xf32>
    %18 = arith.select %16, %14, %17 : vector<24x128xi1>, vector<24x128xf32>
    %19 = arith.truncf %18 : vector<24x128xf32> to vector<24x128xbf16>
    %cst_6 = arith.constant 0.000000e+00 : f32
    %20 = vector.broadcast %cst_6 : f32 to vector<16x128xf32>
    %21 = vector.extract_strided_slice %19 {offsets = [0, 0], sizes = [16, 128], strides = [1, 1]} : vector<24x128xbf16> to vector<16x128xbf16>
    %c0_7 = arith.constant 0 : index
    %c0_8 = arith.constant 0 : index
    %c0_9 = arith.constant 0 : index
    %22 = vector.load %arg3[%c0_7, %c0_8, %c0_9] : memref<5x128x128xbf16, #tpu.memory_space<vmem>>, vector<1x128x128xbf16>
    %23 = vector.shape_cast %22 : vector<1x128x128xbf16> to vector<128x128xbf16>
    %cst_10 = arith.constant dense<0.000000e+00> : vector<16x128xf32>
    %24 = tpu.matmul %21, %23, %cst_10 {dimension_numbers = #tpu.dot_dimension_numbers<[1], [0], [0], [1], [0, 0, 1, 1], [], []>} : vector<16x128xbf16>, vector<128x128xbf16>, vector<16x128xf32> -> vector<16x128xf32>
    %25 = arith.addf %20, %24 : vector<16x128xf32>
    %26 = vector.extract_strided_slice %19 {offsets = [2, 0], sizes = [16, 128], strides = [1, 1]} : vector<24x128xbf16> to vector<16x128xbf16>
    %c1 = arith.constant 1 : index
    %c0_11 = arith.constant 0 : index
    %c0_12 = arith.constant 0 : index
    %27 = vector.load %arg3[%c1, %c0_11, %c0_12] : memref<5x128x128xbf16, #tpu.memory_space<vmem>>, vector<1x128x128xbf16>
    %28 = vector.shape_cast %27 : vector<1x128x128xbf16> to vector<128x128xbf16>
    %cst_13 = arith.constant dense<0.000000e+00> : vector<16x128xf32>
    %29 = tpu.matmul %26, %28, %cst_13 {dimension_numbers = #tpu.dot_dimension_numbers<[1], [0], [0], [1], [0, 0, 1, 1], [], []>} : vector<16x128xbf16>, vector<128x128xbf16>, vector<16x128xf32> -> vector<16x128xf32>
    %30 = arith.addf %25, %29 : vector<16x128xf32>
    %31 = vector.extract_strided_slice %19 {offsets = [4, 0], sizes = [16, 128], strides = [1, 1]} : vector<24x128xbf16> to vector<16x128xbf16>
    %c2 = arith.constant 2 : index
    %c0_14 = arith.constant 0 : index
    %c0_15 = arith.constant 0 : index
    %32 = vector.load %arg3[%c2, %c0_14, %c0_15] : memref<5x128x128xbf16, #tpu.memory_space<vmem>>, vector<1x128x128xbf16>
    %33 = vector.shape_cast %32 : vector<1x128x128xbf16> to vector<128x128xbf16>
    %cst_16 = arith.constant dense<0.000000e+00> : vector<16x128xf32>
    %34 = tpu.matmul %31, %33, %cst_16 {dimension_numbers = #tpu.dot_dimension_numbers<[1], [0], [0], [1], [0, 0, 1, 1], [], []>} : vector<16x128xbf16>, vector<128x128xbf16>, vector<16x128xf32> -> vector<16x128xf32>
    %35 = arith.addf %30, %34 : vector<16x128xf32>
    %36 = vector.extract_strided_slice %19 {offsets = [6, 0], sizes = [16, 128], strides = [1, 1]} : vector<24x128xbf16> to vector<16x128xbf16>
    %c3 = arith.constant 3 : index
    %c0_17 = arith.constant 0 : index
    %c0_18 = arith.constant 0 : index
    %37 = vector.load %arg3[%c3, %c0_17, %c0_18] : memref<5x128x128xbf16, #tpu.memory_space<vmem>>, vector<1x128x128xbf16>
    %38 = vector.shape_cast %37 : vector<1x128x128xbf16> to vector<128x128xbf16>
    %cst_19 = arith.constant dense<0.000000e+00> : vector<16x128xf32>
    %39 = tpu.matmul %36, %38, %cst_19 {dimension_numbers = #tpu.dot_dimension_numbers<[1], [0], [0], [1], [0, 0, 1, 1], [], []>} : vector<16x128xbf16>, vector<128x128xbf16>, vector<16x128xf32> -> vector<16x128xf32>
    %40 = arith.addf %35, %39 : vector<16x128xf32>
    %41 = vector.extract_strided_slice %19 {offsets = [8, 0], sizes = [16, 128], strides = [1, 1]} : vector<24x128xbf16> to vector<16x128xbf16>
    %c4 = arith.constant 4 : index
    %c0_20 = arith.constant 0 : index
    %c0_21 = arith.constant 0 : index
    %42 = vector.load %arg3[%c4, %c0_20, %c0_21] : memref<5x128x128xbf16, #tpu.memory_space<vmem>>, vector<1x128x128xbf16>
    %43 = vector.shape_cast %42 : vector<1x128x128xbf16> to vector<128x128xbf16>
    %cst_22 = arith.constant dense<0.000000e+00> : vector<16x128xf32>
    %44 = tpu.matmul %41, %43, %cst_22 {dimension_numbers = #tpu.dot_dimension_numbers<[1], [0], [0], [1], [0, 0, 1, 1], [], []>} : vector<16x128xbf16>, vector<128x128xbf16>, vector<16x128xf32> -> vector<16x128xf32>
    %45 = arith.addf %40, %44 : vector<16x128xf32>
    %c0_23 = arith.constant 0 : index
    %c0_24 = arith.constant 0 : index
    %46 = vector.load %arg4[%c0_23, %c0_24] : memref<1x128xf32, #tpu.memory_space<vmem>>, vector<1x128xf32>
    %47 = vector.broadcast %46 : vector<1x128xf32> to vector<16x128xf32>
    %48 = arith.addf %45, %47 : vector<16x128xf32>
    %cst_25 = arith.constant 0.000000e+00 : f32
    %49 = vector.broadcast %cst_25 : f32 to vector<16x128xf32>
    %50 = arith.maximumf %48, %49 : vector<16x128xf32>
    %51 = arith.truncf %50 : vector<16x128xf32> to vector<16x128xbf16>
    %c0_26 = arith.constant 0 : index
    %c0_27 = arith.constant 0 : index
    %c0_28 = arith.constant 0 : index
    %52 = vector.load %arg7[%c0_26, %c0_27, %c0_28] : memref<1x16x128xbf16, #tpu.memory_space<vmem>>, vector<1x16x128xbf16>
    %53 = vector.shape_cast %52 : vector<1x16x128xbf16> to vector<16x128xbf16>
    %54 = vector.shape_cast %51 : vector<16x128xbf16> to vector<1x16x128xbf16>
    tpu.vector_store %arg7[%c0_26, %c0_27, %c0_28], %54 {strides = array<i32>} : memref<1x16x128xbf16, #tpu.memory_space<vmem>>, vector<1x16x128xbf16>,
    %55 = tpu.iota {dimensions = array<i32: 0>} : vector<16x1xi32>
    %56 = arith.index_cast %arg0 : i32 to index
    %57 = memref.load %arg1[%56] : memref<4xi32, #tpu.memory_space<smem>>
    %58 = vector.broadcast %57 : i32 to vector<16x1xi32>
    %59 = arith.cmpi slt, %55, %58 : vector<16x1xi32>
    %60 = arith.extui %59 : vector<16x1xi1> to vector<16x1xi32>
    %61 = arith.sitofp %60 : vector<16x1xi32> to vector<16x1xf32>
    %62 = vector.broadcast %61 : vector<16x1xf32> to vector<16x128xf32>
    %63 = arith.mulf %50, %62 : vector<16x128xf32>
    %cst_29 = arith.constant dense<0.000000e+00> : vector<128xf32>
    %64 = vector.multi_reduction <add>, %63, %cst_29 [0] : vector<16x128xf32> to vector<128xf32>
    %65 = vector.shape_cast %64 : vector<128xf32> to vector<1x128xf32>
    %c0_30 = arith.constant 0 : index
    %c0_31 = arith.constant 0 : index
    %c0_32 = arith.constant 0 : index
    %66 = vector.load %arg8[%c0_30, %c0_31, %c0_32] : memref<1x1x128xf32, #tpu.memory_space<vmem>>, vector<1x1x128xf32>
    %67 = vector.shape_cast %66 : vector<1x1x128xf32> to vector<1x128xf32>
    %68 = vector.shape_cast %65 : vector<1x128xf32> to vector<1x1x128xf32>
    tpu.vector_store %arg8[%c0_30, %c0_31, %c0_32], %68 {strides = array<i32>} : memref<1x1x128xf32, #tpu.memory_space<vmem>>, vector<1x1x128xf32>,
    %69 = arith.mulf %63, %50 : vector<16x128xf32>
    %cst_33 = arith.constant dense<0.000000e+00> : vector<128xf32>
    %70 = vector.multi_reduction <add>, %69, %cst_33 [0] : vector<16x128xf32> to vector<128xf32>
    %71 = vector.shape_cast %70 : vector<128xf32> to vector<1x128xf32>
    %c0_34 = arith.constant 0 : index
    %c0_35 = arith.constant 0 : index
    %c0_36 = arith.constant 0 : index
    %72 = vector.load %arg9[%c0_34, %c0_35, %c0_36] : memref<1x1x128xf32, #tpu.memory_space<vmem>>, vector<1x1x128xf32>
    %73 = vector.shape_cast %72 : vector<1x1x128xf32> to vector<1x128xf32>
    %74 = vector.shape_cast %71 : vector<1x128xf32> to vector<1x1x128xf32>
    tpu.vector_store %arg9[%c0_34, %c0_35, %c0_36], %74 {strides = array<i32>} : memref<1x1x128xf32, #tpu.memory_space<vmem>>, vector<1x1x128xf32>,
    return
  }
  func.func @transform_0(%arg0: i32, %arg1: memref<4xi32, #tpu.memory_space<smem>>) -> (i32, i32, i32) {
    %c0_i32 = arith.constant 0 : i32
    %c0_i32_0 = arith.constant 0 : i32
    %c0_i32_1 = arith.constant 0 : i32
    return %arg0, %c0_i32, %c0_i32_0 : i32, i32, i32
  }
  func.func @transform_1(%arg0: i32, %arg1: memref<4xi32, #tpu.memory_space<smem>>) -> (i32, i32, i32) {
    %c0_i32 = arith.constant 0 : i32
    %c0_i32_0 = arith.constant 0 : i32
    %c0_i32_1 = arith.constant 0 : i32
    %c0_i32_2 = arith.constant 0 : i32
    return %c0_i32, %c0_i32_0, %c0_i32_1 : i32, i32, i32
  }
  func.func @transform_2(%arg0: i32, %arg1: memref<4xi32, #tpu.memory_space<smem>>) -> (i32, i32) {
    %c0_i32 = arith.constant 0 : i32
    %c0_i32_0 = arith.constant 0 : i32
    %c0_i32_1 = arith.constant 0 : i32
    return %c0_i32, %c0_i32_0 : i32, i32
  }
  func.func @transform_3(%arg0: i32, %arg1: memref<4xi32, #tpu.memory_space<smem>>) -> (i32, i32) {
    %c0_i32 = arith.constant 0 : i32
    %c0_i32_0 = arith.constant 0 : i32
    %c0_i32_1 = arith.constant 0 : i32
    return %c0_i32, %c0_i32_0 : i32, i32
  }
  func.func @transform_4(%arg0: i32, %arg1: memref<4xi32, #tpu.memory_space<smem>>) -> (i32, i32) {
    %c0_i32 = arith.constant 0 : i32
    %c0_i32_0 = arith.constant 0 : i32
    %c0_i32_1 = arith.constant 0 : i32
    return %c0_i32, %c0_i32_0 : i32, i32
  }
  func.func @transform_5(%arg0: i32, %arg1: memref<4xi32, #tpu.memory_space<smem>>) -> (i32, i32, i32) {
    %c0_i32 = arith.constant 0 : i32
    %c0_i32_0 = arith.constant 0 : i32
    %c0_i32_1 = arith.constant 0 : i32
    return %arg0, %c0_i32, %c0_i32_0 : i32, i32, i32
  }
  func.func @transform_6(%arg0: i32, %arg1: memref<4xi32, #tpu.memory_space<smem>>) -> (i32, i32, i32) {
    %c0_i32 = arith.constant 0 : i32
    %c0_i32_0 = arith.constant 0 : i32
    %c0_i32_1 = arith.constant 0 : i32
    return %arg0, %c0_i32, %c0_i32_0 : i32, i32, i32
  }
  func.func @transform_7(%arg0: i32, %arg1: memref<4xi32, #tpu.memory_space<smem>>) -> (i32, i32, i32) {
    %c0_i32 = arith.constant 0 : i32
    %c0_i32_0 = arith.constant 0 : i32
    %c0_i32_1 = arith.constant 0 : i32
    return %arg0, %c0_i32, %c0_i32_0 : i32, i32, i32
  }
}

module attributes {stable_mosaic.version = 11 : i64} {
  func.func @tdnn_conv_kernel(%arg0: i32, %arg1: memref<4xi32, #tpu.memory_space<smem>>, %arg2: memref<1x20x128xbf16, #tpu.memory_space<vmem>>, %arg3: memref<5x128x128xbf16, #tpu.memory_space<vmem>>, %arg4: memref<1x128xf32, #tpu.memory_space<vmem>>, %arg5: memref<1x128xf32, #tpu.memory_space<vmem>>, %arg6: memref<1x128xf32, #tpu.memory_space<vmem>>, %arg7: memref<1x16x128xbf16, #tpu.memory_space<vmem>>, %arg8: memref<1x1x128xf32, #tpu.memory_space<vmem>>, %arg9: memref<1x1x128xf32, #tpu.memory_space<vmem>>) attributes {dimension_semantics = [#tpu.dimension_semantics<parallel>], iteration_bounds = array<i64: 4>, scalar_prefetch = 1 : i64, scratch_operands = 0 : i64, tpu.core_type = #tpu.core_type<tc>, window_params = [{transform_indices = @transform_0, window_bounds = array<i64: 1, 20, 128>}, {pipeline_mode = #tpu.pipeline_mode<synchronous>, transform_indices = @transform_1, window_bounds = array<i64: 5, 128, 128>}, {pipeline_mode = #tpu.pipeline_mode<synchronous>, transform_indices = @transform_2, window_bounds = array<i64: 1, 128>}, {pipeline_mode = #tpu.pipeline_mode<synchronous>, transform_indices = @transform_3, window_bounds = array<i64: 1, 128>}, {pipeline_mode = #tpu.pipeline_mode<synchronous>, transform_indices = @transform_4, window_bounds = array<i64: 1, 128>}, {transform_indices = @transform_5, window_bounds = array<i64: 1, 16, 128>}, {transform_indices = @transform_6, window_bounds = array<i64: 1, 1, 128>}, {transform_indices = @transform_7, window_bounds = array<i64: 1, 1, 128>}]} {
    %c0 = arith.constant 0 : index
    %c0_0 = arith.constant 0 : index
    %c0_1 = arith.constant 0 : index
    %0 = vector.load %arg2[%c0, %c0_0, %c0_1] : memref<1x20x128xbf16, #tpu.memory_space<vmem>>, vector<1x20x128xbf16>
    %1 = vector.shape_cast %0 : vector<1x20x128xbf16> to vector<20x128xbf16>
    %2 = arith.extf %1 : vector<20x128xbf16> to vector<20x128xf32>
    %3 = tpu.iota {dimensions = array<i32: 0>} : vector<20x1xi32>
    %c2_i32 = arith.constant 2 : i32
    %4 = vector.broadcast %c2_i32 : i32 to vector<20x1xi32>
    %5 = arith.cmpi sge, %3, %4 : vector<20x1xi32>
    %c18_i32 = arith.constant 18 : i32
    %6 = vector.broadcast %c18_i32 : i32 to vector<20x1xi32>
    %7 = arith.cmpi slt, %3, %6 : vector<20x1xi32>
    %8 = arith.andi %5, %7 : vector<20x1xi1>
    %c0_2 = arith.constant 0 : index
    %c0_3 = arith.constant 0 : index
    %9 = vector.load %arg5[%c0_2, %c0_3] : memref<1x128xf32, #tpu.memory_space<vmem>>, vector<1x128xf32>
    %10 = vector.broadcast %9 : vector<1x128xf32> to vector<20x128xf32>
    %11 = arith.mulf %2, %10 : vector<20x128xf32>
    %c0_4 = arith.constant 0 : index
    %c0_5 = arith.constant 0 : index
    %12 = vector.load %arg6[%c0_4, %c0_5] : memref<1x128xf32, #tpu.memory_space<vmem>>, vector<1x128xf32>
    %13 = vector.broadcast %12 : vector<1x128xf32> to vector<20x128xf32>
    %14 = arith.addf %11, %13 : vector<20x128xf32>
    %cst = arith.constant 0.000000e+00 : f32
    %15 = vector.shape_cast %8 : vector<20x1xi1> to vector<20x1xi1>
    %16 = vector.broadcast %15 : vector<20x1xi1> to vector<20x128xi1>
    %17 = vector.broadcast %cst : f32 to vector<20x128xf32>
    %18 = arith.select %16, %14, %17 : vector<20x128xi1>, vector<20x128xf32>
    %19 = arith.truncf %18 : vector<20x128xf32> to vector<20x128xbf16>
    %cst_6 = arith.constant 0.000000e+00 : f32
    %20 = vector.broadcast %cst_6 : f32 to vector<16x128xf32>
    %21 = vector.extract_strided_slice %19 {offsets = [0, 0], sizes = [16, 128], strides = [1, 1]} : vector<20x128xbf16> to vector<16x128xbf16>
    %c0_7 = arith.constant 0 : index
    %c0_8 = arith.constant 0 : index
    %c0_9 = arith.constant 0 : index
    %22 = vector.load %arg3[%c0_7, %c0_8, %c0_9] : memref<5x128x128xbf16, #tpu.memory_space<vmem>>, vector<1x128x128xbf16>
    %23 = vector.shape_cast %22 : vector<1x128x128xbf16> to vector<128x128xbf16>
    %cst_10 = arith.constant dense<0.000000e+00> : vector<16x128xf32>
    %24 = tpu.matmul %21, %23, %cst_10 {dimension_numbers = #tpu.dot_dimension_numbers<[1], [0], [0], [1], [0, 0, 1, 1], [], []>} : vector<16x128xbf16>, vector<128x128xbf16>, vector<16x128xf32> -> vector<16x128xf32>
    %25 = arith.addf %20, %24 : vector<16x128xf32>
    %26 = vector.extract_strided_slice %19 {offsets = [1, 0], sizes = [16, 128], strides = [1, 1]} : vector<20x128xbf16> to vector<16x128xbf16>
    %c1 = arith.constant 1 : index
    %c0_11 = arith.constant 0 : index
    %c0_12 = arith.constant 0 : index
    %27 = vector.load %arg3[%c1, %c0_11, %c0_12] : memref<5x128x128xbf16, #tpu.memory_space<vmem>>, vector<1x128x128xbf16>
    %28 = vector.shape_cast %27 : vector<1x128x128xbf16> to vector<128x128xbf16>
    %cst_13 = arith.constant dense<0.000000e+00> : vector<16x128xf32>
    %29 = tpu.matmul %26, %28, %cst_13 {dimension_numbers = #tpu.dot_dimension_numbers<[1], [0], [0], [1], [0, 0, 1, 1], [], []>} : vector<16x128xbf16>, vector<128x128xbf16>, vector<16x128xf32> -> vector<16x128xf32>
    %30 = arith.addf %25, %29 : vector<16x128xf32>
    %31 = vector.extract_strided_slice %19 {offsets = [2, 0], sizes = [16, 128], strides = [1, 1]} : vector<20x128xbf16> to vector<16x128xbf16>
    %c2 = arith.constant 2 : index
    %c0_14 = arith.constant 0 : index
    %c0_15 = arith.constant 0 : index
    %32 = vector.load %arg3[%c2, %c0_14, %c0_15] : memref<5x128x128xbf16, #tpu.memory_space<vmem>>, vector<1x128x128xbf16>
    %33 = vector.shape_cast %32 : vector<1x128x128xbf16> to vector<128x128xbf16>
    %cst_16 = arith.constant dense<0.000000e+00> : vector<16x128xf32>
    %34 = tpu.matmul %31, %33, %cst_16 {dimension_numbers = #tpu.dot_dimension_numbers<[1], [0], [0], [1], [0, 0, 1, 1], [], []>} : vector<16x128xbf16>, vector<128x128xbf16>, vector<16x128xf32> -> vector<16x128xf32>
    %35 = arith.addf %30, %34 : vector<16x128xf32>
    %36 = vector.extract_strided_slice %19 {offsets = [3, 0], sizes = [16, 128], strides = [1, 1]} : vector<20x128xbf16> to vector<16x128xbf16>
    %c3 = arith.constant 3 : index
    %c0_17 = arith.constant 0 : index
    %c0_18 = arith.constant 0 : index
    %37 = vector.load %arg3[%c3, %c0_17, %c0_18] : memref<5x128x128xbf16, #tpu.memory_space<vmem>>, vector<1x128x128xbf16>
    %38 = vector.shape_cast %37 : vector<1x128x128xbf16> to vector<128x128xbf16>
    %cst_19 = arith.constant dense<0.000000e+00> : vector<16x128xf32>
    %39 = tpu.matmul %36, %38, %cst_19 {dimension_numbers = #tpu.dot_dimension_numbers<[1], [0], [0], [1], [0, 0, 1, 1], [], []>} : vector<16x128xbf16>, vector<128x128xbf16>, vector<16x128xf32> -> vector<16x128xf32>
    %40 = arith.addf %35, %39 : vector<16x128xf32>
    %41 = vector.extract_strided_slice %19 {offsets = [4, 0], sizes = [16, 128], strides = [1, 1]} : vector<20x128xbf16> to vector<16x128xbf16>
    %c4 = arith.constant 4 : index
    %c0_20 = arith.constant 0 : index
    %c0_21 = arith.constant 0 : index
    %42 = vector.load %arg3[%c4, %c0_20, %c0_21] : memref<5x128x128xbf16, #tpu.memory_space<vmem>>, vector<1x128x128xbf16>
    %43 = vector.shape_cast %42 : vector<1x128x128xbf16> to vector<128x128xbf16>
    %cst_22 = arith.constant dense<0.000000e+00> : vector<16x128xf32>
    %44 = tpu.matmul %41, %43, %cst_22 {dimension_numbers = #tpu.dot_dimension_numbers<[1], [0], [0], [1], [0, 0, 1, 1], [], []>} : vector<16x128xbf16>, vector<128x128xbf16>, vector<16x128xf32> -> vector<16x128xf32>
    %45 = arith.addf %40, %44 : vector<16x128xf32>
    %c0_23 = arith.constant 0 : index
    %c0_24 = arith.constant 0 : index
    %46 = vector.load %arg4[%c0_23, %c0_24] : memref<1x128xf32, #tpu.memory_space<vmem>>, vector<1x128xf32>
    %47 = vector.broadcast %46 : vector<1x128xf32> to vector<16x128xf32>
    %48 = arith.addf %45, %47 : vector<16x128xf32>
    %cst_25 = arith.constant 0.000000e+00 : f32
    %49 = vector.broadcast %cst_25 : f32 to vector<16x128xf32>
    %50 = arith.maximumf %48, %49 : vector<16x128xf32>
    %51 = arith.truncf %50 : vector<16x128xf32> to vector<16x128xbf16>
    %c0_26 = arith.constant 0 : index
    %c0_27 = arith.constant 0 : index
    %c0_28 = arith.constant 0 : index
    %52 = vector.load %arg7[%c0_26, %c0_27, %c0_28] : memref<1x16x128xbf16, #tpu.memory_space<vmem>>, vector<1x16x128xbf16>
    %53 = vector.shape_cast %52 : vector<1x16x128xbf16> to vector<16x128xbf16>
    %54 = vector.shape_cast %51 : vector<16x128xbf16> to vector<1x16x128xbf16>
    tpu.vector_store %arg7[%c0_26, %c0_27, %c0_28], %54 {strides = array<i32>} : memref<1x16x128xbf16, #tpu.memory_space<vmem>>, vector<1x16x128xbf16>,
    %55 = tpu.iota {dimensions = array<i32: 0>} : vector<16x1xi32>
    %56 = arith.index_cast %arg0 : i32 to index
    %57 = memref.load %arg1[%56] : memref<4xi32, #tpu.memory_space<smem>>
    %58 = vector.broadcast %57 : i32 to vector<16x1xi32>
    %59 = arith.cmpi slt, %55, %58 : vector<16x1xi32>
    %60 = arith.extui %59 : vector<16x1xi1> to vector<16x1xi32>
    %61 = arith.sitofp %60 : vector<16x1xi32> to vector<16x1xf32>
    %62 = vector.broadcast %61 : vector<16x1xf32> to vector<16x128xf32>
    %63 = arith.mulf %50, %62 : vector<16x128xf32>
    %cst_29 = arith.constant dense<0.000000e+00> : vector<128xf32>
    %64 = vector.multi_reduction <add>, %63, %cst_29 [0] : vector<16x128xf32> to vector<128xf32>
    %65 = vector.shape_cast %64 : vector<128xf32> to vector<1x128xf32>
    %c0_30 = arith.constant 0 : index
    %c0_31 = arith.constant 0 : index
    %c0_32 = arith.constant 0 : index
    %66 = vector.load %arg8[%c0_30, %c0_31, %c0_32] : memref<1x1x128xf32, #tpu.memory_space<vmem>>, vector<1x1x128xf32>
    %67 = vector.shape_cast %66 : vector<1x1x128xf32> to vector<1x128xf32>
    %68 = vector.shape_cast %65 : vector<1x128xf32> to vector<1x1x128xf32>
    tpu.vector_store %arg8[%c0_30, %c0_31, %c0_32], %68 {strides = array<i32>} : memref<1x1x128xf32, #tpu.memory_space<vmem>>, vector<1x1x128xf32>,
    %69 = arith.mulf %63, %50 : vector<16x128xf32>
    %cst_33 = arith.constant dense<0.000000e+00> : vector<128xf32>
    %70 = vector.multi_reduction <add>, %69, %cst_33 [0] : vector<16x128xf32> to vector<128xf32>
    %71 = vector.shape_cast %70 : vector<128xf32> to vector<1x128xf32>
    %c0_34 = arith.constant 0 : index
    %c0_35 = arith.constant 0 : index
    %c0_36 = arith.constant 0 : index
    %72 = vector.load %arg9[%c0_34, %c0_35, %c0_36] : memref<1x1x128xf32, #tpu.memory_space<vmem>>, vector<1x1x128xf32>
    %73 = vector.shape_cast %72 : vector<1x1x128xf32> to vector<1x128xf32>
    %74 = vector.shape_cast %71 : vector<1x128xf32> to vector<1x1x128xf32>
    tpu.vector_store %arg9[%c0_34, %c0_35, %c0_36], %74 {strides = array<i32>} : memref<1x1x128xf32, #tpu.memory_space<vmem>>, vector<1x1x128xf32>,
    return
  }
  func.func @transform_0(%arg0: i32, %arg1: memref<4xi32, #tpu.memory_space<smem>>) -> (i32, i32, i32) {
    %c0_i32 = arith.constant 0 : i32
    %c0_i32_0 = arith.constant 0 : i32
    %c0_i32_1 = arith.constant 0 : i32
    return %arg0, %c0_i32, %c0_i32_0 : i32, i32, i32
  }
  func.func @transform_1(%arg0: i32, %arg1: memref<4xi32, #tpu.memory_space<smem>>) -> (i32, i32, i32) {
    %c0_i32 = arith.constant 0 : i32
    %c0_i32_0 = arith.constant 0 : i32
    %c0_i32_1 = arith.constant 0 : i32
    %c0_i32_2 = arith.constant 0 : i32
    return %c0_i32, %c0_i32_0, %c0_i32_1 : i32, i32, i32
  }
  func.func @transform_2(%arg0: i32, %arg1: memref<4xi32, #tpu.memory_space<smem>>) -> (i32, i32) {
    %c0_i32 = arith.constant 0 : i32
    %c0_i32_0 = arith.constant 0 : i32
    %c0_i32_1 = arith.constant 0 : i32
    return %c0_i32, %c0_i32_0 : i32, i32
  }
  func.func @transform_3(%arg0: i32, %arg1: memref<4xi32, #tpu.memory_space<smem>>) -> (i32, i32) {
    %c0_i32 = arith.constant 0 : i32
    %c0_i32_0 = arith.constant 0 : i32
    %c0_i32_1 = arith.constant 0 : i32
    return %c0_i32, %c0_i32_0 : i32, i32
  }
  func.func @transform_4(%arg0: i32, %arg1: memref<4xi32, #tpu.memory_space<smem>>) -> (i32, i32) {
    %c0_i32 = arith.constant 0 : i32
    %c0_i32_0 = arith.constant 0 : i32
    %c0_i32_1 = arith.constant 0 : i32
    return %c0_i32, %c0_i32_0 : i32, i32
  }
  func.func @transform_5(%arg0: i32, %arg1: memref<4xi32, #tpu.memory_space<smem>>) -> (i32, i32, i32) {
    %c0_i32 = arith.constant 0 : i32
    %c0_i32_0 = arith.constant 0 : i32
    %c0_i32_1 = arith.constant 0 : i32
    return %arg0, %c0_i32, %c0_i32_0 : i32, i32, i32
  }
  func.func @transform_6(%arg0: i32, %arg1: memref<4xi32, #tpu.memory_space<smem>>) -> (i32, i32, i32) {
    %c0_i32 = arith.constant 0 : i32
    %c0_i32_0 = arith.constant 0 : i32
    %c0_i32_1 = arith.constant 0 : i32
    return %arg0, %c0_i32, %c0_i32_0 : i32, i32, i32
  }
  func.func @transform_7(%arg0: i32, %arg1: memref<4xi32, #tpu.memory_space<smem>>) -> (i32, i32, i32) {
    %c0_i32 = arith.constant 0 : i32
    %c0_i32_0 = arith.constant 0 : i32
    %c0_i32_1 = arith.constant 0 : i32
    return %arg0, %c0_i32, %c0_i32_0 : i32, i32, i32
  }
}

module attributes {stable_mosaic.version = 11 : i64} {
  func.func @linear_kernel(%arg0: i32, %arg1: memref<64x128xbf16, #tpu.memory_space<vmem>>, %arg2: memref<128x128xbf16, #tpu.memory_space<vmem>>, %arg3: memref<1x128xf32, #tpu.memory_space<vmem>>, %arg4: memref<64x128xf32, #tpu.memory_space<vmem>>) attributes {dimension_semantics = [#tpu.dimension_semantics<parallel>], iteration_bounds = array<i64: 1>, scalar_prefetch = 0 : i64, scratch_operands = 0 : i64, tpu.core_type = #tpu.core_type<tc>, window_params = [{transform_indices = @transform_0, window_bounds = array<i64: 64, 128>}, {pipeline_mode = #tpu.pipeline_mode<synchronous>, transform_indices = @transform_1, window_bounds = array<i64: 128, 128>}, {pipeline_mode = #tpu.pipeline_mode<synchronous>, transform_indices = @transform_2, window_bounds = array<i64: 1, 128>}, {transform_indices = @transform_3, window_bounds = array<i64: 64, 128>}]} {
    %c0 = arith.constant 0 : index
    %c0_0 = arith.constant 0 : index
    %0 = vector.load %arg1[%c0, %c0_0] : memref<64x128xbf16, #tpu.memory_space<vmem>>, vector<64x128xbf16>
    %c0_1 = arith.constant 0 : index
    %c0_2 = arith.constant 0 : index
    %1 = vector.load %arg2[%c0_1, %c0_2] : memref<128x128xbf16, #tpu.memory_space<vmem>>, vector<128x128xbf16>
    %cst = arith.constant dense<0.000000e+00> : vector<64x128xf32>
    %2 = tpu.matmul %0, %1, %cst {dimension_numbers = #tpu.dot_dimension_numbers<[1], [0], [0], [1], [0, 0, 1, 1], [], []>} : vector<64x128xbf16>, vector<128x128xbf16>, vector<64x128xf32> -> vector<64x128xf32>
    %c0_3 = arith.constant 0 : index
    %c0_4 = arith.constant 0 : index
    %3 = vector.load %arg3[%c0_3, %c0_4] : memref<1x128xf32, #tpu.memory_space<vmem>>, vector<1x128xf32>
    %4 = vector.broadcast %3 : vector<1x128xf32> to vector<64x128xf32>
    %5 = arith.addf %2, %4 : vector<64x128xf32>
    %c0_5 = arith.constant 0 : index
    %c0_6 = arith.constant 0 : index
    %6 = vector.load %arg4[%c0_5, %c0_6] : memref<64x128xf32, #tpu.memory_space<vmem>>, vector<64x128xf32>
    tpu.vector_store %arg4[%c0_5, %c0_6], %5 {strides = array<i32>} : memref<64x128xf32, #tpu.memory_space<vmem>>, vector<64x128xf32>,
    return
  }
  func.func @transform_0(%arg0: i32) -> (i32, i32) {
    %c0_i32 = arith.constant 0 : i32
    %c0_i32_0 = arith.constant 0 : i32
    return %arg0, %c0_i32 : i32, i32
  }
  func.func @transform_1(%arg0: i32) -> (i32, i32) {
    %c0_i32 = arith.constant 0 : i32
    %c0_i32_0 = arith.constant 0 : i32
    %c0_i32_1 = arith.constant 0 : i32
    return %c0_i32, %c0_i32_0 : i32, i32
  }
  func.func @transform_2(%arg0: i32) -> (i32, i32) {
    %c0_i32 = arith.constant 0 : i32
    %c0_i32_0 = arith.constant 0 : i32
    %c0_i32_1 = arith.constant 0 : i32
    return %c0_i32, %c0_i32_0 : i32, i32
  }
  func.func @transform_3(%arg0: i32) -> (i32, i32) {
    %c0_i32 = arith.constant 0 : i32
    %c0_i32_0 = arith.constant 0 : i32
    return %arg0, %c0_i32 : i32, i32
  }
}

</mosaic_0001>

<llo_original>
// kernel: tdnn_nas_forward.8
$region0: #{tdnn_nas_forward.8}
  #allocation0 [shape = 'u32[]', space=smem, size = 0x4, offset = 0x4, fixed_abs, tag = 'smem constant byte address 0x4 - core index']
  #allocation1 [shape = 'u32[144,128]{1,0:T(1,128)}', space=vmem, size = 0x12000, scoped, tag = 'internal scratch']
  #allocation2 [shape = 's32[1]{0}', space=sflag, size = 0x4, scoped, tag = 'scoped memory for tdnn_nas_forward.8']
  #allocation3 [shape = 'u8[512]{0}', space=smem, size = 0x200, scoped, tag = 'prefetched SMEM operand 0']
  %s0 = inlined_call_operand.vmem [shape: s32[4], index: 0, kind: input, shape index: {}]
  %s1 = inlined_call_operand.vmem [shape: bf16[4,52,64], index: 1, kind: input, shape index: {}]
  %s2 = inlined_call_operand.vmem [shape: bf16[5,64,128], index: 2, kind: input, shape index: {}]
  %s3 = inlined_call_operand.vmem [shape: f32[1,128], index: 3, kind: input, shape index: {}]
  %s4 = inlined_call_operand.vmem [shape: f32[1,64], index: 4, kind: input, shape index: {}]
  %s5 = inlined_call_operand.vmem [shape: f32[1,64], index: 5, kind: input, shape index: {}]
  %s6 = inlined_call_operand.vmem [shape: bf16[4,48,128], index: 6, kind: output, shape index: {0}]
  %s7 = inlined_call_operand.vmem [shape: f32[4,1,128], index: 7, kind: output, shape index: {1}]
  %s8 = inlined_call_operand.vmem [shape: f32[4,1,128], index: 8, kind: output, shape index: {2}]
  %9 = xla_tuple %s6, %s7, %s8
  %s10 = sld [smem:[#allocation0]]
  $region69: #{tdnn_nas_forward.8} parent=0
    _
  %s12 = ssub.s32 1, %s10
  %s13 = scalar_select 0, %s12, %s10
  %s14 = sshll.u32 %s0, 4
  %s15 = int_to_ptr.vmem [resolvable:$true] %s14
  %17 = dma.vmem_to_smem %s15, 16, [#allocation3], [#allocation2]
  %18 = dma.done [#allocation2], 16
  %19 = sfence
  loop: start=0, step=1, limit=6
  $region2: #{tdnn_nas_forward.8} parent=0 // loop_pre_header
    _
  $region3: #{tdnn_nas_forward.8} parent=0 // loop_header
    %s21 = sphi 0, %s25
    %p22 = scmp.ge.s32.totalorder %s21, 6
    %s31 = sphi 0, %s33
    %s34 = sphi 0, %s31
    %s35 = sphi 0, %s34
    %s51 = sphi 0, %s35
    %s55 = sphi 0, %s55
    %s57 = sphi 0, %s55
    %s58 = sphi 0, %s57
    %s72 = sphi 0, %s58
    %s76 = sphi 0, %s76
    %s78 = sphi 0, %s76
    %s79 = sphi 0, %s78
    %s93 = sphi 0, %s79
    %s97 = sphi 0, %s97
    %s99 = sphi 0, %s97
    %s100 = sphi 0, %s99
    %s114 = sphi 0, %s100
    %s118 = sphi 0, %s118
    %s120 = sphi 0, %s118
    %s121 = sphi 0, %s120
    %s135 = sphi 0, %s121
    %s141 = sphi 0, %s143
    %s144 = sphi 0, %s141
    %s145 = sphi 0, %s144
    %s161 = sphi 0, %s145
    %s167 = sphi 0, %s169
    %s170 = sphi 0, %s167
    %s171 = sphi 0, %s170
    %s187 = sphi 0, %s171
    %s193 = sphi 0, %s195
    %s196 = sphi 0, %s193
    %s197 = sphi 0, %s196
    %s213 = sphi 0, %s197
  $region4: #{tdnn_nas_forward.8} parent=0 // loop_header_branch
    %24 = sbr.rel (%p22) target = $region8
  $region5: #{tdnn_nas_forward.8} parent=0 // loop_body
    %s26 = ssub.s32 %s21, 1
    %s27 = ssub.s32 %s21, 2
    %s28 = sadd.s32 %s21, 1
    %s29 = ssub.s32 %s21, %s28
    %p30 = scmp.eq.s32.totalorder %s29, 0
    %s32 = sadd.s32 %s31, 1
    %s33 = scalar_select %p30, %s31, %s32
    %p36 = pneg %p30
    %p37 = scmp.eq.s32.totalorder %s21, 3
    %p38 = por %p36, %p37
    %p39 = scmp.ne.s32.totalorder %s31, %s34
    %p40 = scmp.eq.s32.totalorder %s21, 0
    %p41 = por %p39, %p40
    %p42 = scmp.ne.s32.totalorder %s31, %s34
    %p43 = scmp.eq.s32.totalorder %s26, 3
    %p44 = por %p42, %p43
    %p45 = scmp.ne.s32.totalorder %s34, %s35
    %p46 = scmp.eq.s32.totalorder %s26, 0
    %p47 = por %p45, %p46
    %p48 = scmp.ne.s32.totalorder %s34, %s35
    %p49 = scmp.eq.s32.totalorder %s27, 3
    %p50 = por %p48, %p49
    %p52 = scmp.ne.s32.totalorder %s35, %s51
    %p53 = scmp.eq.s32.totalorder %s27, 0
    %p54 = por %p52, %p53
    %s56 = sadd.s32 %s55, 1
    %p59 = scmp.eq.s32.totalorder %s21, 3
    %p60 = scmp.ne.s32.totalorder %s55, %s57
    %p61 = scmp.eq.s32.totalorder %s21, 0
    %p62 = por %p60, %p61
    %p63 = scmp.ne.s32.totalorder %s55, %s57
    %p64 = scmp.eq.s32.totalorder %s26, 3
    %p65 = por %p63, %p64
    %p66 = scmp.ne.s32.totalorder %s57, %s58
    %p67 = scmp.eq.s32.totalorder %s26, 0
    %p68 = por %p66, %p67
    %p69 = scmp.ne.s32.totalorder %s57, %s58
    %p70 = scmp.eq.s32.totalorder %s27, 3
    %p71 = por %p69, %p70
    %p73 = scmp.ne.s32.totalorder %s58, %s72
    %p74 = scmp.eq.s32.totalorder %s27, 0
    %p75 = por %p73, %p74
    %s77 = sadd.s32 %s76, 1
    %p80 = scmp.eq.s32.totalorder %s21, 3
    %p81 = scmp.ne.s32.totalorder %s76, %s78
    %p82 = scmp.eq.s32.totalorder %s21, 0
    %p83 = por %p81, %p82
    %p84 = scmp.ne.s32.totalorder %s76, %s78
    %p85 = scmp.eq.s32.totalorder %s26, 3
    %p86 = por %p84, %p85
    %p87 = scmp.ne.s32.totalorder %s78, %s79
    %p88 = scmp.eq.s32.totalorder %s26, 0
    %p89 = por %p87, %p88
    %p90 = scmp.ne.s32.totalorder %s78, %s79
    %p91 = scmp.eq.s32.totalorder %s27, 3
    %p92 = por %p90, %p91
    %p94 = scmp.ne.s32.totalorder %s79, %s93
    %p95 = scmp.eq.s32.totalorder %s27, 0
    %p96 = por %p94, %p95
    %s98 = sadd.s32 %s97, 1
    %p101 = scmp.eq.s32.totalorder %s21, 3
    %p102 = scmp.ne.s32.totalorder %s97, %s99
    %p103 = scmp.eq.s32.totalorder %s21, 0
    %p104 = por %p102, %p103
    %p105 = scmp.ne.s32.totalorder %s97, %s99
    %p106 = scmp.eq.s32.totalorder %s26, 3
    %p107 = por %p105, %p106
    %p108 = scmp.ne.s32.totalorder %s99, %s100
    %p109 = scmp.eq.s32.totalorder %s26, 0
    %p110 = por %p108, %p109
    %p111 = scmp.ne.s32.totalorder %s99, %s100
    %p112 = scmp.eq.s32.totalorder %s27, 3
    %p113 = por %p111, %p112
    %p115 = scmp.ne.s32.totalorder %s100, %s114
    %p116 = scmp.eq.s32.totalorder %s27, 0
    %p117 = por %p115, %p116
    %s119 = sadd.s32 %s118, 1
    %p122 = scmp.eq.s32.totalorder %s21, 3
    %p123 = scmp.ne.s32.totalorder %s118, %s120
    %p124 = scmp.eq.s32.totalorder %s21, 0
    %p125 = por %p123, %p124
    %p126 = scmp.ne.s32.totalorder %s118, %s120
    %p127 = scmp.eq.s32.totalorder %s26, 3
    %p128 = por %p126, %p127
    %p129 = scmp.ne.s32.totalorder %s120, %s121
    %p130 = scmp.eq.s32.totalorder %s26, 0
    %p131 = por %p129, %p130
    %p132 = scmp.ne.s32.totalorder %s120, %s121
    %p133 = scmp.eq.s32.totalorder %s27, 3
    %p134 = por %p132, %p133
    %p136 = scmp.ne.s32.totalorder %s121, %s135
    %p137 = scmp.eq.s32.totalorder %s27, 0
    %p138 = por %p136, %p137
    %s139 = ssub.s32 %s21, %s28
    %p140 = scmp.eq.s32.totalorder %s139, 0
    %s142 = sadd.s32 %s141, 1
    %s143 = scalar_select %p140, %s141, %s142
    %p146 = pneg %p140
    %p147 = scmp.eq.s32.totalorder %s21, 3
    %p148 = por %p146, %p147
    %p149 = scmp.ne.s32.totalorder %s141, %s144
    %p150 = scmp.eq.s32.totalorder %s21, 0
    %p151 = por %p149, %p150
    %p152 = scmp.ne.s32.totalorder %s141, %s144
    %p153 = scmp.eq.s32.totalorder %s26, 3
    %p154 = por %p152, %p153
    %p155 = scmp.ne.s32.totalorder %s144, %s145
    %p156 = scmp.eq.s32.totalorder %s26, 0
    %p157 = por %p155, %p156
    %p158 = scmp.ne.s32.totalorder %s144, %s145
    %p159 = scmp.eq.s32.totalorder %s27, 3
    %p160 = por %p158, %p159
    %p162 = scmp.ne.s32.totalorder %s145, %s161
    %p163 = scmp.eq.s32.totalorder %s27, 0
    %p164 = por %p162, %p163
    %s165 = ssub.s32 %s21, %s28
    %p166 = scmp.eq.s32.totalorder %s165, 0
    %s168 = sadd.s32 %s167, 1
    %s169 = scalar_select %p166, %s167, %s168
    %p172 = pneg %p166
    %p173 = scmp.eq.s32.totalorder %s21, 3
    %p174 = por %p172, %p173
    %p175 = scmp.ne.s32.totalorder %s167, %s170
    %p176 = scmp.eq.s32.totalorder %s21, 0
    %p177 = por %p175, %p176
    %p178 = scmp.ne.s32.totalorder %s167, %s170
    %p179 = scmp.eq.s32.totalorder %s26, 3
    %p180 = por %p178, %p179
    %p181 = scmp.ne.s32.totalorder %s170, %s171
    %p182 = scmp.eq.s32.totalorder %s26, 0
    %p183 = por %p181, %p182
    %p184 = scmp.ne.s32.totalorder %s170, %s171
    %p185 = scmp.eq.s32.totalorder %s27, 3
    %p186 = por %p184, %p185
    %p188 = scmp.ne.s32.totalorder %s171, %s187
    %p189 = scmp.eq.s32.totalorder %s27, 0
    %p190 = por %p188, %p189
    %s191 = ssub.s32 %s21, %s28
    %p192 = scmp.eq.s32.totalorder %s191, 0
    %s194 = sadd.s32 %s193, 1
    %s195 = scalar_select %p192, %s193, %s194
    %p198 = pneg %p192
    %p199 = scmp.eq.s32.totalorder %s21, 3
    %p200 = por %p198, %p199
    %p201 = scmp.ne.s32.totalorder %s193, %s196
    %p202 = scmp.eq.s32.totalorder %s21, 0
    %p203 = por %p201, %p202
    %p204 = scmp.ne.s32.totalorder %s193, %s196
    %p205 = scmp.eq.s32.totalorder %s26, 3
    %p206 = por %p204, %p205
    %p207 = scmp.ne.s32.totalorder %s196, %s197
    %p208 = scmp.eq.s32.totalorder %s26, 0
    %p209 = por %p207, %p208
    %p210 = scmp.ne.s32.totalorder %s196, %s197
    %p211 = scmp.eq.s32.totalorder %s27, 3
    %p212 = por %p210, %p211
    %p214 = scmp.ne.s32.totalorder %s197, %s213
    %p215 = scmp.eq.s32.totalorder %s27, 0
    %p216 = por %p214, %p215
    %p217 = scmp.le.s32.totalorder 1, %s21
    %p218 = scmp.lt.s32.totalorder %s21, 5
    %p219 = pnand %p217, %p218
    %p220 = pneg %p219
    // Predicated region
    $region9: #{tdnn_nas_forward.8} parent=5 // pred_check
      _
    $region10: #{tdnn_nas_forward.8} parent=5 // pred_check_branch
      %222 = sbr.rel (%p219) target = $region12
    $region11: #{tdnn_nas_forward.8} parent=5 // pred_region
      %s223 = ssub.s32 %s21, 1
      // Predicated region
      $region13: #{tdnn_nas_forward.8} parent=11 // pred_check
        %p224 = pneg %p68
      $region14: #{tdnn_nas_forward.8} parent=11 // pred_check_branch
        %226 = sbr.rel (%p224) target = $region16
      $region15: #{tdnn_nas_forward.8} parent=11 // pred_region
        _
      $region16: #{tdnn_nas_forward.8} parent=11 // pred_fallthru
        _
      // Predicated region
      $region17: #{tdnn_nas_forward.8} parent=11 // pred_check
        %p227 = pneg %p89
      $region18: #{tdnn_nas_forward.8} parent=11 // pred_check_branch
        %229 = sbr.rel (%p227) target = $region20
      $region19: #{tdnn_nas_forward.8} parent=11 // pred_region
        _
      $region20: #{tdnn_nas_forward.8} parent=11 // pred_fallthru
        _
      // Predicated region
      $region21: #{tdnn_nas_forward.8} parent=11 // pred_check
        %p230 = pneg %p110
      $region22: #{tdnn_nas_forward.8} parent=11 // pred_check_branch
        %232 = sbr.rel (%p230) target = $region24
      $region23: #{tdnn_nas_forward.8} parent=11 // pred_region
        _
      $region24: #{tdnn_nas_forward.8} parent=11 // pred_fallthru
        _
      // Predicated region
      $region25: #{tdnn_nas_forward.8} parent=11 // pred_check
        %p233 = pneg %p131
      $region26: #{tdnn_nas_forward.8} parent=11 // pred_check_branch
        %235 = sbr.rel (%p233) target = $region28
      $region27: #{tdnn_nas_forward.8} parent=11 // pred_region
        _
      $region28: #{tdnn_nas_forward.8} parent=11 // pred_fallthru
        _
    $region12: #{tdnn_nas_forward.8} parent=5 // pred_fallthru
      _
    %p236 = scmp.lt.s32.totalorder %s21, 4
    // Predicated region
    $region29: #{tdnn_nas_forward.8} parent=5 // pred_check
      %p237 = pneg %p236
    $region30: #{tdnn_nas_forward.8} parent=5 // pred_check_branch
      %239 = sbr.rel (%p237) target = $region32
    $region31: #{tdnn_nas_forward.8} parent=5 // pred_region
      // Predicated region
      $region33: #{tdnn_nas_forward.8} parent=31 // pred_check
        %p240 = pneg %p41
      $region34: #{tdnn_nas_forward.8} parent=31 // pred_check_branch
        %242 = sbr.rel (%p240) target = $region36
      $region35: #{tdnn_nas_forward.8} parent=31 // pred_region
        %p243 = scmp.lt.s32.totalorder %s21, 3
        %s244 = scalar_select %p243, %s21, 3
        %s245 = smul.addr %s244, 7
        %s246 = smul.addr %s245, 4
        %s247 = scalar_lea.vmem %s1, %s246
      $region36: #{tdnn_nas_forward.8} parent=31 // pred_fallthru
        _
    $region32: #{tdnn_nas_forward.8} parent=5 // pred_fallthru
      _
    %p248 = scmp.le.s32.totalorder 1, %s21
    %p249 = scmp.lt.s32.totalorder %s21, 5
    %p250 = pnand %p248, %p249
    %p251 = pneg %p250
    // Predicated region
    $region37: #{tdnn_nas_forward.8} parent=5 // pred_check
      _
    $region38: #{tdnn_nas_forward.8} parent=5 // pred_check_branch
      %253 = sbr.rel (%p250) target = $region40
    $region39: #{tdnn_nas_forward.8} parent=5 // pred_region
      %s254 = ssub.s32 %s21, 1
      %p255 = scmp.lt.s32.totalorder %s26, 3
      %s256 = scalar_select %p255, %s26, 3
      %s257 = smul.addr %s256, 7
      %s258 = smul.addr %s257, 4
      %s259 = scalar_lea.vmem %s1, %s258
      %p260 = pneg %p47
      %p261 = pneg %p44
      %p262 = pneg %p68
      %p263 = pneg %p65
      %p264 = pneg %p89
      %p265 = pneg %p86
      %p266 = pneg %p110
      %p267 = pneg %p107
      %p268 = pneg %p131
      %p269 = pneg %p128
      %p270 = pneg %p157
      %p271 = pneg %p154
      %p272 = scmp.lt.s32.totalorder %s26, 3
      %s273 = scalar_select %p272, %s26, 3
      %s274 = smul.addr %s273, 6
      %s275 = smul.addr %s274, 4
      %s276 = scalar_lea.vmem %s6, %s275
      %p277 = pneg %p183
      %p278 = pneg %p180
      %p279 = scmp.lt.s32.totalorder %s26, 3
      %s280 = scalar_select %p279, %s26, 3
      %s281 = scalar_lea.vmem %s7, %s280
      %p282 = pneg %p209
      %p283 = pneg %p206
      %p284 = scmp.lt.s32.totalorder %s26, 3
      %s285 = scalar_select %p284, %s26, 3
      %s286 = scalar_lea.vmem %s8, %s285
      %p287 = scmp.lt.s32.totalorder %s26, 3
      %s288 = scalar_select %p287, %s26, 3
      %s289 = smul.addr %s288, 7
      %s290 = smul.addr %s289, 4
      %s291 = scalar_lea.vmem %s1, %s290
      %p292 = scmp.lt.s32.totalorder %s26, 3
      %s293 = scalar_select %p292, %s26, 3
      %s294 = smul.addr %s293, 6
      %s295 = smul.addr %s294, 4
      %s296 = scalar_lea.vmem %s6, %s295
      %p297 = scmp.lt.s32.totalorder %s26, 3
      %s298 = scalar_select %p297, %s26, 3
      %s299 = scalar_lea.vmem %s7, %s298
      %p300 = scmp.lt.s32.totalorder %s26, 3
      %s301 = scalar_select %p300, %s26, 3
      %s302 = scalar_lea.vmem %s8, %s301
      %v304 = vld [vmem:[%s291] sm:$0xf]
      %v305 = vld [vmem:[%s291 + $0x4] sm:$0xf]
      %v306 = vld [vmem:[%s291 + $0x8] sm:$0xf]
      %v307 = vld [vmem:[%s291 + $0xc] sm:$0xf]
      %v308 = vld [vmem:[%s291 + $0x10] sm:$0xf]
      %v309 = vld [vmem:[%s291 + $0x14] sm:$0xf]
      %v310 = vld [vmem:[%s291 + $0x18] sm:$0x3]
      %v311 = vunpack.c.l.bf16 %v304
      %v312 = vunpack.c.l.bf16 %v305
      %v313 = vunpack.c.l.bf16 %v306
      %v314 = vunpack.c.l.bf16 %v307
      %v315 = vunpack.c.l.bf16 %v308
      %v316 = vunpack.c.l.bf16 %v309
      %v317 = vunpack.c.l.bf16 %v310
      %v318 = vlaneseq
      %v319 = vshrl.u32 %v318, 7
      %v320 = vadd.s32 %v319, 8
      %v321 = vadd.s32 %v319, 16
      %v322 = vadd.s32 %v319, 24
      %v323 = vadd.s32 %v319, 32
      %v324 = vadd.s32 %v319, 40
      %v325 = vadd.s32 %v319, 48
      %vm326 = vcmp.ge.s32.totalorder %v319, 2
      %vm327 = vcmp.ge.s32.totalorder %v320, 2
      %vm328 = vcmp.ge.s32.totalorder %v321, 2
      %vm329 = vcmp.ge.s32.totalorder %v322, 2
      %vm330 = vcmp.ge.s32.totalorder %v323, 2
      %vm331 = vcmp.ge.s32.totalorder %v324, 2
      %vm332 = vcmp.ge.s32.totalorder %v325, 2
      %vm333 = vcmp.lt.s32.totalorder %v319, 50
      %vm334 = vcmp.lt.s32.totalorder %v320, 50
      %vm335 = vcmp.lt.s32.totalorder %v321, 50
      %vm336 = vcmp.lt.s32.totalorder %v322, 50
      %vm337 = vcmp.lt.s32.totalorder %v323, 50
      %vm338 = vcmp.lt.s32.totalorder %v324, 50
      %vm339 = vcmp.lt.s32.totalorder %v325, 50
      %vm340 = vmand %vm326, %vm333
      %vm341 = vmand %vm327, %vm334
      %vm342 = vmand %vm328, %vm335
      %vm343 = vmand %vm329, %vm336
      %vm344 = vmand %vm330, %vm337
      %vm345 = vmand %vm331, %vm338
      %vm346 = vmand %vm332, %vm339
      %v347 = vld [vmem:[%s4] sm:$0x1]
      %v349 = vlaneseq
      %v350 = vshrl.u32 %v349, 7
      %v351 = vsub.s32 0, %v350
      %v352 = vrot.slane %v347, %v351
      %v354 = vmul.f32 %v311, %v352
      %v355 = vmul.f32 %v312, %v352
      %v356 = vmul.f32 %v313, %v352
      %v357 = vmul.f32 %v314, %v352
      %v358 = vmul.f32 %v315, %v352
      %v359 = vmul.f32 %v316, %v352
      %v360 = vmul.f32 %v317, %v352
      %v361 = vld [vmem:[%s5] sm:$0x1]
      %v363 = vlaneseq
      %v364 = vshrl.u32 %v363, 7
      %v365 = vsub.s32 0, %v364
      %v366 = vrot.slane %v361, %v365
      %v368 = vadd.f32 %v354, %v366
      %v369 = vadd.f32 %v355, %v366
      %v370 = vadd.f32 %v356, %v366
      %v371 = vadd.f32 %v357, %v366
      %v372 = vadd.f32 %v358, %v366
      %v373 = vadd.f32 %v359, %v366
      %v374 = vadd.f32 %v360, %v366
      %v375 = vsel %vm340, 1, 0
      %v376 = vsel %vm341, 1, 0
      %v377 = vsel %vm342, 1, 0
      %v378 = vsel %vm343, 1, 0
      %v379 = vsel %vm344, 1, 0
      %v380 = vsel %vm345, 1, 0
      %v381 = vsel %vm346, 1, 0
      %vm382 = vcmp.eq.s32.totalorder %v375, 1
      %vm383 = vcmp.eq.s32.totalorder %v376, 1
      %vm384 = vcmp.eq.s32.totalorder %v377, 1
      %vm385 = vcmp.eq.s32.totalorder %v378, 1
      %vm386 = vcmp.eq.s32.totalorder %v379, 1
      %vm387 = vcmp.eq.s32.totalorder %v380, 1
      %vm388 = vcmp.eq.s32.totalorder %v381, 1
      %v389 = vsel %vm382, %v368, 0.0
      %v390 = vsel %vm383, %v369, 0.0
      %v391 = vsel %vm384, %v370, 0.0
      %v392 = vsel %vm385, %v371, 0.0
      %v393 = vsel %vm386, %v372, 0.0
      %v394 = vsel %vm387, %v373, 0.0
      %v395 = vsel %vm388, %v374, 0.0
      %v396 = vpack.c.bf16 %v390, %v389
      %v397 = vpack.c.bf16 %v392, %v391
      %v398 = vpack.c.bf16 %v394, %v393
      %v399 = vpack.c.bf16 %v395, %v395
      %v400 = vld [vmem:[%s2] sm:$0xf]
      %v401 = vld [vmem:[%s2 + $0x4] sm:$0xf]
      %v402 = vld [vmem:[%s2 + $0x8] sm:$0xf]
      %v403 = vld [vmem:[%s2 + $0xc] sm:$0xf]
      %v404 = vld [vmem:[%s2 + $0x10] sm:$0xf]
      %v405 = vld [vmem:[%s2 + $0x14] sm:$0xf]
      %v406 = vld [vmem:[%s2 + $0x18] sm:$0xf]
      %v407 = vld [vmem:[%s2 + $0x1c] sm:$0xf]
      %s408 = scalar_lea.vmem %s2, 32
      %v409 = vld [vmem:[%s408] sm:$0xf]
      %v410 = vld [vmem:[%s408 + $0x4] sm:$0xf]
      %v411 = vld [vmem:[%s408 + $0x8] sm:$0xf]
      %v412 = vld [vmem:[%s408 + $0xc] sm:$0xf]
      %v413 = vld [vmem:[%s408 + $0x10] sm:$0xf]
      %v414 = vld [vmem:[%s408 + $0x14] sm:$0xf]
      %v415 = vld [vmem:[%s408 + $0x18] sm:$0xf]
      %v416 = vld [vmem:[%s408 + $0x1c] sm:$0xf]
      %vm417 = vsmask.f32 7424
      %v419 = vshrl.u32 %v396, 16
      %v421 = vshll.u32 %v396, 16
      %v423 = vrot.slane %v421, 1
      %v424 = vor.u32 %v419, %v423
      %v426 = vshll.u32 %v397, 16
      %v428 = vrot.slane %v426, 1
      %v429 = vsel %vm417, %v424, %v428
      %v430 = vshrl.u32 %v397, 16
      %v432 = vor.u32 %v430, %v428
      %v434 = vshll.u32 %v398, 16
      %v436 = vrot.slane %v434, 1
      %v437 = vsel %vm417, %v432, %v436
      %v438 = vshrl.u32 %v398, 16
      %v440 = vor.u32 %v438, %v436
      %v442 = vshll.u32 %v399, 16
      %v444 = vrot.slane %v442, 1
      %v445 = vsel %vm417, %v440, %v444
      %v454 = vunpack.c.l.b16 %v409
      %v455 = vunpack.c.l.b16 %v410
      %v456 = vunpack.c.l.b16 %v411
      %v457 = vunpack.c.l.b16 %v412
      %v458 = vunpack.c.l.b16 %v413
      %v459 = vunpack.c.l.b16 %v414
      %v460 = vunpack.c.l.b16 %v415
      %v461 = vunpack.c.l.b16 %v416
      %v462 = vpack.c.b16 %v455, %v454
      %v463 = vpack.c.b16 %v457, %v456
      %v464 = vpack.c.b16 %v459, %v458
      %v465 = vpack.c.b16 %v461, %v460
      %vm470 = vcmask 523264
      %v472 = vsel %vm470, %v429, 0
      %v475 = vsel %vm470, %v437, 0
      %v478 = vsel %vm470, %v445, 0
      %480 = vmatprep.subr.bf16.mxu0 0
      %481 = vmatpush1.bf16.msra.mxu0 0
      %482 = vmatprep.subr.bf16.mxu0 0
      %483 = vmatpush1.bf16.msra.mxu0 0
      %484 = vmatprep.subr.bf16.mxu0 0
      %485 = vmatpush1.bf16.msra.mxu0 0
      %486 = vmatprep.subr.bf16.mxu0 0
      %487 = vmatpush1.bf16.msra.mxu0 0
      %488 = vmatprep.subr.bf16.mxu0 0
      %489 = vmatpush1.bf16.msra.mxu0 %v465
      %490 = vmatprep.subr.bf16.mxu0 0
      %491 = vmatpush1.bf16.msra.mxu0 %v464
      %492 = vmatprep.subr.bf16.mxu0 0
      %493 = vmatpush1.bf16.msra.mxu0 %v463
      %494 = vmatprep.subr.bf16.mxu0 0
      %495 = vmatpush1.bf16.msra.mxu0 %v462
      %496 = vmatprep.subr.bf16.mxu0 0
      %497 = vmatpush2.bf16.msra.mxu0 0
      %498 = vmatprep.subr.bf16.mxu0 0
      %499 = vmatpush2.bf16.msra.mxu0 0
      %500 = vmatprep.subr.bf16.mxu0 0
      %501 = vmatpush2.bf16.msra.mxu0 0
      %502 = vmatprep.subr.bf16.mxu0 0
      %503 = vmatpush2.bf16.msra.mxu0 0
      %504 = vmatprep.subr.bf16.mxu0 0
      %505 = vmatpush2.bf16.msra.mxu0 0
      %506 = vmatprep.subr.bf16.mxu0 0
      %507 = vmatpush2.bf16.msra.mxu0 0
      %508 = vmatprep.subr.bf16.mxu0 0
      %509 = vmatpush2.bf16.msra.mxu0 0
      %510 = vmatprep.subr.bf16.mxu0 0
      %511 = vmatpush2.bf16.msra.mxu0 0
      %512 = vmatprep.mubr.bf16.mxu0 0
      %513 = vmatmul.mubr.bf16.gmra.mxu0 %v472
      %v514 = vpop.f32.mrf.mxu0
      %v515 = vadd.f32 0.0, %v514
      %v516 = vpop.f32.mrf.mxu0
      %v517 = vpop.f32.mrf.mxu0
      %v518 = vadd.f32 0.0, %v517
      %v519 = vpop.f32.mrf.mxu0
      %520 = vmatprep.mubr.bf16.mxu0 0
      %521 = vmatmul.mubr.bf16.gmra.mxu0 %v475
      %v522 = vpop.f32.mrf.mxu0
      %v523 = vadd.f32 0.0, %v522
      %v524 = vpop.f32.mrf.mxu0
      %v525 = vpop.f32.mrf.mxu0
      %v526 = vadd.f32 0.0, %v525
      %v527 = vpop.f32.mrf.mxu0
      %528 = vmatprep.mubr.bf16.mxu0 0
      %529 = vmatmul.mubr.bf16.gmra.mxu0 %v478
      %v530 = vpop.f32.mrf.mxu0
      %v531 = vadd.f32 0.0, %v530
      %v532 = vpop.f32.mrf.mxu0
      %v533 = vpop.f32.mrf.mxu0
      %v534 = vadd.f32 0.0, %v533
      %v535 = vpop.f32.mrf.mxu0
      %536 = vdwg.mxu0
      %v545 = vunpack.c.l.b16 %v400
      %v546 = vunpack.c.l.b16 %v401
      %v547 = vunpack.c.l.b16 %v402
      %v548 = vunpack.c.l.b16 %v403
      %v549 = vunpack.c.l.b16 %v404
      %v550 = vunpack.c.l.b16 %v405
      %v551 = vunpack.c.l.b16 %v406
      %v552 = vunpack.c.l.b16 %v407
      %v553 = vpack.c.b16 %v546, %v545
      %v554 = vpack.c.b16 %v548, %v547
      %v555 = vpack.c.b16 %v550, %v549
      %v556 = vpack.c.b16 %v552, %v551
      %v561 = vsel %vm470, %v396, 0
      %v563 = vsel %vm470, %v397, 0
      %v565 = vsel %vm470, %v398, 0
      %567 = vmatprep.subr.bf16.mxu0 0
      %568 = vmatpush1.bf16.msra.mxu0 0
      %569 = vmatprep.subr.bf16.mxu0 0
      %570 = vmatpush1.bf16.msra.mxu0 0
      %571 = vmatprep.subr.bf16.mxu0 0
      %572 = vmatpush1.bf16.msra.mxu0 0
      %573 = vmatprep.subr.bf16.mxu0 0
      %574 = vmatpush1.bf16.msra.mxu0 0
      %575 = vmatprep.subr.bf16.mxu0 0
      %576 = vmatpush1.bf16.msra.mxu0 %v556
      %577 = vmatprep.subr.bf16.mxu0 0
      %578 = vmatpush1.bf16.msra.mxu0 %v555
      %579 = vmatprep.subr.bf16.mxu0 0
      %580 = vmatpush1.bf16.msra.mxu0 %v554
      %581 = vmatprep.subr.bf16.mxu0 0
      %582 = vmatpush1.bf16.msra.mxu0 %v553
      %583 = vmatprep.subr.bf16.mxu0 0
      %584 = vmatpush2.bf16.msra.mxu0 0
      %585 = vmatprep.subr.bf16.mxu0 0
      %586 = vmatpush2.bf16.msra.mxu0 0
      %587 = vmatprep.subr.bf16.mxu0 0
      %588 = vmatpush2.bf16.msra.mxu0 0
      %589 = vmatprep.subr.bf16.mxu0 0
      %590 = vmatpush2.bf16.msra.mxu0 0
      %591 = vmatprep.subr.bf16.mxu0 0
      %592 = vmatpush2.bf16.msra.mxu0 0
      %593 = vmatprep.subr.bf16.mxu0 0
      %594 = vmatpush2.bf16.msra.mxu0 0
      %595 = vmatprep.subr.bf16.mxu0 0
      %596 = vmatpush2.bf16.msra.mxu0 0
      %597 = vmatprep.subr.bf16.mxu0 0
      %598 = vmatpush2.bf16.msra.mxu0 0
      %599 = vmatprep.mubr.bf16.mxu0 0
      %600 = vmatmul.mubr.bf16.gmra.mxu0 %v561
      %v601 = vpop.f32.mrf.mxu0
      %v602 = vadd.f32 %v515, %v601
      %v603 = vpop.f32.mrf.mxu0
      %v604 = vpop.f32.mrf.mxu0
      %v605 = vadd.f32 %v518, %v604
      %v606 = vpop.f32.mrf.mxu0
      %607 = vmatprep.mubr.bf16.mxu0 0
      %608 = vmatmul.mubr.bf16.gmra.mxu0 %v563
      %v609 = vpop.f32.mrf.mxu0
      %v610 = vadd.f32 %v523, %v609
      %v611 = vpop.f32.mrf.mxu0
      %v612 = vpop.f32.mrf.mxu0
      %v613 = vadd.f32 %v526, %v612
      %v614 = vpop.f32.mrf.mxu0
      %615 = vmatprep.mubr.bf16.mxu0 0
      %616 = vmatmul.mubr.bf16.gmra.mxu0 %v565
      %v617 = vpop.f32.mrf.mxu0
      %v618 = vadd.f32 %v531, %v617
      %v619 = vpop.f32.mrf.mxu0
      %v620 = vpop.f32.mrf.mxu0
      %v621 = vadd.f32 %v534, %v620
      %v622 = vpop.f32.mrf.mxu0
      %623 = vdwg.mxu0
      %s624 = scalar_lea.vmem %s2, 64
      %v625 = vld [vmem:[%s624] sm:$0xf]
      %v626 = vld [vmem:[%s624 + $0x4] sm:$0xf]
      %v627 = vld [vmem:[%s624 + $0x8] sm:$0xf]
      %v628 = vld [vmem:[%s624 + $0xc] sm:$0xf]
      %v629 = vld [vmem:[%s624 + $0x10] sm:$0xf]
      %v630 = vld [vmem:[%s624 + $0x14] sm:$0xf]
      %v631 = vld [vmem:[%s624 + $0x18] sm:$0xf]
      %v632 = vld [vmem:[%s624 + $0x1c] sm:$0xf]
      %vm637 = vcmask 1046528
      %v638 = vrot.slane %v396, 1
      %v639 = vrot.slane %v397, 1
      %v640 = vsel %vm637, %v638, %v639
      %v641 = vrot.slane %v398, 1
      %v642 = vsel %vm637, %v639, %v641
      %v643 = vrot.slane %v399, 1
      %v644 = vsel %vm637, %v641, %v643
      %v653 = vunpack.c.l.b16 %v625
      %v654 = vunpack.c.l.b16 %v626
      %v655 = vunpack.c.l.b16 %v627
      %v656 = vunpack.c.l.b16 %v628
      %v657 = vunpack.c.l.b16 %v629
      %v658 = vunpack.c.l.b16 %v630
      %v659 = vunpack.c.l.b16 %v631
      %v660 = vunpack.c.l.b16 %v632
      %v661 = vpack.c.b16 %v654, %v653
      %v662 = vpack.c.b16 %v656, %v655
      %v663 = vpack.c.b16 %v658, %v657
      %v664 = vpack.c.b16 %v660, %v659
      %v670 = vsel %vm470, %v640, 0
      %v673 = vsel %vm470, %v642, 0
      %v676 = vsel %vm470, %v644, 0
      %678 = vmatprep.subr.bf16.mxu0 0
      %679 = vmatpush1.bf16.msra.mxu0 0
      %680 = vmatprep.subr.bf16.mxu0 0
      %681 = vmatpush1.bf16.msra.mxu0 0
      %682 = vmatprep.subr.bf16.mxu0 0
      %683 = vmatpush1.bf16.msra.mxu0 0
      %684 = vmatprep.subr.bf16.mxu0 0
      %685 = vmatpush1.bf16.msra.mxu0 0
      %686 = vmatprep.subr.bf16.mxu0 0
      %687 = vmatpush1.bf16.msra.mxu0 %v664
      %688 = vmatprep.subr.bf16.mxu0 0
      %689 = vmatpush1.bf16.msra.mxu0 %v663
      %690 = vmatprep.subr.bf16.mxu0 0
      %691 = vmatpush1.bf16.msra.mxu0 %v662
      %692 = vmatprep.subr.bf16.mxu0 0
      %693 = vmatpush1.bf16.msra.mxu0 %v661
      %694 = vmatprep.subr.bf16.mxu0 0
      %695 = vmatpush2.bf16.msra.mxu0 0
      %696 = vmatprep.subr.bf16.mxu0 0
      %697 = vmatpush2.bf16.msra.mxu0 0
      %698 = vmatprep.subr.bf16.mxu0 0
      %699 = vmatpush2.bf16.msra.mxu0 0
      %700 = vmatprep.subr.bf16.mxu0 0
      %701 = vmatpush2.bf16.msra.mxu0 0
      %702 = vmatprep.subr.bf16.mxu0 0
      %703 = vmatpush2.bf16.msra.mxu0 0
      %704 = vmatprep.subr.bf16.mxu0 0
      %705 = vmatpush2.bf16.msra.mxu0 0
      %706 = vmatprep.subr.bf16.mxu0 0
      %707 = vmatpush2.bf16.msra.mxu0 0
      %708 = vmatprep.subr.bf16.mxu0 0
      %709 = vmatpush2.bf16.msra.mxu0 0
      %710 = vmatprep.mubr.bf16.mxu0 0
      %711 = vmatmul.mubr.bf16.gmra.mxu0 %v670
      %v712 = vpop.f32.mrf.mxu0
      %v713 = vadd.f32 0.0, %v712
      %v714 = vpop.f32.mrf.mxu0
      %v715 = vpop.f32.mrf.mxu0
      %v716 = vadd.f32 0.0, %v715
      %v717 = vpop.f32.mrf.mxu0
      %718 = vmatprep.mubr.bf16.mxu0 0
      %719 = vmatmul.mubr.bf16.gmra.mxu0 %v673
      %v720 = vpop.f32.mrf.mxu0
      %v721 = vadd.f32 0.0, %v720
      %v722 = vpop.f32.mrf.mxu0
      %v723 = vpop.f32.mrf.mxu0
      %v724 = vadd.f32 0.0, %v723
      %v725 = vpop.f32.mrf.mxu0
      %726 = vmatprep.mubr.bf16.mxu0 0
      %727 = vmatmul.mubr.bf16.gmra.mxu0 %v676
      %v728 = vpop.f32.mrf.mxu0
      %v729 = vadd.f32 0.0, %v728
      %v730 = vpop.f32.mrf.mxu0
      %v731 = vpop.f32.mrf.mxu0
      %v732 = vadd.f32 0.0, %v731
      %v733 = vpop.f32.mrf.mxu0
      %734 = vdwg.mxu0
      %v735 = vadd.f32 %v602, %v713
      %v736 = vadd.f32 %v605, %v716
      %v737 = vadd.f32 %v610, %v721
      %v738 = vadd.f32 %v613, %v724
      %v739 = vadd.f32 %v618, %v729
      %v740 = vadd.f32 %v621, %v732
      %s741 = scalar_lea.vmem %s2, 96
      %v742 = vld [vmem:[%s741] sm:$0xf]
      %v743 = vld [vmem:[%s741 + $0x4] sm:$0xf]
      %v744 = vld [vmem:[%s741 + $0x8] sm:$0xf]
      %v745 = vld [vmem:[%s741 + $0xc] sm:$0xf]
      %v746 = vld [vmem:[%s741 + $0x10] sm:$0xf]
      %v747 = vld [vmem:[%s741 + $0x14] sm:$0xf]
      %v748 = vld [vmem:[%s741 + $0x18] sm:$0xf]
      %v749 = vld [vmem:[%s741 + $0x1c] sm:$0xf]
      %vm750 = vsmask.f32 6400
      %v751 = vrot.slane %v419, 1
      %v752 = vrot.slane %v421, 2
      %v753 = vor.u32 %v751, %v752
      %v754 = vrot.slane %v430, 1
      %v755 = vrot.slane %v426, 2
      %v756 = vor.u32 %v754, %v755
      %v757 = vsel %vm750, %v753, %v756
      %v758 = vrot.slane %v438, 1
      %v759 = vrot.slane %v434, 2
      %v760 = vor.u32 %v758, %v759
      %v761 = vsel %vm750, %v756, %v760
      %v762 = vshrl.u32 %v399, 16
      %v764 = vrot.slane %v762, 1
      %v765 = vrot.slane %v442, 2
      %v766 = vor.u32 %v764, %v765
      %v767 = vsel %vm750, %v760, %v766
      %v776 = vunpack.c.l.b16 %v742
      %v777 = vunpack.c.l.b16 %v743
      %v778 = vunpack.c.l.b16 %v744
      %v779 = vunpack.c.l.b16 %v745
      %v780 = vunpack.c.l.b16 %v746
      %v781 = vunpack.c.l.b16 %v747
      %v782 = vunpack.c.l.b16 %v748
      %v783 = vunpack.c.l.b16 %v749
      %v784 = vpack.c.b16 %v777, %v776
      %v785 = vpack.c.b16 %v779, %v778
      %v786 = vpack.c.b16 %v781, %v780
      %v787 = vpack.c.b16 %v783, %v782
      %v793 = vsel %vm470, %v757, 0
      %v796 = vsel %vm470, %v761, 0
      %v799 = vsel %vm470, %v767, 0
      %801 = vmatprep.subr.bf16.mxu0 0
      %802 = vmatpush1.bf16.msra.mxu0 0
      %803 = vmatprep.subr.bf16.mxu0 0
      %804 = vmatpush1.bf16.msra.mxu0 0
      %805 = vmatprep.subr.bf16.mxu0 0
      %806 = vmatpush1.bf16.msra.mxu0 0
      %807 = vmatprep.subr.bf16.mxu0 0
      %808 = vmatpush1.bf16.msra.mxu0 0
      %809 = vmatprep.subr.bf16.mxu0 0
      %810 = vmatpush1.bf16.msra.mxu0 %v787
      %811 = vmatprep.subr.bf16.mxu0 0
      %812 = vmatpush1.bf16.msra.mxu0 %v786
      %813 = vmatprep.subr.bf16.mxu0 0
      %814 = vmatpush1.bf16.msra.mxu0 %v785
      %815 = vmatprep.subr.bf16.mxu0 0
      %816 = vmatpush1.bf16.msra.mxu0 %v784
      %817 = vmatprep.subr.bf16.mxu0 0
      %818 = vmatpush2.bf16.msra.mxu0 0
      %819 = vmatprep.subr.bf16.mxu0 0
      %820 = vmatpush2.bf16.msra.mxu0 0
      %821 = vmatprep.subr.bf16.mxu0 0
      %822 = vmatpush2.bf16.msra.mxu0 0
      %823 = vmatprep.subr.bf16.mxu0 0
      %824 = vmatpush2.bf16.msra.mxu0 0
      %825 = vmatprep.subr.bf16.mxu0 0
      %826 = vmatpush2.bf16.msra.mxu0 0
      %827 = vmatprep.subr.bf16.mxu0 0
      %828 = vmatpush2.bf16.msra.mxu0 0
      %829 = vmatprep.subr.bf16.mxu0 0
      %830 = vmatpush2.bf16.msra.mxu0 0
      %831 = vmatprep.subr.bf16.mxu0 0
      %832 = vmatpush2.bf16.msra.mxu0 0
      %833 = vmatprep.mubr.bf16.mxu0 0
      %834 = vmatmul.mubr.bf16.gmra.mxu0 %v793
      %v835 = vpop.f32.mrf.mxu0
      %v836 = vadd.f32 0.0, %v835
      %v837 = vpop.f32.mrf.mxu0
      %v838 = vpop.f32.mrf.mxu0
      %v839 = vadd.f32 0.0, %v838
      %v840 = vpop.f32.mrf.mxu0
      %841 = vmatprep.mubr.bf16.mxu0 0
      %842 = vmatmul.mubr.bf16.gmra.mxu0 %v796
      %v843 = vpop.f32.mrf.mxu0
      %v844 = vadd.f32 0.0, %v843
      %v845 = vpop.f32.mrf.mxu0
      %v846 = vpop.f32.mrf.mxu0
      %v847 = vadd.f32 0.0, %v846
      %v848 = vpop.f32.mrf.mxu0
      %849 = vmatprep.mubr.bf16.mxu0 0
      %850 = vmatmul.mubr.bf16.gmra.mxu0 %v799
      %v851 = vpop.f32.mrf.mxu0
      %v852 = vadd.f32 0.0, %v851
      %v853 = vpop.f32.mrf.mxu0
      %v854 = vpop.f32.mrf.mxu0
      %v855 = vadd.f32 0.0, %v854
      %v856 = vpop.f32.mrf.mxu0
      %857 = vdwg.mxu0
      %v858 = vadd.f32 %v735, %v836
      %v859 = vadd.f32 %v736, %v839
      %v860 = vadd.f32 %v737, %v844
      %v861 = vadd.f32 %v738, %v847
      %v862 = vadd.f32 %v739, %v852
      %v863 = vadd.f32 %v740, %v855
      %s864 = scalar_lea.vmem %s2, 128
      %v865 = vld [vmem:[%s864] sm:$0xf]
      %v866 = vld [vmem:[%s864 + $0x4] sm:$0xf]
      %v867 = vld [vmem:[%s864 + $0x8] sm:$0xf]
      %v868 = vld [vmem:[%s864 + $0xc] sm:$0xf]
      %v869 = vld [vmem:[%s864 + $0x10] sm:$0xf]
      %v870 = vld [vmem:[%s864 + $0x14] sm:$0xf]
      %v871 = vld [vmem:[%s864 + $0x18] sm:$0xf]
      %v872 = vld [vmem:[%s864 + $0x1c] sm:$0xf]
      %vm873 = vcmask 1045504
      %v874 = vrot.slane %v396, 2
      %v875 = vrot.slane %v397, 2
      %v876 = vsel %vm873, %v874, %v875
      %v877 = vrot.slane %v398, 2
      %v878 = vsel %vm873, %v875, %v877
      %v879 = vrot.slane %v399, 2
      %v880 = vsel %vm873, %v877, %v879
      %v889 = vunpack.c.l.b16 %v865
      %v890 = vunpack.c.l.b16 %v866
      %v891 = vunpack.c.l.b16 %v867
      %v892 = vunpack.c.l.b16 %v868
      %v893 = vunpack.c.l.b16 %v869
      %v894 = vunpack.c.l.b16 %v870
      %v895 = vunpack.c.l.b16 %v871
      %v896 = vunpack.c.l.b16 %v872
      %v897 = vpack.c.b16 %v890, %v889
      %v898 = vpack.c.b16 %v892, %v891
      %v899 = vpack.c.b16 %v894, %v893
      %v900 = vpack.c.b16 %v896, %v895
      %v906 = vsel %vm470, %v876, 0
      %v909 = vsel %vm470, %v878, 0
      %v912 = vsel %vm470, %v880, 0
      %914 = vmatprep.subr.bf16.mxu0 0
      %915 = vmatpush1.bf16.msra.mxu0 0
      %916 = vmatprep.subr.bf16.mxu0 0
      %917 = vmatpush1.bf16.msra.mxu0 0
      %918 = vmatprep.subr.bf16.mxu0 0
      %919 = vmatpush1.bf16.msra.mxu0 0
      %920 = vmatprep.subr.bf16.mxu0 0
      %921 = vmatpush1.bf16.msra.mxu0 0
      %922 = vmatprep.subr.bf16.mxu0 0
      %923 = vmatpush1.bf16.msra.mxu0 %v900
      %924 = vmatprep.subr.bf16.mxu0 0
      %925 = vmatpush1.bf16.msra.mxu0 %v899
      %926 = vmatprep.subr.bf16.mxu0 0
      %927 = vmatpush1.bf16.msra.mxu0 %v898
      %928 = vmatprep.subr.bf16.mxu0 0
      %929 = vmatpush1.bf16.msra.mxu0 %v897
      %930 = vmatprep.subr.bf16.mxu0 0
      %931 = vmatpush2.bf16.msra.mxu0 0
      %932 = vmatprep.subr.bf16.mxu0 0
      %933 = vmatpush2.bf16.msra.mxu0 0
      %934 = vmatprep.subr.bf16.mxu0 0
      %935 = vmatpush2.bf16.msra.mxu0 0
      %936 = vmatprep.subr.bf16.mxu0 0
      %937 = vmatpush2.bf16.msra.mxu0 0
      %938 = vmatprep.subr.bf16.mxu0 0
      %939 = vmatpush2.bf16.msra.mxu0 0
      %940 = vmatprep.subr.bf16.mxu0 0
      %941 = vmatpush2.bf16.msra.mxu0 0
      %942 = vmatprep.subr.bf16.mxu0 0
      %943 = vmatpush2.bf16.msra.mxu0 0
      %944 = vmatprep.subr.bf16.mxu0 0
      %945 = vmatpush2.bf16.msra.mxu0 0
      %946 = vmatprep.mubr.bf16.mxu0 0
      %947 = vmatmul.mubr.bf16.gmra.mxu0 %v906
      %v948 = vpop.f32.mrf.mxu0
      %v949 = vadd.f32 0.0, %v948
      %v950 = vpop.f32.mrf.mxu0
      %v951 = vpop.f32.mrf.mxu0
      %v952 = vadd.f32 0.0, %v951
      %v953 = vpop.f32.mrf.mxu0
      %954 = vmatprep.mubr.bf16.mxu0 0
      %955 = vmatmul.mubr.bf16.gmra.mxu0 %v909
      %v956 = vpop.f32.mrf.mxu0
      %v957 = vadd.f32 0.0, %v956
      %v958 = vpop.f32.mrf.mxu0
      %v959 = vpop.f32.mrf.mxu0
      %v960 = vadd.f32 0.0, %v959
      %v961 = vpop.f32.mrf.mxu0
      %962 = vmatprep.mubr.bf16.mxu0 0
      %963 = vmatmul.mubr.bf16.gmra.mxu0 %v912
      %v964 = vpop.f32.mrf.mxu0
      %v965 = vadd.f32 0.0, %v964
      %v966 = vpop.f32.mrf.mxu0
      %v967 = vpop.f32.mrf.mxu0
      %v968 = vadd.f32 0.0, %v967
      %v969 = vpop.f32.mrf.mxu0
      %970 = vdwg.mxu0
      %v971 = vadd.f32 %v858, %v949
      %v972 = vadd.f32 %v859, %v952
      %v973 = vadd.f32 %v860, %v957
      %v974 = vadd.f32 %v861, %v960
      %v975 = vadd.f32 %v862, %v965
      %v976 = vadd.f32 %v863, %v968
      %v977 = vld [vmem:[%s3] sm:$0x1]
      %v979 = vlaneseq
      %v980 = vshrl.u32 %v979, 7
      %v981 = vsub.s32 0, %v980
      %v982 = vrot.slane %v977, %v981
      %v984 = vadd.f32 %v971, %v982
      %v985 = vadd.f32 %v972, %v982
      %v986 = vadd.f32 %v973, %v982
      %v987 = vadd.f32 %v974, %v982
      %v988 = vadd.f32 %v975, %v982
      %v989 = vadd.f32 %v976, %v982
      %v990 = vmax.f32 %v984, 0.0
      %v991 = vmax.f32 %v985, 0.0
      %v992 = vmax.f32 %v986, 0.0
      %v993 = vmax.f32 %v987, 0.0
      %v994 = vmax.f32 %v988, 0.0
      %v995 = vmax.f32 %v989, 0.0
      %v996 = vpack.c.bf16 %v991, %v990
      %v997 = vpack.c.bf16 %v993, %v992
      %v998 = vpack.c.bf16 %v995, %v994
      %v1002 = vunpack.c.l.b16 %v996
      %v1003 = vunpack.c.h.b16 %v996
      %v1004 = vunpack.c.l.b16 %v997
      %v1005 = vunpack.c.h.b16 %v997
      %v1006 = vunpack.c.l.b16 %v998
      %v1007 = vunpack.c.h.b16 %v998
      %v1008 = vpack.c.b16 %v1002, %v1002
      %v1009 = vpack.c.b16 %v1003, %v1003
      %v1010 = vpack.c.b16 %v1004, %v1004
      %v1011 = vpack.c.b16 %v1005, %v1005
      %v1012 = vpack.c.b16 %v1006, %v1006
      %v1013 = vpack.c.b16 %v1007, %v1007
      %1020 = vst [vmem:[%s296] sm:$0xf] %v1008
      %1021 = vst [vmem:[%s296 + $0x4] sm:$0xf] %v1009
      %1022 = vst [vmem:[%s296 + $0x8] sm:$0xf] %v1010
      %1023 = vst [vmem:[%s296 + $0xc] sm:$0xf] %v1011
      %1024 = vst [vmem:[%s296 + $0x10] sm:$0xf] %v1012
      %1025 = vst [vmem:[%s296 + $0x14] sm:$0xf] %v1013
      %s1026 = sld [smem:[#allocation3 + %s26]]
      %v1027 = vstv %s1026
      %vm1028 = vcmp.lt.s32.totalorder %v319, %v1027
      %vm1029 = vcmp.lt.s32.totalorder %v320, %v1027
      %vm1030 = vcmp.lt.s32.totalorder %v321, %v1027
      %vm1031 = vcmp.lt.s32.totalorder %v322, %v1027
      %vm1032 = vcmp.lt.s32.totalorder %v323, %v1027
      %vm1033 = vcmp.lt.s32.totalorder %v324, %v1027
      %v1034 = vsel %vm1028, 1, 0
      %v1035 = vsel %vm1029, 1, 0
      %v1036 = vsel %vm1030, 1, 0
      %v1037 = vsel %vm1031, 1, 0
      %v1038 = vsel %vm1032, 1, 0
      %v1039 = vsel %vm1033, 1, 0
      %v1040 = vcvt.s32.f32 %v1034
      %v1041 = vcvt.s32.f32 %v1035
      %v1042 = vcvt.s32.f32 %v1036
      %v1043 = vcvt.s32.f32 %v1037
      %v1044 = vcvt.s32.f32 %v1038
      %v1045 = vcvt.s32.f32 %v1039
      %v1046 = vmul.f32 %v990, %v1040
      %v1047 = vmul.f32 %v991, %v1041
      %v1048 = vmul.f32 %v992, %v1042
      %v1049 = vmul.f32 %v993, %v1043
      %v1050 = vmul.f32 %v994, %v1044
      %v1051 = vmul.f32 %v995, %v1045
      %v1052 = vadd.f32 %v1046, %v1047
      %v1053 = vadd.f32 %v1052, %v1048
      %v1054 = vadd.f32 %v1053, %v1049
      %v1055 = vadd.f32 %v1054, %v1050
      %v1056 = vadd.f32 %v1055, %v1051
      %v1057 = vrot.slane %v1056, 4
      %v1058 = vadd.f32 %v1056, %v1057
      %v1059 = vrot.slane %v1058, 2
      %v1060 = vadd.f32 %v1058, %v1059
      %v1061 = vrot.slane %v1060, 1
      %v1062 = vadd.f32 %v1060, %v1061
      %1063 = vst [vmem:[%s299] sm:$0x1] %v1062
      %v1064 = vmul.f32 %v1046, %v990
      %v1065 = vmul.f32 %v1047, %v991
      %v1066 = vmul.f32 %v1048, %v992
      %v1067 = vmul.f32 %v1049, %v993
      %v1068 = vmul.f32 %v1050, %v994
      %v1069 = vmul.f32 %v1051, %v995
      %v1070 = vadd.f32 %v1064, %v1065
      %v1071 = vadd.f32 %v1070, %v1066
      %v1072 = vadd.f32 %v1071, %v1067
      %v1073 = vadd.f32 %v1072, %v1068
      %v1074 = vadd.f32 %v1073, %v1069
      %v1075 = vrot.slane %v1074, 4
      %v1076 = vadd.f32 %v1074, %v1075
      %v1077 = vrot.slane %v1076, 2
      %v1078 = vadd.f32 %v1076, %v1077
      %v1079 = vrot.slane %v1078, 1
      %v1080 = vadd.f32 %v1078, %v1079
      %1081 = vst [vmem:[%s302] sm:$0x1] %v1080
      %p1082 = scmp.lt.s32.totalorder %s26, 3
      %s1083 = scalar_select %p1082, %s26, 3
      %s1084 = smul.addr %s1083, 6
      %s1085 = smul.addr %s1084, 4
      %s1086 = scalar_lea.vmem %s6, %s1085
      %p1087 = scmp.lt.s32.totalorder %s26, 3
      %s1088 = scalar_select %p1087, %s26, 3
      %s1089 = scalar_lea.vmem %s7, %s1088
      %p1090 = scmp.lt.s32.totalorder %s26, 3
      %s1091 = scalar_select %p1090, %s26, 3
      %s1092 = scalar_lea.vmem %s8, %s1091
      // Predicated region
      $region41: #{tdnn_nas_forward.8} parent=39 // pred_check
        %p1093 = pneg %p154
      $region42: #{tdnn_nas_forward.8} parent=39 // pred_check_branch
        %1095 = sbr.rel (%p1093) target = $region44
      $region43: #{tdnn_nas_forward.8} parent=39 // pred_region
        _
      $region44: #{tdnn_nas_forward.8} parent=39 // pred_fallthru
        _
      // Predicated region
      $region45: #{tdnn_nas_forward.8} parent=39 // pred_check
        %p1096 = pneg %p180
      $region46: #{tdnn_nas_forward.8} parent=39 // pred_check_branch
        %1098 = sbr.rel (%p1096) target = $region48
      $region47: #{tdnn_nas_forward.8} parent=39 // pred_region
        _
      $region48: #{tdnn_nas_forward.8} parent=39 // pred_fallthru
        _
      // Predicated region
      $region49: #{tdnn_nas_forward.8} parent=39 // pred_check
        %p1099 = pneg %p206
      $region50: #{tdnn_nas_forward.8} parent=39 // pred_check_branch
        %1101 = sbr.rel (%p1099) target = $region52
      $region51: #{tdnn_nas_forward.8} parent=39 // pred_region
        _
      $region52: #{tdnn_nas_forward.8} parent=39 // pred_fallthru
        _
    $region40: #{tdnn_nas_forward.8} parent=5 // pred_fallthru
      _
    %p1102 = scmp.le.s32.totalorder 2, %s21
    // Predicated region
    $region53: #{tdnn_nas_forward.8} parent=5 // pred_check
      %p1103 = pneg %p1102
    $region54: #{tdnn_nas_forward.8} parent=5 // pred_check_branch
      %1105 = sbr.rel (%p1103) target = $region56
    $region55: #{tdnn_nas_forward.8} parent=5 // pred_region
      %s1106 = ssub.s32 %s21, 2
      // Predicated region
      $region57: #{tdnn_nas_forward.8} parent=55 // pred_check
        %p1107 = pneg %p160
      $region58: #{tdnn_nas_forward.8} parent=55 // pred_check_branch
        %1109 = sbr.rel (%p1107) target = $region60
      $region59: #{tdnn_nas_forward.8} parent=55 // pred_region
        %p1110 = scmp.lt.s32.totalorder %s27, 3
        %s1111 = scalar_select %p1110, %s27, 3
        %s1112 = smul.addr %s1111, 6
        %s1113 = smul.addr %s1112, 4
        %s1114 = scalar_lea.vmem %s6, %s1113
      $region60: #{tdnn_nas_forward.8} parent=55 // pred_fallthru
        _
      // Predicated region
      $region61: #{tdnn_nas_forward.8} parent=55 // pred_check
        %p1115 = pneg %p186
      $region62: #{tdnn_nas_forward.8} parent=55 // pred_check_branch
        %1117 = sbr.rel (%p1115) target = $region64
      $region63: #{tdnn_nas_forward.8} parent=55 // pred_region
        %p1118 = scmp.lt.s32.totalorder %s27, 3
        %s1119 = scalar_select %p1118, %s27, 3
        %s1120 = scalar_lea.vmem %s7, %s1119
      $region64: #{tdnn_nas_forward.8} parent=55 // pred_fallthru
        _
      // Predicated region
      $region65: #{tdnn_nas_forward.8} parent=55 // pred_check
        %p1121 = pneg %p212
      $region66: #{tdnn_nas_forward.8} parent=55 // pred_check_branch
        %1123 = sbr.rel (%p1121) target = $region68
      $region67: #{tdnn_nas_forward.8} parent=55 // pred_region
        %p1124 = scmp.lt.s32.totalorder %s27, 3
        %s1125 = scalar_select %p1124, %s27, 3
        %s1126 = scalar_lea.vmem %s8, %s1125
      $region68: #{tdnn_nas_forward.8} parent=55 // pred_fallthru
        _
    $region56: #{tdnn_nas_forward.8} parent=5 // pred_fallthru
      _
  $region6: #{tdnn_nas_forward.8} parent=0 // loop_footer
    %s25 = sadd.s32 1, %s21
  $region7: #{tdnn_nas_forward.8} parent=0 // loop_footer_branch
    %20 = sbr.rel target = $region3
  $region8: #{tdnn_nas_forward.8} parent=0 // loop_exit
    _

// kernel: tdnn_nas_forward.9
$region0: #{tdnn_nas_forward.9}
  #allocation0 [shape = 'u32[]', space=smem, size = 0x4, offset = 0x4, fixed_abs, tag = 'smem constant byte address 0x4 - core index']
  #allocation1 [shape = 'u32[144,128]{1,0:T(1,128)}', space=vmem, size = 0x12000, scoped, tag = 'internal scratch']
  #allocation2 [shape = 's32[1]{0}', space=sflag, size = 0x4, scoped, tag = 'scoped memory for tdnn_nas_forward.9']
  #allocation3 [shape = 'u8[512]{0}', space=smem, size = 0x200, scoped, tag = 'prefetched SMEM operand 0']
  %s0 = inlined_call_operand.vmem [shape: s32[4], index: 0, kind: input, shape index: {}]
  %s1 = inlined_call_operand.vmem [shape: bf16[4,56,128], index: 1, kind: input, shape index: {}]
  %s2 = inlined_call_operand.vmem [shape: bf16[5,128,128], index: 2, kind: input, shape index: {}]
  %s3 = inlined_call_operand.vmem [shape: f32[1,128], index: 3, kind: input, shape index: {}]
  %s4 = inlined_call_operand.vmem [shape: f32[1,128], index: 4, kind: input, shape index: {}]
  %s5 = inlined_call_operand.vmem [shape: f32[1,128], index: 5, kind: input, shape index: {}]
  %s6 = inlined_call_operand.vmem [shape: bf16[4,48,128], index: 6, kind: output, shape index: {0}]
  %s7 = inlined_call_operand.vmem [shape: f32[4,1,128], index: 7, kind: output, shape index: {1}]
  %s8 = inlined_call_operand.vmem [shape: f32[4,1,128], index: 8, kind: output, shape index: {2}]
  %9 = xla_tuple %s6, %s7, %s8
  %s10 = sld [smem:[#allocation0]]
  $region69: #{tdnn_nas_forward.9} parent=0
    _
  %s12 = ssub.s32 1, %s10
  %s13 = scalar_select 0, %s12, %s10
  %s14 = sshll.u32 %s0, 4
  %s15 = int_to_ptr.vmem [resolvable:$true] %s14
  %17 = dma.vmem_to_smem %s15, 16, [#allocation3], [#allocation2]
  %18 = dma.done [#allocation2], 16
  %19 = sfence
  loop: start=0, step=1, limit=6
  $region2: #{tdnn_nas_forward.9} parent=0 // loop_pre_header
    _
  $region3: #{tdnn_nas_forward.9} parent=0 // loop_header
    %s21 = sphi 0, %s25
    %p22 = scmp.ge.s32.totalorder %s21, 6
    %s31 = sphi 0, %s33
    %s34 = sphi 0, %s31
    %s35 = sphi 0, %s34
    %s51 = sphi 0, %s35
    %s55 = sphi 0, %s55
    %s57 = sphi 0, %s55
    %s58 = sphi 0, %s57
    %s72 = sphi 0, %s58
    %s76 = sphi 0, %s76
    %s78 = sphi 0, %s76
    %s79 = sphi 0, %s78
    %s93 = sphi 0, %s79
    %s97 = sphi 0, %s97
    %s99 = sphi 0, %s97
    %s100 = sphi 0, %s99
    %s114 = sphi 0, %s100
    %s118 = sphi 0, %s118
    %s120 = sphi 0, %s118
    %s121 = sphi 0, %s120
    %s135 = sphi 0, %s121
    %s141 = sphi 0, %s143
    %s144 = sphi 0, %s141
    %s145 = sphi 0, %s144
    %s161 = sphi 0, %s145
    %s167 = sphi 0, %s169
    %s170 = sphi 0, %s167
    %s171 = sphi 0, %s170
    %s187 = sphi 0, %s171
    %s193 = sphi 0, %s195
    %s196 = sphi 0, %s193
    %s197 = sphi 0, %s196
    %s213 = sphi 0, %s197
  $region4: #{tdnn_nas_forward.9} parent=0 // loop_header_branch
    %24 = sbr.rel (%p22) target = $region8
  $region5: #{tdnn_nas_forward.9} parent=0 // loop_body
    %s26 = ssub.s32 %s21, 1
    %s27 = ssub.s32 %s21, 2
    %s28 = sadd.s32 %s21, 1
    %s29 = ssub.s32 %s21, %s28
    %p30 = scmp.eq.s32.totalorder %s29, 0
    %s32 = sadd.s32 %s31, 1
    %s33 = scalar_select %p30, %s31, %s32
    %p36 = pneg %p30
    %p37 = scmp.eq.s32.totalorder %s21, 3
    %p38 = por %p36, %p37
    %p39 = scmp.ne.s32.totalorder %s31, %s34
    %p40 = scmp.eq.s32.totalorder %s21, 0
    %p41 = por %p39, %p40
    %p42 = scmp.ne.s32.totalorder %s31, %s34
    %p43 = scmp.eq.s32.totalorder %s26, 3
    %p44 = por %p42, %p43
    %p45 = scmp.ne.s32.totalorder %s34, %s35
    %p46 = scmp.eq.s32.totalorder %s26, 0
    %p47 = por %p45, %p46
    %p48 = scmp.ne.s32.totalorder %s34, %s35
    %p49 = scmp.eq.s32.totalorder %s27, 3
    %p50 = por %p48, %p49
    %p52 = scmp.ne.s32.totalorder %s35, %s51
    %p53 = scmp.eq.s32.totalorder %s27, 0
    %p54 = por %p52, %p53
    %s56 = sadd.s32 %s55, 1
    %p59 = scmp.eq.s32.totalorder %s21, 3
    %p60 = scmp.ne.s32.totalorder %s55, %s57
    %p61 = scmp.eq.s32.totalorder %s21, 0
    %p62 = por %p60, %p61
    %p63 = scmp.ne.s32.totalorder %s55, %s57
    %p64 = scmp.eq.s32.totalorder %s26, 3
    %p65 = por %p63, %p64
    %p66 = scmp.ne.s32.totalorder %s57, %s58
    %p67 = scmp.eq.s32.totalorder %s26, 0
    %p68 = por %p66, %p67
    %p69 = scmp.ne.s32.totalorder %s57, %s58
    %p70 = scmp.eq.s32.totalorder %s27, 3
    %p71 = por %p69, %p70
    %p73 = scmp.ne.s32.totalorder %s58, %s72
    %p74 = scmp.eq.s32.totalorder %s27, 0
    %p75 = por %p73, %p74
    %s77 = sadd.s32 %s76, 1
    %p80 = scmp.eq.s32.totalorder %s21, 3
    %p81 = scmp.ne.s32.totalorder %s76, %s78
    %p82 = scmp.eq.s32.totalorder %s21, 0
    %p83 = por %p81, %p82
    %p84 = scmp.ne.s32.totalorder %s76, %s78
    %p85 = scmp.eq.s32.totalorder %s26, 3
    %p86 = por %p84, %p85
    %p87 = scmp.ne.s32.totalorder %s78, %s79
    %p88 = scmp.eq.s32.totalorder %s26, 0
    %p89 = por %p87, %p88
    %p90 = scmp.ne.s32.totalorder %s78, %s79
    %p91 = scmp.eq.s32.totalorder %s27, 3
    %p92 = por %p90, %p91
    %p94 = scmp.ne.s32.totalorder %s79, %s93
    %p95 = scmp.eq.s32.totalorder %s27, 0
    %p96 = por %p94, %p95
    %s98 = sadd.s32 %s97, 1
    %p101 = scmp.eq.s32.totalorder %s21, 3
    %p102 = scmp.ne.s32.totalorder %s97, %s99
    %p103 = scmp.eq.s32.totalorder %s21, 0
    %p104 = por %p102, %p103
    %p105 = scmp.ne.s32.totalorder %s97, %s99
    %p106 = scmp.eq.s32.totalorder %s26, 3
    %p107 = por %p105, %p106
    %p108 = scmp.ne.s32.totalorder %s99, %s100
    %p109 = scmp.eq.s32.totalorder %s26, 0
    %p110 = por %p108, %p109
    %p111 = scmp.ne.s32.totalorder %s99, %s100
    %p112 = scmp.eq.s32.totalorder %s27, 3
    %p113 = por %p111, %p112
    %p115 = scmp.ne.s32.totalorder %s100, %s114
    %p116 = scmp.eq.s32.totalorder %s27, 0
    %p117 = por %p115, %p116
    %s119 = sadd.s32 %s118, 1
    %p122 = scmp.eq.s32.totalorder %s21, 3
    %p123 = scmp.ne.s32.totalorder %s118, %s120
    %p124 = scmp.eq.s32.totalorder %s21, 0
    %p125 = por %p123, %p124
    %p126 = scmp.ne.s32.totalorder %s118, %s120
    %p127 = scmp.eq.s32.totalorder %s26, 3
    %p128 = por %p126, %p127
    %p129 = scmp.ne.s32.totalorder %s120, %s121
    %p130 = scmp.eq.s32.totalorder %s26, 0
    %p131 = por %p129, %p130
    %p132 = scmp.ne.s32.totalorder %s120, %s121
    %p133 = scmp.eq.s32.totalorder %s27, 3
    %p134 = por %p132, %p133
    %p136 = scmp.ne.s32.totalorder %s121, %s135
    %p137 = scmp.eq.s32.totalorder %s27, 0
    %p138 = por %p136, %p137
    %s139 = ssub.s32 %s21, %s28
    %p140 = scmp.eq.s32.totalorder %s139, 0
    %s142 = sadd.s32 %s141, 1
    %s143 = scalar_select %p140, %s141, %s142
    %p146 = pneg %p140
    %p147 = scmp.eq.s32.totalorder %s21, 3
    %p148 = por %p146, %p147
    %p149 = scmp.ne.s32.totalorder %s141, %s144
    %p150 = scmp.eq.s32.totalorder %s21, 0
    %p151 = por %p149, %p150
    %p152 = scmp.ne.s32.totalorder %s141, %s144
    %p153 = scmp.eq.s32.totalorder %s26, 3
    %p154 = por %p152, %p153
    %p155 = scmp.ne.s32.totalorder %s144, %s145
    %p156 = scmp.eq.s32.totalorder %s26, 0
    %p157 = por %p155, %p156
    %p158 = scmp.ne.s32.totalorder %s144, %s145
    %p159 = scmp.eq.s32.totalorder %s27, 3
    %p160 = por %p158, %p159
    %p162 = scmp.ne.s32.totalorder %s145, %s161
    %p163 = scmp.eq.s32.totalorder %s27, 0
    %p164 = por %p162, %p163
    %s165 = ssub.s32 %s21, %s28
    %p166 = scmp.eq.s32.totalorder %s165, 0
    %s168 = sadd.s32 %s167, 1
    %s169 = scalar_select %p166, %s167, %s168
    %p172 = pneg %p166
    %p173 = scmp.eq.s32.totalorder %s21, 3
    %p174 = por %p172, %p173
    %p175 = scmp.ne.s32.totalorder %s167, %s170
    %p176 = scmp.eq.s32.totalorder %s21, 0
    %p177 = por %p175, %p176
    %p178 = scmp.ne.s32.totalorder %s167, %s170
    %p179 = scmp.eq.s32.totalorder %s26, 3
    %p180 = por %p178, %p179
    %p181 = scmp.ne.s32.totalorder %s170, %s171
    %p182 = scmp.eq.s32.totalorder %s26, 0
    %p183 = por %p181, %p182
    %p184 = scmp.ne.s32.totalorder %s170, %s171
    %p185 = scmp.eq.s32.totalorder %s27, 3
    %p186 = por %p184, %p185
    %p188 = scmp.ne.s32.totalorder %s171, %s187
    %p189 = scmp.eq.s32.totalorder %s27, 0
    %p190 = por %p188, %p189
    %s191 = ssub.s32 %s21, %s28
    %p192 = scmp.eq.s32.totalorder %s191, 0
    %s194 = sadd.s32 %s193, 1
    %s195 = scalar_select %p192, %s193, %s194
    %p198 = pneg %p192
    %p199 = scmp.eq.s32.totalorder %s21, 3
    %p200 = por %p198, %p199
    %p201 = scmp.ne.s32.totalorder %s193, %s196
    %p202 = scmp.eq.s32.totalorder %s21, 0
    %p203 = por %p201, %p202
    %p204 = scmp.ne.s32.totalorder %s193, %s196
    %p205 = scmp.eq.s32.totalorder %s26, 3
    %p206 = por %p204, %p205
    %p207 = scmp.ne.s32.totalorder %s196, %s197
    %p208 = scmp.eq.s32.totalorder %s26, 0
    %p209 = por %p207, %p208
    %p210 = scmp.ne.s32.totalorder %s196, %s197
    %p211 = scmp.eq.s32.totalorder %s27, 3
    %p212 = por %p210, %p211
    %p214 = scmp.ne.s32.totalorder %s197, %s213
    %p215 = scmp.eq.s32.totalorder %s27, 0
    %p216 = por %p214, %p215
    %p217 = scmp.le.s32.totalorder 1, %s21
    %p218 = scmp.lt.s32.totalorder %s21, 5
    %p219 = pnand %p217, %p218
    %p220 = pneg %p219
    // Predicated region
    $region9: #{tdnn_nas_forward.9} parent=5 // pred_check
      _
    $region10: #{tdnn_nas_forward.9} parent=5 // pred_check_branch
      %222 = sbr.rel (%p219) target = $region12
    $region11: #{tdnn_nas_forward.9} parent=5 // pred_region
      %s223 = ssub.s32 %s21, 1
      // Predicated region
      $region13: #{tdnn_nas_forward.9} parent=11 // pred_check
        %p224 = pneg %p68
      $region14: #{tdnn_nas_forward.9} parent=11 // pred_check_branch
        %226 = sbr.rel (%p224) target = $region16
      $region15: #{tdnn_nas_forward.9} parent=11 // pred_region
        _
      $region16: #{tdnn_nas_forward.9} parent=11 // pred_fallthru
        _
      // Predicated region
      $region17: #{tdnn_nas_forward.9} parent=11 // pred_check
        %p227 = pneg %p89
      $region18: #{tdnn_nas_forward.9} parent=11 // pred_check_branch
        %229 = sbr.rel (%p227) target = $region20
      $region19: #{tdnn_nas_forward.9} parent=11 // pred_region
        _
      $region20: #{tdnn_nas_forward.9} parent=11 // pred_fallthru
        _
      // Predicated region
      $region21: #{tdnn_nas_forward.9} parent=11 // pred_check
        %p230 = pneg %p110
      $region22: #{tdnn_nas_forward.9} parent=11 // pred_check_branch
        %232 = sbr.rel (%p230) target = $region24
      $region23: #{tdnn_nas_forward.9} parent=11 // pred_region
        _
      $region24: #{tdnn_nas_forward.9} parent=11 // pred_fallthru
        _
      // Predicated region
      $region25: #{tdnn_nas_forward.9} parent=11 // pred_check
        %p233 = pneg %p131
      $region26: #{tdnn_nas_forward.9} parent=11 // pred_check_branch
        %235 = sbr.rel (%p233) target = $region28
      $region27: #{tdnn_nas_forward.9} parent=11 // pred_region
        _
      $region28: #{tdnn_nas_forward.9} parent=11 // pred_fallthru
        _
    $region12: #{tdnn_nas_forward.9} parent=5 // pred_fallthru
      _
    %p236 = scmp.lt.s32.totalorder %s21, 4
    // Predicated region
    $region29: #{tdnn_nas_forward.9} parent=5 // pred_check
      %p237 = pneg %p236
    $region30: #{tdnn_nas_forward.9} parent=5 // pred_check_branch
      %239 = sbr.rel (%p237) target = $region32
    $region31: #{tdnn_nas_forward.9} parent=5 // pred_region
      // Predicated region
      $region33: #{tdnn_nas_forward.9} parent=31 // pred_check
        %p240 = pneg %p41
      $region34: #{tdnn_nas_forward.9} parent=31 // pred_check_branch
        %242 = sbr.rel (%p240) target = $region36
      $region35: #{tdnn_nas_forward.9} parent=31 // pred_region
        %p243 = scmp.lt.s32.totalorder %s21, 3
        %s244 = scalar_select %p243, %s21, 3
        %s245 = smul.addr %s244, 7
        %s246 = smul.addr %s245, 4
        %s247 = scalar_lea.vmem %s1, %s246
      $region36: #{tdnn_nas_forward.9} parent=31 // pred_fallthru
        _
    $region32: #{tdnn_nas_forward.9} parent=5 // pred_fallthru
      _
    %p248 = scmp.le.s32.totalorder 1, %s21
    %p249 = scmp.lt.s32.totalorder %s21, 5
    %p250 = pnand %p248, %p249
    %p251 = pneg %p250
    // Predicated region
    $region37: #{tdnn_nas_forward.9} parent=5 // pred_check
      _
    $region38: #{tdnn_nas_forward.9} parent=5 // pred_check_branch
      %253 = sbr.rel (%p250) target = $region40
    $region39: #{tdnn_nas_forward.9} parent=5 // pred_region
      %s254 = ssub.s32 %s21, 1
      %p255 = scmp.lt.s32.totalorder %s26, 3
      %s256 = scalar_select %p255, %s26, 3
      %s257 = smul.addr %s256, 7
      %s258 = smul.addr %s257, 4
      %s259 = scalar_lea.vmem %s1, %s258
      %p260 = pneg %p47
      %p261 = pneg %p44
      %p262 = pneg %p68
      %p263 = pneg %p65
      %p264 = pneg %p89
      %p265 = pneg %p86
      %p266 = pneg %p110
      %p267 = pneg %p107
      %p268 = pneg %p131
      %p269 = pneg %p128
      %p270 = pneg %p157
      %p271 = pneg %p154
      %p272 = scmp.lt.s32.totalorder %s26, 3
      %s273 = scalar_select %p272, %s26, 3
      %s274 = smul.addr %s273, 6
      %s275 = smul.addr %s274, 4
      %s276 = scalar_lea.vmem %s6, %s275
      %p277 = pneg %p183
      %p278 = pneg %p180
      %p279 = scmp.lt.s32.totalorder %s26, 3
      %s280 = scalar_select %p279, %s26, 3
      %s281 = scalar_lea.vmem %s7, %s280
      %p282 = pneg %p209
      %p283 = pneg %p206
      %p284 = scmp.lt.s32.totalorder %s26, 3
      %s285 = scalar_select %p284, %s26, 3
      %s286 = scalar_lea.vmem %s8, %s285
      %p287 = scmp.lt.s32.totalorder %s26, 3
      %s288 = scalar_select %p287, %s26, 3
      %s289 = smul.addr %s288, 7
      %s290 = smul.addr %s289, 4
      %s291 = scalar_lea.vmem %s1, %s290
      %p292 = scmp.lt.s32.totalorder %s26, 3
      %s293 = scalar_select %p292, %s26, 3
      %s294 = smul.addr %s293, 6
      %s295 = smul.addr %s294, 4
      %s296 = scalar_lea.vmem %s6, %s295
      %p297 = scmp.lt.s32.totalorder %s26, 3
      %s298 = scalar_select %p297, %s26, 3
      %s299 = scalar_lea.vmem %s7, %s298
      %p300 = scmp.lt.s32.totalorder %s26, 3
      %s301 = scalar_select %p300, %s26, 3
      %s302 = scalar_lea.vmem %s8, %s301
      %v304 = vld [vmem:[%s291] sm:$0xf]
      %v305 = vld [vmem:[%s291 + $0x4] sm:$0xf]
      %v306 = vld [vmem:[%s291 + $0x8] sm:$0xf]
      %v307 = vld [vmem:[%s291 + $0xc] sm:$0xf]
      %v308 = vld [vmem:[%s291 + $0x10] sm:$0xf]
      %v309 = vld [vmem:[%s291 + $0x14] sm:$0xf]
      %v310 = vld [vmem:[%s291 + $0x18] sm:$0xf]
      %v311 = vunpack.c.l.bf16 %v304
      %v312 = vunpack.c.l.bf16 %v305
      %v313 = vunpack.c.l.bf16 %v306
      %v314 = vunpack.c.l.bf16 %v307
      %v315 = vunpack.c.l.bf16 %v308
      %v316 = vunpack.c.l.bf16 %v309
      %v317 = vunpack.c.l.bf16 %v310
      %v318 = vlaneseq
      %v319 = vshrl.u32 %v318, 7
      %v320 = vadd.s32 %v319, 8
      %v321 = vadd.s32 %v319, 16
      %v322 = vadd.s32 %v319, 24
      %v323 = vadd.s32 %v319, 32
      %v324 = vadd.s32 %v319, 40
      %v325 = vadd.s32 %v319, 48
      %vm326 = vcmp.ge.s32.totalorder %v319, 4
      %vm327 = vcmp.ge.s32.totalorder %v320, 4
      %vm328 = vcmp.ge.s32.totalorder %v321, 4
      %vm329 = vcmp.ge.s32.totalorder %v322, 4
      %vm330 = vcmp.ge.s32.totalorder %v323, 4
      %vm331 = vcmp.ge.s32.totalorder %v324, 4
      %vm332 = vcmp.ge.s32.totalorder %v325, 4
      %vm333 = vcmp.lt.s32.totalorder %v319, 52
      %vm334 = vcmp.lt.s32.totalorder %v320, 52
      %vm335 = vcmp.lt.s32.totalorder %v321, 52
      %vm336 = vcmp.lt.s32.totalorder %v322, 52
      %vm337 = vcmp.lt.s32.totalorder %v323, 52
      %vm338 = vcmp.lt.s32.totalorder %v324, 52
      %vm339 = vcmp.lt.s32.totalorder %v325, 52
      %vm340 = vmand %vm326, %vm333
      %vm341 = vmand %vm327, %vm334
      %vm342 = vmand %vm328, %vm335
      %vm343 = vmand %vm329, %vm336
      %vm344 = vmand %vm330, %vm337
      %vm345 = vmand %vm331, %vm338
      %vm346 = vmand %vm332, %vm339
      %v347 = vld [vmem:[%s4] sm:$0x1]
      %v349 = vlaneseq
      %v350 = vshrl.u32 %v349, 7
      %v351 = vsub.s32 0, %v350
      %v352 = vrot.slane %v347, %v351
      %v354 = vmul.f32 %v311, %v352
      %v355 = vmul.f32 %v312, %v352
      %v356 = vmul.f32 %v313, %v352
      %v357 = vmul.f32 %v314, %v352
      %v358 = vmul.f32 %v315, %v352
      %v359 = vmul.f32 %v316, %v352
      %v360 = vmul.f32 %v317, %v352
      %v361 = vld [vmem:[%s5] sm:$0x1]
      %v363 = vlaneseq
      %v364 = vshrl.u32 %v363, 7
      %v365 = vsub.s32 0, %v364
      %v366 = vrot.slane %v361, %v365
      %v368 = vadd.f32 %v354, %v366
      %v369 = vadd.f32 %v355, %v366
      %v370 = vadd.f32 %v356, %v366
      %v371 = vadd.f32 %v357, %v366
      %v372 = vadd.f32 %v358, %v366
      %v373 = vadd.f32 %v359, %v366
      %v374 = vadd.f32 %v360, %v366
      %v375 = vsel %vm340, 1, 0
      %v376 = vsel %vm341, 1, 0
      %v377 = vsel %vm342, 1, 0
      %v378 = vsel %vm343, 1, 0
      %v379 = vsel %vm344, 1, 0
      %v380 = vsel %vm345, 1, 0
      %v381 = vsel %vm346, 1, 0
      %vm382 = vcmp.eq.s32.totalorder %v375, 1
      %vm383 = vcmp.eq.s32.totalorder %v376, 1
      %vm384 = vcmp.eq.s32.totalorder %v377, 1
      %vm385 = vcmp.eq.s32.totalorder %v378, 1
      %vm386 = vcmp.eq.s32.totalorder %v379, 1
      %vm387 = vcmp.eq.s32.totalorder %v380, 1
      %vm388 = vcmp.eq.s32.totalorder %v381, 1
      %v389 = vsel %vm382, %v368, 0.0
      %v390 = vsel %vm383, %v369, 0.0
      %v391 = vsel %vm384, %v370, 0.0
      %v392 = vsel %vm385, %v371, 0.0
      %v393 = vsel %vm386, %v372, 0.0
      %v394 = vsel %vm387, %v373, 0.0
      %v395 = vsel %vm388, %v374, 0.0
      %v396 = vpack.c.bf16 %v390, %v389
      %v397 = vpack.c.bf16 %v392, %v391
      %v398 = vpack.c.bf16 %v394, %v393
      %v399 = vpack.c.bf16 %v395, %v395
      %v400 = vld [vmem:[%s2] sm:$0xf]
      %v401 = vld [vmem:[%s2 + $0x4] sm:$0xf]
      %v402 = vld [vmem:[%s2 + $0x8] sm:$0xf]
      %v403 = vld [vmem:[%s2 + $0xc] sm:$0xf]
      %v404 = vld [vmem:[%s2 + $0x10] sm:$0xf]
      %v405 = vld [vmem:[%s2 + $0x14] sm:$0xf]
      %v406 = vld [vmem:[%s2 + $0x18] sm:$0xf]
      %v407 = vld [vmem:[%s2 + $0x1c] sm:$0xf]
      %v408 = vld [vmem:[%s2 + $0x20] sm:$0xf]
      %v409 = vld [vmem:[%s2 + $0x24] sm:$0xf]
      %v410 = vld [vmem:[%s2 + $0x28] sm:$0xf]
      %v411 = vld [vmem:[%s2 + $0x2c] sm:$0xf]
      %v412 = vld [vmem:[%s2 + $0x30] sm:$0xf]
      %v413 = vld [vmem:[%s2 + $0x34] sm:$0xf]
      %v414 = vld [vmem:[%s2 + $0x38] sm:$0xf]
      %v415 = vld [vmem:[%s2 + $0x3c] sm:$0xf]
      %s416 = scalar_lea.vmem %s2, 64
      %v417 = vld [vmem:[%s416] sm:$0xf]
      %v418 = vld [vmem:[%s416 + $0x4] sm:$0xf]
      %v419 = vld [vmem:[%s416 + $0x8] sm:$0xf]
      %v420 = vld [vmem:[%s416 + $0xc] sm:$0xf]
      %v421 = vld [vmem:[%s416 + $0x10] sm:$0xf]
      %v422 = vld [vmem:[%s416 + $0x14] sm:$0xf]
      %v423 = vld [vmem:[%s416 + $0x18] sm:$0xf]
      %v424 = vld [vmem:[%s416 + $0x1c] sm:$0xf]
      %v425 = vld [vmem:[%s416 + $0x20] sm:$0xf]
      %v426 = vld [vmem:[%s416 + $0x24] sm:$0xf]
      %v427 = vld [vmem:[%s416 + $0x28] sm:$0xf]
      %v428 = vld [vmem:[%s416 + $0x2c] sm:$0xf]
      %v429 = vld [vmem:[%s416 + $0x30] sm:$0xf]
      %v430 = vld [vmem:[%s416 + $0x34] sm:$0xf]
      %v431 = vld [vmem:[%s416 + $0x38] sm:$0xf]
      %v432 = vld [vmem:[%s416 + $0x3c] sm:$0xf]
      %vm437 = vcmask 1046528
      %v438 = vrot.slane %v396, 1
      %v439 = vrot.slane %v397, 1
      %v440 = vsel %vm437, %v438, %v439
      %v441 = vrot.slane %v398, 1
      %v442 = vsel %vm437, %v439, %v441
      %v443 = vrot.slane %v399, 1
      %v444 = vsel %vm437, %v441, %v443
      %v464 = vunpack.c.l.b16 %v417
      %v465 = vunpack.c.l.b16 %v418
      %v466 = vunpack.c.l.b16 %v419
      %v467 = vunpack.c.l.b16 %v420
      %v468 = vunpack.c.l.b16 %v421
      %v469 = vunpack.c.l.b16 %v422
      %v470 = vunpack.c.l.b16 %v423
      %v471 = vunpack.c.l.b16 %v424
      %v472 = vunpack.c.l.b16 %v425
      %v473 = vunpack.c.l.b16 %v426
      %v474 = vunpack.c.l.b16 %v427
      %v475 = vunpack.c.l.b16 %v428
      %v476 = vunpack.c.l.b16 %v429
      %v477 = vunpack.c.l.b16 %v430
      %v478 = vunpack.c.l.b16 %v431
      %v479 = vunpack.c.l.b16 %v432
      %v480 = vpack.c.b16 %v465, %v464
      %v481 = vpack.c.b16 %v467, %v466
      %v482 = vpack.c.b16 %v469, %v468
      %v483 = vpack.c.b16 %v471, %v470
      %v484 = vpack.c.b16 %v473, %v472
      %v485 = vpack.c.b16 %v475, %v474
      %v486 = vpack.c.b16 %v477, %v476
      %v487 = vpack.c.b16 %v479, %v478
      %496 = vmatprep.subr.bf16.mxu0 0
      %497 = vmatpush1.bf16.msra.mxu0 %v487
      %498 = vmatprep.subr.bf16.mxu0 0
      %499 = vmatpush1.bf16.msra.mxu0 %v486
      %500 = vmatprep.subr.bf16.mxu0 0
      %501 = vmatpush1.bf16.msra.mxu0 %v485
      %502 = vmatprep.subr.bf16.mxu0 0
      %503 = vmatpush1.bf16.msra.mxu0 %v484
      %504 = vmatprep.subr.bf16.mxu0 0
      %505 = vmatpush1.bf16.msra.mxu0 %v483
      %506 = vmatprep.subr.bf16.mxu0 0
      %507 = vmatpush1.bf16.msra.mxu0 %v482
      %508 = vmatprep.subr.bf16.mxu0 0
      %509 = vmatpush1.bf16.msra.mxu0 %v481
      %510 = vmatprep.subr.bf16.mxu0 0
      %511 = vmatpush1.bf16.msra.mxu0 %v480
      %512 = vmatprep.subr.bf16.mxu0 0
      %513 = vmatpush2.bf16.msra.mxu0 0
      %514 = vmatprep.subr.bf16.mxu0 0
      %515 = vmatpush2.bf16.msra.mxu0 0
      %516 = vmatprep.subr.bf16.mxu0 0
      %517 = vmatpush2.bf16.msra.mxu0 0
      %518 = vmatprep.subr.bf16.mxu0 0
      %519 = vmatpush2.bf16.msra.mxu0 0
      %520 = vmatprep.subr.bf16.mxu0 0
      %521 = vmatpush2.bf16.msra.mxu0 0
      %522 = vmatprep.subr.bf16.mxu0 0
      %523 = vmatpush2.bf16.msra.mxu0 0
      %524 = vmatprep.subr.bf16.mxu0 0
      %525 = vmatpush2.bf16.msra.mxu0 0
      %526 = vmatprep.subr.bf16.mxu0 0
      %527 = vmatpush2.bf16.msra.mxu0 0
      %528 = vmatprep.mubr.bf16.mxu0 0
      %529 = vmatmul.mubr.bf16.gmra.mxu0 %v440
      %v530 = vpop.f32.mrf.mxu0
      %v531 = vadd.f32 0.0, %v530
      %v532 = vpop.f32.mrf.mxu0
      %v533 = vpop.f32.mrf.mxu0
      %v534 = vadd.f32 0.0, %v533
      %v535 = vpop.f32.mrf.mxu0
      %536 = vmatprep.mubr.bf16.mxu0 0
      %537 = vmatmul.mubr.bf16.gmra.mxu0 %v442
      %v538 = vpop.f32.mrf.mxu0
      %v539 = vadd.f32 0.0, %v538
      %v540 = vpop.f32.mrf.mxu0
      %v541 = vpop.f32.mrf.mxu0
      %v542 = vadd.f32 0.0, %v541
      %v543 = vpop.f32.mrf.mxu0
      %544 = vmatprep.mubr.bf16.mxu0 0
      %545 = vmatmul.mubr.bf16.gmra.mxu0 %v444
      %v546 = vpop.f32.mrf.mxu0
      %v547 = vadd.f32 0.0, %v546
      %v548 = vpop.f32.mrf.mxu0
      %v549 = vpop.f32.mrf.mxu0
      %v550 = vadd.f32 0.0, %v549
      %v551 = vpop.f32.mrf.mxu0
      %552 = vdwg.mxu0
      %v569 = vunpack.c.l.b16 %v400
      %v570 = vunpack.c.l.b16 %v401
      %v571 = vunpack.c.l.b16 %v402
      %v572 = vunpack.c.l.b16 %v403
      %v573 = vunpack.c.l.b16 %v404
      %v574 = vunpack.c.l.b16 %v405
      %v575 = vunpack.c.l.b16 %v406
      %v576 = vunpack.c.l.b16 %v407
      %v577 = vunpack.c.l.b16 %v408
      %v578 = vunpack.c.l.b16 %v409
      %v579 = vunpack.c.l.b16 %v410
      %v580 = vunpack.c.l.b16 %v411
      %v581 = vunpack.c.l.b16 %v412
      %v582 = vunpack.c.l.b16 %v413
      %v583 = vunpack.c.l.b16 %v414
      %v584 = vunpack.c.l.b16 %v415
      %v585 = vpack.c.b16 %v570, %v569
      %v586 = vpack.c.b16 %v572, %v571
      %v587 = vpack.c.b16 %v574, %v573
      %v588 = vpack.c.b16 %v576, %v575
      %v589 = vpack.c.b16 %v578, %v577
      %v590 = vpack.c.b16 %v580, %v579
      %v591 = vpack.c.b16 %v582, %v581
      %v592 = vpack.c.b16 %v584, %v583
      %601 = vmatprep.subr.bf16.mxu0 0
      %602 = vmatpush1.bf16.msra.mxu0 %v592
      %603 = vmatprep.subr.bf16.mxu0 0
      %604 = vmatpush1.bf16.msra.mxu0 %v591
      %605 = vmatprep.subr.bf16.mxu0 0
      %606 = vmatpush1.bf16.msra.mxu0 %v590
      %607 = vmatprep.subr.bf16.mxu0 0
      %608 = vmatpush1.bf16.msra.mxu0 %v589
      %609 = vmatprep.subr.bf16.mxu0 0
      %610 = vmatpush1.bf16.msra.mxu0 %v588
      %611 = vmatprep.subr.bf16.mxu0 0
      %612 = vmatpush1.bf16.msra.mxu0 %v587
      %613 = vmatprep.subr.bf16.mxu0 0
      %614 = vmatpush1.bf16.msra.mxu0 %v586
      %615 = vmatprep.subr.bf16.mxu0 0
      %616 = vmatpush1.bf16.msra.mxu0 %v585
      %617 = vmatprep.subr.bf16.mxu0 0
      %618 = vmatpush2.bf16.msra.mxu0 0
      %619 = vmatprep.subr.bf16.mxu0 0
      %620 = vmatpush2.bf16.msra.mxu0 0
      %621 = vmatprep.subr.bf16.mxu0 0
      %622 = vmatpush2.bf16.msra.mxu0 0
      %623 = vmatprep.subr.bf16.mxu0 0
      %624 = vmatpush2.bf16.msra.mxu0 0
      %625 = vmatprep.subr.bf16.mxu0 0
      %626 = vmatpush2.bf16.msra.mxu0 0
      %627 = vmatprep.subr.bf16.mxu0 0
      %628 = vmatpush2.bf16.msra.mxu0 0
      %629 = vmatprep.subr.bf16.mxu0 0
      %630 = vmatpush2.bf16.msra.mxu0 0
      %631 = vmatprep.subr.bf16.mxu0 0
      %632 = vmatpush2.bf16.msra.mxu0 0
      %633 = vmatprep.mubr.bf16.mxu0 0
      %634 = vmatmul.mubr.bf16.gmra.mxu0 %v396
      %v635 = vpop.f32.mrf.mxu0
      %v636 = vadd.f32 %v531, %v635
      %v637 = vpop.f32.mrf.mxu0
      %v638 = vpop.f32.mrf.mxu0
      %v639 = vadd.f32 %v534, %v638
      %v640 = vpop.f32.mrf.mxu0
      %641 = vmatprep.mubr.bf16.mxu0 0
      %642 = vmatmul.mubr.bf16.gmra.mxu0 %v397
      %v643 = vpop.f32.mrf.mxu0
      %v644 = vadd.f32 %v539, %v643
      %v645 = vpop.f32.mrf.mxu0
      %v646 = vpop.f32.mrf.mxu0
      %v647 = vadd.f32 %v542, %v646
      %v648 = vpop.f32.mrf.mxu0
      %649 = vmatprep.mubr.bf16.mxu0 0
      %650 = vmatmul.mubr.bf16.gmra.mxu0 %v398
      %v651 = vpop.f32.mrf.mxu0
      %v652 = vadd.f32 %v547, %v651
      %v653 = vpop.f32.mrf.mxu0
      %v654 = vpop.f32.mrf.mxu0
      %v655 = vadd.f32 %v550, %v654
      %v656 = vpop.f32.mrf.mxu0
      %657 = vdwg.mxu0
      %s658 = scalar_lea.vmem %s2, 128
      %v659 = vld [vmem:[%s658] sm:$0xf]
      %v660 = vld [vmem:[%s658 + $0x4] sm:$0xf]
      %v661 = vld [vmem:[%s658 + $0x8] sm:$0xf]
      %v662 = vld [vmem:[%s658 + $0xc] sm:$0xf]
      %v663 = vld [vmem:[%s658 + $0x10] sm:$0xf]
      %v664 = vld [vmem:[%s658 + $0x14] sm:$0xf]
      %v665 = vld [vmem:[%s658 + $0x18] sm:$0xf]
      %v666 = vld [vmem:[%s658 + $0x1c] sm:$0xf]
      %v667 = vld [vmem:[%s658 + $0x20] sm:$0xf]
      %v668 = vld [vmem:[%s658 + $0x24] sm:$0xf]
      %v669 = vld [vmem:[%s658 + $0x28] sm:$0xf]
      %v670 = vld [vmem:[%s658 + $0x2c] sm:$0xf]
      %v671 = vld [vmem:[%s658 + $0x30] sm:$0xf]
      %v672 = vld [vmem:[%s658 + $0x34] sm:$0xf]
      %v673 = vld [vmem:[%s658 + $0x38] sm:$0xf]
      %v674 = vld [vmem:[%s658 + $0x3c] sm:$0xf]
      %vm675 = vcmask 1045504
      %v676 = vrot.slane %v396, 2
      %v677 = vrot.slane %v397, 2
      %v678 = vsel %vm675, %v676, %v677
      %v679 = vrot.slane %v398, 2
      %v680 = vsel %vm675, %v677, %v679
      %v681 = vrot.slane %v399, 2
      %v682 = vsel %vm675, %v679, %v681
      %v702 = vunpack.c.l.b16 %v659
      %v703 = vunpack.c.l.b16 %v660
      %v704 = vunpack.c.l.b16 %v661
      %v705 = vunpack.c.l.b16 %v662
      %v706 = vunpack.c.l.b16 %v663
      %v707 = vunpack.c.l.b16 %v664
      %v708 = vunpack.c.l.b16 %v665
      %v709 = vunpack.c.l.b16 %v666
      %v710 = vunpack.c.l.b16 %v667
      %v711 = vunpack.c.l.b16 %v668
      %v712 = vunpack.c.l.b16 %v669
      %v713 = vunpack.c.l.b16 %v670
      %v714 = vunpack.c.l.b16 %v671
      %v715 = vunpack.c.l.b16 %v672
      %v716 = vunpack.c.l.b16 %v673
      %v717 = vunpack.c.l.b16 %v674
      %v718 = vpack.c.b16 %v703, %v702
      %v719 = vpack.c.b16 %v705, %v704
      %v720 = vpack.c.b16 %v707, %v706
      %v721 = vpack.c.b16 %v709, %v708
      %v722 = vpack.c.b16 %v711, %v710
      %v723 = vpack.c.b16 %v713, %v712
      %v724 = vpack.c.b16 %v715, %v714
      %v725 = vpack.c.b16 %v717, %v716
      %734 = vmatprep.subr.bf16.mxu0 0
      %735 = vmatpush1.bf16.msra.mxu0 %v725
      %736 = vmatprep.subr.bf16.mxu0 0
      %737 = vmatpush1.bf16.msra.mxu0 %v724
      %738 = vmatprep.subr.bf16.mxu0 0
      %739 = vmatpush1.bf16.msra.mxu0 %v723
      %740 = vmatprep.subr.bf16.mxu0 0
      %741 = vmatpush1.bf16.msra.mxu0 %v722
      %742 = vmatprep.subr.bf16.mxu0 0
      %743 = vmatpush1.bf16.msra.mxu0 %v721
      %744 = vmatprep.subr.bf16.mxu0 0
      %745 = vmatpush1.bf16.msra.mxu0 %v720
      %746 = vmatprep.subr.bf16.mxu0 0
      %747 = vmatpush1.bf16.msra.mxu0 %v719
      %748 = vmatprep.subr.bf16.mxu0 0
      %749 = vmatpush1.bf16.msra.mxu0 %v718
      %750 = vmatprep.subr.bf16.mxu0 0
      %751 = vmatpush2.bf16.msra.mxu0 0
      %752 = vmatprep.subr.bf16.mxu0 0
      %753 = vmatpush2.bf16.msra.mxu0 0
      %754 = vmatprep.subr.bf16.mxu0 0
      %755 = vmatpush2.bf16.msra.mxu0 0
      %756 = vmatprep.subr.bf16.mxu0 0
      %757 = vmatpush2.bf16.msra.mxu0 0
      %758 = vmatprep.subr.bf16.mxu0 0
      %759 = vmatpush2.bf16.msra.mxu0 0
      %760 = vmatprep.subr.bf16.mxu0 0
      %761 = vmatpush2.bf16.msra.mxu0 0
      %762 = vmatprep.subr.bf16.mxu0 0
      %763 = vmatpush2.bf16.msra.mxu0 0
      %764 = vmatprep.subr.bf16.mxu0 0
      %765 = vmatpush2.bf16.msra.mxu0 0
      %766 = vmatprep.mubr.bf16.mxu0 0
      %767 = vmatmul.mubr.bf16.gmra.mxu0 %v678
      %v768 = vpop.f32.mrf.mxu0
      %v769 = vadd.f32 0.0, %v768
      %v770 = vpop.f32.mrf.mxu0
      %v771 = vpop.f32.mrf.mxu0
      %v772 = vadd.f32 0.0, %v771
      %v773 = vpop.f32.mrf.mxu0
      %774 = vmatprep.mubr.bf16.mxu0 0
      %775 = vmatmul.mubr.bf16.gmra.mxu0 %v680
      %v776 = vpop.f32.mrf.mxu0
      %v777 = vadd.f32 0.0, %v776
      %v778 = vpop.f32.mrf.mxu0
      %v779 = vpop.f32.mrf.mxu0
      %v780 = vadd.f32 0.0, %v779
      %v781 = vpop.f32.mrf.mxu0
      %782 = vmatprep.mubr.bf16.mxu0 0
      %783 = vmatmul.mubr.bf16.gmra.mxu0 %v682
      %v784 = vpop.f32.mrf.mxu0
      %v785 = vadd.f32 0.0, %v784
      %v786 = vpop.f32.mrf.mxu0
      %v787 = vpop.f32.mrf.mxu0
      %v788 = vadd.f32 0.0, %v787
      %v789 = vpop.f32.mrf.mxu0
      %790 = vdwg.mxu0
      %v791 = vadd.f32 %v636, %v769
      %v792 = vadd.f32 %v639, %v772
      %v793 = vadd.f32 %v644, %v777
      %v794 = vadd.f32 %v647, %v780
      %v795 = vadd.f32 %v652, %v785
      %v796 = vadd.f32 %v655, %v788
      %s797 = scalar_lea.vmem %s2, 192
      %v798 = vld [vmem:[%s797] sm:$0xf]
      %v799 = vld [vmem:[%s797 + $0x4] sm:$0xf]
      %v800 = vld [vmem:[%s797 + $0x8] sm:$0xf]
      %v801 = vld [vmem:[%s797 + $0xc] sm:$0xf]
      %v802 = vld [vmem:[%s797 + $0x10] sm:$0xf]
      %v803 = vld [vmem:[%s797 + $0x14] sm:$0xf]
      %v804 = vld [vmem:[%s797 + $0x18] sm:$0xf]
      %v805 = vld [vmem:[%s797 + $0x1c] sm:$0xf]
      %v806 = vld [vmem:[%s797 + $0x20] sm:$0xf]
      %v807 = vld [vmem:[%s797 + $0x24] sm:$0xf]
      %v808 = vld [vmem:[%s797 + $0x28] sm:$0xf]
      %v809 = vld [vmem:[%s797 + $0x2c] sm:$0xf]
      %v810 = vld [vmem:[%s797 + $0x30] sm:$0xf]
      %v811 = vld [vmem:[%s797 + $0x34] sm:$0xf]
      %v812 = vld [vmem:[%s797 + $0x38] sm:$0xf]
      %v813 = vld [vmem:[%s797 + $0x3c] sm:$0xf]
      %vm814 = vcmask 1044480
      %v815 = vrot.slane %v396, 3
      %v816 = vrot.slane %v397, 3
      %v817 = vsel %vm814, %v815, %v816
      %v818 = vrot.slane %v398, 3
      %v819 = vsel %vm814, %v816, %v818
      %v820 = vrot.slane %v399, 3
      %v821 = vsel %vm814, %v818, %v820
      %v841 = vunpack.c.l.b16 %v798
      %v842 = vunpack.c.l.b16 %v799
      %v843 = vunpack.c.l.b16 %v800
      %v844 = vunpack.c.l.b16 %v801
      %v845 = vunpack.c.l.b16 %v802
      %v846 = vunpack.c.l.b16 %v803
      %v847 = vunpack.c.l.b16 %v804
      %v848 = vunpack.c.l.b16 %v805
      %v849 = vunpack.c.l.b16 %v806
      %v850 = vunpack.c.l.b16 %v807
      %v851 = vunpack.c.l.b16 %v808
      %v852 = vunpack.c.l.b16 %v809
      %v853 = vunpack.c.l.b16 %v810
      %v854 = vunpack.c.l.b16 %v811
      %v855 = vunpack.c.l.b16 %v812
      %v856 = vunpack.c.l.b16 %v813
      %v857 = vpack.c.b16 %v842, %v841
      %v858 = vpack.c.b16 %v844, %v843
      %v859 = vpack.c.b16 %v846, %v845
      %v860 = vpack.c.b16 %v848, %v847
      %v861 = vpack.c.b16 %v850, %v849
      %v862 = vpack.c.b16 %v852, %v851
      %v863 = vpack.c.b16 %v854, %v853
      %v864 = vpack.c.b16 %v856, %v855
      %873 = vmatprep.subr.bf16.mxu0 0
      %874 = vmatpush1.bf16.msra.mxu0 %v864
      %875 = vmatprep.subr.bf16.mxu0 0
      %876 = vmatpush1.bf16.msra.mxu0 %v863
      %877 = vmatprep.subr.bf16.mxu0 0
      %878 = vmatpush1.bf16.msra.mxu0 %v862
      %879 = vmatprep.subr.bf16.mxu0 0
      %880 = vmatpush1.bf16.msra.mxu0 %v861
      %881 = vmatprep.subr.bf16.mxu0 0
      %882 = vmatpush1.bf16.msra.mxu0 %v860
      %883 = vmatprep.subr.bf16.mxu0 0
      %884 = vmatpush1.bf16.msra.mxu0 %v859
      %885 = vmatprep.subr.bf16.mxu0 0
      %886 = vmatpush1.bf16.msra.mxu0 %v858
      %887 = vmatprep.subr.bf16.mxu0 0
      %888 = vmatpush1.bf16.msra.mxu0 %v857
      %889 = vmatprep.subr.bf16.mxu0 0
      %890 = vmatpush2.bf16.msra.mxu0 0
      %891 = vmatprep.subr.bf16.mxu0 0
      %892 = vmatpush2.bf16.msra.mxu0 0
      %893 = vmatprep.subr.bf16.mxu0 0
      %894 = vmatpush2.bf16.msra.mxu0 0
      %895 = vmatprep.subr.bf16.mxu0 0
      %896 = vmatpush2.bf16.msra.mxu0 0
      %897 = vmatprep.subr.bf16.mxu0 0
      %898 = vmatpush2.bf16.msra.mxu0 0
      %899 = vmatprep.subr.bf16.mxu0 0
      %900 = vmatpush2.bf16.msra.mxu0 0
      %901 = vmatprep.subr.bf16.mxu0 0
      %902 = vmatpush2.bf16.msra.mxu0 0
      %903 = vmatprep.subr.bf16.mxu0 0
      %904 = vmatpush2.bf16.msra.mxu0 0
      %905 = vmatprep.mubr.bf16.mxu0 0
      %906 = vmatmul.mubr.bf16.gmra.mxu0 %v817
      %v907 = vpop.f32.mrf.mxu0
      %v908 = vadd.f32 0.0, %v907
      %v909 = vpop.f32.mrf.mxu0
      %v910 = vpop.f32.mrf.mxu0
      %v911 = vadd.f32 0.0, %v910
      %v912 = vpop.f32.mrf.mxu0
      %913 = vmatprep.mubr.bf16.mxu0 0
      %914 = vmatmul.mubr.bf16.gmra.mxu0 %v819
      %v915 = vpop.f32.mrf.mxu0
      %v916 = vadd.f32 0.0, %v915
      %v917 = vpop.f32.mrf.mxu0
      %v918 = vpop.f32.mrf.mxu0
      %v919 = vadd.f32 0.0, %v918
      %v920 = vpop.f32.mrf.mxu0
      %921 = vmatprep.mubr.bf16.mxu0 0
      %922 = vmatmul.mubr.bf16.gmra.mxu0 %v821
      %v923 = vpop.f32.mrf.mxu0
      %v924 = vadd.f32 0.0, %v923
      %v925 = vpop.f32.mrf.mxu0
      %v926 = vpop.f32.mrf.mxu0
      %v927 = vadd.f32 0.0, %v926
      %v928 = vpop.f32.mrf.mxu0
      %929 = vdwg.mxu0
      %v930 = vadd.f32 %v791, %v908
      %v931 = vadd.f32 %v792, %v911
      %v932 = vadd.f32 %v793, %v916
      %v933 = vadd.f32 %v794, %v919
      %v934 = vadd.f32 %v795, %v924
      %v935 = vadd.f32 %v796, %v927
      %s936 = scalar_lea.vmem %s2, 256
      %v937 = vld [vmem:[%s936] sm:$0xf]
      %v938 = vld [vmem:[%s936 + $0x4] sm:$0xf]
      %v939 = vld [vmem:[%s936 + $0x8] sm:$0xf]
      %v940 = vld [vmem:[%s936 + $0xc] sm:$0xf]
      %v941 = vld [vmem:[%s936 + $0x10] sm:$0xf]
      %v942 = vld [vmem:[%s936 + $0x14] sm:$0xf]
      %v943 = vld [vmem:[%s936 + $0x18] sm:$0xf]
      %v944 = vld [vmem:[%s936 + $0x1c] sm:$0xf]
      %v945 = vld [vmem:[%s936 + $0x20] sm:$0xf]
      %v946 = vld [vmem:[%s936 + $0x24] sm:$0xf]
      %v947 = vld [vmem:[%s936 + $0x28] sm:$0xf]
      %v948 = vld [vmem:[%s936 + $0x2c] sm:$0xf]
      %v949 = vld [vmem:[%s936 + $0x30] sm:$0xf]
      %v950 = vld [vmem:[%s936 + $0x34] sm:$0xf]
      %v951 = vld [vmem:[%s936 + $0x38] sm:$0xf]
      %v952 = vld [vmem:[%s936 + $0x3c] sm:$0xf]
      %vm953 = vcmask 1043456
      %v954 = vrot.slane %v396, 4
      %v955 = vrot.slane %v397, 4
      %v956 = vsel %vm953, %v954, %v955
      %v957 = vrot.slane %v398, 4
      %v958 = vsel %vm953, %v955, %v957
      %v959 = vrot.slane %v399, 4
      %v960 = vsel %vm953, %v957, %v959
      %v980 = vunpack.c.l.b16 %v937
      %v981 = vunpack.c.l.b16 %v938
      %v982 = vunpack.c.l.b16 %v939
      %v983 = vunpack.c.l.b16 %v940
      %v984 = vunpack.c.l.b16 %v941
      %v985 = vunpack.c.l.b16 %v942
      %v986 = vunpack.c.l.b16 %v943
      %v987 = vunpack.c.l.b16 %v944
      %v988 = vunpack.c.l.b16 %v945
      %v989 = vunpack.c.l.b16 %v946
      %v990 = vunpack.c.l.b16 %v947
      %v991 = vunpack.c.l.b16 %v948
      %v992 = vunpack.c.l.b16 %v949
      %v993 = vunpack.c.l.b16 %v950
      %v994 = vunpack.c.l.b16 %v951
      %v995 = vunpack.c.l.b16 %v952
      %v996 = vpack.c.b16 %v981, %v980
      %v997 = vpack.c.b16 %v983, %v982
      %v998 = vpack.c.b16 %v985, %v984
      %v999 = vpack.c.b16 %v987, %v986
      %v1000 = vpack.c.b16 %v989, %v988
      %v1001 = vpack.c.b16 %v991, %v990
      %v1002 = vpack.c.b16 %v993, %v992
      %v1003 = vpack.c.b16 %v995, %v994
      %1012 = vmatprep.subr.bf16.mxu0 0
      %1013 = vmatpush1.bf16.msra.mxu0 %v1003
      %1014 = vmatprep.subr.bf16.mxu0 0
      %1015 = vmatpush1.bf16.msra.mxu0 %v1002
      %1016 = vmatprep.subr.bf16.mxu0 0
      %1017 = vmatpush1.bf16.msra.mxu0 %v1001
      %1018 = vmatprep.subr.bf16.mxu0 0
      %1019 = vmatpush1.bf16.msra.mxu0 %v1000
      %1020 = vmatprep.subr.bf16.mxu0 0
      %1021 = vmatpush1.bf16.msra.mxu0 %v999
      %1022 = vmatprep.subr.bf16.mxu0 0
      %1023 = vmatpush1.bf16.msra.mxu0 %v998
      %1024 = vmatprep.subr.bf16.mxu0 0
      %1025 = vmatpush1.bf16.msra.mxu0 %v997
      %1026 = vmatprep.subr.bf16.mxu0 0
      %1027 = vmatpush1.bf16.msra.mxu0 %v996
      %1028 = vmatprep.subr.bf16.mxu0 0
      %1029 = vmatpush2.bf16.msra.mxu0 0
      %1030 = vmatprep.subr.bf16.mxu0 0
      %1031 = vmatpush2.bf16.msra.mxu0 0
      %1032 = vmatprep.subr.bf16.mxu0 0
      %1033 = vmatpush2.bf16.msra.mxu0 0
      %1034 = vmatprep.subr.bf16.mxu0 0
      %1035 = vmatpush2.bf16.msra.mxu0 0
      %1036 = vmatprep.subr.bf16.mxu0 0
      %1037 = vmatpush2.bf16.msra.mxu0 0
      %1038 = vmatprep.subr.bf16.mxu0 0
      %1039 = vmatpush2.bf16.msra.mxu0 0
      %1040 = vmatprep.subr.bf16.mxu0 0
      %1041 = vmatpush2.bf16.msra.mxu0 0
      %1042 = vmatprep.subr.bf16.mxu0 0
      %1043 = vmatpush2.bf16.msra.mxu0 0
      %1044 = vmatprep.mubr.bf16.mxu0 0
      %1045 = vmatmul.mubr.bf16.gmra.mxu0 %v956
      %v1046 = vpop.f32.mrf.mxu0
      %v1047 = vadd.f32 0.0, %v1046
      %v1048 = vpop.f32.mrf.mxu0
      %v1049 = vpop.f32.mrf.mxu0
      %v1050 = vadd.f32 0.0, %v1049
      %v1051 = vpop.f32.mrf.mxu0
      %1052 = vmatprep.mubr.bf16.mxu0 0
      %1053 = vmatmul.mubr.bf16.gmra.mxu0 %v958
      %v1054 = vpop.f32.mrf.mxu0
      %v1055 = vadd.f32 0.0, %v1054
      %v1056 = vpop.f32.mrf.mxu0
      %v1057 = vpop.f32.mrf.mxu0
      %v1058 = vadd.f32 0.0, %v1057
      %v1059 = vpop.f32.mrf.mxu0
      %1060 = vmatprep.mubr.bf16.mxu0 0
      %1061 = vmatmul.mubr.bf16.gmra.mxu0 %v960
      %v1062 = vpop.f32.mrf.mxu0
      %v1063 = vadd.f32 0.0, %v1062
      %v1064 = vpop.f32.mrf.mxu0
      %v1065 = vpop.f32.mrf.mxu0
      %v1066 = vadd.f32 0.0, %v1065
      %v1067 = vpop.f32.mrf.mxu0
      %1068 = vdwg.mxu0
      %v1069 = vadd.f32 %v930, %v1047
      %v1070 = vadd.f32 %v931, %v1050
      %v1071 = vadd.f32 %v932, %v1055
      %v1072 = vadd.f32 %v933, %v1058
      %v1073 = vadd.f32 %v934, %v1063
      %v1074 = vadd.f32 %v935, %v1066
      %v1075 = vld [vmem:[%s3] sm:$0x1]
      %v1077 = vlaneseq
      %v1078 = vshrl.u32 %v1077, 7
      %v1079 = vsub.s32 0, %v1078
      %v1080 = vrot.slane %v1075, %v1079
      %v1082 = vadd.f32 %v1069, %v1080
      %v1083 = vadd.f32 %v1070, %v1080
      %v1084 = vadd.f32 %v1071, %v1080
      %v1085 = vadd.f32 %v1072, %v1080
      %v1086 = vadd.f32 %v1073, %v1080
      %v1087 = vadd.f32 %v1074, %v1080
      %v1088 = vmax.f32 %v1082, 0.0
      %v1089 = vmax.f32 %v1083, 0.0
      %v1090 = vmax.f32 %v1084, 0.0
      %v1091 = vmax.f32 %v1085, 0.0
      %v1092 = vmax.f32 %v1086, 0.0
      %v1093 = vmax.f32 %v1087, 0.0
      %v1094 = vpack.c.bf16 %v1089, %v1088
      %v1095 = vpack.c.bf16 %v1091, %v1090
      %v1096 = vpack.c.bf16 %v1093, %v1092
      %v1100 = vunpack.c.l.b16 %v1094
      %v1101 = vunpack.c.h.b16 %v1094
      %v1102 = vunpack.c.l.b16 %v1095
      %v1103 = vunpack.c.h.b16 %v1095
      %v1104 = vunpack.c.l.b16 %v1096
      %v1105 = vunpack.c.h.b16 %v1096
      %v1106 = vpack.c.b16 %v1100, %v1100
      %v1107 = vpack.c.b16 %v1101, %v1101
      %v1108 = vpack.c.b16 %v1102, %v1102
      %v1109 = vpack.c.b16 %v1103, %v1103
      %v1110 = vpack.c.b16 %v1104, %v1104
      %v1111 = vpack.c.b16 %v1105, %v1105
      %1118 = vst [vmem:[%s296] sm:$0xf] %v1106
      %1119 = vst [vmem:[%s296 + $0x4] sm:$0xf] %v1107
      %1120 = vst [vmem:[%s296 + $0x8] sm:$0xf] %v1108
      %1121 = vst [vmem:[%s296 + $0xc] sm:$0xf] %v1109
      %1122 = vst [vmem:[%s296 + $0x10] sm:$0xf] %v1110
      %1123 = vst [vmem:[%s296 + $0x14] sm:$0xf] %v1111
      %s1124 = sld [smem:[#allocation3 + %s26]]
      %v1125 = vstv %s1124
      %vm1126 = vcmp.lt.s32.totalorder %v319, %v1125
      %vm1127 = vcmp.lt.s32.totalorder %v320, %v1125
      %vm1128 = vcmp.lt.s32.totalorder %v321, %v1125
      %vm1129 = vcmp.lt.s32.totalorder %v322, %v1125
      %vm1130 = vcmp.lt.s32.totalorder %v323, %v1125
      %vm1131 = vcmp.lt.s32.totalorder %v324, %v1125
      %v1132 = vsel %vm1126, 1, 0
      %v1133 = vsel %vm1127, 1, 0
      %v1134 = vsel %vm1128, 1, 0
      %v1135 = vsel %vm1129, 1, 0
      %v1136 = vsel %vm1130, 1, 0
      %v1137 = vsel %vm1131, 1, 0
      %v1138 = vcvt.s32.f32 %v1132
      %v1139 = vcvt.s32.f32 %v1133
      %v1140 = vcvt.s32.f32 %v1134
      %v1141 = vcvt.s32.f32 %v1135
      %v1142 = vcvt.s32.f32 %v1136
      %v1143 = vcvt.s32.f32 %v1137
      %v1144 = vmul.f32 %v1088, %v1138
      %v1145 = vmul.f32 %v1089, %v1139
      %v1146 = vmul.f32 %v1090, %v1140
      %v1147 = vmul.f32 %v1091, %v1141
      %v1148 = vmul.f32 %v1092, %v1142
      %v1149 = vmul.f32 %v1093, %v1143
      %v1150 = vadd.f32 %v1144, %v1145
      %v1151 = vadd.f32 %v1150, %v1146
      %v1152 = vadd.f32 %v1151, %v1147
      %v1153 = vadd.f32 %v1152, %v1148
      %v1154 = vadd.f32 %v1153, %v1149
      %v1155 = vrot.slane %v1154, 4
      %v1156 = vadd.f32 %v1154, %v1155
      %v1157 = vrot.slane %v1156, 2
      %v1158 = vadd.f32 %v1156, %v1157
      %v1159 = vrot.slane %v1158, 1
      %v1160 = vadd.f32 %v1158, %v1159
      %1161 = vst [vmem:[%s299] sm:$0x1] %v1160
      %v1162 = vmul.f32 %v1144, %v1088
      %v1163 = vmul.f32 %v1145, %v1089
      %v1164 = vmul.f32 %v1146, %v1090
      %v1165 = vmul.f32 %v1147, %v1091
      %v1166 = vmul.f32 %v1148, %v1092
      %v1167 = vmul.f32 %v1149, %v1093
      %v1168 = vadd.f32 %v1162, %v1163
      %v1169 = vadd.f32 %v1168, %v1164
      %v1170 = vadd.f32 %v1169, %v1165
      %v1171 = vadd.f32 %v1170, %v1166
      %v1172 = vadd.f32 %v1171, %v1167
      %v1173 = vrot.slane %v1172, 4
      %v1174 = vadd.f32 %v1172, %v1173
      %v1175 = vrot.slane %v1174, 2
      %v1176 = vadd.f32 %v1174, %v1175
      %v1177 = vrot.slane %v1176, 1
      %v1178 = vadd.f32 %v1176, %v1177
      %1179 = vst [vmem:[%s302] sm:$0x1] %v1178
      %p1180 = scmp.lt.s32.totalorder %s26, 3
      %s1181 = scalar_select %p1180, %s26, 3
      %s1182 = smul.addr %s1181, 6
      %s1183 = smul.addr %s1182, 4
      %s1184 = scalar_lea.vmem %s6, %s1183
      %p1185 = scmp.lt.s32.totalorder %s26, 3
      %s1186 = scalar_select %p1185, %s26, 3
      %s1187 = scalar_lea.vmem %s7, %s1186
      %p1188 = scmp.lt.s32.totalorder %s26, 3
      %s1189 = scalar_select %p1188, %s26, 3
      %s1190 = scalar_lea.vmem %s8, %s1189
      // Predicated region
      $region41: #{tdnn_nas_forward.9} parent=39 // pred_check
        %p1191 = pneg %p154
      $region42: #{tdnn_nas_forward.9} parent=39 // pred_check_branch
        %1193 = sbr.rel (%p1191) target = $region44
      $region43: #{tdnn_nas_forward.9} parent=39 // pred_region
        _
      $region44: #{tdnn_nas_forward.9} parent=39 // pred_fallthru
        _
      // Predicated region
      $region45: #{tdnn_nas_forward.9} parent=39 // pred_check
        %p1194 = pneg %p180
      $region46: #{tdnn_nas_forward.9} parent=39 // pred_check_branch
        %1196 = sbr.rel (%p1194) target = $region48
      $region47: #{tdnn_nas_forward.9} parent=39 // pred_region
        _
      $region48: #{tdnn_nas_forward.9} parent=39 // pred_fallthru
        _
      // Predicated region
      $region49: #{tdnn_nas_forward.9} parent=39 // pred_check
        %p1197 = pneg %p206
      $region50: #{tdnn_nas_forward.9} parent=39 // pred_check_branch
        %1199 = sbr.rel (%p1197) target = $region52
      $region51: #{tdnn_nas_forward.9} parent=39 // pred_region
        _
      $region52: #{tdnn_nas_forward.9} parent=39 // pred_fallthru
        _
    $region40: #{tdnn_nas_forward.9} parent=5 // pred_fallthru
      _
    %p1200 = scmp.le.s32.totalorder 2, %s21
    // Predicated region
    $region53: #{tdnn_nas_forward.9} parent=5 // pred_check
      %p1201 = pneg %p1200
    $region54: #{tdnn_nas_forward.9} parent=5 // pred_check_branch
      %1203 = sbr.rel (%p1201) target = $region56
    $region55: #{tdnn_nas_forward.9} parent=5 // pred_region
      %s1204 = ssub.s32 %s21, 2
      // Predicated region
      $region57: #{tdnn_nas_forward.9} parent=55 // pred_check
        %p1205 = pneg %p160
      $region58: #{tdnn_nas_forward.9} parent=55 // pred_check_branch
        %1207 = sbr.rel (%p1205) target = $region60
      $region59: #{tdnn_nas_forward.9} parent=55 // pred_region
        %p1208 = scmp.lt.s32.totalorder %s27, 3
        %s1209 = scalar_select %p1208, %s27, 3
        %s1210 = smul.addr %s1209, 6
        %s1211 = smul.addr %s1210, 4
        %s1212 = scalar_lea.vmem %s6, %s1211
      $region60: #{tdnn_nas_forward.9} parent=55 // pred_fallthru
        _
      // Predicated region
      $region61: #{tdnn_nas_forward.9} parent=55 // pred_check
        %p1213 = pneg %p186
      $region62: #{tdnn_nas_forward.9} parent=55 // pred_check_branch
        %1215 = sbr.rel (%p1213) target = $region64
      $region63: #{tdnn_nas_forward.9} parent=55 // pred_region
        %p1216 = scmp.lt.s32.totalorder %s27, 3
        %s1217 = scalar_select %p1216, %s27, 3
        %s1218 = scalar_lea.vmem %s7, %s1217
      $region64: #{tdnn_nas_forward.9} parent=55 // pred_fallthru
        _
      // Predicated region
      $region65: #{tdnn_nas_forward.9} parent=55 // pred_check
        %p1219 = pneg %p212
      $region66: #{tdnn_nas_forward.9} parent=55 // pred_check_branch
        %1221 = sbr.rel (%p1219) target = $region68
      $region67: #{tdnn_nas_forward.9} parent=55 // pred_region
        %p1222 = scmp.lt.s32.totalorder %s27, 3
        %s1223 = scalar_select %p1222, %s27, 3
        %s1224 = scalar_lea.vmem %s8, %s1223
      $region68: #{tdnn_nas_forward.9} parent=55 // pred_fallthru
        _
    $region56: #{tdnn_nas_forward.9} parent=5 // pred_fallthru
      _
  $region6: #{tdnn_nas_forward.9} parent=0 // loop_footer
    %s25 = sadd.s32 1, %s21
  $region7: #{tdnn_nas_forward.9} parent=0 // loop_footer_branch
    %20 = sbr.rel target = $region3
  $region8: #{tdnn_nas_forward.9} parent=0 // loop_exit
    _

// kernel: tdnn_nas_forward.11
$region0: #{tdnn_nas_forward.11}
  #allocation0 [shape = 'u32[]', space=smem, size = 0x4, offset = 0x4, fixed_abs, tag = 'smem constant byte address 0x4 - core index']
  #allocation1 [shape = 'u32[144,128]{1,0:T(1,128)}', space=vmem, size = 0x12000, scoped, tag = 'internal scratch']
  #allocation2 [shape = 's32[1]{0}', space=sflag, size = 0x4, scoped, tag = 'scoped memory for tdnn_nas_forward.11']
  #allocation3 [shape = 'u8[512]{0}', space=smem, size = 0x200, scoped, tag = 'prefetched SMEM operand 0']
  %s0 = inlined_call_operand.vmem [shape: s32[4], index: 0, kind: input, shape index: {}]
  %s1 = inlined_call_operand.vmem [shape: bf16[4,16,384], index: 1, kind: input, shape index: {}]
  %s2 = inlined_call_operand.vmem [shape: bf16[1,384,128], index: 2, kind: input, shape index: {}]
  %s3 = inlined_call_operand.vmem [shape: f32[1,128], index: 3, kind: input, shape index: {}]
  %s4 = inlined_call_operand.vmem [shape: f32[1,384], index: 4, kind: input, shape index: {}]
  %s5 = inlined_call_operand.vmem [shape: f32[1,384], index: 5, kind: input, shape index: {}]
  %s6 = inlined_call_operand.vmem [shape: bf16[4,16,128], index: 6, kind: output, shape index: {0}]
  %s7 = inlined_call_operand.vmem [shape: f32[4,1,128], index: 7, kind: output, shape index: {1}]
  %s8 = inlined_call_operand.vmem [shape: f32[4,1,128], index: 8, kind: output, shape index: {2}]
  %9 = xla_tuple %s6, %s7, %s8
  %s10 = sld [smem:[#allocation0]]
  $region69: #{tdnn_nas_forward.11} parent=0
    _
  %s12 = ssub.s32 1, %s10
  %s13 = scalar_select 0, %s12, %s10
  %s14 = sshll.u32 %s0, 4
  %s15 = int_to_ptr.vmem [resolvable:$true] %s14
  %17 = dma.vmem_to_smem %s15, 16, [#allocation3], [#allocation2]
  %18 = dma.done [#allocation2], 16
  %19 = sfence
  loop: start=0, step=1, limit=6
  $region2: #{tdnn_nas_forward.11} parent=0 // loop_pre_header
    _
  $region3: #{tdnn_nas_forward.11} parent=0 // loop_header
    %s21 = sphi 0, %s25
    %p22 = scmp.ge.s32.totalorder %s21, 6
    %s31 = sphi 0, %s33
    %s34 = sphi 0, %s31
    %s35 = sphi 0, %s34
    %s51 = sphi 0, %s35
    %s55 = sphi 0, %s55
    %s57 = sphi 0, %s55
    %s58 = sphi 0, %s57
    %s72 = sphi 0, %s58
    %s76 = sphi 0, %s76
    %s78 = sphi 0, %s76
    %s79 = sphi 0, %s78
    %s93 = sphi 0, %s79
    %s97 = sphi 0, %s97
    %s99 = sphi 0, %s97
    %s100 = sphi 0, %s99
    %s114 = sphi 0, %s100
    %s118 = sphi 0, %s118
    %s120 = sphi 0, %s118
    %s121 = sphi 0, %s120
    %s135 = sphi 0, %s121
    %s141 = sphi 0, %s143
    %s144 = sphi 0, %s141
    %s145 = sphi 0, %s144
    %s161 = sphi 0, %s145
    %s167 = sphi 0, %s169
    %s170 = sphi 0, %s167
    %s171 = sphi 0, %s170
    %s187 = sphi 0, %s171
    %s193 = sphi 0, %s195
    %s196 = sphi 0, %s193
    %s197 = sphi 0, %s196
    %s213 = sphi 0, %s197
  $region4: #{tdnn_nas_forward.11} parent=0 // loop_header_branch
    %24 = sbr.rel (%p22) target = $region8
  $region5: #{tdnn_nas_forward.11} parent=0 // loop_body
    %s26 = ssub.s32 %s21, 1
    %s27 = ssub.s32 %s21, 2
    %s28 = sadd.s32 %s21, 1
    %s29 = ssub.s32 %s21, %s28
    %p30 = scmp.eq.s32.totalorder %s29, 0
    %s32 = sadd.s32 %s31, 1
    %s33 = scalar_select %p30, %s31, %s32
    %p36 = pneg %p30
    %p37 = scmp.eq.s32.totalorder %s21, 3
    %p38 = por %p36, %p37
    %p39 = scmp.ne.s32.totalorder %s31, %s34
    %p40 = scmp.eq.s32.totalorder %s21, 0
    %p41 = por %p39, %p40
    %p42 = scmp.ne.s32.totalorder %s31, %s34
    %p43 = scmp.eq.s32.totalorder %s26, 3
    %p44 = por %p42, %p43
    %p45 = scmp.ne.s32.totalorder %s34, %s35
    %p46 = scmp.eq.s32.totalorder %s26, 0
    %p47 = por %p45, %p46
    %p48 = scmp.ne.s32.totalorder %s34, %s35
    %p49 = scmp.eq.s32.totalorder %s27, 3
    %p50 = por %p48, %p49
    %p52 = scmp.ne.s32.totalorder %s35, %s51
    %p53 = scmp.eq.s32.totalorder %s27, 0
    %p54 = por %p52, %p53
    %s56 = sadd.s32 %s55, 1
    %p59 = scmp.eq.s32.totalorder %s21, 3
    %p60 = scmp.ne.s32.totalorder %s55, %s57
    %p61 = scmp.eq.s32.totalorder %s21, 0
    %p62 = por %p60, %p61
    %p63 = scmp.ne.s32.totalorder %s55, %s57
    %p64 = scmp.eq.s32.totalorder %s26, 3
    %p65 = por %p63, %p64
    %p66 = scmp.ne.s32.totalorder %s57, %s58
    %p67 = scmp.eq.s32.totalorder %s26, 0
    %p68 = por %p66, %p67
    %p69 = scmp.ne.s32.totalorder %s57, %s58
    %p70 = scmp.eq.s32.totalorder %s27, 3
    %p71 = por %p69, %p70
    %p73 = scmp.ne.s32.totalorder %s58, %s72
    %p74 = scmp.eq.s32.totalorder %s27, 0
    %p75 = por %p73, %p74
    %s77 = sadd.s32 %s76, 1
    %p80 = scmp.eq.s32.totalorder %s21, 3
    %p81 = scmp.ne.s32.totalorder %s76, %s78
    %p82 = scmp.eq.s32.totalorder %s21, 0
    %p83 = por %p81, %p82
    %p84 = scmp.ne.s32.totalorder %s76, %s78
    %p85 = scmp.eq.s32.totalorder %s26, 3
    %p86 = por %p84, %p85
    %p87 = scmp.ne.s32.totalorder %s78, %s79
    %p88 = scmp.eq.s32.totalorder %s26, 0
    %p89 = por %p87, %p88
    %p90 = scmp.ne.s32.totalorder %s78, %s79
    %p91 = scmp.eq.s32.totalorder %s27, 3
    %p92 = por %p90, %p91
    %p94 = scmp.ne.s32.totalorder %s79, %s93
    %p95 = scmp.eq.s32.totalorder %s27, 0
    %p96 = por %p94, %p95
    %s98 = sadd.s32 %s97, 1
    %p101 = scmp.eq.s32.totalorder %s21, 3
    %p102 = scmp.ne.s32.totalorder %s97, %s99
    %p103 = scmp.eq.s32.totalorder %s21, 0
    %p104 = por %p102, %p103
    %p105 = scmp.ne.s32.totalorder %s97, %s99
    %p106 = scmp.eq.s32.totalorder %s26, 3
    %p107 = por %p105, %p106
    %p108 = scmp.ne.s32.totalorder %s99, %s100
    %p109 = scmp.eq.s32.totalorder %s26, 0
    %p110 = por %p108, %p109
    %p111 = scmp.ne.s32.totalorder %s99, %s100
    %p112 = scmp.eq.s32.totalorder %s27, 3
    %p113 = por %p111, %p112
    %p115 = scmp.ne.s32.totalorder %s100, %s114
    %p116 = scmp.eq.s32.totalorder %s27, 0
    %p117 = por %p115, %p116
    %s119 = sadd.s32 %s118, 1
    %p122 = scmp.eq.s32.totalorder %s21, 3
    %p123 = scmp.ne.s32.totalorder %s118, %s120
    %p124 = scmp.eq.s32.totalorder %s21, 0
    %p125 = por %p123, %p124
    %p126 = scmp.ne.s32.totalorder %s118, %s120
    %p127 = scmp.eq.s32.totalorder %s26, 3
    %p128 = por %p126, %p127
    %p129 = scmp.ne.s32.totalorder %s120, %s121
    %p130 = scmp.eq.s32.totalorder %s26, 0
    %p131 = por %p129, %p130
    %p132 = scmp.ne.s32.totalorder %s120, %s121
    %p133 = scmp.eq.s32.totalorder %s27, 3
    %p134 = por %p132, %p133
    %p136 = scmp.ne.s32.totalorder %s121, %s135
    %p137 = scmp.eq.s32.totalorder %s27, 0
    %p138 = por %p136, %p137
    %s139 = ssub.s32 %s21, %s28
    %p140 = scmp.eq.s32.totalorder %s139, 0
    %s142 = sadd.s32 %s141, 1
    %s143 = scalar_select %p140, %s141, %s142
    %p146 = pneg %p140
    %p147 = scmp.eq.s32.totalorder %s21, 3
    %p148 = por %p146, %p147
    %p149 = scmp.ne.s32.totalorder %s141, %s144
    %p150 = scmp.eq.s32.totalorder %s21, 0
    %p151 = por %p149, %p150
    %p152 = scmp.ne.s32.totalorder %s141, %s144
    %p153 = scmp.eq.s32.totalorder %s26, 3
    %p154 = por %p152, %p153
    %p155 = scmp.ne.s32.totalorder %s144, %s145
    %p156 = scmp.eq.s32.totalorder %s26, 0
    %p157 = por %p155, %p156
    %p158 = scmp.ne.s32.totalorder %s144, %s145
    %p159 = scmp.eq.s32.totalorder %s27, 3
    %p160 = por %p158, %p159
    %p162 = scmp.ne.s32.totalorder %s145, %s161
    %p163 = scmp.eq.s32.totalorder %s27, 0
    %p164 = por %p162, %p163
    %s165 = ssub.s32 %s21, %s28
    %p166 = scmp.eq.s32.totalorder %s165, 0
    %s168 = sadd.s32 %s167, 1
    %s169 = scalar_select %p166, %s167, %s168
    %p172 = pneg %p166
    %p173 = scmp.eq.s32.totalorder %s21, 3
    %p174 = por %p172, %p173
    %p175 = scmp.ne.s32.totalorder %s167, %s170
    %p176 = scmp.eq.s32.totalorder %s21, 0
    %p177 = por %p175, %p176
    %p178 = scmp.ne.s32.totalorder %s167, %s170
    %p179 = scmp.eq.s32.totalorder %s26, 3
    %p180 = por %p178, %p179
    %p181 = scmp.ne.s32.totalorder %s170, %s171
    %p182 = scmp.eq.s32.totalorder %s26, 0
    %p183 = por %p181, %p182
    %p184 = scmp.ne.s32.totalorder %s170, %s171
    %p185 = scmp.eq.s32.totalorder %s27, 3
    %p186 = por %p184, %p185
    %p188 = scmp.ne.s32.totalorder %s171, %s187
    %p189 = scmp.eq.s32.totalorder %s27, 0
    %p190 = por %p188, %p189
    %s191 = ssub.s32 %s21, %s28
    %p192 = scmp.eq.s32.totalorder %s191, 0
    %s194 = sadd.s32 %s193, 1
    %s195 = scalar_select %p192, %s193, %s194
    %p198 = pneg %p192
    %p199 = scmp.eq.s32.totalorder %s21, 3
    %p200 = por %p198, %p199
    %p201 = scmp.ne.s32.totalorder %s193, %s196
    %p202 = scmp.eq.s32.totalorder %s21, 0
    %p203 = por %p201, %p202
    %p204 = scmp.ne.s32.totalorder %s193, %s196
    %p205 = scmp.eq.s32.totalorder %s26, 3
    %p206 = por %p204, %p205
    %p207 = scmp.ne.s32.totalorder %s196, %s197
    %p208 = scmp.eq.s32.totalorder %s26, 0
    %p209 = por %p207, %p208
    %p210 = scmp.ne.s32.totalorder %s196, %s197
    %p211 = scmp.eq.s32.totalorder %s27, 3
    %p212 = por %p210, %p211
    %p214 = scmp.ne.s32.totalorder %s197, %s213
    %p215 = scmp.eq.s32.totalorder %s27, 0
    %p216 = por %p214, %p215
    %p217 = scmp.le.s32.totalorder 1, %s21
    %p218 = scmp.lt.s32.totalorder %s21, 5
    %p219 = pnand %p217, %p218
    %p220 = pneg %p219
    // Predicated region
    $region9: #{tdnn_nas_forward.11} parent=5 // pred_check
      _
    $region10: #{tdnn_nas_forward.11} parent=5 // pred_check_branch
      %222 = sbr.rel (%p219) target = $region12
    $region11: #{tdnn_nas_forward.11} parent=5 // pred_region
      %s223 = ssub.s32 %s21, 1
      // Predicated region
      $region13: #{tdnn_nas_forward.11} parent=11 // pred_check
        %p224 = pneg %p68
      $region14: #{tdnn_nas_forward.11} parent=11 // pred_check_branch
        %226 = sbr.rel (%p224) target = $region16
      $region15: #{tdnn_nas_forward.11} parent=11 // pred_region
        _
      $region16: #{tdnn_nas_forward.11} parent=11 // pred_fallthru
        _
      // Predicated region
      $region17: #{tdnn_nas_forward.11} parent=11 // pred_check
        %p227 = pneg %p89
      $region18: #{tdnn_nas_forward.11} parent=11 // pred_check_branch
        %229 = sbr.rel (%p227) target = $region20
      $region19: #{tdnn_nas_forward.11} parent=11 // pred_region
        _
      $region20: #{tdnn_nas_forward.11} parent=11 // pred_fallthru
        _
      // Predicated region
      $region21: #{tdnn_nas_forward.11} parent=11 // pred_check
        %p230 = pneg %p110
      $region22: #{tdnn_nas_forward.11} parent=11 // pred_check_branch
        %232 = sbr.rel (%p230) target = $region24
      $region23: #{tdnn_nas_forward.11} parent=11 // pred_region
        _
      $region24: #{tdnn_nas_forward.11} parent=11 // pred_fallthru
        _
      // Predicated region
      $region25: #{tdnn_nas_forward.11} parent=11 // pred_check
        %p233 = pneg %p131
      $region26: #{tdnn_nas_forward.11} parent=11 // pred_check_branch
        %235 = sbr.rel (%p233) target = $region28
      $region27: #{tdnn_nas_forward.11} parent=11 // pred_region
        _
      $region28: #{tdnn_nas_forward.11} parent=11 // pred_fallthru
        _
    $region12: #{tdnn_nas_forward.11} parent=5 // pred_fallthru
      _
    %p236 = scmp.lt.s32.totalorder %s21, 4
    // Predicated region
    $region29: #{tdnn_nas_forward.11} parent=5 // pred_check
      %p237 = pneg %p236
    $region30: #{tdnn_nas_forward.11} parent=5 // pred_check_branch
      %239 = sbr.rel (%p237) target = $region32
    $region31: #{tdnn_nas_forward.11} parent=5 // pred_region
      // Predicated region
      $region33: #{tdnn_nas_forward.11} parent=31 // pred_check
        %p240 = pneg %p41
      $region34: #{tdnn_nas_forward.11} parent=31 // pred_check_branch
        %242 = sbr.rel (%p240) target = $region36
      $region35: #{tdnn_nas_forward.11} parent=31 // pred_region
        %p243 = scmp.lt.s32.totalorder %s21, 3
        %s244 = scalar_select %p243, %s21, 3
        %s245 = smul.addr %s244, 6
        %s246 = smul.addr %s245, 4
        %s247 = scalar_lea.vmem %s1, %s246
      $region36: #{tdnn_nas_forward.11} parent=31 // pred_fallthru
        _
    $region32: #{tdnn_nas_forward.11} parent=5 // pred_fallthru
      _
    %p248 = scmp.le.s32.totalorder 1, %s21
    %p249 = scmp.lt.s32.totalorder %s21, 5
    %p250 = pnand %p248, %p249
    %p251 = pneg %p250
    // Predicated region
    $region37: #{tdnn_nas_forward.11} parent=5 // pred_check
      _
    $region38: #{tdnn_nas_forward.11} parent=5 // pred_check_branch
      %253 = sbr.rel (%p250) target = $region40
    $region39: #{tdnn_nas_forward.11} parent=5 // pred_region
      %s254 = ssub.s32 %s21, 1
      %p255 = scmp.lt.s32.totalorder %s26, 3
      %s256 = scalar_select %p255, %s26, 3
      %s257 = smul.addr %s256, 6
      %s258 = smul.addr %s257, 4
      %s259 = scalar_lea.vmem %s1, %s258
      %p260 = pneg %p47
      %p261 = pneg %p44
      %p262 = pneg %p68
      %p263 = pneg %p65
      %p264 = pneg %p89
      %p265 = pneg %p86
      %p266 = pneg %p110
      %p267 = pneg %p107
      %p268 = pneg %p131
      %p269 = pneg %p128
      %p270 = pneg %p157
      %p271 = pneg %p154
      %p272 = scmp.lt.s32.totalorder %s26, 3
      %s273 = scalar_select %p272, %s26, 3
      %s274 = smul.addr %s273, 2
      %s275 = smul.addr %s274, 4
      %s276 = scalar_lea.vmem %s6, %s275
      %p277 = pneg %p183
      %p278 = pneg %p180
      %p279 = scmp.lt.s32.totalorder %s26, 3
      %s280 = scalar_select %p279, %s26, 3
      %s281 = scalar_lea.vmem %s7, %s280
      %p282 = pneg %p209
      %p283 = pneg %p206
      %p284 = scmp.lt.s32.totalorder %s26, 3
      %s285 = scalar_select %p284, %s26, 3
      %s286 = scalar_lea.vmem %s8, %s285
      %p287 = scmp.lt.s32.totalorder %s26, 3
      %s288 = scalar_select %p287, %s26, 3
      %s289 = smul.addr %s288, 6
      %s290 = smul.addr %s289, 4
      %s291 = scalar_lea.vmem %s1, %s290
      %p292 = scmp.lt.s32.totalorder %s26, 3
      %s293 = scalar_select %p292, %s26, 3
      %s294 = smul.addr %s293, 2
      %s295 = smul.addr %s294, 4
      %s296 = scalar_lea.vmem %s6, %s295
      %p297 = scmp.lt.s32.totalorder %s26, 3
      %s298 = scalar_select %p297, %s26, 3
      %s299 = scalar_lea.vmem %s7, %s298
      %p300 = scmp.lt.s32.totalorder %s26, 3
      %s301 = scalar_select %p300, %s26, 3
      %s302 = scalar_lea.vmem %s8, %s301
      %v304 = vld [vmem:[%s291] sm:$0xff]
      %v305 = vld [vmem:[%s291 + $0x8] sm:$0xf]
      %v306 = vld [vmem:[%s291 + $0xc] sm:$0xff]
      %v307 = vld [vmem:[%s291 + $0x14] sm:$0xf]
      %v308 = vunpack.c.l.bf16 %v304
      %v309 = vunpack.c.h.bf16 %v304
      %v310 = vunpack.c.l.bf16 %v305
      %v311 = vunpack.c.l.bf16 %v306
      %v312 = vunpack.c.h.bf16 %v306
      %v313 = vunpack.c.l.bf16 %v307
      %v314 = vlaneseq
      %v315 = vshrl.u32 %v314, 7
      %v316 = vadd.s32 %v315, 8
      %vm317 = vcmp.ge.s32.totalorder %v315, 0
      %vm318 = vcmp.ge.s32.totalorder %v316, 0
      %vm319 = vcmp.lt.s32.totalorder %v315, 16
      %vm320 = vcmp.lt.s32.totalorder %v316, 16
      %vm321 = vmand %vm317, %vm319
      %vm322 = vmand %vm318, %vm320
      %v323 = vld [vmem:[%s4] sm:$0x7]
      %v325 = vlaneseq
      %v326 = vshrl.u32 %v325, 7
      %v327 = vsub.s32 0, %v326
      %v328 = vrot.slane %v323, %v327
      %v329 = vlaneseq
      %v330 = vshrl.u32 %v329, 7
      %v331 = vsub.s32 1, %v330
      %v332 = vrot.slane %v323, %v331
      %v333 = vlaneseq
      %v334 = vshrl.u32 %v333, 7
      %v335 = vsub.s32 2, %v334
      %v336 = vrot.slane %v323, %v335
      %v340 = vmul.f32 %v308, %v328
      %v341 = vmul.f32 %v309, %v332
      %v342 = vmul.f32 %v310, %v336
      %v343 = vmul.f32 %v311, %v328
      %v344 = vmul.f32 %v312, %v332
      %v345 = vmul.f32 %v313, %v336
      %v346 = vld [vmem:[%s5] sm:$0x7]
      %v348 = vlaneseq
      %v349 = vshrl.u32 %v348, 7
      %v350 = vsub.s32 0, %v349
      %v351 = vrot.slane %v346, %v350
      %v352 = vlaneseq
      %v353 = vshrl.u32 %v352, 7
      %v354 = vsub.s32 1, %v353
      %v355 = vrot.slane %v346, %v354
      %v356 = vlaneseq
      %v357 = vshrl.u32 %v356, 7
      %v358 = vsub.s32 2, %v357
      %v359 = vrot.slane %v346, %v358
      %v363 = vadd.f32 %v340, %v351
      %v364 = vadd.f32 %v341, %v355
      %v365 = vadd.f32 %v342, %v359
      %v366 = vadd.f32 %v343, %v351
      %v367 = vadd.f32 %v344, %v355
      %v368 = vadd.f32 %v345, %v359
      %v369 = vsel %vm321, 1, 0
      %v370 = vsel %vm322, 1, 0
      %vm371 = vcmp.eq.s32.totalorder %v369, 1
      %vm372 = vcmp.eq.s32.totalorder %v370, 1
      %v373 = vsel %vm371, %v363, 0.0
      %v374 = vsel %vm371, %v364, 0.0
      %v375 = vsel %vm371, %v365, 0.0
      %v376 = vsel %vm372, %v366, 0.0
      %v377 = vsel %vm372, %v367, 0.0
      %v378 = vsel %vm372, %v368, 0.0
      %v379 = vpack.c.bf16 %v376, %v373
      %v380 = vpack.c.bf16 %v377, %v374
      %v381 = vpack.c.bf16 %v378, %v375
      %v382 = vld [vmem:[%s2] sm:$0xf]
      %v383 = vld [vmem:[%s2 + $0x4] sm:$0xf]
      %v384 = vld [vmem:[%s2 + $0x8] sm:$0xf]
      %v385 = vld [vmem:[%s2 + $0xc] sm:$0xf]
      %v386 = vld [vmem:[%s2 + $0x10] sm:$0xf]
      %v387 = vld [vmem:[%s2 + $0x14] sm:$0xf]
      %v388 = vld [vmem:[%s2 + $0x18] sm:$0xf]
      %v389 = vld [vmem:[%s2 + $0x1c] sm:$0xf]
      %v390 = vld [vmem:[%s2 + $0x20] sm:$0xf]
      %v391 = vld [vmem:[%s2 + $0x24] sm:$0xf]
      %v392 = vld [vmem:[%s2 + $0x28] sm:$0xf]
      %v393 = vld [vmem:[%s2 + $0x2c] sm:$0xf]
      %v394 = vld [vmem:[%s2 + $0x30] sm:$0xf]
      %v395 = vld [vmem:[%s2 + $0x34] sm:$0xf]
      %v396 = vld [vmem:[%s2 + $0x38] sm:$0xf]
      %v397 = vld [vmem:[%s2 + $0x3c] sm:$0xf]
      %v398 = vld [vmem:[%s2 + $0x40] sm:$0xf]
      %v399 = vld [vmem:[%s2 + $0x44] sm:$0xf]
      %v400 = vld [vmem:[%s2 + $0x48] sm:$0xf]
      %v401 = vld [vmem:[%s2 + $0x4c] sm:$0xf]
      %v402 = vld [vmem:[%s2 + $0x50] sm:$0xf]
      %v403 = vld [vmem:[%s2 + $0x54] sm:$0xf]
      %v404 = vld [vmem:[%s2 + $0x58] sm:$0xf]
      %v405 = vld [vmem:[%s2 + $0x5c] sm:$0xf]
      %v406 = vld [vmem:[%s2 + $0x60] sm:$0xf]
      %v407 = vld [vmem:[%s2 + $0x64] sm:$0xf]
      %v408 = vld [vmem:[%s2 + $0x68] sm:$0xf]
      %v409 = vld [vmem:[%s2 + $0x6c] sm:$0xf]
      %v410 = vld [vmem:[%s2 + $0x70] sm:$0xf]
      %v411 = vld [vmem:[%s2 + $0x74] sm:$0xf]
      %v412 = vld [vmem:[%s2 + $0x78] sm:$0xf]
      %v413 = vld [vmem:[%s2 + $0x7c] sm:$0xf]
      %v414 = vld [vmem:[%s2 + $0x80] sm:$0xf]
      %v415 = vld [vmem:[%s2 + $0x84] sm:$0xf]
      %v416 = vld [vmem:[%s2 + $0x88] sm:$0xf]
      %v417 = vld [vmem:[%s2 + $0x8c] sm:$0xf]
      %v418 = vld [vmem:[%s2 + $0x90] sm:$0xf]
      %v419 = vld [vmem:[%s2 + $0x94] sm:$0xf]
      %v420 = vld [vmem:[%s2 + $0x98] sm:$0xf]
      %v421 = vld [vmem:[%s2 + $0x9c] sm:$0xf]
      %v422 = vld [vmem:[%s2 + $0xa0] sm:$0xf]
      %v423 = vld [vmem:[%s2 + $0xa4] sm:$0xf]
      %v424 = vld [vmem:[%s2 + $0xa8] sm:$0xf]
      %v425 = vld [vmem:[%s2 + $0xac] sm:$0xf]
      %v426 = vld [vmem:[%s2 + $0xb0] sm:$0xf]
      %v427 = vld [vmem:[%s2 + $0xb4] sm:$0xf]
      %v428 = vld [vmem:[%s2 + $0xb8] sm:$0xf]
      %v429 = vld [vmem:[%s2 + $0xbc] sm:$0xf]
      %v430 = vld [vmem:[%s3] sm:$0x1]
      %v432 = vlaneseq
      %v433 = vshrl.u32 %v432, 7
      %v434 = vsub.s32 0, %v433
      %v435 = vrot.slane %v430, %v434
      %v485 = vunpack.c.l.b16 %v382
      %v486 = vunpack.c.l.b16 %v383
      %v487 = vunpack.c.l.b16 %v384
      %v488 = vunpack.c.l.b16 %v385
      %v489 = vunpack.c.l.b16 %v386
      %v490 = vunpack.c.l.b16 %v387
      %v491 = vunpack.c.l.b16 %v388
      %v492 = vunpack.c.l.b16 %v389
      %v493 = vunpack.c.l.b16 %v390
      %v494 = vunpack.c.l.b16 %v391
      %v495 = vunpack.c.l.b16 %v392
      %v496 = vunpack.c.l.b16 %v393
      %v497 = vunpack.c.l.b16 %v394
      %v498 = vunpack.c.l.b16 %v395
      %v499 = vunpack.c.l.b16 %v396
      %v500 = vunpack.c.l.b16 %v397
      %v501 = vunpack.c.l.b16 %v398
      %v502 = vunpack.c.l.b16 %v399
      %v503 = vunpack.c.l.b16 %v400
      %v504 = vunpack.c.l.b16 %v401
      %v505 = vunpack.c.l.b16 %v402
      %v506 = vunpack.c.l.b16 %v403
      %v507 = vunpack.c.l.b16 %v404
      %v508 = vunpack.c.l.b16 %v405
      %v509 = vunpack.c.l.b16 %v406
      %v510 = vunpack.c.l.b16 %v407
      %v511 = vunpack.c.l.b16 %v408
      %v512 = vunpack.c.l.b16 %v409
      %v513 = vunpack.c.l.b16 %v410
      %v514 = vunpack.c.l.b16 %v411
      %v515 = vunpack.c.l.b16 %v412
      %v516 = vunpack.c.l.b16 %v413
      %v517 = vunpack.c.l.b16 %v414
      %v518 = vunpack.c.l.b16 %v415
      %v519 = vunpack.c.l.b16 %v416
      %v520 = vunpack.c.l.b16 %v417
      %v521 = vunpack.c.l.b16 %v418
      %v522 = vunpack.c.l.b16 %v419
      %v523 = vunpack.c.l.b16 %v420
      %v524 = vunpack.c.l.b16 %v421
      %v525 = vunpack.c.l.b16 %v422
      %v526 = vunpack.c.l.b16 %v423
      %v527 = vunpack.c.l.b16 %v424
      %v528 = vunpack.c.l.b16 %v425
      %v529 = vunpack.c.l.b16 %v426
      %v530 = vunpack.c.l.b16 %v427
      %v531 = vunpack.c.l.b16 %v428
      %v532 = vunpack.c.l.b16 %v429
      %v533 = vpack.c.b16 %v486, %v485
      %v534 = vpack.c.b16 %v488, %v487
      %v535 = vpack.c.b16 %v490, %v489
      %v536 = vpack.c.b16 %v492, %v491
      %v537 = vpack.c.b16 %v494, %v493
      %v538 = vpack.c.b16 %v496, %v495
      %v539 = vpack.c.b16 %v498, %v497
      %v540 = vpack.c.b16 %v500, %v499
      %v541 = vpack.c.b16 %v502, %v501
      %v542 = vpack.c.b16 %v504, %v503
      %v543 = vpack.c.b16 %v506, %v505
      %v544 = vpack.c.b16 %v508, %v507
      %v545 = vpack.c.b16 %v510, %v509
      %v546 = vpack.c.b16 %v512, %v511
      %v547 = vpack.c.b16 %v514, %v513
      %v548 = vpack.c.b16 %v516, %v515
      %v549 = vpack.c.b16 %v518, %v517
      %v550 = vpack.c.b16 %v520, %v519
      %v551 = vpack.c.b16 %v522, %v521
      %v552 = vpack.c.b16 %v524, %v523
      %v553 = vpack.c.b16 %v526, %v525
      %v554 = vpack.c.b16 %v528, %v527
      %v555 = vpack.c.b16 %v530, %v529
      %v556 = vpack.c.b16 %v532, %v531
      %581 = vmatprep.subr.bf16.mxu0 0
      %582 = vmatpush1.bf16.msra.mxu0 %v540
      %583 = vmatprep.subr.bf16.mxu0 0
      %584 = vmatpush1.bf16.msra.mxu0 %v539
      %585 = vmatprep.subr.bf16.mxu0 0
      %586 = vmatpush1.bf16.msra.mxu0 %v538
      %587 = vmatprep.subr.bf16.mxu0 0
      %588 = vmatpush1.bf16.msra.mxu0 %v537
      %589 = vmatprep.subr.bf16.mxu0 0
      %590 = vmatpush1.bf16.msra.mxu0 %v536
      %591 = vmatprep.subr.bf16.mxu0 0
      %592 = vmatpush1.bf16.msra.mxu0 %v535
      %593 = vmatprep.subr.bf16.mxu0 0
      %594 = vmatpush1.bf16.msra.mxu0 %v534
      %595 = vmatprep.subr.bf16.mxu0 0
      %596 = vmatpush1.bf16.msra.mxu0 %v533
      %597 = vmatprep.subr.bf16.mxu0 0
      %598 = vmatpush2.bf16.msra.mxu0 %v548
      %599 = vmatprep.subr.bf16.mxu0 0
      %600 = vmatpush2.bf16.msra.mxu0 %v547
      %601 = vmatprep.subr.bf16.mxu0 0
      %602 = vmatpush2.bf16.msra.mxu0 %v546
      %603 = vmatprep.subr.bf16.mxu0 0
      %604 = vmatpush2.bf16.msra.mxu0 %v545
      %605 = vmatprep.subr.bf16.mxu0 0
      %606 = vmatpush2.bf16.msra.mxu0 %v544
      %607 = vmatprep.subr.bf16.mxu0 0
      %608 = vmatpush2.bf16.msra.mxu0 %v543
      %609 = vmatprep.subr.bf16.mxu0 0
      %610 = vmatpush2.bf16.msra.mxu0 %v542
      %611 = vmatprep.subr.bf16.mxu0 0
      %612 = vmatpush2.bf16.msra.mxu0 %v541
      %613 = vmatprep.mubr.bf16.mxu0 %v380
      %614 = vmatmul.mubr.bf16.gmra.mxu0 %v379
      %v615 = vpop.f32.mrf.mxu0
      %v616 = vadd.f32 %v435, %v615
      %v617 = vpop.f32.mrf.mxu0
      %v618 = vpop.f32.mrf.mxu0
      %v619 = vadd.f32 %v435, %v618
      %v620 = vpop.f32.mrf.mxu0
      %621 = vdwg.mxu0
      %622 = vmatprep.subr.bf16.mxu0 0
      %623 = vmatpush1.bf16.msra.mxu0 %v556
      %624 = vmatprep.subr.bf16.mxu0 0
      %625 = vmatpush1.bf16.msra.mxu0 %v555
      %626 = vmatprep.subr.bf16.mxu0 0
      %627 = vmatpush1.bf16.msra.mxu0 %v554
      %628 = vmatprep.subr.bf16.mxu0 0
      %629 = vmatpush1.bf16.msra.mxu0 %v553
      %630 = vmatprep.subr.bf16.mxu0 0
      %631 = vmatpush1.bf16.msra.mxu0 %v552
      %632 = vmatprep.subr.bf16.mxu0 0
      %633 = vmatpush1.bf16.msra.mxu0 %v551
      %634 = vmatprep.subr.bf16.mxu0 0
      %635 = vmatpush1.bf16.msra.mxu0 %v550
      %636 = vmatprep.subr.bf16.mxu0 0
      %637 = vmatpush1.bf16.msra.mxu0 %v549
      %638 = vmatprep.subr.bf16.mxu0 0
      %639 = vmatpush2.bf16.msra.mxu0 0
      %640 = vmatprep.subr.bf16.mxu0 0
      %641 = vmatpush2.bf16.msra.mxu0 0
      %642 = vmatprep.subr.bf16.mxu0 0
      %643 = vmatpush2.bf16.msra.mxu0 0
      %644 = vmatprep.subr.bf16.mxu0 0
      %645 = vmatpush2.bf16.msra.mxu0 0
      %646 = vmatprep.subr.bf16.mxu0 0
      %647 = vmatpush2.bf16.msra.mxu0 0
      %648 = vmatprep.subr.bf16.mxu0 0
      %649 = vmatpush2.bf16.msra.mxu0 0
      %650 = vmatprep.subr.bf16.mxu0 0
      %651 = vmatpush2.bf16.msra.mxu0 0
      %652 = vmatprep.subr.bf16.mxu0 0
      %653 = vmatpush2.bf16.msra.mxu0 0
      %654 = vmatprep.mubr.bf16.mxu0 0
      %655 = vmatmul.mubr.bf16.gmra.mxu0 %v381
      %v656 = vpop.f32.mrf.mxu0
      %v657 = vadd.f32 %v616, %v656
      %v658 = vpop.f32.mrf.mxu0
      %v659 = vpop.f32.mrf.mxu0
      %v660 = vadd.f32 %v619, %v659
      %v661 = vpop.f32.mrf.mxu0
      %662 = vdwg.mxu0
      %v663 = vmax.f32 %v657, 0.0
      %v664 = vmax.f32 %v660, 0.0
      %v665 = vpack.c.bf16 %v664, %v663
      %v667 = vunpack.c.l.b16 %v665
      %v668 = vunpack.c.h.b16 %v665
      %v669 = vpack.c.b16 %v667, %v667
      %v670 = vpack.c.b16 %v668, %v668
      %673 = vst [vmem:[%s296] sm:$0xf] %v669
      %674 = vst [vmem:[%s296 + $0x4] sm:$0xf] %v670
      %s675 = sld [smem:[#allocation3 + %s26]]
      %v676 = vstv %s675
      %vm677 = vcmp.lt.s32.totalorder %v315, %v676
      %vm678 = vcmp.lt.s32.totalorder %v316, %v676
      %v679 = vsel %vm677, 1, 0
      %v680 = vsel %vm678, 1, 0
      %v681 = vcvt.s32.f32 %v679
      %v682 = vcvt.s32.f32 %v680
      %v683 = vmul.f32 %v663, %v681
      %v684 = vmul.f32 %v664, %v682
      %v685 = vadd.f32 %v683, %v684
      %v686 = vrot.slane %v685, 4
      %v687 = vadd.f32 %v685, %v686
      %v688 = vrot.slane %v687, 2
      %v689 = vadd.f32 %v687, %v688
      %v690 = vrot.slane %v689, 1
      %v691 = vadd.f32 %v689, %v690
      %692 = vst [vmem:[%s299] sm:$0x1] %v691
      %v693 = vmul.f32 %v683, %v663
      %v694 = vmul.f32 %v684, %v664
      %v695 = vadd.f32 %v693, %v694
      %v696 = vrot.slane %v695, 4
      %v697 = vadd.f32 %v695, %v696
      %v698 = vrot.slane %v697, 2
      %v699 = vadd.f32 %v697, %v698
      %v700 = vrot.slane %v699, 1
      %v701 = vadd.f32 %v699, %v700
      %702 = vst [vmem:[%s302] sm:$0x1] %v701
      %p703 = scmp.lt.s32.totalorder %s26, 3
      %s704 = scalar_select %p703, %s26, 3
      %s705 = smul.addr %s704, 2
      %s706 = smul.addr %s705, 4
      %s707 = scalar_lea.vmem %s6, %s706
      %p708 = scmp.lt.s32.totalorder %s26, 3
      %s709 = scalar_select %p708, %s26, 3
      %s710 = scalar_lea.vmem %s7, %s709
      %p711 = scmp.lt.s32.totalorder %s26, 3
      %s712 = scalar_select %p711, %s26, 3
      %s713 = scalar_lea.vmem %s8, %s712
      // Predicated region
      $region41: #{tdnn_nas_forward.11} parent=39 // pred_check
        %p714 = pneg %p154
      $region42: #{tdnn_nas_forward.11} parent=39 // pred_check_branch
        %716 = sbr.rel (%p714) target = $region44
      $region43: #{tdnn_nas_forward.11} parent=39 // pred_region
        _
      $region44: #{tdnn_nas_forward.11} parent=39 // pred_fallthru
        _
      // Predicated region
      $region45: #{tdnn_nas_forward.11} parent=39 // pred_check
        %p717 = pneg %p180
      $region46: #{tdnn_nas_forward.11} parent=39 // pred_check_branch
        %719 = sbr.rel (%p717) target = $region48
      $region47: #{tdnn_nas_forward.11} parent=39 // pred_region
        _
      $region48: #{tdnn_nas_forward.11} parent=39 // pred_fallthru
        _
      // Predicated region
      $region49: #{tdnn_nas_forward.11} parent=39 // pred_check
        %p720 = pneg %p206
      $region50: #{tdnn_nas_forward.11} parent=39 // pred_check_branch
        %722 = sbr.rel (%p720) target = $region52
      $region51: #{tdnn_nas_forward.11} parent=39 // pred_region
        _
      $region52: #{tdnn_nas_forward.11} parent=39 // pred_fallthru
        _
    $region40: #{tdnn_nas_forward.11} parent=5 // pred_fallthru
      _
    %p723 = scmp.le.s32.totalorder 2, %s21
    // Predicated region
    $region53: #{tdnn_nas_forward.11} parent=5 // pred_check
      %p724 = pneg %p723
    $region54: #{tdnn_nas_forward.11} parent=5 // pred_check_branch
      %726 = sbr.rel (%p724) target = $region56
    $region55: #{tdnn_nas_forward.11} parent=5 // pred_region
      %s727 = ssub.s32 %s21, 2
      // Predicated region
      $region57: #{tdnn_nas_forward.11} parent=55 // pred_check
        %p728 = pneg %p160
      $region58: #{tdnn_nas_forward.11} parent=55 // pred_check_branch
        %730 = sbr.rel (%p728) target = $region60
      $region59: #{tdnn_nas_forward.11} parent=55 // pred_region
        %p731 = scmp.lt.s32.totalorder %s27, 3
        %s732 = scalar_select %p731, %s27, 3
        %s733 = smul.addr %s732, 2
        %s734 = smul.addr %s733, 4
        %s735 = scalar_lea.vmem %s6, %s734
      $region60: #{tdnn_nas_forward.11} parent=55 // pred_fallthru
        _
      // Predicated region
      $region61: #{tdnn_nas_forward.11} parent=55 // pred_check
        %p736 = pneg %p186
      $region62: #{tdnn_nas_forward.11} parent=55 // pred_check_branch
        %738 = sbr.rel (%p736) target = $region64
      $region63: #{tdnn_nas_forward.11} parent=55 // pred_region
        %p739 = scmp.lt.s32.totalorder %s27, 3
        %s740 = scalar_select %p739, %s27, 3
        %s741 = scalar_lea.vmem %s7, %s740
      $region64: #{tdnn_nas_forward.11} parent=55 // pred_fallthru
        _
      // Predicated region
      $region65: #{tdnn_nas_forward.11} parent=55 // pred_check
        %p742 = pneg %p212
      $region66: #{tdnn_nas_forward.11} parent=55 // pred_check_branch
        %744 = sbr.rel (%p742) target = $region68
      $region67: #{tdnn_nas_forward.11} parent=55 // pred_region
        %p745 = scmp.lt.s32.totalorder %s27, 3
        %s746 = scalar_select %p745, %s27, 3
        %s747 = scalar_lea.vmem %s8, %s746
      $region68: #{tdnn_nas_forward.11} parent=55 // pred_fallthru
        _
    $region56: #{tdnn_nas_forward.11} parent=5 // pred_fallthru
      _
  $region6: #{tdnn_nas_forward.11} parent=0 // loop_footer
    %s25 = sadd.s32 1, %s21
  $region7: #{tdnn_nas_forward.11} parent=0 // loop_footer_branch
    %20 = sbr.rel target = $region3
  $region8: #{tdnn_nas_forward.11} parent=0 // loop_exit
    _

// kernel: tdnn_nas_forward.10
$region0: #{tdnn_nas_forward.10}
  #allocation0 [shape = 'u32[]', space=smem, size = 0x4, offset = 0x4, fixed_abs, tag = 'smem constant byte address 0x4 - core index']
  #allocation1 [shape = 'u32[144,128]{1,0:T(1,128)}', space=vmem, size = 0x12000, scoped, tag = 'internal scratch']
  #allocation2 [shape = 's32[1]{0}', space=sflag, size = 0x4, scoped, tag = 'scoped memory for tdnn_nas_forward.10']
  #allocation3 [shape = 'u8[512]{0}', space=smem, size = 0x200, scoped, tag = 'prefetched SMEM operand 0']
  %s0 = inlined_call_operand.vmem [shape: s32[4], index: 0, kind: input, shape index: {}]
  %s1 = inlined_call_operand.vmem [shape: bf16[4,52,128], index: 1, kind: input, shape index: {}]
  %s2 = inlined_call_operand.vmem [shape: bf16[5,128,128], index: 2, kind: input, shape index: {}]
  %s3 = inlined_call_operand.vmem [shape: f32[1,128], index: 3, kind: input, shape index: {}]
  %s4 = inlined_call_operand.vmem [shape: f32[1,128], index: 4, kind: input, shape index: {}]
  %s5 = inlined_call_operand.vmem [shape: f32[1,128], index: 5, kind: input, shape index: {}]
  %s6 = inlined_call_operand.vmem [shape: bf16[4,48,128], index: 6, kind: output, shape index: {0}]
  %s7 = inlined_call_operand.vmem [shape: f32[4,1,128], index: 7, kind: output, shape index: {1}]
  %s8 = inlined_call_operand.vmem [shape: f32[4,1,128], index: 8, kind: output, shape index: {2}]
  %9 = xla_tuple %s6, %s7, %s8
  %s10 = sld [smem:[#allocation0]]
  $region69: #{tdnn_nas_forward.10} parent=0
    _
  %s12 = ssub.s32 1, %s10
  %s13 = scalar_select 0, %s12, %s10
  %s14 = sshll.u32 %s0, 4
  %s15 = int_to_ptr.vmem [resolvable:$true] %s14
  %17 = dma.vmem_to_smem %s15, 16, [#allocation3], [#allocation2]
  %18 = dma.done [#allocation2], 16
  %19 = sfence
  loop: start=0, step=1, limit=6
  $region2: #{tdnn_nas_forward.10} parent=0 // loop_pre_header
    _
  $region3: #{tdnn_nas_forward.10} parent=0 // loop_header
    %s21 = sphi 0, %s25
    %p22 = scmp.ge.s32.totalorder %s21, 6
    %s31 = sphi 0, %s33
    %s34 = sphi 0, %s31
    %s35 = sphi 0, %s34
    %s51 = sphi 0, %s35
    %s55 = sphi 0, %s55
    %s57 = sphi 0, %s55
    %s58 = sphi 0, %s57
    %s72 = sphi 0, %s58
    %s76 = sphi 0, %s76
    %s78 = sphi 0, %s76
    %s79 = sphi 0, %s78
    %s93 = sphi 0, %s79
    %s97 = sphi 0, %s97
    %s99 = sphi 0, %s97
    %s100 = sphi 0, %s99
    %s114 = sphi 0, %s100
    %s118 = sphi 0, %s118
    %s120 = sphi 0, %s118
    %s121 = sphi 0, %s120
    %s135 = sphi 0, %s121
    %s141 = sphi 0, %s143
    %s144 = sphi 0, %s141
    %s145 = sphi 0, %s144
    %s161 = sphi 0, %s145
    %s167 = sphi 0, %s169
    %s170 = sphi 0, %s167
    %s171 = sphi 0, %s170
    %s187 = sphi 0, %s171
    %s193 = sphi 0, %s195
    %s196 = sphi 0, %s193
    %s197 = sphi 0, %s196
    %s213 = sphi 0, %s197
  $region4: #{tdnn_nas_forward.10} parent=0 // loop_header_branch
    %24 = sbr.rel (%p22) target = $region8
  $region5: #{tdnn_nas_forward.10} parent=0 // loop_body
    %s26 = ssub.s32 %s21, 1
    %s27 = ssub.s32 %s21, 2
    %s28 = sadd.s32 %s21, 1
    %s29 = ssub.s32 %s21, %s28
    %p30 = scmp.eq.s32.totalorder %s29, 0
    %s32 = sadd.s32 %s31, 1
    %s33 = scalar_select %p30, %s31, %s32
    %p36 = pneg %p30
    %p37 = scmp.eq.s32.totalorder %s21, 3
    %p38 = por %p36, %p37
    %p39 = scmp.ne.s32.totalorder %s31, %s34
    %p40 = scmp.eq.s32.totalorder %s21, 0
    %p41 = por %p39, %p40
    %p42 = scmp.ne.s32.totalorder %s31, %s34
    %p43 = scmp.eq.s32.totalorder %s26, 3
    %p44 = por %p42, %p43
    %p45 = scmp.ne.s32.totalorder %s34, %s35
    %p46 = scmp.eq.s32.totalorder %s26, 0
    %p47 = por %p45, %p46
    %p48 = scmp.ne.s32.totalorder %s34, %s35
    %p49 = scmp.eq.s32.totalorder %s27, 3
    %p50 = por %p48, %p49
    %p52 = scmp.ne.s32.totalorder %s35, %s51
    %p53 = scmp.eq.s32.totalorder %s27, 0
    %p54 = por %p52, %p53
    %s56 = sadd.s32 %s55, 1
    %p59 = scmp.eq.s32.totalorder %s21, 3
    %p60 = scmp.ne.s32.totalorder %s55, %s57
    %p61 = scmp.eq.s32.totalorder %s21, 0
    %p62 = por %p60, %p61
    %p63 = scmp.ne.s32.totalorder %s55, %s57
    %p64 = scmp.eq.s32.totalorder %s26, 3
    %p65 = por %p63, %p64
    %p66 = scmp.ne.s32.totalorder %s57, %s58
    %p67 = scmp.eq.s32.totalorder %s26, 0
    %p68 = por %p66, %p67
    %p69 = scmp.ne.s32.totalorder %s57, %s58
    %p70 = scmp.eq.s32.totalorder %s27, 3
    %p71 = por %p69, %p70
    %p73 = scmp.ne.s32.totalorder %s58, %s72
    %p74 = scmp.eq.s32.totalorder %s27, 0
    %p75 = por %p73, %p74
    %s77 = sadd.s32 %s76, 1
    %p80 = scmp.eq.s32.totalorder %s21, 3
    %p81 = scmp.ne.s32.totalorder %s76, %s78
    %p82 = scmp.eq.s32.totalorder %s21, 0
    %p83 = por %p81, %p82
    %p84 = scmp.ne.s32.totalorder %s76, %s78
    %p85 = scmp.eq.s32.totalorder %s26, 3
    %p86 = por %p84, %p85
    %p87 = scmp.ne.s32.totalorder %s78, %s79
    %p88 = scmp.eq.s32.totalorder %s26, 0
    %p89 = por %p87, %p88
    %p90 = scmp.ne.s32.totalorder %s78, %s79
    %p91 = scmp.eq.s32.totalorder %s27, 3
    %p92 = por %p90, %p91
    %p94 = scmp.ne.s32.totalorder %s79, %s93
    %p95 = scmp.eq.s32.totalorder %s27, 0
    %p96 = por %p94, %p95
    %s98 = sadd.s32 %s97, 1
    %p101 = scmp.eq.s32.totalorder %s21, 3
    %p102 = scmp.ne.s32.totalorder %s97, %s99
    %p103 = scmp.eq.s32.totalorder %s21, 0
    %p104 = por %p102, %p103
    %p105 = scmp.ne.s32.totalorder %s97, %s99
    %p106 = scmp.eq.s32.totalorder %s26, 3
    %p107 = por %p105, %p106
    %p108 = scmp.ne.s32.totalorder %s99, %s100
    %p109 = scmp.eq.s32.totalorder %s26, 0
    %p110 = por %p108, %p109
    %p111 = scmp.ne.s32.totalorder %s99, %s100
    %p112 = scmp.eq.s32.totalorder %s27, 3
    %p113 = por %p111, %p112
    %p115 = scmp.ne.s32.totalorder %s100, %s114
    %p116 = scmp.eq.s32.totalorder %s27, 0
    %p117 = por %p115, %p116
    %s119 = sadd.s32 %s118, 1
    %p122 = scmp.eq.s32.totalorder %s21, 3
    %p123 = scmp.ne.s32.totalorder %s118, %s120
    %p124 = scmp.eq.s32.totalorder %s21, 0
    %p125 = por %p123, %p124
    %p126 = scmp.ne.s32.totalorder %s118, %s120
    %p127 = scmp.eq.s32.totalorder %s26, 3
    %p128 = por %p126, %p127
    %p129 = scmp.ne.s32.totalorder %s120, %s121
    %p130 = scmp.eq.s32.totalorder %s26, 0
    %p131 = por %p129, %p130
    %p132 = scmp.ne.s32.totalorder %s120, %s121
    %p133 = scmp.eq.s32.totalorder %s27, 3
    %p134 = por %p132, %p133
    %p136 = scmp.ne.s32.totalorder %s121, %s135
    %p137 = scmp.eq.s32.totalorder %s27, 0
    %p138 = por %p136, %p137
    %s139 = ssub.s32 %s21, %s28
    %p140 = scmp.eq.s32.totalorder %s139, 0
    %s142 = sadd.s32 %s141, 1
    %s143 = scalar_select %p140, %s141, %s142
    %p146 = pneg %p140
    %p147 = scmp.eq.s32.totalorder %s21, 3
    %p148 = por %p146, %p147
    %p149 = scmp.ne.s32.totalorder %s141, %s144
    %p150 = scmp.eq.s32.totalorder %s21, 0
    %p151 = por %p149, %p150
    %p152 = scmp.ne.s32.totalorder %s141, %s144
    %p153 = scmp.eq.s32.totalorder %s26, 3
    %p154 = por %p152, %p153
    %p155 = scmp.ne.s32.totalorder %s144, %s145
    %p156 = scmp.eq.s32.totalorder %s26, 0
    %p157 = por %p155, %p156
    %p158 = scmp.ne.s32.totalorder %s144, %s145
    %p159 = scmp.eq.s32.totalorder %s27, 3
    %p160 = por %p158, %p159
    %p162 = scmp.ne.s32.totalorder %s145, %s161
    %p163 = scmp.eq.s32.totalorder %s27, 0
    %p164 = por %p162, %p163
    %s165 = ssub.s32 %s21, %s28
    %p166 = scmp.eq.s32.totalorder %s165, 0
    %s168 = sadd.s32 %s167, 1
    %s169 = scalar_select %p166, %s167, %s168
    %p172 = pneg %p166
    %p173 = scmp.eq.s32.totalorder %s21, 3
    %p174 = por %p172, %p173
    %p175 = scmp.ne.s32.totalorder %s167, %s170
    %p176 = scmp.eq.s32.totalorder %s21, 0
    %p177 = por %p175, %p176
    %p178 = scmp.ne.s32.totalorder %s167, %s170
    %p179 = scmp.eq.s32.totalorder %s26, 3
    %p180 = por %p178, %p179
    %p181 = scmp.ne.s32.totalorder %s170, %s171
    %p182 = scmp.eq.s32.totalorder %s26, 0
    %p183 = por %p181, %p182
    %p184 = scmp.ne.s32.totalorder %s170, %s171
    %p185 = scmp.eq.s32.totalorder %s27, 3
    %p186 = por %p184, %p185
    %p188 = scmp.ne.s32.totalorder %s171, %s187
    %p189 = scmp.eq.s32.totalorder %s27, 0
    %p190 = por %p188, %p189
    %s191 = ssub.s32 %s21, %s28
    %p192 = scmp.eq.s32.totalorder %s191, 0
    %s194 = sadd.s32 %s193, 1
    %s195 = scalar_select %p192, %s193, %s194
    %p198 = pneg %p192
    %p199 = scmp.eq.s32.totalorder %s21, 3
    %p200 = por %p198, %p199
    %p201 = scmp.ne.s32.totalorder %s193, %s196
    %p202 = scmp.eq.s32.totalorder %s21, 0
    %p203 = por %p201, %p202
    %p204 = scmp.ne.s32.totalorder %s193, %s196
    %p205 = scmp.eq.s32.totalorder %s26, 3
    %p206 = por %p204, %p205
    %p207 = scmp.ne.s32.totalorder %s196, %s197
    %p208 = scmp.eq.s32.totalorder %s26, 0
    %p209 = por %p207, %p208
    %p210 = scmp.ne.s32.totalorder %s196, %s197
    %p211 = scmp.eq.s32.totalorder %s27, 3
    %p212 = por %p210, %p211
    %p214 = scmp.ne.s32.totalorder %s197, %s213
    %p215 = scmp.eq.s32.totalorder %s27, 0
    %p216 = por %p214, %p215
    %p217 = scmp.le.s32.totalorder 1, %s21
    %p218 = scmp.lt.s32.totalorder %s21, 5
    %p219 = pnand %p217, %p218
    %p220 = pneg %p219
    // Predicated region
    $region9: #{tdnn_nas_forward.10} parent=5 // pred_check
      _
    $region10: #{tdnn_nas_forward.10} parent=5 // pred_check_branch
      %222 = sbr.rel (%p219) target = $region12
    $region11: #{tdnn_nas_forward.10} parent=5 // pred_region
      %s223 = ssub.s32 %s21, 1
      // Predicated region
      $region13: #{tdnn_nas_forward.10} parent=11 // pred_check
        %p224 = pneg %p68
      $region14: #{tdnn_nas_forward.10} parent=11 // pred_check_branch
        %226 = sbr.rel (%p224) target = $region16
      $region15: #{tdnn_nas_forward.10} parent=11 // pred_region
        _
      $region16: #{tdnn_nas_forward.10} parent=11 // pred_fallthru
        _
      // Predicated region
      $region17: #{tdnn_nas_forward.10} parent=11 // pred_check
        %p227 = pneg %p89
      $region18: #{tdnn_nas_forward.10} parent=11 // pred_check_branch
        %229 = sbr.rel (%p227) target = $region20
      $region19: #{tdnn_nas_forward.10} parent=11 // pred_region
        _
      $region20: #{tdnn_nas_forward.10} parent=11 // pred_fallthru
        _
      // Predicated region
      $region21: #{tdnn_nas_forward.10} parent=11 // pred_check
        %p230 = pneg %p110
      $region22: #{tdnn_nas_forward.10} parent=11 // pred_check_branch
        %232 = sbr.rel (%p230) target = $region24
      $region23: #{tdnn_nas_forward.10} parent=11 // pred_region
        _
      $region24: #{tdnn_nas_forward.10} parent=11 // pred_fallthru
        _
      // Predicated region
      $region25: #{tdnn_nas_forward.10} parent=11 // pred_check
        %p233 = pneg %p131
      $region26: #{tdnn_nas_forward.10} parent=11 // pred_check_branch
        %235 = sbr.rel (%p233) target = $region28
      $region27: #{tdnn_nas_forward.10} parent=11 // pred_region
        _
      $region28: #{tdnn_nas_forward.10} parent=11 // pred_fallthru
        _
    $region12: #{tdnn_nas_forward.10} parent=5 // pred_fallthru
      _
    %p236 = scmp.lt.s32.totalorder %s21, 4
    // Predicated region
    $region29: #{tdnn_nas_forward.10} parent=5 // pred_check
      %p237 = pneg %p236
    $region30: #{tdnn_nas_forward.10} parent=5 // pred_check_branch
      %239 = sbr.rel (%p237) target = $region32
    $region31: #{tdnn_nas_forward.10} parent=5 // pred_region
      // Predicated region
      $region33: #{tdnn_nas_forward.10} parent=31 // pred_check
        %p240 = pneg %p41
      $region34: #{tdnn_nas_forward.10} parent=31 // pred_check_branch
        %242 = sbr.rel (%p240) target = $region36
      $region35: #{tdnn_nas_forward.10} parent=31 // pred_region
        %p243 = scmp.lt.s32.totalorder %s21, 3
        %s244 = scalar_select %p243, %s21, 3
        %s245 = smul.addr %s244, 7
        %s246 = smul.addr %s245, 4
        %s247 = scalar_lea.vmem %s1, %s246
      $region36: #{tdnn_nas_forward.10} parent=31 // pred_fallthru
        _
    $region32: #{tdnn_nas_forward.10} parent=5 // pred_fallthru
      _
    %p248 = scmp.le.s32.totalorder 1, %s21
    %p249 = scmp.lt.s32.totalorder %s21, 5
    %p250 = pnand %p248, %p249
    %p251 = pneg %p250
    // Predicated region
    $region37: #{tdnn_nas_forward.10} parent=5 // pred_check
      _
    $region38: #{tdnn_nas_forward.10} parent=5 // pred_check_branch
      %253 = sbr.rel (%p250) target = $region40
    $region39: #{tdnn_nas_forward.10} parent=5 // pred_region
      %s254 = ssub.s32 %s21, 1
      %p255 = scmp.lt.s32.totalorder %s26, 3
      %s256 = scalar_select %p255, %s26, 3
      %s257 = smul.addr %s256, 7
      %s258 = smul.addr %s257, 4
      %s259 = scalar_lea.vmem %s1, %s258
      %p260 = pneg %p47
      %p261 = pneg %p44
      %p262 = pneg %p68
      %p263 = pneg %p65
      %p264 = pneg %p89
      %p265 = pneg %p86
      %p266 = pneg %p110
      %p267 = pneg %p107
      %p268 = pneg %p131
      %p269 = pneg %p128
      %p270 = pneg %p157
      %p271 = pneg %p154
      %p272 = scmp.lt.s32.totalorder %s26, 3
      %s273 = scalar_select %p272, %s26, 3
      %s274 = smul.addr %s273, 6
      %s275 = smul.addr %s274, 4
      %s276 = scalar_lea.vmem %s6, %s275
      %p277 = pneg %p183
      %p278 = pneg %p180
      %p279 = scmp.lt.s32.totalorder %s26, 3
      %s280 = scalar_select %p279, %s26, 3
      %s281 = scalar_lea.vmem %s7, %s280
      %p282 = pneg %p209
      %p283 = pneg %p206
      %p284 = scmp.lt.s32.totalorder %s26, 3
      %s285 = scalar_select %p284, %s26, 3
      %s286 = scalar_lea.vmem %s8, %s285
      %p287 = scmp.lt.s32.totalorder %s26, 3
      %s288 = scalar_select %p287, %s26, 3
      %s289 = smul.addr %s288, 7
      %s290 = smul.addr %s289, 4
      %s291 = scalar_lea.vmem %s1, %s290
      %p292 = scmp.lt.s32.totalorder %s26, 3
      %s293 = scalar_select %p292, %s26, 3
      %s294 = smul.addr %s293, 6
      %s295 = smul.addr %s294, 4
      %s296 = scalar_lea.vmem %s6, %s295
      %p297 = scmp.lt.s32.totalorder %s26, 3
      %s298 = scalar_select %p297, %s26, 3
      %s299 = scalar_lea.vmem %s7, %s298
      %p300 = scmp.lt.s32.totalorder %s26, 3
      %s301 = scalar_select %p300, %s26, 3
      %s302 = scalar_lea.vmem %s8, %s301
      %v304 = vld [vmem:[%s291] sm:$0xf]
      %v305 = vld [vmem:[%s291 + $0x4] sm:$0xf]
      %v306 = vld [vmem:[%s291 + $0x8] sm:$0xf]
      %v307 = vld [vmem:[%s291 + $0xc] sm:$0xf]
      %v308 = vld [vmem:[%s291 + $0x10] sm:$0xf]
      %v309 = vld [vmem:[%s291 + $0x14] sm:$0xf]
      %v310 = vld [vmem:[%s291 + $0x18] sm:$0x3]
      %v311 = vunpack.c.l.bf16 %v304
      %v312 = vunpack.c.l.bf16 %v305
      %v313 = vunpack.c.l.bf16 %v306
      %v314 = vunpack.c.l.bf16 %v307
      %v315 = vunpack.c.l.bf16 %v308
      %v316 = vunpack.c.l.bf16 %v309
      %v317 = vunpack.c.l.bf16 %v310
      %v318 = vlaneseq
      %v319 = vshrl.u32 %v318, 7
      %v320 = vadd.s32 %v319, 8
      %v321 = vadd.s32 %v319, 16
      %v322 = vadd.s32 %v319, 24
      %v323 = vadd.s32 %v319, 32
      %v324 = vadd.s32 %v319, 40
      %v325 = vadd.s32 %v319, 48
      %vm326 = vcmp.ge.s32.totalorder %v319, 2
      %vm327 = vcmp.ge.s32.totalorder %v320, 2
      %vm328 = vcmp.ge.s32.totalorder %v321, 2
      %vm329 = vcmp.ge.s32.totalorder %v322, 2
      %vm330 = vcmp.ge.s32.totalorder %v323, 2
      %vm331 = vcmp.ge.s32.totalorder %v324, 2
      %vm332 = vcmp.ge.s32.totalorder %v325, 2
      %vm333 = vcmp.lt.s32.totalorder %v319, 50
      %vm334 = vcmp.lt.s32.totalorder %v320, 50
      %vm335 = vcmp.lt.s32.totalorder %v321, 50
      %vm336 = vcmp.lt.s32.totalorder %v322, 50
      %vm337 = vcmp.lt.s32.totalorder %v323, 50
      %vm338 = vcmp.lt.s32.totalorder %v324, 50
      %vm339 = vcmp.lt.s32.totalorder %v325, 50
      %vm340 = vmand %vm326, %vm333
      %vm341 = vmand %vm327, %vm334
      %vm342 = vmand %vm328, %vm335
      %vm343 = vmand %vm329, %vm336
      %vm344 = vmand %vm330, %vm337
      %vm345 = vmand %vm331, %vm338
      %vm346 = vmand %vm332, %vm339
      %v347 = vld [vmem:[%s4] sm:$0x1]
      %v349 = vlaneseq
      %v350 = vshrl.u32 %v349, 7
      %v351 = vsub.s32 0, %v350
      %v352 = vrot.slane %v347, %v351
      %v354 = vmul.f32 %v311, %v352
      %v355 = vmul.f32 %v312, %v352
      %v356 = vmul.f32 %v313, %v352
      %v357 = vmul.f32 %v314, %v352
      %v358 = vmul.f32 %v315, %v352
      %v359 = vmul.f32 %v316, %v352
      %v360 = vmul.f32 %v317, %v352
      %v361 = vld [vmem:[%s5] sm:$0x1]
      %v363 = vlaneseq
      %v364 = vshrl.u32 %v363, 7
      %v365 = vsub.s32 0, %v364
      %v366 = vrot.slane %v361, %v365
      %v368 = vadd.f32 %v354, %v366
      %v369 = vadd.f32 %v355, %v366
      %v370 = vadd.f32 %v356, %v366
      %v371 = vadd.f32 %v357, %v366
      %v372 = vadd.f32 %v358, %v366
      %v373 = vadd.f32 %v359, %v366
      %v374 = vadd.f32 %v360, %v366
      %v375 = vsel %vm340, 1, 0
      %v376 = vsel %vm341, 1, 0
      %v377 = vsel %vm342, 1, 0
      %v378 = vsel %vm343, 1, 0
      %v379 = vsel %vm344, 1, 0
      %v380 = vsel %vm345, 1, 0
      %v381 = vsel %vm346, 1, 0
      %vm382 = vcmp.eq.s32.totalorder %v375, 1
      %vm383 = vcmp.eq.s32.totalorder %v376, 1
      %vm384 = vcmp.eq.s32.totalorder %v377, 1
      %vm385 = vcmp.eq.s32.totalorder %v378, 1
      %vm386 = vcmp.eq.s32.totalorder %v379, 1
      %vm387 = vcmp.eq.s32.totalorder %v380, 1
      %vm388 = vcmp.eq.s32.totalorder %v381, 1
      %v389 = vsel %vm382, %v368, 0.0
      %v390 = vsel %vm383, %v369, 0.0
      %v391 = vsel %vm384, %v370, 0.0
      %v392 = vsel %vm385, %v371, 0.0
      %v393 = vsel %vm386, %v372, 0.0
      %v394 = vsel %vm387, %v373, 0.0
      %v395 = vsel %vm388, %v374, 0.0
      %v396 = vpack.c.bf16 %v390, %v389
      %v397 = vpack.c.bf16 %v392, %v391
      %v398 = vpack.c.bf16 %v394, %v393
      %v399 = vpack.c.bf16 %v395, %v395
      %v400 = vld [vmem:[%s2] sm:$0xf]
      %v401 = vld [vmem:[%s2 + $0x4] sm:$0xf]
      %v402 = vld [vmem:[%s2 + $0x8] sm:$0xf]
      %v403 = vld [vmem:[%s2 + $0xc] sm:$0xf]
      %v404 = vld [vmem:[%s2 + $0x10] sm:$0xf]
      %v405 = vld [vmem:[%s2 + $0x14] sm:$0xf]
      %v406 = vld [vmem:[%s2 + $0x18] sm:$0xf]
      %v407 = vld [vmem:[%s2 + $0x1c] sm:$0xf]
      %v408 = vld [vmem:[%s2 + $0x20] sm:$0xf]
      %v409 = vld [vmem:[%s2 + $0x24] sm:$0xf]
      %v410 = vld [vmem:[%s2 + $0x28] sm:$0xf]
      %v411 = vld [vmem:[%s2 + $0x2c] sm:$0xf]
      %v412 = vld [vmem:[%s2 + $0x30] sm:$0xf]
      %v413 = vld [vmem:[%s2 + $0x34] sm:$0xf]
      %v414 = vld [vmem:[%s2 + $0x38] sm:$0xf]
      %v415 = vld [vmem:[%s2 + $0x3c] sm:$0xf]
      %s416 = scalar_lea.vmem %s2, 64
      %v417 = vld [vmem:[%s416] sm:$0xf]
      %v418 = vld [vmem:[%s416 + $0x4] sm:$0xf]
      %v419 = vld [vmem:[%s416 + $0x8] sm:$0xf]
      %v420 = vld [vmem:[%s416 + $0xc] sm:$0xf]
      %v421 = vld [vmem:[%s416 + $0x10] sm:$0xf]
      %v422 = vld [vmem:[%s416 + $0x14] sm:$0xf]
      %v423 = vld [vmem:[%s416 + $0x18] sm:$0xf]
      %v424 = vld [vmem:[%s416 + $0x1c] sm:$0xf]
      %v425 = vld [vmem:[%s416 + $0x20] sm:$0xf]
      %v426 = vld [vmem:[%s416 + $0x24] sm:$0xf]
      %v427 = vld [vmem:[%s416 + $0x28] sm:$0xf]
      %v428 = vld [vmem:[%s416 + $0x2c] sm:$0xf]
      %v429 = vld [vmem:[%s416 + $0x30] sm:$0xf]
      %v430 = vld [vmem:[%s416 + $0x34] sm:$0xf]
      %v431 = vld [vmem:[%s416 + $0x38] sm:$0xf]
      %v432 = vld [vmem:[%s416 + $0x3c] sm:$0xf]
      %vm433 = vsmask.f32 7424
      %v435 = vshrl.u32 %v396, 16
      %v437 = vshll.u32 %v396, 16
      %v439 = vrot.slane %v437, 1
      %v440 = vor.u32 %v435, %v439
      %v442 = vshll.u32 %v397, 16
      %v444 = vrot.slane %v442, 1
      %v445 = vsel %vm433, %v440, %v444
      %v446 = vshrl.u32 %v397, 16
      %v448 = vor.u32 %v446, %v444
      %v450 = vshll.u32 %v398, 16
      %v452 = vrot.slane %v450, 1
      %v453 = vsel %vm433, %v448, %v452
      %v454 = vshrl.u32 %v398, 16
      %v456 = vor.u32 %v454, %v452
      %v458 = vshll.u32 %v399, 16
      %v460 = vrot.slane %v458, 1
      %v461 = vsel %vm433, %v456, %v460
      %v481 = vunpack.c.l.b16 %v417
      %v482 = vunpack.c.l.b16 %v418
      %v483 = vunpack.c.l.b16 %v419
      %v484 = vunpack.c.l.b16 %v420
      %v485 = vunpack.c.l.b16 %v421
      %v486 = vunpack.c.l.b16 %v422
      %v487 = vunpack.c.l.b16 %v423
      %v488 = vunpack.c.l.b16 %v424
      %v489 = vunpack.c.l.b16 %v425
      %v490 = vunpack.c.l.b16 %v426
      %v491 = vunpack.c.l.b16 %v427
      %v492 = vunpack.c.l.b16 %v428
      %v493 = vunpack.c.l.b16 %v429
      %v494 = vunpack.c.l.b16 %v430
      %v495 = vunpack.c.l.b16 %v431
      %v496 = vunpack.c.l.b16 %v432
      %v497 = vpack.c.b16 %v482, %v481
      %v498 = vpack.c.b16 %v484, %v483
      %v499 = vpack.c.b16 %v486, %v485
      %v500 = vpack.c.b16 %v488, %v487
      %v501 = vpack.c.b16 %v490, %v489
      %v502 = vpack.c.b16 %v492, %v491
      %v503 = vpack.c.b16 %v494, %v493
      %v504 = vpack.c.b16 %v496, %v495
      %513 = vmatprep.subr.bf16.mxu0 0
      %514 = vmatpush1.bf16.msra.mxu0 %v504
      %515 = vmatprep.subr.bf16.mxu0 0
      %516 = vmatpush1.bf16.msra.mxu0 %v503
      %517 = vmatprep.subr.bf16.mxu0 0
      %518 = vmatpush1.bf16.msra.mxu0 %v502
      %519 = vmatprep.subr.bf16.mxu0 0
      %520 = vmatpush1.bf16.msra.mxu0 %v501
      %521 = vmatprep.subr.bf16.mxu0 0
      %522 = vmatpush1.bf16.msra.mxu0 %v500
      %523 = vmatprep.subr.bf16.mxu0 0
      %524 = vmatpush1.bf16.msra.mxu0 %v499
      %525 = vmatprep.subr.bf16.mxu0 0
      %526 = vmatpush1.bf16.msra.mxu0 %v498
      %527 = vmatprep.subr.bf16.mxu0 0
      %528 = vmatpush1.bf16.msra.mxu0 %v497
      %529 = vmatprep.subr.bf16.mxu0 0
      %530 = vmatpush2.bf16.msra.mxu0 0
      %531 = vmatprep.subr.bf16.mxu0 0
      %532 = vmatpush2.bf16.msra.mxu0 0
      %533 = vmatprep.subr.bf16.mxu0 0
      %534 = vmatpush2.bf16.msra.mxu0 0
      %535 = vmatprep.subr.bf16.mxu0 0
      %536 = vmatpush2.bf16.msra.mxu0 0
      %537 = vmatprep.subr.bf16.mxu0 0
      %538 = vmatpush2.bf16.msra.mxu0 0
      %539 = vmatprep.subr.bf16.mxu0 0
      %540 = vmatpush2.bf16.msra.mxu0 0
      %541 = vmatprep.subr.bf16.mxu0 0
      %542 = vmatpush2.bf16.msra.mxu0 0
      %543 = vmatprep.subr.bf16.mxu0 0
      %544 = vmatpush2.bf16.msra.mxu0 0
      %545 = vmatprep.mubr.bf16.mxu0 0
      %546 = vmatmul.mubr.bf16.gmra.mxu0 %v445
      %v547 = vpop.f32.mrf.mxu0
      %v548 = vadd.f32 0.0, %v547
      %v549 = vpop.f32.mrf.mxu0
      %v550 = vpop.f32.mrf.mxu0
      %v551 = vadd.f32 0.0, %v550
      %v552 = vpop.f32.mrf.mxu0
      %553 = vmatprep.mubr.bf16.mxu0 0
      %554 = vmatmul.mubr.bf16.gmra.mxu0 %v453
      %v555 = vpop.f32.mrf.mxu0
      %v556 = vadd.f32 0.0, %v555
      %v557 = vpop.f32.mrf.mxu0
      %v558 = vpop.f32.mrf.mxu0
      %v559 = vadd.f32 0.0, %v558
      %v560 = vpop.f32.mrf.mxu0
      %561 = vmatprep.mubr.bf16.mxu0 0
      %562 = vmatmul.mubr.bf16.gmra.mxu0 %v461
      %v563 = vpop.f32.mrf.mxu0
      %v564 = vadd.f32 0.0, %v563
      %v565 = vpop.f32.mrf.mxu0
      %v566 = vpop.f32.mrf.mxu0
      %v567 = vadd.f32 0.0, %v566
      %v568 = vpop.f32.mrf.mxu0
      %569 = vdwg.mxu0
      %v586 = vunpack.c.l.b16 %v400
      %v587 = vunpack.c.l.b16 %v401
      %v588 = vunpack.c.l.b16 %v402
      %v589 = vunpack.c.l.b16 %v403
      %v590 = vunpack.c.l.b16 %v404
      %v591 = vunpack.c.l.b16 %v405
      %v592 = vunpack.c.l.b16 %v406
      %v593 = vunpack.c.l.b16 %v407
      %v594 = vunpack.c.l.b16 %v408
      %v595 = vunpack.c.l.b16 %v409
      %v596 = vunpack.c.l.b16 %v410
      %v597 = vunpack.c.l.b16 %v411
      %v598 = vunpack.c.l.b16 %v412
      %v599 = vunpack.c.l.b16 %v413
      %v600 = vunpack.c.l.b16 %v414
      %v601 = vunpack.c.l.b16 %v415
      %v602 = vpack.c.b16 %v587, %v586
      %v603 = vpack.c.b16 %v589, %v588
      %v604 = vpack.c.b16 %v591, %v590
      %v605 = vpack.c.b16 %v593, %v592
      %v606 = vpack.c.b16 %v595, %v594
      %v607 = vpack.c.b16 %v597, %v596
      %v608 = vpack.c.b16 %v599, %v598
      %v609 = vpack.c.b16 %v601, %v600
      %618 = vmatprep.subr.bf16.mxu0 0
      %619 = vmatpush1.bf16.msra.mxu0 %v609
      %620 = vmatprep.subr.bf16.mxu0 0
      %621 = vmatpush1.bf16.msra.mxu0 %v608
      %622 = vmatprep.subr.bf16.mxu0 0
      %623 = vmatpush1.bf16.msra.mxu0 %v607
      %624 = vmatprep.subr.bf16.mxu0 0
      %625 = vmatpush1.bf16.msra.mxu0 %v606
      %626 = vmatprep.subr.bf16.mxu0 0
      %627 = vmatpush1.bf16.msra.mxu0 %v605
      %628 = vmatprep.subr.bf16.mxu0 0
      %629 = vmatpush1.bf16.msra.mxu0 %v604
      %630 = vmatprep.subr.bf16.mxu0 0
      %631 = vmatpush1.bf16.msra.mxu0 %v603
      %632 = vmatprep.subr.bf16.mxu0 0
      %633 = vmatpush1.bf16.msra.mxu0 %v602
      %634 = vmatprep.subr.bf16.mxu0 0
      %635 = vmatpush2.bf16.msra.mxu0 0
      %636 = vmatprep.subr.bf16.mxu0 0
      %637 = vmatpush2.bf16.msra.mxu0 0
      %638 = vmatprep.subr.bf16.mxu0 0
      %639 = vmatpush2.bf16.msra.mxu0 0
      %640 = vmatprep.subr.bf16.mxu0 0
      %641 = vmatpush2.bf16.msra.mxu0 0
      %642 = vmatprep.subr.bf16.mxu0 0
      %643 = vmatpush2.bf16.msra.mxu0 0
      %644 = vmatprep.subr.bf16.mxu0 0
      %645 = vmatpush2.bf16.msra.mxu0 0
      %646 = vmatprep.subr.bf16.mxu0 0
      %647 = vmatpush2.bf16.msra.mxu0 0
      %648 = vmatprep.subr.bf16.mxu0 0
      %649 = vmatpush2.bf16.msra.mxu0 0
      %650 = vmatprep.mubr.bf16.mxu0 0
      %651 = vmatmul.mubr.bf16.gmra.mxu0 %v396
      %v652 = vpop.f32.mrf.mxu0
      %v653 = vadd.f32 %v548, %v652
      %v654 = vpop.f32.mrf.mxu0
      %v655 = vpop.f32.mrf.mxu0
      %v656 = vadd.f32 %v551, %v655
      %v657 = vpop.f32.mrf.mxu0
      %658 = vmatprep.mubr.bf16.mxu0 0
      %659 = vmatmul.mubr.bf16.gmra.mxu0 %v397
      %v660 = vpop.f32.mrf.mxu0
      %v661 = vadd.f32 %v556, %v660
      %v662 = vpop.f32.mrf.mxu0
      %v663 = vpop.f32.mrf.mxu0
      %v664 = vadd.f32 %v559, %v663
      %v665 = vpop.f32.mrf.mxu0
      %666 = vmatprep.mubr.bf16.mxu0 0
      %667 = vmatmul.mubr.bf16.gmra.mxu0 %v398
      %v668 = vpop.f32.mrf.mxu0
      %v669 = vadd.f32 %v564, %v668
      %v670 = vpop.f32.mrf.mxu0
      %v671 = vpop.f32.mrf.mxu0
      %v672 = vadd.f32 %v567, %v671
      %v673 = vpop.f32.mrf.mxu0
      %674 = vdwg.mxu0
      %s675 = scalar_lea.vmem %s2, 128
      %v676 = vld [vmem:[%s675] sm:$0xf]
      %v677 = vld [vmem:[%s675 + $0x4] sm:$0xf]
      %v678 = vld [vmem:[%s675 + $0x8] sm:$0xf]
      %v679 = vld [vmem:[%s675 + $0xc] sm:$0xf]
      %v680 = vld [vmem:[%s675 + $0x10] sm:$0xf]
      %v681 = vld [vmem:[%s675 + $0x14] sm:$0xf]
      %v682 = vld [vmem:[%s675 + $0x18] sm:$0xf]
      %v683 = vld [vmem:[%s675 + $0x1c] sm:$0xf]
      %v684 = vld [vmem:[%s675 + $0x20] sm:$0xf]
      %v685 = vld [vmem:[%s675 + $0x24] sm:$0xf]
      %v686 = vld [vmem:[%s675 + $0x28] sm:$0xf]
      %v687 = vld [vmem:[%s675 + $0x2c] sm:$0xf]
      %v688 = vld [vmem:[%s675 + $0x30] sm:$0xf]
      %v689 = vld [vmem:[%s675 + $0x34] sm:$0xf]
      %v690 = vld [vmem:[%s675 + $0x38] sm:$0xf]
      %v691 = vld [vmem:[%s675 + $0x3c] sm:$0xf]
      %vm696 = vcmask 1046528
      %v697 = vrot.slane %v396, 1
      %v698 = vrot.slane %v397, 1
      %v699 = vsel %vm696, %v697, %v698
      %v700 = vrot.slane %v398, 1
      %v701 = vsel %vm696, %v698, %v700
      %v702 = vrot.slane %v399, 1
      %v703 = vsel %vm696, %v700, %v702
      %v723 = vunpack.c.l.b16 %v676
      %v724 = vunpack.c.l.b16 %v677
      %v725 = vunpack.c.l.b16 %v678
      %v726 = vunpack.c.l.b16 %v679
      %v727 = vunpack.c.l.b16 %v680
      %v728 = vunpack.c.l.b16 %v681
      %v729 = vunpack.c.l.b16 %v682
      %v730 = vunpack.c.l.b16 %v683
      %v731 = vunpack.c.l.b16 %v684
      %v732 = vunpack.c.l.b16 %v685
      %v733 = vunpack.c.l.b16 %v686
      %v734 = vunpack.c.l.b16 %v687
      %v735 = vunpack.c.l.b16 %v688
      %v736 = vunpack.c.l.b16 %v689
      %v737 = vunpack.c.l.b16 %v690
      %v738 = vunpack.c.l.b16 %v691
      %v739 = vpack.c.b16 %v724, %v723
      %v740 = vpack.c.b16 %v726, %v725
      %v741 = vpack.c.b16 %v728, %v727
      %v742 = vpack.c.b16 %v730, %v729
      %v743 = vpack.c.b16 %v732, %v731
      %v744 = vpack.c.b16 %v734, %v733
      %v745 = vpack.c.b16 %v736, %v735
      %v746 = vpack.c.b16 %v738, %v737
      %755 = vmatprep.subr.bf16.mxu0 0
      %756 = vmatpush1.bf16.msra.mxu0 %v746
      %757 = vmatprep.subr.bf16.mxu0 0
      %758 = vmatpush1.bf16.msra.mxu0 %v745
      %759 = vmatprep.subr.bf16.mxu0 0
      %760 = vmatpush1.bf16.msra.mxu0 %v744
      %761 = vmatprep.subr.bf16.mxu0 0
      %762 = vmatpush1.bf16.msra.mxu0 %v743
      %763 = vmatprep.subr.bf16.mxu0 0
      %764 = vmatpush1.bf16.msra.mxu0 %v742
      %765 = vmatprep.subr.bf16.mxu0 0
      %766 = vmatpush1.bf16.msra.mxu0 %v741
      %767 = vmatprep.subr.bf16.mxu0 0
      %768 = vmatpush1.bf16.msra.mxu0 %v740
      %769 = vmatprep.subr.bf16.mxu0 0
      %770 = vmatpush1.bf16.msra.mxu0 %v739
      %771 = vmatprep.subr.bf16.mxu0 0
      %772 = vmatpush2.bf16.msra.mxu0 0
      %773 = vmatprep.subr.bf16.mxu0 0
      %774 = vmatpush2.bf16.msra.mxu0 0
      %775 = vmatprep.subr.bf16.mxu0 0
      %776 = vmatpush2.bf16.msra.mxu0 0
      %777 = vmatprep.subr.bf16.mxu0 0
      %778 = vmatpush2.bf16.msra.mxu0 0
      %779 = vmatprep.subr.bf16.mxu0 0
      %780 = vmatpush2.bf16.msra.mxu0 0
      %781 = vmatprep.subr.bf16.mxu0 0
      %782 = vmatpush2.bf16.msra.mxu0 0
      %783 = vmatprep.subr.bf16.mxu0 0
      %784 = vmatpush2.bf16.msra.mxu0 0
      %785 = vmatprep.subr.bf16.mxu0 0
      %786 = vmatpush2.bf16.msra.mxu0 0
      %787 = vmatprep.mubr.bf16.mxu0 0
      %788 = vmatmul.mubr.bf16.gmra.mxu0 %v699
      %v789 = vpop.f32.mrf.mxu0
      %v790 = vadd.f32 0.0, %v789
      %v791 = vpop.f32.mrf.mxu0
      %v792 = vpop.f32.mrf.mxu0
      %v793 = vadd.f32 0.0, %v792
      %v794 = vpop.f32.mrf.mxu0
      %795 = vmatprep.mubr.bf16.mxu0 0
      %796 = vmatmul.mubr.bf16.gmra.mxu0 %v701
      %v797 = vpop.f32.mrf.mxu0
      %v798 = vadd.f32 0.0, %v797
      %v799 = vpop.f32.mrf.mxu0
      %v800 = vpop.f32.mrf.mxu0
      %v801 = vadd.f32 0.0, %v800
      %v802 = vpop.f32.mrf.mxu0
      %803 = vmatprep.mubr.bf16.mxu0 0
      %804 = vmatmul.mubr.bf16.gmra.mxu0 %v703
      %v805 = vpop.f32.mrf.mxu0
      %v806 = vadd.f32 0.0, %v805
      %v807 = vpop.f32.mrf.mxu0
      %v808 = vpop.f32.mrf.mxu0
      %v809 = vadd.f32 0.0, %v808
      %v810 = vpop.f32.mrf.mxu0
      %811 = vdwg.mxu0
      %v812 = vadd.f32 %v653, %v790
      %v813 = vadd.f32 %v656, %v793
      %v814 = vadd.f32 %v661, %v798
      %v815 = vadd.f32 %v664, %v801
      %v816 = vadd.f32 %v669, %v806
      %v817 = vadd.f32 %v672, %v809
      %s818 = scalar_lea.vmem %s2, 192
      %v819 = vld [vmem:[%s818] sm:$0xf]
      %v820 = vld [vmem:[%s818 + $0x4] sm:$0xf]
      %v821 = vld [vmem:[%s818 + $0x8] sm:$0xf]
      %v822 = vld [vmem:[%s818 + $0xc] sm:$0xf]
      %v823 = vld [vmem:[%s818 + $0x10] sm:$0xf]
      %v824 = vld [vmem:[%s818 + $0x14] sm:$0xf]
      %v825 = vld [vmem:[%s818 + $0x18] sm:$0xf]
      %v826 = vld [vmem:[%s818 + $0x1c] sm:$0xf]
      %v827 = vld [vmem:[%s818 + $0x20] sm:$0xf]
      %v828 = vld [vmem:[%s818 + $0x24] sm:$0xf]
      %v829 = vld [vmem:[%s818 + $0x28] sm:$0xf]
      %v830 = vld [vmem:[%s818 + $0x2c] sm:$0xf]
      %v831 = vld [vmem:[%s818 + $0x30] sm:$0xf]
      %v832 = vld [vmem:[%s818 + $0x34] sm:$0xf]
      %v833 = vld [vmem:[%s818 + $0x38] sm:$0xf]
      %v834 = vld [vmem:[%s818 + $0x3c] sm:$0xf]
      %vm835 = vsmask.f32 6400
      %v836 = vrot.slane %v435, 1
      %v837 = vrot.slane %v437, 2
      %v838 = vor.u32 %v836, %v837
      %v839 = vrot.slane %v446, 1
      %v840 = vrot.slane %v442, 2
      %v841 = vor.u32 %v839, %v840
      %v842 = vsel %vm835, %v838, %v841
      %v843 = vrot.slane %v454, 1
      %v844 = vrot.slane %v450, 2
      %v845 = vor.u32 %v843, %v844
      %v846 = vsel %vm835, %v841, %v845
      %v847 = vshrl.u32 %v399, 16
      %v849 = vrot.slane %v847, 1
      %v850 = vrot.slane %v458, 2
      %v851 = vor.u32 %v849, %v850
      %v852 = vsel %vm835, %v845, %v851
      %v872 = vunpack.c.l.b16 %v819
      %v873 = vunpack.c.l.b16 %v820
      %v874 = vunpack.c.l.b16 %v821
      %v875 = vunpack.c.l.b16 %v822
      %v876 = vunpack.c.l.b16 %v823
      %v877 = vunpack.c.l.b16 %v824
      %v878 = vunpack.c.l.b16 %v825
      %v879 = vunpack.c.l.b16 %v826
      %v880 = vunpack.c.l.b16 %v827
      %v881 = vunpack.c.l.b16 %v828
      %v882 = vunpack.c.l.b16 %v829
      %v883 = vunpack.c.l.b16 %v830
      %v884 = vunpack.c.l.b16 %v831
      %v885 = vunpack.c.l.b16 %v832
      %v886 = vunpack.c.l.b16 %v833
      %v887 = vunpack.c.l.b16 %v834
      %v888 = vpack.c.b16 %v873, %v872
      %v889 = vpack.c.b16 %v875, %v874
      %v890 = vpack.c.b16 %v877, %v876
      %v891 = vpack.c.b16 %v879, %v878
      %v892 = vpack.c.b16 %v881, %v880
      %v893 = vpack.c.b16 %v883, %v882
      %v894 = vpack.c.b16 %v885, %v884
      %v895 = vpack.c.b16 %v887, %v886
      %904 = vmatprep.subr.bf16.mxu0 0
      %905 = vmatpush1.bf16.msra.mxu0 %v895
      %906 = vmatprep.subr.bf16.mxu0 0
      %907 = vmatpush1.bf16.msra.mxu0 %v894
      %908 = vmatprep.subr.bf16.mxu0 0
      %909 = vmatpush1.bf16.msra.mxu0 %v893
      %910 = vmatprep.subr.bf16.mxu0 0
      %911 = vmatpush1.bf16.msra.mxu0 %v892
      %912 = vmatprep.subr.bf16.mxu0 0
      %913 = vmatpush1.bf16.msra.mxu0 %v891
      %914 = vmatprep.subr.bf16.mxu0 0
      %915 = vmatpush1.bf16.msra.mxu0 %v890
      %916 = vmatprep.subr.bf16.mxu0 0
      %917 = vmatpush1.bf16.msra.mxu0 %v889
      %918 = vmatprep.subr.bf16.mxu0 0
      %919 = vmatpush1.bf16.msra.mxu0 %v888
      %920 = vmatprep.subr.bf16.mxu0 0
      %921 = vmatpush2.bf16.msra.mxu0 0
      %922 = vmatprep.subr.bf16.mxu0 0
      %923 = vmatpush2.bf16.msra.mxu0 0
      %924 = vmatprep.subr.bf16.mxu0 0
      %925 = vmatpush2.bf16.msra.mxu0 0
      %926 = vmatprep.subr.bf16.mxu0 0
      %927 = vmatpush2.bf16.msra.mxu0 0
      %928 = vmatprep.subr.bf16.mxu0 0
      %929 = vmatpush2.bf16.msra.mxu0 0
      %930 = vmatprep.subr.bf16.mxu0 0
      %931 = vmatpush2.bf16.msra.mxu0 0
      %932 = vmatprep.subr.bf16.mxu0 0
      %933 = vmatpush2.bf16.msra.mxu0 0
      %934 = vmatprep.subr.bf16.mxu0 0
      %935 = vmatpush2.bf16.msra.mxu0 0
      %936 = vmatprep.mubr.bf16.mxu0 0
      %937 = vmatmul.mubr.bf16.gmra.mxu0 %v842
      %v938 = vpop.f32.mrf.mxu0
      %v939 = vadd.f32 0.0, %v938
      %v940 = vpop.f32.mrf.mxu0
      %v941 = vpop.f32.mrf.mxu0
      %v942 = vadd.f32 0.0, %v941
      %v943 = vpop.f32.mrf.mxu0
      %944 = vmatprep.mubr.bf16.mxu0 0
      %945 = vmatmul.mubr.bf16.gmra.mxu0 %v846
      %v946 = vpop.f32.mrf.mxu0
      %v947 = vadd.f32 0.0, %v946
      %v948 = vpop.f32.mrf.mxu0
      %v949 = vpop.f32.mrf.mxu0
      %v950 = vadd.f32 0.0, %v949
      %v951 = vpop.f32.mrf.mxu0
      %952 = vmatprep.mubr.bf16.mxu0 0
      %953 = vmatmul.mubr.bf16.gmra.mxu0 %v852
      %v954 = vpop.f32.mrf.mxu0
      %v955 = vadd.f32 0.0, %v954
      %v956 = vpop.f32.mrf.mxu0
      %v957 = vpop.f32.mrf.mxu0
      %v958 = vadd.f32 0.0, %v957
      %v959 = vpop.f32.mrf.mxu0
      %960 = vdwg.mxu0
      %v961 = vadd.f32 %v812, %v939
      %v962 = vadd.f32 %v813, %v942
      %v963 = vadd.f32 %v814, %v947
      %v964 = vadd.f32 %v815, %v950
      %v965 = vadd.f32 %v816, %v955
      %v966 = vadd.f32 %v817, %v958
      %s967 = scalar_lea.vmem %s2, 256
      %v968 = vld [vmem:[%s967] sm:$0xf]
      %v969 = vld [vmem:[%s967 + $0x4] sm:$0xf]
      %v970 = vld [vmem:[%s967 + $0x8] sm:$0xf]
      %v971 = vld [vmem:[%s967 + $0xc] sm:$0xf]
      %v972 = vld [vmem:[%s967 + $0x10] sm:$0xf]
      %v973 = vld [vmem:[%s967 + $0x14] sm:$0xf]
      %v974 = vld [vmem:[%s967 + $0x18] sm:$0xf]
      %v975 = vld [vmem:[%s967 + $0x1c] sm:$0xf]
      %v976 = vld [vmem:[%s967 + $0x20] sm:$0xf]
      %v977 = vld [vmem:[%s967 + $0x24] sm:$0xf]
      %v978 = vld [vmem:[%s967 + $0x28] sm:$0xf]
      %v979 = vld [vmem:[%s967 + $0x2c] sm:$0xf]
      %v980 = vld [vmem:[%s967 + $0x30] sm:$0xf]
      %v981 = vld [vmem:[%s967 + $0x34] sm:$0xf]
      %v982 = vld [vmem:[%s967 + $0x38] sm:$0xf]
      %v983 = vld [vmem:[%s967 + $0x3c] sm:$0xf]
      %vm984 = vcmask 1045504
      %v985 = vrot.slane %v396, 2
      %v986 = vrot.slane %v397, 2
      %v987 = vsel %vm984, %v985, %v986
      %v988 = vrot.slane %v398, 2
      %v989 = vsel %vm984, %v986, %v988
      %v990 = vrot.slane %v399, 2
      %v991 = vsel %vm984, %v988, %v990
      %v1011 = vunpack.c.l.b16 %v968
      %v1012 = vunpack.c.l.b16 %v969
      %v1013 = vunpack.c.l.b16 %v970
      %v1014 = vunpack.c.l.b16 %v971
      %v1015 = vunpack.c.l.b16 %v972
      %v1016 = vunpack.c.l.b16 %v973
      %v1017 = vunpack.c.l.b16 %v974
      %v1018 = vunpack.c.l.b16 %v975
      %v1019 = vunpack.c.l.b16 %v976
      %v1020 = vunpack.c.l.b16 %v977
      %v1021 = vunpack.c.l.b16 %v978
      %v1022 = vunpack.c.l.b16 %v979
      %v1023 = vunpack.c.l.b16 %v980
      %v1024 = vunpack.c.l.b16 %v981
      %v1025 = vunpack.c.l.b16 %v982
      %v1026 = vunpack.c.l.b16 %v983
      %v1027 = vpack.c.b16 %v1012, %v1011
      %v1028 = vpack.c.b16 %v1014, %v1013
      %v1029 = vpack.c.b16 %v1016, %v1015
      %v1030 = vpack.c.b16 %v1018, %v1017
      %v1031 = vpack.c.b16 %v1020, %v1019
      %v1032 = vpack.c.b16 %v1022, %v1021
      %v1033 = vpack.c.b16 %v1024, %v1023
      %v1034 = vpack.c.b16 %v1026, %v1025
      %1043 = vmatprep.subr.bf16.mxu0 0
      %1044 = vmatpush1.bf16.msra.mxu0 %v1034
      %1045 = vmatprep.subr.bf16.mxu0 0
      %1046 = vmatpush1.bf16.msra.mxu0 %v1033
      %1047 = vmatprep.subr.bf16.mxu0 0
      %1048 = vmatpush1.bf16.msra.mxu0 %v1032
      %1049 = vmatprep.subr.bf16.mxu0 0
      %1050 = vmatpush1.bf16.msra.mxu0 %v1031
      %1051 = vmatprep.subr.bf16.mxu0 0
      %1052 = vmatpush1.bf16.msra.mxu0 %v1030
      %1053 = vmatprep.subr.bf16.mxu0 0
      %1054 = vmatpush1.bf16.msra.mxu0 %v1029
      %1055 = vmatprep.subr.bf16.mxu0 0
      %1056 = vmatpush1.bf16.msra.mxu0 %v1028
      %1057 = vmatprep.subr.bf16.mxu0 0
      %1058 = vmatpush1.bf16.msra.mxu0 %v1027
      %1059 = vmatprep.subr.bf16.mxu0 0
      %1060 = vmatpush2.bf16.msra.mxu0 0
      %1061 = vmatprep.subr.bf16.mxu0 0
      %1062 = vmatpush2.bf16.msra.mxu0 0
      %1063 = vmatprep.subr.bf16.mxu0 0
      %1064 = vmatpush2.bf16.msra.mxu0 0
      %1065 = vmatprep.subr.bf16.mxu0 0
      %1066 = vmatpush2.bf16.msra.mxu0 0
      %1067 = vmatprep.subr.bf16.mxu0 0
      %1068 = vmatpush2.bf16.msra.mxu0 0
      %1069 = vmatprep.subr.bf16.mxu0 0
      %1070 = vmatpush2.bf16.msra.mxu0 0
      %1071 = vmatprep.subr.bf16.mxu0 0
      %1072 = vmatpush2.bf16.msra.mxu0 0
      %1073 = vmatprep.subr.bf16.mxu0 0
      %1074 = vmatpush2.bf16.msra.mxu0 0
      %1075 = vmatprep.mubr.bf16.mxu0 0
      %1076 = vmatmul.mubr.bf16.gmra.mxu0 %v987
      %v1077 = vpop.f32.mrf.mxu0
      %v1078 = vadd.f32 0.0, %v1077
      %v1079 = vpop.f32.mrf.mxu0
      %v1080 = vpop.f32.mrf.mxu0
      %v1081 = vadd.f32 0.0, %v1080
      %v1082 = vpop.f32.mrf.mxu0
      %1083 = vmatprep.mubr.bf16.mxu0 0
      %1084 = vmatmul.mubr.bf16.gmra.mxu0 %v989
      %v1085 = vpop.f32.mrf.mxu0
      %v1086 = vadd.f32 0.0, %v1085
      %v1087 = vpop.f32.mrf.mxu0
      %v1088 = vpop.f32.mrf.mxu0
      %v1089 = vadd.f32 0.0, %v1088
      %v1090 = vpop.f32.mrf.mxu0
      %1091 = vmatprep.mubr.bf16.mxu0 0
      %1092 = vmatmul.mubr.bf16.gmra.mxu0 %v991
      %v1093 = vpop.f32.mrf.mxu0
      %v1094 = vadd.f32 0.0, %v1093
      %v1095 = vpop.f32.mrf.mxu0
      %v1096 = vpop.f32.mrf.mxu0
      %v1097 = vadd.f32 0.0, %v1096
      %v1098 = vpop.f32.mrf.mxu0
      %1099 = vdwg.mxu0
      %v1100 = vadd.f32 %v961, %v1078
      %v1101 = vadd.f32 %v962, %v1081
      %v1102 = vadd.f32 %v963, %v1086
      %v1103 = vadd.f32 %v964, %v1089
      %v1104 = vadd.f32 %v965, %v1094
      %v1105 = vadd.f32 %v966, %v1097
      %v1106 = vld [vmem:[%s3] sm:$0x1]
      %v1108 = vlaneseq
      %v1109 = vshrl.u32 %v1108, 7
      %v1110 = vsub.s32 0, %v1109
      %v1111 = vrot.slane %v1106, %v1110
      %v1113 = vadd.f32 %v1100, %v1111
      %v1114 = vadd.f32 %v1101, %v1111
      %v1115 = vadd.f32 %v1102, %v1111
      %v1116 = vadd.f32 %v1103, %v1111
      %v1117 = vadd.f32 %v1104, %v1111
      %v1118 = vadd.f32 %v1105, %v1111
      %v1119 = vmax.f32 %v1113, 0.0
      %v1120 = vmax.f32 %v1114, 0.0
      %v1121 = vmax.f32 %v1115, 0.0
      %v1122 = vmax.f32 %v1116, 0.0
      %v1123 = vmax.f32 %v1117, 0.0
      %v1124 = vmax.f32 %v1118, 0.0
      %v1125 = vpack.c.bf16 %v1120, %v1119
      %v1126 = vpack.c.bf16 %v1122, %v1121
      %v1127 = vpack.c.bf16 %v1124, %v1123
      %v1131 = vunpack.c.l.b16 %v1125
      %v1132 = vunpack.c.h.b16 %v1125
      %v1133 = vunpack.c.l.b16 %v1126
      %v1134 = vunpack.c.h.b16 %v1126
      %v1135 = vunpack.c.l.b16 %v1127
      %v1136 = vunpack.c.h.b16 %v1127
      %v1137 = vpack.c.b16 %v1131, %v1131
      %v1138 = vpack.c.b16 %v1132, %v1132
      %v1139 = vpack.c.b16 %v1133, %v1133
      %v1140 = vpack.c.b16 %v1134, %v1134
      %v1141 = vpack.c.b16 %v1135, %v1135
      %v1142 = vpack.c.b16 %v1136, %v1136
      %1149 = vst [vmem:[%s296] sm:$0xf] %v1137
      %1150 = vst [vmem:[%s296 + $0x4] sm:$0xf] %v1138
      %1151 = vst [vmem:[%s296 + $0x8] sm:$0xf] %v1139
      %1152 = vst [vmem:[%s296 + $0xc] sm:$0xf] %v1140
      %1153 = vst [vmem:[%s296 + $0x10] sm:$0xf] %v1141
      %1154 = vst [vmem:[%s296 + $0x14] sm:$0xf] %v1142
      %s1155 = sld [smem:[#allocation3 + %s26]]
      %v1156 = vstv %s1155
      %vm1157 = vcmp.lt.s32.totalorder %v319, %v1156
      %vm1158 = vcmp.lt.s32.totalorder %v320, %v1156
      %vm1159 = vcmp.lt.s32.totalorder %v321, %v1156
      %vm1160 = vcmp.lt.s32.totalorder %v322, %v1156
      %vm1161 = vcmp.lt.s32.totalorder %v323, %v1156
      %vm1162 = vcmp.lt.s32.totalorder %v324, %v1156
      %v1163 = vsel %vm1157, 1, 0
      %v1164 = vsel %vm1158, 1, 0
      %v1165 = vsel %vm1159, 1, 0
      %v1166 = vsel %vm1160, 1, 0
      %v1167 = vsel %vm1161, 1, 0
      %v1168 = vsel %vm1162, 1, 0
      %v1169 = vcvt.s32.f32 %v1163
      %v1170 = vcvt.s32.f32 %v1164
      %v1171 = vcvt.s32.f32 %v1165
      %v1172 = vcvt.s32.f32 %v1166
      %v1173 = vcvt.s32.f32 %v1167
      %v1174 = vcvt.s32.f32 %v1168
      %v1175 = vmul.f32 %v1119, %v1169
      %v1176 = vmul.f32 %v1120, %v1170
      %v1177 = vmul.f32 %v1121, %v1171
      %v1178 = vmul.f32 %v1122, %v1172
      %v1179 = vmul.f32 %v1123, %v1173
      %v1180 = vmul.f32 %v1124, %v1174
      %v1181 = vadd.f32 %v1175, %v1176
      %v1182 = vadd.f32 %v1181, %v1177
      %v1183 = vadd.f32 %v1182, %v1178
      %v1184 = vadd.f32 %v1183, %v1179
      %v1185 = vadd.f32 %v1184, %v1180
      %v1186 = vrot.slane %v1185, 4
      %v1187 = vadd.f32 %v1185, %v1186
      %v1188 = vrot.slane %v1187, 2
      %v1189 = vadd.f32 %v1187, %v1188
      %v1190 = vrot.slane %v1189, 1
      %v1191 = vadd.f32 %v1189, %v1190
      %1192 = vst [vmem:[%s299] sm:$0x1] %v1191
      %v1193 = vmul.f32 %v1175, %v1119
      %v1194 = vmul.f32 %v1176, %v1120
      %v1195 = vmul.f32 %v1177, %v1121
      %v1196 = vmul.f32 %v1178, %v1122
      %v1197 = vmul.f32 %v1179, %v1123
      %v1198 = vmul.f32 %v1180, %v1124
      %v1199 = vadd.f32 %v1193, %v1194
      %v1200 = vadd.f32 %v1199, %v1195
      %v1201 = vadd.f32 %v1200, %v1196
      %v1202 = vadd.f32 %v1201, %v1197
      %v1203 = vadd.f32 %v1202, %v1198
      %v1204 = vrot.slane %v1203, 4
      %v1205 = vadd.f32 %v1203, %v1204
      %v1206 = vrot.slane %v1205, 2
      %v1207 = vadd.f32 %v1205, %v1206
      %v1208 = vrot.slane %v1207, 1
      %v1209 = vadd.f32 %v1207, %v1208
      %1210 = vst [vmem:[%s302] sm:$0x1] %v1209
      %p1211 = scmp.lt.s32.totalorder %s26, 3
      %s1212 = scalar_select %p1211, %s26, 3
      %s1213 = smul.addr %s1212, 6
      %s1214 = smul.addr %s1213, 4
      %s1215 = scalar_lea.vmem %s6, %s1214
      %p1216 = scmp.lt.s32.totalorder %s26, 3
      %s1217 = scalar_select %p1216, %s26, 3
      %s1218 = scalar_lea.vmem %s7, %s1217
      %p1219 = scmp.lt.s32.totalorder %s26, 3
      %s1220 = scalar_select %p1219, %s26, 3
      %s1221 = scalar_lea.vmem %s8, %s1220
      // Predicated region
      $region41: #{tdnn_nas_forward.10} parent=39 // pred_check
        %p1222 = pneg %p154
      $region42: #{tdnn_nas_forward.10} parent=39 // pred_check_branch
        %1224 = sbr.rel (%p1222) target = $region44
      $region43: #{tdnn_nas_forward.10} parent=39 // pred_region
        _
      $region44: #{tdnn_nas_forward.10} parent=39 // pred_fallthru
        _
      // Predicated region
      $region45: #{tdnn_nas_forward.10} parent=39 // pred_check
        %p1225 = pneg %p180
      $region46: #{tdnn_nas_forward.10} parent=39 // pred_check_branch
        %1227 = sbr.rel (%p1225) target = $region48
      $region47: #{tdnn_nas_forward.10} parent=39 // pred_region
        _
      $region48: #{tdnn_nas_forward.10} parent=39 // pred_fallthru
        _
      // Predicated region
      $region49: #{tdnn_nas_forward.10} parent=39 // pred_check
        %p1228 = pneg %p206
      $region50: #{tdnn_nas_forward.10} parent=39 // pred_check_branch
        %1230 = sbr.rel (%p1228) target = $region52
      $region51: #{tdnn_nas_forward.10} parent=39 // pred_region
        _
      $region52: #{tdnn_nas_forward.10} parent=39 // pred_fallthru
        _
    $region40: #{tdnn_nas_forward.10} parent=5 // pred_fallthru
      _
    %p1231 = scmp.le.s32.totalorder 2, %s21
    // Predicated region
    $region53: #{tdnn_nas_forward.10} parent=5 // pred_check
      %p1232 = pneg %p1231
    $region54: #{tdnn_nas_forward.10} parent=5 // pred_check_branch
      %1234 = sbr.rel (%p1232) target = $region56
    $region55: #{tdnn_nas_forward.10} parent=5 // pred_region
      %s1235 = ssub.s32 %s21, 2
      // Predicated region
      $region57: #{tdnn_nas_forward.10} parent=55 // pred_check
        %p1236 = pneg %p160
      $region58: #{tdnn_nas_forward.10} parent=55 // pred_check_branch
        %1238 = sbr.rel (%p1236) target = $region60
      $region59: #{tdnn_nas_forward.10} parent=55 // pred_region
        %p1239 = scmp.lt.s32.totalorder %s27, 3
        %s1240 = scalar_select %p1239, %s27, 3
        %s1241 = smul.addr %s1240, 6
        %s1242 = smul.addr %s1241, 4
        %s1243 = scalar_lea.vmem %s6, %s1242
      $region60: #{tdnn_nas_forward.10} parent=55 // pred_fallthru
        _
      // Predicated region
      $region61: #{tdnn_nas_forward.10} parent=55 // pred_check
        %p1244 = pneg %p186
      $region62: #{tdnn_nas_forward.10} parent=55 // pred_check_branch
        %1246 = sbr.rel (%p1244) target = $region64
      $region63: #{tdnn_nas_forward.10} parent=55 // pred_region
        %p1247 = scmp.lt.s32.totalorder %s27, 3
        %s1248 = scalar_select %p1247, %s27, 3
        %s1249 = scalar_lea.vmem %s7, %s1248
      $region64: #{tdnn_nas_forward.10} parent=55 // pred_fallthru
        _
      // Predicated region
      $region65: #{tdnn_nas_forward.10} parent=55 // pred_check
        %p1250 = pneg %p212
      $region66: #{tdnn_nas_forward.10} parent=55 // pred_check_branch
        %1252 = sbr.rel (%p1250) target = $region68
      $region67: #{tdnn_nas_forward.10} parent=55 // pred_region
        %p1253 = scmp.lt.s32.totalorder %s27, 3
        %s1254 = scalar_select %p1253, %s27, 3
        %s1255 = scalar_lea.vmem %s8, %s1254
      $region68: #{tdnn_nas_forward.10} parent=55 // pred_fallthru
        _
    $region56: #{tdnn_nas_forward.10} parent=5 // pred_fallthru
      _
  $region6: #{tdnn_nas_forward.10} parent=0 // loop_footer
    %s25 = sadd.s32 1, %s21
  $region7: #{tdnn_nas_forward.10} parent=0 // loop_footer_branch
    %20 = sbr.rel target = $region3
  $region8: #{tdnn_nas_forward.10} parent=0 // loop_exit
    _

// kernel: tdnn_nas_forward.15
$region0: #{tdnn_nas_forward.15}
  #allocation0 [shape = 'u32[]', space=smem, size = 0x4, offset = 0x4, fixed_abs, tag = 'smem constant byte address 0x4 - core index']
  #allocation1 [shape = 'u32[144,128]{1,0:T(1,128)}', space=vmem, size = 0x12000, scoped, tag = 'internal scratch']
  %s0 = inlined_call_operand.vmem [shape: bf16[64,128], index: 0, kind: input, shape index: {}]
  %s1 = inlined_call_operand.vmem [shape: bf16[128,128], index: 1, kind: input, shape index: {}]
  %s2 = inlined_call_operand.vmem [shape: f32[1,128], index: 2, kind: input, shape index: {}]
  %s3 = inlined_call_operand.vmem [shape: f32[64,128], index: 3, kind: output, shape index: {}]
  %s4 = sld [smem:[#allocation0]]
  $region22: #{tdnn_nas_forward.15} parent=0
    _
  %s6 = ssub.s32 1, %s4
  %s7 = scalar_select 0, %s6, %s4
  // Predicated region
  $region2: #{tdnn_nas_forward.15} parent=0 // pred_check
    _
  $region3: #{tdnn_nas_forward.15} parent=0 // pred_check_branch
    %9 = sbr.rel (0) target = $region5
  $region4: #{tdnn_nas_forward.15} parent=0 // pred_region
    _
  $region5: #{tdnn_nas_forward.15} parent=0 // pred_fallthru
    _
  // Predicated region
  $region6: #{tdnn_nas_forward.15} parent=0 // pred_check
    _
  $region7: #{tdnn_nas_forward.15} parent=0 // pred_check_branch
    %11 = sbr.rel (0) target = $region9
  $region8: #{tdnn_nas_forward.15} parent=0 // pred_region
    _
  $region9: #{tdnn_nas_forward.15} parent=0 // pred_fallthru
    _
  // Predicated region
  $region10: #{tdnn_nas_forward.15} parent=0 // pred_check
    _
  $region11: #{tdnn_nas_forward.15} parent=0 // pred_check_branch
    %13 = sbr.rel (0) target = $region13
  $region12: #{tdnn_nas_forward.15} parent=0 // pred_region
    _
  $region13: #{tdnn_nas_forward.15} parent=0 // pred_fallthru
    _
  %v15 = vld [vmem:[%s0] sm:$0xf]
  %v16 = vld [vmem:[%s0 + $0x4] sm:$0xf]
  %v17 = vld [vmem:[%s0 + $0x8] sm:$0xf]
  %v18 = vld [vmem:[%s0 + $0xc] sm:$0xf]
  %v19 = vld [vmem:[%s0 + $0x10] sm:$0xf]
  %v20 = vld [vmem:[%s0 + $0x14] sm:$0xf]
  %v21 = vld [vmem:[%s0 + $0x18] sm:$0xf]
  %v22 = vld [vmem:[%s0 + $0x1c] sm:$0xf]
  %v23 = vld [vmem:[%s1] sm:$0xf]
  %v24 = vld [vmem:[%s1 + $0x4] sm:$0xf]
  %v25 = vld [vmem:[%s1 + $0x8] sm:$0xf]
  %v26 = vld [vmem:[%s1 + $0xc] sm:$0xf]
  %v27 = vld [vmem:[%s1 + $0x10] sm:$0xf]
  %v28 = vld [vmem:[%s1 + $0x14] sm:$0xf]
  %v29 = vld [vmem:[%s1 + $0x18] sm:$0xf]
  %v30 = vld [vmem:[%s1 + $0x1c] sm:$0xf]
  %v31 = vld [vmem:[%s1 + $0x20] sm:$0xf]
  %v32 = vld [vmem:[%s1 + $0x24] sm:$0xf]
  %v33 = vld [vmem:[%s1 + $0x28] sm:$0xf]
  %v34 = vld [vmem:[%s1 + $0x2c] sm:$0xf]
  %v35 = vld [vmem:[%s1 + $0x30] sm:$0xf]
  %v36 = vld [vmem:[%s1 + $0x34] sm:$0xf]
  %v37 = vld [vmem:[%s1 + $0x38] sm:$0xf]
  %v38 = vld [vmem:[%s1 + $0x3c] sm:$0xf]
  %v39 = vld [vmem:[%s2] sm:$0x1]
  %v41 = vlaneseq
  %v42 = vshrl.u32 %v41, 7
  %v43 = vsub.s32 0, %v42
  %v44 = vrot.slane %v39, %v43
  %v54 = vunpack.c.l.b16 %v15
  %v55 = vunpack.c.l.b16 %v16
  %v56 = vunpack.c.l.b16 %v17
  %v57 = vunpack.c.l.b16 %v18
  %v58 = vunpack.c.l.b16 %v19
  %v59 = vunpack.c.l.b16 %v20
  %v60 = vunpack.c.l.b16 %v21
  %v61 = vunpack.c.l.b16 %v22
  %v62 = vpack.c.b16 %v55, %v54
  %v63 = vpack.c.b16 %v57, %v56
  %v64 = vpack.c.b16 %v59, %v58
  %v65 = vpack.c.b16 %v61, %v60
  %v86 = vunpack.c.l.b16 %v23
  %v87 = vunpack.c.l.b16 %v24
  %v88 = vunpack.c.l.b16 %v25
  %v89 = vunpack.c.l.b16 %v26
  %v90 = vunpack.c.l.b16 %v27
  %v91 = vunpack.c.l.b16 %v28
  %v92 = vunpack.c.l.b16 %v29
  %v93 = vunpack.c.l.b16 %v30
  %v94 = vunpack.c.l.b16 %v31
  %v95 = vunpack.c.l.b16 %v32
  %v96 = vunpack.c.l.b16 %v33
  %v97 = vunpack.c.l.b16 %v34
  %v98 = vunpack.c.l.b16 %v35
  %v99 = vunpack.c.l.b16 %v36
  %v100 = vunpack.c.l.b16 %v37
  %v101 = vunpack.c.l.b16 %v38
  %v102 = vpack.c.b16 %v87, %v86
  %v103 = vpack.c.b16 %v89, %v88
  %v104 = vpack.c.b16 %v91, %v90
  %v105 = vpack.c.b16 %v93, %v92
  %v106 = vpack.c.b16 %v95, %v94
  %v107 = vpack.c.b16 %v97, %v96
  %v108 = vpack.c.b16 %v99, %v98
  %v109 = vpack.c.b16 %v101, %v100
  %118 = vmatprep.subr.bf16.mxu0 0
  %119 = vmatpush1.bf16.msra.mxu0 %v109
  %120 = vmatprep.subr.bf16.mxu0 0
  %121 = vmatpush1.bf16.msra.mxu0 %v108
  %122 = vmatprep.subr.bf16.mxu0 0
  %123 = vmatpush1.bf16.msra.mxu0 %v107
  %124 = vmatprep.subr.bf16.mxu0 0
  %125 = vmatpush1.bf16.msra.mxu0 %v106
  %126 = vmatprep.subr.bf16.mxu0 0
  %127 = vmatpush1.bf16.msra.mxu0 %v105
  %128 = vmatprep.subr.bf16.mxu0 0
  %129 = vmatpush1.bf16.msra.mxu0 %v104
  %130 = vmatprep.subr.bf16.mxu0 0
  %131 = vmatpush1.bf16.msra.mxu0 %v103
  %132 = vmatprep.subr.bf16.mxu0 0
  %133 = vmatpush1.bf16.msra.mxu0 %v102
  %134 = vmatprep.subr.bf16.mxu0 0
  %135 = vmatpush2.bf16.msra.mxu0 0
  %136 = vmatprep.subr.bf16.mxu0 0
  %137 = vmatpush2.bf16.msra.mxu0 0
  %138 = vmatprep.subr.bf16.mxu0 0
  %139 = vmatpush2.bf16.msra.mxu0 0
  %140 = vmatprep.subr.bf16.mxu0 0
  %141 = vmatpush2.bf16.msra.mxu0 0
  %142 = vmatprep.subr.bf16.mxu0 0
  %143 = vmatpush2.bf16.msra.mxu0 0
  %144 = vmatprep.subr.bf16.mxu0 0
  %145 = vmatpush2.bf16.msra.mxu0 0
  %146 = vmatprep.subr.bf16.mxu0 0
  %147 = vmatpush2.bf16.msra.mxu0 0
  %148 = vmatprep.subr.bf16.mxu0 0
  %149 = vmatpush2.bf16.msra.mxu0 0
  %150 = vmatprep.mubr.bf16.mxu0 0
  %151 = vmatmul.mubr.bf16.gmra.mxu0 %v62
  %v152 = vpop.f32.mrf.mxu0
  %v153 = vadd.f32 %v44, %v152
  %v154 = vpop.f32.mrf.mxu0
  %v155 = vpop.f32.mrf.mxu0
  %v156 = vadd.f32 %v44, %v155
  %v157 = vpop.f32.mrf.mxu0
  %158 = vmatprep.mubr.bf16.mxu0 0
  %159 = vmatmul.mubr.bf16.gmra.mxu0 %v63
  %v160 = vpop.f32.mrf.mxu0
  %v161 = vadd.f32 %v44, %v160
  %v162 = vpop.f32.mrf.mxu0
  %v163 = vpop.f32.mrf.mxu0
  %v164 = vadd.f32 %v44, %v163
  %v165 = vpop.f32.mrf.mxu0
  %166 = vmatprep.mubr.bf16.mxu0 0
  %167 = vmatmul.mubr.bf16.gmra.mxu0 %v64
  %v168 = vpop.f32.mrf.mxu0
  %v169 = vadd.f32 %v44, %v168
  %v170 = vpop.f32.mrf.mxu0
  %v171 = vpop.f32.mrf.mxu0
  %v172 = vadd.f32 %v44, %v171
  %v173 = vpop.f32.mrf.mxu0
  %174 = vmatprep.mubr.bf16.mxu0 0
  %175 = vmatmul.mubr.bf16.gmra.mxu0 %v65
  %v176 = vpop.f32.mrf.mxu0
  %v177 = vadd.f32 %v44, %v176
  %v178 = vpop.f32.mrf.mxu0
  %v179 = vpop.f32.mrf.mxu0
  %v180 = vadd.f32 %v44, %v179
  %v181 = vpop.f32.mrf.mxu0
  %182 = vdwg.mxu0
  %183 = vst [vmem:[%s3] sm:$0xff] %v153
  %184 = vst [vmem:[%s3 + $0x8] sm:$0xff] %v156
  %185 = vst [vmem:[%s3 + $0x10] sm:$0xff] %v161
  %186 = vst [vmem:[%s3 + $0x18] sm:$0xff] %v164
  %187 = vst [vmem:[%s3 + $0x20] sm:$0xff] %v169
  %188 = vst [vmem:[%s3 + $0x28] sm:$0xff] %v172
  %189 = vst [vmem:[%s3 + $0x30] sm:$0xff] %v177
  %190 = vst [vmem:[%s3 + $0x38] sm:$0xff] %v180
  // Predicated region
  $region14: #{tdnn_nas_forward.15} parent=0 // pred_check
    _
  $region15: #{tdnn_nas_forward.15} parent=0 // pred_check_branch
    %192 = sbr.rel (0) target = $region17
  $region16: #{tdnn_nas_forward.15} parent=0 // pred_region
    _
  $region17: #{tdnn_nas_forward.15} parent=0 // pred_fallthru
    _
  // Predicated region
  $region18: #{tdnn_nas_forward.15} parent=0 // pred_check
    _
  $region19: #{tdnn_nas_forward.15} parent=0 // pred_check_branch
    %194 = sbr.rel (0) target = $region21
  $region20: #{tdnn_nas_forward.15} parent=0 // pred_region
    _
  $region21: #{tdnn_nas_forward.15} parent=0 // pred_fallthru
    _

// kernel: tdnn_nas_forward.12
$region0: #{tdnn_nas_forward.12}
  #allocation0 [shape = 'u32[]', space=smem, size = 0x4, offset = 0x4, fixed_abs, tag = 'smem constant byte address 0x4 - core index']
  #allocation1 [shape = 'u32[144,128]{1,0:T(1,128)}', space=vmem, size = 0x12000, scoped, tag = 'internal scratch']
  #allocation2 [shape = 's32[1]{0}', space=sflag, size = 0x4, scoped, tag = 'scoped memory for tdnn_nas_forward.12']
  #allocation3 [shape = 'u8[512]{0}', space=smem, size = 0x200, scoped, tag = 'prefetched SMEM operand 0']
  %s0 = inlined_call_operand.vmem [shape: s32[4], index: 0, kind: input, shape index: {}]
  %s1 = inlined_call_operand.vmem [shape: bf16[4,24,128], index: 1, kind: input, shape index: {}]
  %s2 = inlined_call_operand.vmem [shape: bf16[5,128,128], index: 2, kind: input, shape index: {}]
  %s3 = inlined_call_operand.vmem [shape: f32[1,128], index: 3, kind: input, shape index: {}]
  %s4 = inlined_call_operand.vmem [shape: f32[1,128], index: 4, kind: input, shape index: {}]
  %s5 = inlined_call_operand.vmem [shape: f32[1,128], index: 5, kind: input, shape index: {}]
  %s6 = inlined_call_operand.vmem [shape: bf16[4,16,128], index: 6, kind: output, shape index: {0}]
  %s7 = inlined_call_operand.vmem [shape: f32[4,1,128], index: 7, kind: output, shape index: {1}]
  %s8 = inlined_call_operand.vmem [shape: f32[4,1,128], index: 8, kind: output, shape index: {2}]
  %9 = xla_tuple %s6, %s7, %s8
  %s10 = sld [smem:[#allocation0]]
  $region69: #{tdnn_nas_forward.12} parent=0
    _
  %s12 = ssub.s32 1, %s10
  %s13 = scalar_select 0, %s12, %s10
  %s14 = sshll.u32 %s0, 4
  %s15 = int_to_ptr.vmem [resolvable:$true] %s14
  %17 = dma.vmem_to_smem %s15, 16, [#allocation3], [#allocation2]
  %18 = dma.done [#allocation2], 16
  %19 = sfence
  loop: start=0, step=1, limit=6
  $region2: #{tdnn_nas_forward.12} parent=0 // loop_pre_header
    _
  $region3: #{tdnn_nas_forward.12} parent=0 // loop_header
    %s21 = sphi 0, %s25
    %p22 = scmp.ge.s32.totalorder %s21, 6
    %s31 = sphi 0, %s33
    %s34 = sphi 0, %s31
    %s35 = sphi 0, %s34
    %s51 = sphi 0, %s35
    %s55 = sphi 0, %s55
    %s57 = sphi 0, %s55
    %s58 = sphi 0, %s57
    %s72 = sphi 0, %s58
    %s76 = sphi 0, %s76
    %s78 = sphi 0, %s76
    %s79 = sphi 0, %s78
    %s93 = sphi 0, %s79
    %s97 = sphi 0, %s97
    %s99 = sphi 0, %s97
    %s100 = sphi 0, %s99
    %s114 = sphi 0, %s100
    %s118 = sphi 0, %s118
    %s120 = sphi 0, %s118
    %s121 = sphi 0, %s120
    %s135 = sphi 0, %s121
    %s141 = sphi 0, %s143
    %s144 = sphi 0, %s141
    %s145 = sphi 0, %s144
    %s161 = sphi 0, %s145
    %s167 = sphi 0, %s169
    %s170 = sphi 0, %s167
    %s171 = sphi 0, %s170
    %s187 = sphi 0, %s171
    %s193 = sphi 0, %s195
    %s196 = sphi 0, %s193
    %s197 = sphi 0, %s196
    %s213 = sphi 0, %s197
  $region4: #{tdnn_nas_forward.12} parent=0 // loop_header_branch
    %24 = sbr.rel (%p22) target = $region8
  $region5: #{tdnn_nas_forward.12} parent=0 // loop_body
    %s26 = ssub.s32 %s21, 1
    %s27 = ssub.s32 %s21, 2
    %s28 = sadd.s32 %s21, 1
    %s29 = ssub.s32 %s21, %s28
    %p30 = scmp.eq.s32.totalorder %s29, 0
    %s32 = sadd.s32 %s31, 1
    %s33 = scalar_select %p30, %s31, %s32
    %p36 = pneg %p30
    %p37 = scmp.eq.s32.totalorder %s21, 3
    %p38 = por %p36, %p37
    %p39 = scmp.ne.s32.totalorder %s31, %s34
    %p40 = scmp.eq.s32.totalorder %s21, 0
    %p41 = por %p39, %p40
    %p42 = scmp.ne.s32.totalorder %s31, %s34
    %p43 = scmp.eq.s32.totalorder %s26, 3
    %p44 = por %p42, %p43
    %p45 = scmp.ne.s32.totalorder %s34, %s35
    %p46 = scmp.eq.s32.totalorder %s26, 0
    %p47 = por %p45, %p46
    %p48 = scmp.ne.s32.totalorder %s34, %s35
    %p49 = scmp.eq.s32.totalorder %s27, 3
    %p50 = por %p48, %p49
    %p52 = scmp.ne.s32.totalorder %s35, %s51
    %p53 = scmp.eq.s32.totalorder %s27, 0
    %p54 = por %p52, %p53
    %s56 = sadd.s32 %s55, 1
    %p59 = scmp.eq.s32.totalorder %s21, 3
    %p60 = scmp.ne.s32.totalorder %s55, %s57
    %p61 = scmp.eq.s32.totalorder %s21, 0
    %p62 = por %p60, %p61
    %p63 = scmp.ne.s32.totalorder %s55, %s57
    %p64 = scmp.eq.s32.totalorder %s26, 3
    %p65 = por %p63, %p64
    %p66 = scmp.ne.s32.totalorder %s57, %s58
    %p67 = scmp.eq.s32.totalorder %s26, 0
    %p68 = por %p66, %p67
    %p69 = scmp.ne.s32.totalorder %s57, %s58
    %p70 = scmp.eq.s32.totalorder %s27, 3
    %p71 = por %p69, %p70
    %p73 = scmp.ne.s32.totalorder %s58, %s72
    %p74 = scmp.eq.s32.totalorder %s27, 0
    %p75 = por %p73, %p74
    %s77 = sadd.s32 %s76, 1
    %p80 = scmp.eq.s32.totalorder %s21, 3
    %p81 = scmp.ne.s32.totalorder %s76, %s78
    %p82 = scmp.eq.s32.totalorder %s21, 0
    %p83 = por %p81, %p82
    %p84 = scmp.ne.s32.totalorder %s76, %s78
    %p85 = scmp.eq.s32.totalorder %s26, 3
    %p86 = por %p84, %p85
    %p87 = scmp.ne.s32.totalorder %s78, %s79
    %p88 = scmp.eq.s32.totalorder %s26, 0
    %p89 = por %p87, %p88
    %p90 = scmp.ne.s32.totalorder %s78, %s79
    %p91 = scmp.eq.s32.totalorder %s27, 3
    %p92 = por %p90, %p91
    %p94 = scmp.ne.s32.totalorder %s79, %s93
    %p95 = scmp.eq.s32.totalorder %s27, 0
    %p96 = por %p94, %p95
    %s98 = sadd.s32 %s97, 1
    %p101 = scmp.eq.s32.totalorder %s21, 3
    %p102 = scmp.ne.s32.totalorder %s97, %s99
    %p103 = scmp.eq.s32.totalorder %s21, 0
    %p104 = por %p102, %p103
    %p105 = scmp.ne.s32.totalorder %s97, %s99
    %p106 = scmp.eq.s32.totalorder %s26, 3
    %p107 = por %p105, %p106
    %p108 = scmp.ne.s32.totalorder %s99, %s100
    %p109 = scmp.eq.s32.totalorder %s26, 0
    %p110 = por %p108, %p109
    %p111 = scmp.ne.s32.totalorder %s99, %s100
    %p112 = scmp.eq.s32.totalorder %s27, 3
    %p113 = por %p111, %p112
    %p115 = scmp.ne.s32.totalorder %s100, %s114
    %p116 = scmp.eq.s32.totalorder %s27, 0
    %p117 = por %p115, %p116
    %s119 = sadd.s32 %s118, 1
    %p122 = scmp.eq.s32.totalorder %s21, 3
    %p123 = scmp.ne.s32.totalorder %s118, %s120
    %p124 = scmp.eq.s32.totalorder %s21, 0
    %p125 = por %p123, %p124
    %p126 = scmp.ne.s32.totalorder %s118, %s120
    %p127 = scmp.eq.s32.totalorder %s26, 3
    %p128 = por %p126, %p127
    %p129 = scmp.ne.s32.totalorder %s120, %s121
    %p130 = scmp.eq.s32.totalorder %s26, 0
    %p131 = por %p129, %p130
    %p132 = scmp.ne.s32.totalorder %s120, %s121
    %p133 = scmp.eq.s32.totalorder %s27, 3
    %p134 = por %p132, %p133
    %p136 = scmp.ne.s32.totalorder %s121, %s135
    %p137 = scmp.eq.s32.totalorder %s27, 0
    %p138 = por %p136, %p137
    %s139 = ssub.s32 %s21, %s28
    %p140 = scmp.eq.s32.totalorder %s139, 0
    %s142 = sadd.s32 %s141, 1
    %s143 = scalar_select %p140, %s141, %s142
    %p146 = pneg %p140
    %p147 = scmp.eq.s32.totalorder %s21, 3
    %p148 = por %p146, %p147
    %p149 = scmp.ne.s32.totalorder %s141, %s144
    %p150 = scmp.eq.s32.totalorder %s21, 0
    %p151 = por %p149, %p150
    %p152 = scmp.ne.s32.totalorder %s141, %s144
    %p153 = scmp.eq.s32.totalorder %s26, 3
    %p154 = por %p152, %p153
    %p155 = scmp.ne.s32.totalorder %s144, %s145
    %p156 = scmp.eq.s32.totalorder %s26, 0
    %p157 = por %p155, %p156
    %p158 = scmp.ne.s32.totalorder %s144, %s145
    %p159 = scmp.eq.s32.totalorder %s27, 3
    %p160 = por %p158, %p159
    %p162 = scmp.ne.s32.totalorder %s145, %s161
    %p163 = scmp.eq.s32.totalorder %s27, 0
    %p164 = por %p162, %p163
    %s165 = ssub.s32 %s21, %s28
    %p166 = scmp.eq.s32.totalorder %s165, 0
    %s168 = sadd.s32 %s167, 1
    %s169 = scalar_select %p166, %s167, %s168
    %p172 = pneg %p166
    %p173 = scmp.eq.s32.totalorder %s21, 3
    %p174 = por %p172, %p173
    %p175 = scmp.ne.s32.totalorder %s167, %s170
    %p176 = scmp.eq.s32.totalorder %s21, 0
    %p177 = por %p175, %p176
    %p178 = scmp.ne.s32.totalorder %s167, %s170
    %p179 = scmp.eq.s32.totalorder %s26, 3
    %p180 = por %p178, %p179
    %p181 = scmp.ne.s32.totalorder %s170, %s171
    %p182 = scmp.eq.s32.totalorder %s26, 0
    %p183 = por %p181, %p182
    %p184 = scmp.ne.s32.totalorder %s170, %s171
    %p185 = scmp.eq.s32.totalorder %s27, 3
    %p186 = por %p184, %p185
    %p188 = scmp.ne.s32.totalorder %s171, %s187
    %p189 = scmp.eq.s32.totalorder %s27, 0
    %p190 = por %p188, %p189
    %s191 = ssub.s32 %s21, %s28
    %p192 = scmp.eq.s32.totalorder %s191, 0
    %s194 = sadd.s32 %s193, 1
    %s195 = scalar_select %p192, %s193, %s194
    %p198 = pneg %p192
    %p199 = scmp.eq.s32.totalorder %s21, 3
    %p200 = por %p198, %p199
    %p201 = scmp.ne.s32.totalorder %s193, %s196
    %p202 = scmp.eq.s32.totalorder %s21, 0
    %p203 = por %p201, %p202
    %p204 = scmp.ne.s32.totalorder %s193, %s196
    %p205 = scmp.eq.s32.totalorder %s26, 3
    %p206 = por %p204, %p205
    %p207 = scmp.ne.s32.totalorder %s196, %s197
    %p208 = scmp.eq.s32.totalorder %s26, 0
    %p209 = por %p207, %p208
    %p210 = scmp.ne.s32.totalorder %s196, %s197
    %p211 = scmp.eq.s32.totalorder %s27, 3
    %p212 = por %p210, %p211
    %p214 = scmp.ne.s32.totalorder %s197, %s213
    %p215 = scmp.eq.s32.totalorder %s27, 0
    %p216 = por %p214, %p215
    %p217 = scmp.le.s32.totalorder 1, %s21
    %p218 = scmp.lt.s32.totalorder %s21, 5
    %p219 = pnand %p217, %p218
    %p220 = pneg %p219
    // Predicated region
    $region9: #{tdnn_nas_forward.12} parent=5 // pred_check
      _
    $region10: #{tdnn_nas_forward.12} parent=5 // pred_check_branch
      %222 = sbr.rel (%p219) target = $region12
    $region11: #{tdnn_nas_forward.12} parent=5 // pred_region
      %s223 = ssub.s32 %s21, 1
      // Predicated region
      $region13: #{tdnn_nas_forward.12} parent=11 // pred_check
        %p224 = pneg %p68
      $region14: #{tdnn_nas_forward.12} parent=11 // pred_check_branch
        %226 = sbr.rel (%p224) target = $region16
      $region15: #{tdnn_nas_forward.12} parent=11 // pred_region
        _
      $region16: #{tdnn_nas_forward.12} parent=11 // pred_fallthru
        _
      // Predicated region
      $region17: #{tdnn_nas_forward.12} parent=11 // pred_check
        %p227 = pneg %p89
      $region18: #{tdnn_nas_forward.12} parent=11 // pred_check_branch
        %229 = sbr.rel (%p227) target = $region20
      $region19: #{tdnn_nas_forward.12} parent=11 // pred_region
        _
      $region20: #{tdnn_nas_forward.12} parent=11 // pred_fallthru
        _
      // Predicated region
      $region21: #{tdnn_nas_forward.12} parent=11 // pred_check
        %p230 = pneg %p110
      $region22: #{tdnn_nas_forward.12} parent=11 // pred_check_branch
        %232 = sbr.rel (%p230) target = $region24
      $region23: #{tdnn_nas_forward.12} parent=11 // pred_region
        _
      $region24: #{tdnn_nas_forward.12} parent=11 // pred_fallthru
        _
      // Predicated region
      $region25: #{tdnn_nas_forward.12} parent=11 // pred_check
        %p233 = pneg %p131
      $region26: #{tdnn_nas_forward.12} parent=11 // pred_check_branch
        %235 = sbr.rel (%p233) target = $region28
      $region27: #{tdnn_nas_forward.12} parent=11 // pred_region
        _
      $region28: #{tdnn_nas_forward.12} parent=11 // pred_fallthru
        _
    $region12: #{tdnn_nas_forward.12} parent=5 // pred_fallthru
      _
    %p236 = scmp.lt.s32.totalorder %s21, 4
    // Predicated region
    $region29: #{tdnn_nas_forward.12} parent=5 // pred_check
      %p237 = pneg %p236
    $region30: #{tdnn_nas_forward.12} parent=5 // pred_check_branch
      %239 = sbr.rel (%p237) target = $region32
    $region31: #{tdnn_nas_forward.12} parent=5 // pred_region
      // Predicated region
      $region33: #{tdnn_nas_forward.12} parent=31 // pred_check
        %p240 = pneg %p41
      $region34: #{tdnn_nas_forward.12} parent=31 // pred_check_branch
        %242 = sbr.rel (%p240) target = $region36
      $region35: #{tdnn_nas_forward.12} parent=31 // pred_region
        %p243 = scmp.lt.s32.totalorder %s21, 3
        %s244 = scalar_select %p243, %s21, 3
        %s245 = smul.addr %s244, 3
        %s246 = smul.addr %s245, 4
        %s247 = scalar_lea.vmem %s1, %s246
      $region36: #{tdnn_nas_forward.12} parent=31 // pred_fallthru
        _
    $region32: #{tdnn_nas_forward.12} parent=5 // pred_fallthru
      _
    %p248 = scmp.le.s32.totalorder 1, %s21
    %p249 = scmp.lt.s32.totalorder %s21, 5
    %p250 = pnand %p248, %p249
    %p251 = pneg %p250
    // Predicated region
    $region37: #{tdnn_nas_forward.12} parent=5 // pred_check
      _
    $region38: #{tdnn_nas_forward.12} parent=5 // pred_check_branch
      %253 = sbr.rel (%p250) target = $region40
    $region39: #{tdnn_nas_forward.12} parent=5 // pred_region
      %s254 = ssub.s32 %s21, 1
      %p255 = scmp.lt.s32.totalorder %s26, 3
      %s256 = scalar_select %p255, %s26, 3
      %s257 = smul.addr %s256, 3
      %s258 = smul.addr %s257, 4
      %s259 = scalar_lea.vmem %s1, %s258
      %p260 = pneg %p47
      %p261 = pneg %p44
      %p262 = pneg %p68
      %p263 = pneg %p65
      %p264 = pneg %p89
      %p265 = pneg %p86
      %p266 = pneg %p110
      %p267 = pneg %p107
      %p268 = pneg %p131
      %p269 = pneg %p128
      %p270 = pneg %p157
      %p271 = pneg %p154
      %p272 = scmp.lt.s32.totalorder %s26, 3
      %s273 = scalar_select %p272, %s26, 3
      %s274 = smul.addr %s273, 2
      %s275 = smul.addr %s274, 4
      %s276 = scalar_lea.vmem %s6, %s275
      %p277 = pneg %p183
      %p278 = pneg %p180
      %p279 = scmp.lt.s32.totalorder %s26, 3
      %s280 = scalar_select %p279, %s26, 3
      %s281 = scalar_lea.vmem %s7, %s280
      %p282 = pneg %p209
      %p283 = pneg %p206
      %p284 = scmp.lt.s32.totalorder %s26, 3
      %s285 = scalar_select %p284, %s26, 3
      %s286 = scalar_lea.vmem %s8, %s285
      %p287 = scmp.lt.s32.totalorder %s26, 3
      %s288 = scalar_select %p287, %s26, 3
      %s289 = smul.addr %s288, 3
      %s290 = smul.addr %s289, 4
      %s291 = scalar_lea.vmem %s1, %s290
      %p292 = scmp.lt.s32.totalorder %s26, 3
      %s293 = scalar_select %p292, %s26, 3
      %s294 = smul.addr %s293, 2
      %s295 = smul.addr %s294, 4
      %s296 = scalar_lea.vmem %s6, %s295
      %p297 = scmp.lt.s32.totalorder %s26, 3
      %s298 = scalar_select %p297, %s26, 3
      %s299 = scalar_lea.vmem %s7, %s298
      %p300 = scmp.lt.s32.totalorder %s26, 3
      %s301 = scalar_select %p300, %s26, 3
      %s302 = scalar_lea.vmem %s8, %s301
      %v304 = vld [vmem:[%s291] sm:$0xf]
      %v305 = vld [vmem:[%s291 + $0x4] sm:$0xf]
      %v306 = vld [vmem:[%s291 + $0x8] sm:$0xf]
      %v307 = vunpack.c.l.bf16 %v304
      %v308 = vunpack.c.l.bf16 %v305
      %v309 = vunpack.c.l.bf16 %v306
      %v310 = vlaneseq
      %v311 = vshrl.u32 %v310, 7
      %v312 = vadd.s32 %v311, 8
      %v313 = vadd.s32 %v311, 16
      %vm314 = vcmp.ge.s32.totalorder %v311, 4
      %vm315 = vcmp.ge.s32.totalorder %v312, 4
      %vm316 = vcmp.ge.s32.totalorder %v313, 4
      %vm317 = vcmp.lt.s32.totalorder %v311, 20
      %vm318 = vcmp.lt.s32.totalorder %v312, 20
      %vm319 = vcmp.lt.s32.totalorder %v313, 20
      %vm320 = vmand %vm314, %vm317
      %vm321 = vmand %vm315, %vm318
      %vm322 = vmand %vm316, %vm319
      %v323 = vld [vmem:[%s4] sm:$0x1]
      %v325 = vlaneseq
      %v326 = vshrl.u32 %v325, 7
      %v327 = vsub.s32 0, %v326
      %v328 = vrot.slane %v323, %v327
      %v330 = vmul.f32 %v307, %v328
      %v331 = vmul.f32 %v308, %v328
      %v332 = vmul.f32 %v309, %v328
      %v333 = vld [vmem:[%s5] sm:$0x1]
      %v335 = vlaneseq
      %v336 = vshrl.u32 %v335, 7
      %v337 = vsub.s32 0, %v336
      %v338 = vrot.slane %v333, %v337
      %v340 = vadd.f32 %v330, %v338
      %v341 = vadd.f32 %v331, %v338
      %v342 = vadd.f32 %v332, %v338
      %v343 = vsel %vm320, 1, 0
      %v344 = vsel %vm321, 1, 0
      %v345 = vsel %vm322, 1, 0
      %vm346 = vcmp.eq.s32.totalorder %v343, 1
      %vm347 = vcmp.eq.s32.totalorder %v344, 1
      %vm348 = vcmp.eq.s32.totalorder %v345, 1
      %v349 = vsel %vm346, %v340, 0.0
      %v350 = vsel %vm347, %v341, 0.0
      %v351 = vsel %vm348, %v342, 0.0
      %v352 = vpack.c.bf16 %v350, %v349
      %v353 = vpack.c.bf16 %v351, %v351
      %v354 = vld [vmem:[%s2] sm:$0xf]
      %v355 = vld [vmem:[%s2 + $0x4] sm:$0xf]
      %v356 = vld [vmem:[%s2 + $0x8] sm:$0xf]
      %v357 = vld [vmem:[%s2 + $0xc] sm:$0xf]
      %v358 = vld [vmem:[%s2 + $0x10] sm:$0xf]
      %v359 = vld [vmem:[%s2 + $0x14] sm:$0xf]
      %v360 = vld [vmem:[%s2 + $0x18] sm:$0xf]
      %v361 = vld [vmem:[%s2 + $0x1c] sm:$0xf]
      %v362 = vld [vmem:[%s2 + $0x20] sm:$0xf]
      %v363 = vld [vmem:[%s2 + $0x24] sm:$0xf]
      %v364 = vld [vmem:[%s2 + $0x28] sm:$0xf]
      %v365 = vld [vmem:[%s2 + $0x2c] sm:$0xf]
      %v366 = vld [vmem:[%s2 + $0x30] sm:$0xf]
      %v367 = vld [vmem:[%s2 + $0x34] sm:$0xf]
      %v368 = vld [vmem:[%s2 + $0x38] sm:$0xf]
      %v369 = vld [vmem:[%s2 + $0x3c] sm:$0xf]
      %s370 = scalar_lea.vmem %s2, 64
      %v371 = vld [vmem:[%s370] sm:$0xf]
      %v372 = vld [vmem:[%s370 + $0x4] sm:$0xf]
      %v373 = vld [vmem:[%s370 + $0x8] sm:$0xf]
      %v374 = vld [vmem:[%s370 + $0xc] sm:$0xf]
      %v375 = vld [vmem:[%s370 + $0x10] sm:$0xf]
      %v376 = vld [vmem:[%s370 + $0x14] sm:$0xf]
      %v377 = vld [vmem:[%s370 + $0x18] sm:$0xf]
      %v378 = vld [vmem:[%s370 + $0x1c] sm:$0xf]
      %v379 = vld [vmem:[%s370 + $0x20] sm:$0xf]
      %v380 = vld [vmem:[%s370 + $0x24] sm:$0xf]
      %v381 = vld [vmem:[%s370 + $0x28] sm:$0xf]
      %v382 = vld [vmem:[%s370 + $0x2c] sm:$0xf]
      %v383 = vld [vmem:[%s370 + $0x30] sm:$0xf]
      %v384 = vld [vmem:[%s370 + $0x34] sm:$0xf]
      %v385 = vld [vmem:[%s370 + $0x38] sm:$0xf]
      %v386 = vld [vmem:[%s370 + $0x3c] sm:$0xf]
      %vm389 = vcmask 1046528
      %v390 = vrot.slane %v352, 1
      %v391 = vrot.slane %v353, 1
      %v392 = vsel %vm389, %v390, %v391
      %v410 = vunpack.c.l.b16 %v371
      %v411 = vunpack.c.l.b16 %v372
      %v412 = vunpack.c.l.b16 %v373
      %v413 = vunpack.c.l.b16 %v374
      %v414 = vunpack.c.l.b16 %v375
      %v415 = vunpack.c.l.b16 %v376
      %v416 = vunpack.c.l.b16 %v377
      %v417 = vunpack.c.l.b16 %v378
      %v418 = vunpack.c.l.b16 %v379
      %v419 = vunpack.c.l.b16 %v380
      %v420 = vunpack.c.l.b16 %v381
      %v421 = vunpack.c.l.b16 %v382
      %v422 = vunpack.c.l.b16 %v383
      %v423 = vunpack.c.l.b16 %v384
      %v424 = vunpack.c.l.b16 %v385
      %v425 = vunpack.c.l.b16 %v386
      %v426 = vpack.c.b16 %v411, %v410
      %v427 = vpack.c.b16 %v413, %v412
      %v428 = vpack.c.b16 %v415, %v414
      %v429 = vpack.c.b16 %v417, %v416
      %v430 = vpack.c.b16 %v419, %v418
      %v431 = vpack.c.b16 %v421, %v420
      %v432 = vpack.c.b16 %v423, %v422
      %v433 = vpack.c.b16 %v425, %v424
      %442 = vmatprep.subr.bf16.mxu0 0
      %443 = vmatpush1.bf16.msra.mxu0 %v433
      %444 = vmatprep.subr.bf16.mxu0 0
      %445 = vmatpush1.bf16.msra.mxu0 %v432
      %446 = vmatprep.subr.bf16.mxu0 0
      %447 = vmatpush1.bf16.msra.mxu0 %v431
      %448 = vmatprep.subr.bf16.mxu0 0
      %449 = vmatpush1.bf16.msra.mxu0 %v430
      %450 = vmatprep.subr.bf16.mxu0 0
      %451 = vmatpush1.bf16.msra.mxu0 %v429
      %452 = vmatprep.subr.bf16.mxu0 0
      %453 = vmatpush1.bf16.msra.mxu0 %v428
      %454 = vmatprep.subr.bf16.mxu0 0
      %455 = vmatpush1.bf16.msra.mxu0 %v427
      %456 = vmatprep.subr.bf16.mxu0 0
      %457 = vmatpush1.bf16.msra.mxu0 %v426
      %458 = vmatprep.subr.bf16.mxu0 0
      %459 = vmatpush2.bf16.msra.mxu0 0
      %460 = vmatprep.subr.bf16.mxu0 0
      %461 = vmatpush2.bf16.msra.mxu0 0
      %462 = vmatprep.subr.bf16.mxu0 0
      %463 = vmatpush2.bf16.msra.mxu0 0
      %464 = vmatprep.subr.bf16.mxu0 0
      %465 = vmatpush2.bf16.msra.mxu0 0
      %466 = vmatprep.subr.bf16.mxu0 0
      %467 = vmatpush2.bf16.msra.mxu0 0
      %468 = vmatprep.subr.bf16.mxu0 0
      %469 = vmatpush2.bf16.msra.mxu0 0
      %470 = vmatprep.subr.bf16.mxu0 0
      %471 = vmatpush2.bf16.msra.mxu0 0
      %472 = vmatprep.subr.bf16.mxu0 0
      %473 = vmatpush2.bf16.msra.mxu0 0
      %474 = vmatprep.mubr.bf16.mxu0 0
      %475 = vmatmul.mubr.bf16.gmra.mxu0 %v392
      %v476 = vpop.f32.mrf.mxu0
      %v477 = vadd.f32 0.0, %v476
      %v478 = vpop.f32.mrf.mxu0
      %v479 = vpop.f32.mrf.mxu0
      %v480 = vadd.f32 0.0, %v479
      %v481 = vpop.f32.mrf.mxu0
      %482 = vdwg.mxu0
      %v499 = vunpack.c.l.b16 %v354
      %v500 = vunpack.c.l.b16 %v355
      %v501 = vunpack.c.l.b16 %v356
      %v502 = vunpack.c.l.b16 %v357
      %v503 = vunpack.c.l.b16 %v358
      %v504 = vunpack.c.l.b16 %v359
      %v505 = vunpack.c.l.b16 %v360
      %v506 = vunpack.c.l.b16 %v361
      %v507 = vunpack.c.l.b16 %v362
      %v508 = vunpack.c.l.b16 %v363
      %v509 = vunpack.c.l.b16 %v364
      %v510 = vunpack.c.l.b16 %v365
      %v511 = vunpack.c.l.b16 %v366
      %v512 = vunpack.c.l.b16 %v367
      %v513 = vunpack.c.l.b16 %v368
      %v514 = vunpack.c.l.b16 %v369
      %v515 = vpack.c.b16 %v500, %v499
      %v516 = vpack.c.b16 %v502, %v501
      %v517 = vpack.c.b16 %v504, %v503
      %v518 = vpack.c.b16 %v506, %v505
      %v519 = vpack.c.b16 %v508, %v507
      %v520 = vpack.c.b16 %v510, %v509
      %v521 = vpack.c.b16 %v512, %v511
      %v522 = vpack.c.b16 %v514, %v513
      %531 = vmatprep.subr.bf16.mxu0 0
      %532 = vmatpush1.bf16.msra.mxu0 %v522
      %533 = vmatprep.subr.bf16.mxu0 0
      %534 = vmatpush1.bf16.msra.mxu0 %v521
      %535 = vmatprep.subr.bf16.mxu0 0
      %536 = vmatpush1.bf16.msra.mxu0 %v520
      %537 = vmatprep.subr.bf16.mxu0 0
      %538 = vmatpush1.bf16.msra.mxu0 %v519
      %539 = vmatprep.subr.bf16.mxu0 0
      %540 = vmatpush1.bf16.msra.mxu0 %v518
      %541 = vmatprep.subr.bf16.mxu0 0
      %542 = vmatpush1.bf16.msra.mxu0 %v517
      %543 = vmatprep.subr.bf16.mxu0 0
      %544 = vmatpush1.bf16.msra.mxu0 %v516
      %545 = vmatprep.subr.bf16.mxu0 0
      %546 = vmatpush1.bf16.msra.mxu0 %v515
      %547 = vmatprep.subr.bf16.mxu0 0
      %548 = vmatpush2.bf16.msra.mxu0 0
      %549 = vmatprep.subr.bf16.mxu0 0
      %550 = vmatpush2.bf16.msra.mxu0 0
      %551 = vmatprep.subr.bf16.mxu0 0
      %552 = vmatpush2.bf16.msra.mxu0 0
      %553 = vmatprep.subr.bf16.mxu0 0
      %554 = vmatpush2.bf16.msra.mxu0 0
      %555 = vmatprep.subr.bf16.mxu0 0
      %556 = vmatpush2.bf16.msra.mxu0 0
      %557 = vmatprep.subr.bf16.mxu0 0
      %558 = vmatpush2.bf16.msra.mxu0 0
      %559 = vmatprep.subr.bf16.mxu0 0
      %560 = vmatpush2.bf16.msra.mxu0 0
      %561 = vmatprep.subr.bf16.mxu0 0
      %562 = vmatpush2.bf16.msra.mxu0 0
      %563 = vmatprep.mubr.bf16.mxu0 0
      %564 = vmatmul.mubr.bf16.gmra.mxu0 %v352
      %v565 = vpop.f32.mrf.mxu0
      %v566 = vadd.f32 %v477, %v565
      %v567 = vpop.f32.mrf.mxu0
      %v568 = vpop.f32.mrf.mxu0
      %v569 = vadd.f32 %v480, %v568
      %v570 = vpop.f32.mrf.mxu0
      %571 = vdwg.mxu0
      %s572 = scalar_lea.vmem %s2, 128
      %v573 = vld [vmem:[%s572] sm:$0xf]
      %v574 = vld [vmem:[%s572 + $0x4] sm:$0xf]
      %v575 = vld [vmem:[%s572 + $0x8] sm:$0xf]
      %v576 = vld [vmem:[%s572 + $0xc] sm:$0xf]
      %v577 = vld [vmem:[%s572 + $0x10] sm:$0xf]
      %v578 = vld [vmem:[%s572 + $0x14] sm:$0xf]
      %v579 = vld [vmem:[%s572 + $0x18] sm:$0xf]
      %v580 = vld [vmem:[%s572 + $0x1c] sm:$0xf]
      %v581 = vld [vmem:[%s572 + $0x20] sm:$0xf]
      %v582 = vld [vmem:[%s572 + $0x24] sm:$0xf]
      %v583 = vld [vmem:[%s572 + $0x28] sm:$0xf]
      %v584 = vld [vmem:[%s572 + $0x2c] sm:$0xf]
      %v585 = vld [vmem:[%s572 + $0x30] sm:$0xf]
      %v586 = vld [vmem:[%s572 + $0x34] sm:$0xf]
      %v587 = vld [vmem:[%s572 + $0x38] sm:$0xf]
      %v588 = vld [vmem:[%s572 + $0x3c] sm:$0xf]
      %vm589 = vcmask 1045504
      %v590 = vrot.slane %v352, 2
      %v591 = vrot.slane %v353, 2
      %v592 = vsel %vm589, %v590, %v591
      %v610 = vunpack.c.l.b16 %v573
      %v611 = vunpack.c.l.b16 %v574
      %v612 = vunpack.c.l.b16 %v575
      %v613 = vunpack.c.l.b16 %v576
      %v614 = vunpack.c.l.b16 %v577
      %v615 = vunpack.c.l.b16 %v578
      %v616 = vunpack.c.l.b16 %v579
      %v617 = vunpack.c.l.b16 %v580
      %v618 = vunpack.c.l.b16 %v581
      %v619 = vunpack.c.l.b16 %v582
      %v620 = vunpack.c.l.b16 %v583
      %v621 = vunpack.c.l.b16 %v584
      %v622 = vunpack.c.l.b16 %v585
      %v623 = vunpack.c.l.b16 %v586
      %v624 = vunpack.c.l.b16 %v587
      %v625 = vunpack.c.l.b16 %v588
      %v626 = vpack.c.b16 %v611, %v610
      %v627 = vpack.c.b16 %v613, %v612
      %v628 = vpack.c.b16 %v615, %v614
      %v629 = vpack.c.b16 %v617, %v616
      %v630 = vpack.c.b16 %v619, %v618
      %v631 = vpack.c.b16 %v621, %v620
      %v632 = vpack.c.b16 %v623, %v622
      %v633 = vpack.c.b16 %v625, %v624
      %642 = vmatprep.subr.bf16.mxu0 0
      %643 = vmatpush1.bf16.msra.mxu0 %v633
      %644 = vmatprep.subr.bf16.mxu0 0
      %645 = vmatpush1.bf16.msra.mxu0 %v632
      %646 = vmatprep.subr.bf16.mxu0 0
      %647 = vmatpush1.bf16.msra.mxu0 %v631
      %648 = vmatprep.subr.bf16.mxu0 0
      %649 = vmatpush1.bf16.msra.mxu0 %v630
      %650 = vmatprep.subr.bf16.mxu0 0
      %651 = vmatpush1.bf16.msra.mxu0 %v629
      %652 = vmatprep.subr.bf16.mxu0 0
      %653 = vmatpush1.bf16.msra.mxu0 %v628
      %654 = vmatprep.subr.bf16.mxu0 0
      %655 = vmatpush1.bf16.msra.mxu0 %v627
      %656 = vmatprep.subr.bf16.mxu0 0
      %657 = vmatpush1.bf16.msra.mxu0 %v626
      %658 = vmatprep.subr.bf16.mxu0 0
      %659 = vmatpush2.bf16.msra.mxu0 0
      %660 = vmatprep.subr.bf16.mxu0 0
      %661 = vmatpush2.bf16.msra.mxu0 0
      %662 = vmatprep.subr.bf16.mxu0 0
      %663 = vmatpush2.bf16.msra.mxu0 0
      %664 = vmatprep.subr.bf16.mxu0 0
      %665 = vmatpush2.bf16.msra.mxu0 0
      %666 = vmatprep.subr.bf16.mxu0 0
      %667 = vmatpush2.bf16.msra.mxu0 0
      %668 = vmatprep.subr.bf16.mxu0 0
      %669 = vmatpush2.bf16.msra.mxu0 0
      %670 = vmatprep.subr.bf16.mxu0 0
      %671 = vmatpush2.bf16.msra.mxu0 0
      %672 = vmatprep.subr.bf16.mxu0 0
      %673 = vmatpush2.bf16.msra.mxu0 0
      %674 = vmatprep.mubr.bf16.mxu0 0
      %675 = vmatmul.mubr.bf16.gmra.mxu0 %v592
      %v676 = vpop.f32.mrf.mxu0
      %v677 = vadd.f32 0.0, %v676
      %v678 = vpop.f32.mrf.mxu0
      %v679 = vpop.f32.mrf.mxu0
      %v680 = vadd.f32 0.0, %v679
      %v681 = vpop.f32.mrf.mxu0
      %682 = vdwg.mxu0
      %v683 = vadd.f32 %v566, %v677
      %v684 = vadd.f32 %v569, %v680
      %s685 = scalar_lea.vmem %s2, 192
      %v686 = vld [vmem:[%s685] sm:$0xf]
      %v687 = vld [vmem:[%s685 + $0x4] sm:$0xf]
      %v688 = vld [vmem:[%s685 + $0x8] sm:$0xf]
      %v689 = vld [vmem:[%s685 + $0xc] sm:$0xf]
      %v690 = vld [vmem:[%s685 + $0x10] sm:$0xf]
      %v691 = vld [vmem:[%s685 + $0x14] sm:$0xf]
      %v692 = vld [vmem:[%s685 + $0x18] sm:$0xf]
      %v693 = vld [vmem:[%s685 + $0x1c] sm:$0xf]
      %v694 = vld [vmem:[%s685 + $0x20] sm:$0xf]
      %v695 = vld [vmem:[%s685 + $0x24] sm:$0xf]
      %v696 = vld [vmem:[%s685 + $0x28] sm:$0xf]
      %v697 = vld [vmem:[%s685 + $0x2c] sm:$0xf]
      %v698 = vld [vmem:[%s685 + $0x30] sm:$0xf]
      %v699 = vld [vmem:[%s685 + $0x34] sm:$0xf]
      %v700 = vld [vmem:[%s685 + $0x38] sm:$0xf]
      %v701 = vld [vmem:[%s685 + $0x3c] sm:$0xf]
      %vm702 = vcmask 1044480
      %v703 = vrot.slane %v352, 3
      %v704 = vrot.slane %v353, 3
      %v705 = vsel %vm702, %v703, %v704
      %v723 = vunpack.c.l.b16 %v686
      %v724 = vunpack.c.l.b16 %v687
      %v725 = vunpack.c.l.b16 %v688
      %v726 = vunpack.c.l.b16 %v689
      %v727 = vunpack.c.l.b16 %v690
      %v728 = vunpack.c.l.b16 %v691
      %v729 = vunpack.c.l.b16 %v692
      %v730 = vunpack.c.l.b16 %v693
      %v731 = vunpack.c.l.b16 %v694
      %v732 = vunpack.c.l.b16 %v695
      %v733 = vunpack.c.l.b16 %v696
      %v734 = vunpack.c.l.b16 %v697
      %v735 = vunpack.c.l.b16 %v698
      %v736 = vunpack.c.l.b16 %v699
      %v737 = vunpack.c.l.b16 %v700
      %v738 = vunpack.c.l.b16 %v701
      %v739 = vpack.c.b16 %v724, %v723
      %v740 = vpack.c.b16 %v726, %v725
      %v741 = vpack.c.b16 %v728, %v727
      %v742 = vpack.c.b16 %v730, %v729
      %v743 = vpack.c.b16 %v732, %v731
      %v744 = vpack.c.b16 %v734, %v733
      %v745 = vpack.c.b16 %v736, %v735
      %v746 = vpack.c.b16 %v738, %v737
      %755 = vmatprep.subr.bf16.mxu0 0
      %756 = vmatpush1.bf16.msra.mxu0 %v746
      %757 = vmatprep.subr.bf16.mxu0 0
      %758 = vmatpush1.bf16.msra.mxu0 %v745
      %759 = vmatprep.subr.bf16.mxu0 0
      %760 = vmatpush1.bf16.msra.mxu0 %v744
      %761 = vmatprep.subr.bf16.mxu0 0
      %762 = vmatpush1.bf16.msra.mxu0 %v743
      %763 = vmatprep.subr.bf16.mxu0 0
      %764 = vmatpush1.bf16.msra.mxu0 %v742
      %765 = vmatprep.subr.bf16.mxu0 0
      %766 = vmatpush1.bf16.msra.mxu0 %v741
      %767 = vmatprep.subr.bf16.mxu0 0
      %768 = vmatpush1.bf16.msra.mxu0 %v740
      %769 = vmatprep.subr.bf16.mxu0 0
      %770 = vmatpush1.bf16.msra.mxu0 %v739
      %771 = vmatprep.subr.bf16.mxu0 0
      %772 = vmatpush2.bf16.msra.mxu0 0
      %773 = vmatprep.subr.bf16.mxu0 0
      %774 = vmatpush2.bf16.msra.mxu0 0
      %775 = vmatprep.subr.bf16.mxu0 0
      %776 = vmatpush2.bf16.msra.mxu0 0
      %777 = vmatprep.subr.bf16.mxu0 0
      %778 = vmatpush2.bf16.msra.mxu0 0
      %779 = vmatprep.subr.bf16.mxu0 0
      %780 = vmatpush2.bf16.msra.mxu0 0
      %781 = vmatprep.subr.bf16.mxu0 0
      %782 = vmatpush2.bf16.msra.mxu0 0
      %783 = vmatprep.subr.bf16.mxu0 0
      %784 = vmatpush2.bf16.msra.mxu0 0
      %785 = vmatprep.subr.bf16.mxu0 0
      %786 = vmatpush2.bf16.msra.mxu0 0
      %787 = vmatprep.mubr.bf16.mxu0 0
      %788 = vmatmul.mubr.bf16.gmra.mxu0 %v705
      %v789 = vpop.f32.mrf.mxu0
      %v790 = vadd.f32 0.0, %v789
      %v791 = vpop.f32.mrf.mxu0
      %v792 = vpop.f32.mrf.mxu0
      %v793 = vadd.f32 0.0, %v792
      %v794 = vpop.f32.mrf.mxu0
      %795 = vdwg.mxu0
      %v796 = vadd.f32 %v683, %v790
      %v797 = vadd.f32 %v684, %v793
      %s798 = scalar_lea.vmem %s2, 256
      %v799 = vld [vmem:[%s798] sm:$0xf]
      %v800 = vld [vmem:[%s798 + $0x4] sm:$0xf]
      %v801 = vld [vmem:[%s798 + $0x8] sm:$0xf]
      %v802 = vld [vmem:[%s798 + $0xc] sm:$0xf]
      %v803 = vld [vmem:[%s798 + $0x10] sm:$0xf]
      %v804 = vld [vmem:[%s798 + $0x14] sm:$0xf]
      %v805 = vld [vmem:[%s798 + $0x18] sm:$0xf]
      %v806 = vld [vmem:[%s798 + $0x1c] sm:$0xf]
      %v807 = vld [vmem:[%s798 + $0x20] sm:$0xf]
      %v808 = vld [vmem:[%s798 + $0x24] sm:$0xf]
      %v809 = vld [vmem:[%s798 + $0x28] sm:$0xf]
      %v810 = vld [vmem:[%s798 + $0x2c] sm:$0xf]
      %v811 = vld [vmem:[%s798 + $0x30] sm:$0xf]
      %v812 = vld [vmem:[%s798 + $0x34] sm:$0xf]
      %v813 = vld [vmem:[%s798 + $0x38] sm:$0xf]
      %v814 = vld [vmem:[%s798 + $0x3c] sm:$0xf]
      %vm815 = vcmask 1043456
      %v816 = vrot.slane %v352, 4
      %v817 = vrot.slane %v353, 4
      %v818 = vsel %vm815, %v816, %v817
      %v836 = vunpack.c.l.b16 %v799
      %v837 = vunpack.c.l.b16 %v800
      %v838 = vunpack.c.l.b16 %v801
      %v839 = vunpack.c.l.b16 %v802
      %v840 = vunpack.c.l.b16 %v803
      %v841 = vunpack.c.l.b16 %v804
      %v842 = vunpack.c.l.b16 %v805
      %v843 = vunpack.c.l.b16 %v806
      %v844 = vunpack.c.l.b16 %v807
      %v845 = vunpack.c.l.b16 %v808
      %v846 = vunpack.c.l.b16 %v809
      %v847 = vunpack.c.l.b16 %v810
      %v848 = vunpack.c.l.b16 %v811
      %v849 = vunpack.c.l.b16 %v812
      %v850 = vunpack.c.l.b16 %v813
      %v851 = vunpack.c.l.b16 %v814
      %v852 = vpack.c.b16 %v837, %v836
      %v853 = vpack.c.b16 %v839, %v838
      %v854 = vpack.c.b16 %v841, %v840
      %v855 = vpack.c.b16 %v843, %v842
      %v856 = vpack.c.b16 %v845, %v844
      %v857 = vpack.c.b16 %v847, %v846
      %v858 = vpack.c.b16 %v849, %v848
      %v859 = vpack.c.b16 %v851, %v850
      %868 = vmatprep.subr.bf16.mxu0 0
      %869 = vmatpush1.bf16.msra.mxu0 %v859
      %870 = vmatprep.subr.bf16.mxu0 0
      %871 = vmatpush1.bf16.msra.mxu0 %v858
      %872 = vmatprep.subr.bf16.mxu0 0
      %873 = vmatpush1.bf16.msra.mxu0 %v857
      %874 = vmatprep.subr.bf16.mxu0 0
      %875 = vmatpush1.bf16.msra.mxu0 %v856
      %876 = vmatprep.subr.bf16.mxu0 0
      %877 = vmatpush1.bf16.msra.mxu0 %v855
      %878 = vmatprep.subr.bf16.mxu0 0
      %879 = vmatpush1.bf16.msra.mxu0 %v854
      %880 = vmatprep.subr.bf16.mxu0 0
      %881 = vmatpush1.bf16.msra.mxu0 %v853
      %882 = vmatprep.subr.bf16.mxu0 0
      %883 = vmatpush1.bf16.msra.mxu0 %v852
      %884 = vmatprep.subr.bf16.mxu0 0
      %885 = vmatpush2.bf16.msra.mxu0 0
      %886 = vmatprep.subr.bf16.mxu0 0
      %887 = vmatpush2.bf16.msra.mxu0 0
      %888 = vmatprep.subr.bf16.mxu0 0
      %889 = vmatpush2.bf16.msra.mxu0 0
      %890 = vmatprep.subr.bf16.mxu0 0
      %891 = vmatpush2.bf16.msra.mxu0 0
      %892 = vmatprep.subr.bf16.mxu0 0
      %893 = vmatpush2.bf16.msra.mxu0 0
      %894 = vmatprep.subr.bf16.mxu0 0
      %895 = vmatpush2.bf16.msra.mxu0 0
      %896 = vmatprep.subr.bf16.mxu0 0
      %897 = vmatpush2.bf16.msra.mxu0 0
      %898 = vmatprep.subr.bf16.mxu0 0
      %899 = vmatpush2.bf16.msra.mxu0 0
      %900 = vmatprep.mubr.bf16.mxu0 0
      %901 = vmatmul.mubr.bf16.gmra.mxu0 %v818
      %v902 = vpop.f32.mrf.mxu0
      %v903 = vadd.f32 0.0, %v902
      %v904 = vpop.f32.mrf.mxu0
      %v905 = vpop.f32.mrf.mxu0
      %v906 = vadd.f32 0.0, %v905
      %v907 = vpop.f32.mrf.mxu0
      %908 = vdwg.mxu0
      %v909 = vadd.f32 %v796, %v903
      %v910 = vadd.f32 %v797, %v906
      %v911 = vld [vmem:[%s3] sm:$0x1]
      %v913 = vlaneseq
      %v914 = vshrl.u32 %v913, 7
      %v915 = vsub.s32 0, %v914
      %v916 = vrot.slane %v911, %v915
      %v918 = vadd.f32 %v909, %v916
      %v919 = vadd.f32 %v910, %v916
      %v920 = vmax.f32 %v918, 0.0
      %v921 = vmax.f32 %v919, 0.0
      %v922 = vpack.c.bf16 %v921, %v920
      %v924 = vunpack.c.l.b16 %v922
      %v925 = vunpack.c.h.b16 %v922
      %v926 = vpack.c.b16 %v924, %v924
      %v927 = vpack.c.b16 %v925, %v925
      %930 = vst [vmem:[%s296] sm:$0xf] %v926
      %931 = vst [vmem:[%s296 + $0x4] sm:$0xf] %v927
      %s932 = sld [smem:[#allocation3 + %s26]]
      %v933 = vstv %s932
      %vm934 = vcmp.lt.s32.totalorder %v311, %v933
      %vm935 = vcmp.lt.s32.totalorder %v312, %v933
      %v936 = vsel %vm934, 1, 0
      %v937 = vsel %vm935, 1, 0
      %v938 = vcvt.s32.f32 %v936
      %v939 = vcvt.s32.f32 %v937
      %v940 = vmul.f32 %v920, %v938
      %v941 = vmul.f32 %v921, %v939
      %v942 = vadd.f32 %v940, %v941
      %v943 = vrot.slane %v942, 4
      %v944 = vadd.f32 %v942, %v943
      %v945 = vrot.slane %v944, 2
      %v946 = vadd.f32 %v944, %v945
      %v947 = vrot.slane %v946, 1
      %v948 = vadd.f32 %v946, %v947
      %949 = vst [vmem:[%s299] sm:$0x1] %v948
      %v950 = vmul.f32 %v940, %v920
      %v951 = vmul.f32 %v941, %v921
      %v952 = vadd.f32 %v950, %v951
      %v953 = vrot.slane %v952, 4
      %v954 = vadd.f32 %v952, %v953
      %v955 = vrot.slane %v954, 2
      %v956 = vadd.f32 %v954, %v955
      %v957 = vrot.slane %v956, 1
      %v958 = vadd.f32 %v956, %v957
      %959 = vst [vmem:[%s302] sm:$0x1] %v958
      %p960 = scmp.lt.s32.totalorder %s26, 3
      %s961 = scalar_select %p960, %s26, 3
      %s962 = smul.addr %s961, 2
      %s963 = smul.addr %s962, 4
      %s964 = scalar_lea.vmem %s6, %s963
      %p965 = scmp.lt.s32.totalorder %s26, 3
      %s966 = scalar_select %p965, %s26, 3
      %s967 = scalar_lea.vmem %s7, %s966
      %p968 = scmp.lt.s32.totalorder %s26, 3
      %s969 = scalar_select %p968, %s26, 3
      %s970 = scalar_lea.vmem %s8, %s969
      // Predicated region
      $region41: #{tdnn_nas_forward.12} parent=39 // pred_check
        %p971 = pneg %p154
      $region42: #{tdnn_nas_forward.12} parent=39 // pred_check_branch
        %973 = sbr.rel (%p971) target = $region44
      $region43: #{tdnn_nas_forward.12} parent=39 // pred_region
        _
      $region44: #{tdnn_nas_forward.12} parent=39 // pred_fallthru
        _
      // Predicated region
      $region45: #{tdnn_nas_forward.12} parent=39 // pred_check
        %p974 = pneg %p180
      $region46: #{tdnn_nas_forward.12} parent=39 // pred_check_branch
        %976 = sbr.rel (%p974) target = $region48
      $region47: #{tdnn_nas_forward.12} parent=39 // pred_region
        _
      $region48: #{tdnn_nas_forward.12} parent=39 // pred_fallthru
        _
      // Predicated region
      $region49: #{tdnn_nas_forward.12} parent=39 // pred_check
        %p977 = pneg %p206
      $region50: #{tdnn_nas_forward.12} parent=39 // pred_check_branch
        %979 = sbr.rel (%p977) target = $region52
      $region51: #{tdnn_nas_forward.12} parent=39 // pred_region
        _
      $region52: #{tdnn_nas_forward.12} parent=39 // pred_fallthru
        _
    $region40: #{tdnn_nas_forward.12} parent=5 // pred_fallthru
      _
    %p980 = scmp.le.s32.totalorder 2, %s21
    // Predicated region
    $region53: #{tdnn_nas_forward.12} parent=5 // pred_check
      %p981 = pneg %p980
    $region54: #{tdnn_nas_forward.12} parent=5 // pred_check_branch
      %983 = sbr.rel (%p981) target = $region56
    $region55: #{tdnn_nas_forward.12} parent=5 // pred_region
      %s984 = ssub.s32 %s21, 2
      // Predicated region
      $region57: #{tdnn_nas_forward.12} parent=55 // pred_check
        %p985 = pneg %p160
      $region58: #{tdnn_nas_forward.12} parent=55 // pred_check_branch
        %987 = sbr.rel (%p985) target = $region60
      $region59: #{tdnn_nas_forward.12} parent=55 // pred_region
        %p988 = scmp.lt.s32.totalorder %s27, 3
        %s989 = scalar_select %p988, %s27, 3
        %s990 = smul.addr %s989, 2
        %s991 = smul.addr %s990, 4
        %s992 = scalar_lea.vmem %s6, %s991
      $region60: #{tdnn_nas_forward.12} parent=55 // pred_fallthru
        _
      // Predicated region
      $region61: #{tdnn_nas_forward.12} parent=55 // pred_check
        %p993 = pneg %p186
      $region62: #{tdnn_nas_forward.12} parent=55 // pred_check_branch
        %995 = sbr.rel (%p993) target = $region64
      $region63: #{tdnn_nas_forward.12} parent=55 // pred_region
        %p996 = scmp.lt.s32.totalorder %s27, 3
        %s997 = scalar_select %p996, %s27, 3
        %s998 = scalar_lea.vmem %s7, %s997
      $region64: #{tdnn_nas_forward.12} parent=55 // pred_fallthru
        _
      // Predicated region
      $region65: #{tdnn_nas_forward.12} parent=55 // pred_check
        %p999 = pneg %p212
      $region66: #{tdnn_nas_forward.12} parent=55 // pred_check_branch
        %1001 = sbr.rel (%p999) target = $region68
      $region67: #{tdnn_nas_forward.12} parent=55 // pred_region
        %p1002 = scmp.lt.s32.totalorder %s27, 3
        %s1003 = scalar_select %p1002, %s27, 3
        %s1004 = scalar_lea.vmem %s8, %s1003
      $region68: #{tdnn_nas_forward.12} parent=55 // pred_fallthru
        _
    $region56: #{tdnn_nas_forward.12} parent=5 // pred_fallthru
      _
  $region6: #{tdnn_nas_forward.12} parent=0 // loop_footer
    %s25 = sadd.s32 1, %s21
  $region7: #{tdnn_nas_forward.12} parent=0 // loop_footer_branch
    %20 = sbr.rel target = $region3
  $region8: #{tdnn_nas_forward.12} parent=0 // loop_exit
    _

// kernel: tdnn_nas_forward.13
$region0: #{tdnn_nas_forward.13}
  #allocation0 [shape = 'u32[]', space=smem, size = 0x4, offset = 0x4, fixed_abs, tag = 'smem constant byte address 0x4 - core index']
  #allocation1 [shape = 'u32[144,128]{1,0:T(1,128)}', space=vmem, size = 0x12000, scoped, tag = 'internal scratch']
  #allocation2 [shape = 's32[1]{0}', space=sflag, size = 0x4, scoped, tag = 'scoped memory for tdnn_nas_forward.13']
  #allocation3 [shape = 'u8[512]{0}', space=smem, size = 0x200, scoped, tag = 'prefetched SMEM operand 0']
  %s0 = inlined_call_operand.vmem [shape: s32[4], index: 0, kind: input, shape index: {}]
  %s1 = inlined_call_operand.vmem [shape: bf16[4,20,128], index: 1, kind: input, shape index: {}]
  %s2 = inlined_call_operand.vmem [shape: bf16[5,128,128], index: 2, kind: input, shape index: {}]
  %s3 = inlined_call_operand.vmem [shape: f32[1,128], index: 3, kind: input, shape index: {}]
  %s4 = inlined_call_operand.vmem [shape: f32[1,128], index: 4, kind: input, shape index: {}]
  %s5 = inlined_call_operand.vmem [shape: f32[1,128], index: 5, kind: input, shape index: {}]
  %s6 = inlined_call_operand.vmem [shape: bf16[4,16,128], index: 6, kind: output, shape index: {0}]
  %s7 = inlined_call_operand.vmem [shape: f32[4,1,128], index: 7, kind: output, shape index: {1}]
  %s8 = inlined_call_operand.vmem [shape: f32[4,1,128], index: 8, kind: output, shape index: {2}]
  %9 = xla_tuple %s6, %s7, %s8
  %s10 = sld [smem:[#allocation0]]
  $region69: #{tdnn_nas_forward.13} parent=0
    _
  %s12 = ssub.s32 1, %s10
  %s13 = scalar_select 0, %s12, %s10
  %s14 = sshll.u32 %s0, 4
  %s15 = int_to_ptr.vmem [resolvable:$true] %s14
  %17 = dma.vmem_to_smem %s15, 16, [#allocation3], [#allocation2]
  %18 = dma.done [#allocation2], 16
  %19 = sfence
  loop: start=0, step=1, limit=6
  $region2: #{tdnn_nas_forward.13} parent=0 // loop_pre_header
    _
  $region3: #{tdnn_nas_forward.13} parent=0 // loop_header
    %s21 = sphi 0, %s25
    %p22 = scmp.ge.s32.totalorder %s21, 6
    %s31 = sphi 0, %s33
    %s34 = sphi 0, %s31
    %s35 = sphi 0, %s34
    %s51 = sphi 0, %s35
    %s55 = sphi 0, %s55
    %s57 = sphi 0, %s55
    %s58 = sphi 0, %s57
    %s72 = sphi 0, %s58
    %s76 = sphi 0, %s76
    %s78 = sphi 0, %s76
    %s79 = sphi 0, %s78
    %s93 = sphi 0, %s79
    %s97 = sphi 0, %s97
    %s99 = sphi 0, %s97
    %s100 = sphi 0, %s99
    %s114 = sphi 0, %s100
    %s118 = sphi 0, %s118
    %s120 = sphi 0, %s118
    %s121 = sphi 0, %s120
    %s135 = sphi 0, %s121
    %s141 = sphi 0, %s143
    %s144 = sphi 0, %s141
    %s145 = sphi 0, %s144
    %s161 = sphi 0, %s145
    %s167 = sphi 0, %s169
    %s170 = sphi 0, %s167
    %s171 = sphi 0, %s170
    %s187 = sphi 0, %s171
    %s193 = sphi 0, %s195
    %s196 = sphi 0, %s193
    %s197 = sphi 0, %s196
    %s213 = sphi 0, %s197
  $region4: #{tdnn_nas_forward.13} parent=0 // loop_header_branch
    %24 = sbr.rel (%p22) target = $region8
  $region5: #{tdnn_nas_forward.13} parent=0 // loop_body
    %s26 = ssub.s32 %s21, 1
    %s27 = ssub.s32 %s21, 2
    %s28 = sadd.s32 %s21, 1
    %s29 = ssub.s32 %s21, %s28
    %p30 = scmp.eq.s32.totalorder %s29, 0
    %s32 = sadd.s32 %s31, 1
    %s33 = scalar_select %p30, %s31, %s32
    %p36 = pneg %p30
    %p37 = scmp.eq.s32.totalorder %s21, 3
    %p38 = por %p36, %p37
    %p39 = scmp.ne.s32.totalorder %s31, %s34
    %p40 = scmp.eq.s32.totalorder %s21, 0
    %p41 = por %p39, %p40
    %p42 = scmp.ne.s32.totalorder %s31, %s34
    %p43 = scmp.eq.s32.totalorder %s26, 3
    %p44 = por %p42, %p43
    %p45 = scmp.ne.s32.totalorder %s34, %s35
    %p46 = scmp.eq.s32.totalorder %s26, 0
    %p47 = por %p45, %p46
    %p48 = scmp.ne.s32.totalorder %s34, %s35
    %p49 = scmp.eq.s32.totalorder %s27, 3
    %p50 = por %p48, %p49
    %p52 = scmp.ne.s32.totalorder %s35, %s51
    %p53 = scmp.eq.s32.totalorder %s27, 0
    %p54 = por %p52, %p53
    %s56 = sadd.s32 %s55, 1
    %p59 = scmp.eq.s32.totalorder %s21, 3
    %p60 = scmp.ne.s32.totalorder %s55, %s57
    %p61 = scmp.eq.s32.totalorder %s21, 0
    %p62 = por %p60, %p61
    %p63 = scmp.ne.s32.totalorder %s55, %s57
    %p64 = scmp.eq.s32.totalorder %s26, 3
    %p65 = por %p63, %p64
    %p66 = scmp.ne.s32.totalorder %s57, %s58
    %p67 = scmp.eq.s32.totalorder %s26, 0
    %p68 = por %p66, %p67
    %p69 = scmp.ne.s32.totalorder %s57, %s58
    %p70 = scmp.eq.s32.totalorder %s27, 3
    %p71 = por %p69, %p70
    %p73 = scmp.ne.s32.totalorder %s58, %s72
    %p74 = scmp.eq.s32.totalorder %s27, 0
    %p75 = por %p73, %p74
    %s77 = sadd.s32 %s76, 1
    %p80 = scmp.eq.s32.totalorder %s21, 3
    %p81 = scmp.ne.s32.totalorder %s76, %s78
    %p82 = scmp.eq.s32.totalorder %s21, 0
    %p83 = por %p81, %p82
    %p84 = scmp.ne.s32.totalorder %s76, %s78
    %p85 = scmp.eq.s32.totalorder %s26, 3
    %p86 = por %p84, %p85
    %p87 = scmp.ne.s32.totalorder %s78, %s79
    %p88 = scmp.eq.s32.totalorder %s26, 0
    %p89 = por %p87, %p88
    %p90 = scmp.ne.s32.totalorder %s78, %s79
    %p91 = scmp.eq.s32.totalorder %s27, 3
    %p92 = por %p90, %p91
    %p94 = scmp.ne.s32.totalorder %s79, %s93
    %p95 = scmp.eq.s32.totalorder %s27, 0
    %p96 = por %p94, %p95
    %s98 = sadd.s32 %s97, 1
    %p101 = scmp.eq.s32.totalorder %s21, 3
    %p102 = scmp.ne.s32.totalorder %s97, %s99
    %p103 = scmp.eq.s32.totalorder %s21, 0
    %p104 = por %p102, %p103
    %p105 = scmp.ne.s32.totalorder %s97, %s99
    %p106 = scmp.eq.s32.totalorder %s26, 3
    %p107 = por %p105, %p106
    %p108 = scmp.ne.s32.totalorder %s99, %s100
    %p109 = scmp.eq.s32.totalorder %s26, 0
    %p110 = por %p108, %p109
    %p111 = scmp.ne.s32.totalorder %s99, %s100
    %p112 = scmp.eq.s32.totalorder %s27, 3
    %p113 = por %p111, %p112
    %p115 = scmp.ne.s32.totalorder %s100, %s114
    %p116 = scmp.eq.s32.totalorder %s27, 0
    %p117 = por %p115, %p116
    %s119 = sadd.s32 %s118, 1
    %p122 = scmp.eq.s32.totalorder %s21, 3
    %p123 = scmp.ne.s32.totalorder %s118, %s120
    %p124 = scmp.eq.s32.totalorder %s21, 0
    %p125 = por %p123, %p124
    %p126 = scmp.ne.s32.totalorder %s118, %s120
    %p127 = scmp.eq.s32.totalorder %s26, 3
    %p128 = por %p126, %p127
    %p129 = scmp.ne.s32.totalorder %s120, %s121
    %p130 = scmp.eq.s32.totalorder %s26, 0
    %p131 = por %p129, %p130
    %p132 = scmp.ne.s32.totalorder %s120, %s121
    %p133 = scmp.eq.s32.totalorder %s27, 3
    %p134 = por %p132, %p133
    %p136 = scmp.ne.s32.totalorder %s121, %s135
    %p137 = scmp.eq.s32.totalorder %s27, 0
    %p138 = por %p136, %p137
    %s139 = ssub.s32 %s21, %s28
    %p140 = scmp.eq.s32.totalorder %s139, 0
    %s142 = sadd.s32 %s141, 1
    %s143 = scalar_select %p140, %s141, %s142
    %p146 = pneg %p140
    %p147 = scmp.eq.s32.totalorder %s21, 3
    %p148 = por %p146, %p147
    %p149 = scmp.ne.s32.totalorder %s141, %s144
    %p150 = scmp.eq.s32.totalorder %s21, 0
    %p151 = por %p149, %p150
    %p152 = scmp.ne.s32.totalorder %s141, %s144
    %p153 = scmp.eq.s32.totalorder %s26, 3
    %p154 = por %p152, %p153
    %p155 = scmp.ne.s32.totalorder %s144, %s145
    %p156 = scmp.eq.s32.totalorder %s26, 0
    %p157 = por %p155, %p156
    %p158 = scmp.ne.s32.totalorder %s144, %s145
    %p159 = scmp.eq.s32.totalorder %s27, 3
    %p160 = por %p158, %p159
    %p162 = scmp.ne.s32.totalorder %s145, %s161
    %p163 = scmp.eq.s32.totalorder %s27, 0
    %p164 = por %p162, %p163
    %s165 = ssub.s32 %s21, %s28
    %p166 = scmp.eq.s32.totalorder %s165, 0
    %s168 = sadd.s32 %s167, 1
    %s169 = scalar_select %p166, %s167, %s168
    %p172 = pneg %p166
    %p173 = scmp.eq.s32.totalorder %s21, 3
    %p174 = por %p172, %p173
    %p175 = scmp.ne.s32.totalorder %s167, %s170
    %p176 = scmp.eq.s32.totalorder %s21, 0
    %p177 = por %p175, %p176
    %p178 = scmp.ne.s32.totalorder %s167, %s170
    %p179 = scmp.eq.s32.totalorder %s26, 3
    %p180 = por %p178, %p179
    %p181 = scmp.ne.s32.totalorder %s170, %s171
    %p182 = scmp.eq.s32.totalorder %s26, 0
    %p183 = por %p181, %p182
    %p184 = scmp.ne.s32.totalorder %s170, %s171
    %p185 = scmp.eq.s32.totalorder %s27, 3
    %p186 = por %p184, %p185
    %p188 = scmp.ne.s32.totalorder %s171, %s187
    %p189 = scmp.eq.s32.totalorder %s27, 0
    %p190 = por %p188, %p189
    %s191 = ssub.s32 %s21, %s28
    %p192 = scmp.eq.s32.totalorder %s191, 0
    %s194 = sadd.s32 %s193, 1
    %s195 = scalar_select %p192, %s193, %s194
    %p198 = pneg %p192
    %p199 = scmp.eq.s32.totalorder %s21, 3
    %p200 = por %p198, %p199
    %p201 = scmp.ne.s32.totalorder %s193, %s196
    %p202 = scmp.eq.s32.totalorder %s21, 0
    %p203 = por %p201, %p202
    %p204 = scmp.ne.s32.totalorder %s193, %s196
    %p205 = scmp.eq.s32.totalorder %s26, 3
    %p206 = por %p204, %p205
    %p207 = scmp.ne.s32.totalorder %s196, %s197
    %p208 = scmp.eq.s32.totalorder %s26, 0
    %p209 = por %p207, %p208
    %p210 = scmp.ne.s32.totalorder %s196, %s197
    %p211 = scmp.eq.s32.totalorder %s27, 3
    %p212 = por %p210, %p211
    %p214 = scmp.ne.s32.totalorder %s197, %s213
    %p215 = scmp.eq.s32.totalorder %s27, 0
    %p216 = por %p214, %p215
    %p217 = scmp.le.s32.totalorder 1, %s21
    %p218 = scmp.lt.s32.totalorder %s21, 5
    %p219 = pnand %p217, %p218
    %p220 = pneg %p219
    // Predicated region
    $region9: #{tdnn_nas_forward.13} parent=5 // pred_check
      _
    $region10: #{tdnn_nas_forward.13} parent=5 // pred_check_branch
      %222 = sbr.rel (%p219) target = $region12
    $region11: #{tdnn_nas_forward.13} parent=5 // pred_region
      %s223 = ssub.s32 %s21, 1
      // Predicated region
      $region13: #{tdnn_nas_forward.13} parent=11 // pred_check
        %p224 = pneg %p68
      $region14: #{tdnn_nas_forward.13} parent=11 // pred_check_branch
        %226 = sbr.rel (%p224) target = $region16
      $region15: #{tdnn_nas_forward.13} parent=11 // pred_region
        _
      $region16: #{tdnn_nas_forward.13} parent=11 // pred_fallthru
        _
      // Predicated region
      $region17: #{tdnn_nas_forward.13} parent=11 // pred_check
        %p227 = pneg %p89
      $region18: #{tdnn_nas_forward.13} parent=11 // pred_check_branch
        %229 = sbr.rel (%p227) target = $region20
      $region19: #{tdnn_nas_forward.13} parent=11 // pred_region
        _
      $region20: #{tdnn_nas_forward.13} parent=11 // pred_fallthru
        _
      // Predicated region
      $region21: #{tdnn_nas_forward.13} parent=11 // pred_check
        %p230 = pneg %p110
      $region22: #{tdnn_nas_forward.13} parent=11 // pred_check_branch
        %232 = sbr.rel (%p230) target = $region24
      $region23: #{tdnn_nas_forward.13} parent=11 // pred_region
        _
      $region24: #{tdnn_nas_forward.13} parent=11 // pred_fallthru
        _
      // Predicated region
      $region25: #{tdnn_nas_forward.13} parent=11 // pred_check
        %p233 = pneg %p131
      $region26: #{tdnn_nas_forward.13} parent=11 // pred_check_branch
        %235 = sbr.rel (%p233) target = $region28
      $region27: #{tdnn_nas_forward.13} parent=11 // pred_region
        _
      $region28: #{tdnn_nas_forward.13} parent=11 // pred_fallthru
        _
    $region12: #{tdnn_nas_forward.13} parent=5 // pred_fallthru
      _
    %p236 = scmp.lt.s32.totalorder %s21, 4
    // Predicated region
    $region29: #{tdnn_nas_forward.13} parent=5 // pred_check
      %p237 = pneg %p236
    $region30: #{tdnn_nas_forward.13} parent=5 // pred_check_branch
      %239 = sbr.rel (%p237) target = $region32
    $region31: #{tdnn_nas_forward.13} parent=5 // pred_region
      // Predicated region
      $region33: #{tdnn_nas_forward.13} parent=31 // pred_check
        %p240 = pneg %p41
      $region34: #{tdnn_nas_forward.13} parent=31 // pred_check_branch
        %242 = sbr.rel (%p240) target = $region36
      $region35: #{tdnn_nas_forward.13} parent=31 // pred_region
        %p243 = scmp.lt.s32.totalorder %s21, 3
        %s244 = scalar_select %p243, %s21, 3
        %s245 = smul.addr %s244, 3
        %s246 = smul.addr %s245, 4
        %s247 = scalar_lea.vmem %s1, %s246
      $region36: #{tdnn_nas_forward.13} parent=31 // pred_fallthru
        _
    $region32: #{tdnn_nas_forward.13} parent=5 // pred_fallthru
      _
    %p248 = scmp.le.s32.totalorder 1, %s21
    %p249 = scmp.lt.s32.totalorder %s21, 5
    %p250 = pnand %p248, %p249
    %p251 = pneg %p250
    // Predicated region
    $region37: #{tdnn_nas_forward.13} parent=5 // pred_check
      _
    $region38: #{tdnn_nas_forward.13} parent=5 // pred_check_branch
      %253 = sbr.rel (%p250) target = $region40
    $region39: #{tdnn_nas_forward.13} parent=5 // pred_region
      %s254 = ssub.s32 %s21, 1
      %p255 = scmp.lt.s32.totalorder %s26, 3
      %s256 = scalar_select %p255, %s26, 3
      %s257 = smul.addr %s256, 3
      %s258 = smul.addr %s257, 4
      %s259 = scalar_lea.vmem %s1, %s258
      %p260 = pneg %p47
      %p261 = pneg %p44
      %p262 = pneg %p68
      %p263 = pneg %p65
      %p264 = pneg %p89
      %p265 = pneg %p86
      %p266 = pneg %p110
      %p267 = pneg %p107
      %p268 = pneg %p131
      %p269 = pneg %p128
      %p270 = pneg %p157
      %p271 = pneg %p154
      %p272 = scmp.lt.s32.totalorder %s26, 3
      %s273 = scalar_select %p272, %s26, 3
      %s274 = smul.addr %s273, 2
      %s275 = smul.addr %s274, 4
      %s276 = scalar_lea.vmem %s6, %s275
      %p277 = pneg %p183
      %p278 = pneg %p180
      %p279 = scmp.lt.s32.totalorder %s26, 3
      %s280 = scalar_select %p279, %s26, 3
      %s281 = scalar_lea.vmem %s7, %s280
      %p282 = pneg %p209
      %p283 = pneg %p206
      %p284 = scmp.lt.s32.totalorder %s26, 3
      %s285 = scalar_select %p284, %s26, 3
      %s286 = scalar_lea.vmem %s8, %s285
      %p287 = scmp.lt.s32.totalorder %s26, 3
      %s288 = scalar_select %p287, %s26, 3
      %s289 = smul.addr %s288, 3
      %s290 = smul.addr %s289, 4
      %s291 = scalar_lea.vmem %s1, %s290
      %p292 = scmp.lt.s32.totalorder %s26, 3
      %s293 = scalar_select %p292, %s26, 3
      %s294 = smul.addr %s293, 2
      %s295 = smul.addr %s294, 4
      %s296 = scalar_lea.vmem %s6, %s295
      %p297 = scmp.lt.s32.totalorder %s26, 3
      %s298 = scalar_select %p297, %s26, 3
      %s299 = scalar_lea.vmem %s7, %s298
      %p300 = scmp.lt.s32.totalorder %s26, 3
      %s301 = scalar_select %p300, %s26, 3
      %s302 = scalar_lea.vmem %s8, %s301
      %v304 = vld [vmem:[%s291] sm:$0xf]
      %v305 = vld [vmem:[%s291 + $0x4] sm:$0xf]
      %v306 = vld [vmem:[%s291 + $0x8] sm:$0x3]
      %v307 = vunpack.c.l.bf16 %v304
      %v308 = vunpack.c.l.bf16 %v305
      %v309 = vunpack.c.l.bf16 %v306
      %v310 = vlaneseq
      %v311 = vshrl.u32 %v310, 7
      %v312 = vadd.s32 %v311, 8
      %v313 = vadd.s32 %v311, 16
      %vm314 = vcmp.ge.s32.totalorder %v311, 2
      %vm315 = vcmp.ge.s32.totalorder %v312, 2
      %vm316 = vcmp.ge.s32.totalorder %v313, 2
      %vm317 = vcmp.lt.s32.totalorder %v311, 18
      %vm318 = vcmp.lt.s32.totalorder %v312, 18
      %vm319 = vcmp.lt.s32.totalorder %v313, 18
      %vm320 = vmand %vm314, %vm317
      %vm321 = vmand %vm315, %vm318
      %vm322 = vmand %vm316, %vm319
      %v323 = vld [vmem:[%s4] sm:$0x1]
      %v325 = vlaneseq
      %v326 = vshrl.u32 %v325, 7
      %v327 = vsub.s32 0, %v326
      %v328 = vrot.slane %v323, %v327
      %v330 = vmul.f32 %v307, %v328
      %v331 = vmul.f32 %v308, %v328
      %v332 = vmul.f32 %v309, %v328
      %v333 = vld [vmem:[%s5] sm:$0x1]
      %v335 = vlaneseq
      %v336 = vshrl.u32 %v335, 7
      %v337 = vsub.s32 0, %v336
      %v338 = vrot.slane %v333, %v337
      %v340 = vadd.f32 %v330, %v338
      %v341 = vadd.f32 %v331, %v338
      %v342 = vadd.f32 %v332, %v338
      %v343 = vsel %vm320, 1, 0
      %v344 = vsel %vm321, 1, 0
      %v345 = vsel %vm322, 1, 0
      %vm346 = vcmp.eq.s32.totalorder %v343, 1
      %vm347 = vcmp.eq.s32.totalorder %v344, 1
      %vm348 = vcmp.eq.s32.totalorder %v345, 1
      %v349 = vsel %vm346, %v340, 0.0
      %v350 = vsel %vm347, %v341, 0.0
      %v351 = vsel %vm348, %v342, 0.0
      %v352 = vpack.c.bf16 %v350, %v349
      %v353 = vpack.c.bf16 %v351, %v351
      %v354 = vld [vmem:[%s2] sm:$0xf]
      %v355 = vld [vmem:[%s2 + $0x4] sm:$0xf]
      %v356 = vld [vmem:[%s2 + $0x8] sm:$0xf]
      %v357 = vld [vmem:[%s2 + $0xc] sm:$0xf]
      %v358 = vld [vmem:[%s2 + $0x10] sm:$0xf]
      %v359 = vld [vmem:[%s2 + $0x14] sm:$0xf]
      %v360 = vld [vmem:[%s2 + $0x18] sm:$0xf]
      %v361 = vld [vmem:[%s2 + $0x1c] sm:$0xf]
      %v362 = vld [vmem:[%s2 + $0x20] sm:$0xf]
      %v363 = vld [vmem:[%s2 + $0x24] sm:$0xf]
      %v364 = vld [vmem:[%s2 + $0x28] sm:$0xf]
      %v365 = vld [vmem:[%s2 + $0x2c] sm:$0xf]
      %v366 = vld [vmem:[%s2 + $0x30] sm:$0xf]
      %v367 = vld [vmem:[%s2 + $0x34] sm:$0xf]
      %v368 = vld [vmem:[%s2 + $0x38] sm:$0xf]
      %v369 = vld [vmem:[%s2 + $0x3c] sm:$0xf]
      %s370 = scalar_lea.vmem %s2, 64
      %v371 = vld [vmem:[%s370] sm:$0xf]
      %v372 = vld [vmem:[%s370 + $0x4] sm:$0xf]
      %v373 = vld [vmem:[%s370 + $0x8] sm:$0xf]
      %v374 = vld [vmem:[%s370 + $0xc] sm:$0xf]
      %v375 = vld [vmem:[%s370 + $0x10] sm:$0xf]
      %v376 = vld [vmem:[%s370 + $0x14] sm:$0xf]
      %v377 = vld [vmem:[%s370 + $0x18] sm:$0xf]
      %v378 = vld [vmem:[%s370 + $0x1c] sm:$0xf]
      %v379 = vld [vmem:[%s370 + $0x20] sm:$0xf]
      %v380 = vld [vmem:[%s370 + $0x24] sm:$0xf]
      %v381 = vld [vmem:[%s370 + $0x28] sm:$0xf]
      %v382 = vld [vmem:[%s370 + $0x2c] sm:$0xf]
      %v383 = vld [vmem:[%s370 + $0x30] sm:$0xf]
      %v384 = vld [vmem:[%s370 + $0x34] sm:$0xf]
      %v385 = vld [vmem:[%s370 + $0x38] sm:$0xf]
      %v386 = vld [vmem:[%s370 + $0x3c] sm:$0xf]
      %vm387 = vsmask.f32 7424
      %v389 = vshrl.u32 %v352, 16
      %v391 = vshll.u32 %v352, 16
      %v393 = vrot.slane %v391, 1
      %v394 = vor.u32 %v389, %v393
      %v396 = vshll.u32 %v353, 16
      %v398 = vrot.slane %v396, 1
      %v399 = vsel %vm387, %v394, %v398
      %v417 = vunpack.c.l.b16 %v371
      %v418 = vunpack.c.l.b16 %v372
      %v419 = vunpack.c.l.b16 %v373
      %v420 = vunpack.c.l.b16 %v374
      %v421 = vunpack.c.l.b16 %v375
      %v422 = vunpack.c.l.b16 %v376
      %v423 = vunpack.c.l.b16 %v377
      %v424 = vunpack.c.l.b16 %v378
      %v425 = vunpack.c.l.b16 %v379
      %v426 = vunpack.c.l.b16 %v380
      %v427 = vunpack.c.l.b16 %v381
      %v428 = vunpack.c.l.b16 %v382
      %v429 = vunpack.c.l.b16 %v383
      %v430 = vunpack.c.l.b16 %v384
      %v431 = vunpack.c.l.b16 %v385
      %v432 = vunpack.c.l.b16 %v386
      %v433 = vpack.c.b16 %v418, %v417
      %v434 = vpack.c.b16 %v420, %v419
      %v435 = vpack.c.b16 %v422, %v421
      %v436 = vpack.c.b16 %v424, %v423
      %v437 = vpack.c.b16 %v426, %v425
      %v438 = vpack.c.b16 %v428, %v427
      %v439 = vpack.c.b16 %v430, %v429
      %v440 = vpack.c.b16 %v432, %v431
      %449 = vmatprep.subr.bf16.mxu0 0
      %450 = vmatpush1.bf16.msra.mxu0 %v440
      %451 = vmatprep.subr.bf16.mxu0 0
      %452 = vmatpush1.bf16.msra.mxu0 %v439
      %453 = vmatprep.subr.bf16.mxu0 0
      %454 = vmatpush1.bf16.msra.mxu0 %v438
      %455 = vmatprep.subr.bf16.mxu0 0
      %456 = vmatpush1.bf16.msra.mxu0 %v437
      %457 = vmatprep.subr.bf16.mxu0 0
      %458 = vmatpush1.bf16.msra.mxu0 %v436
      %459 = vmatprep.subr.bf16.mxu0 0
      %460 = vmatpush1.bf16.msra.mxu0 %v435
      %461 = vmatprep.subr.bf16.mxu0 0
      %462 = vmatpush1.bf16.msra.mxu0 %v434
      %463 = vmatprep.subr.bf16.mxu0 0
      %464 = vmatpush1.bf16.msra.mxu0 %v433
      %465 = vmatprep.subr.bf16.mxu0 0
      %466 = vmatpush2.bf16.msra.mxu0 0
      %467 = vmatprep.subr.bf16.mxu0 0
      %468 = vmatpush2.bf16.msra.mxu0 0
      %469 = vmatprep.subr.bf16.mxu0 0
      %470 = vmatpush2.bf16.msra.mxu0 0
      %471 = vmatprep.subr.bf16.mxu0 0
      %472 = vmatpush2.bf16.msra.mxu0 0
      %473 = vmatprep.subr.bf16.mxu0 0
      %474 = vmatpush2.bf16.msra.mxu0 0
      %475 = vmatprep.subr.bf16.mxu0 0
      %476 = vmatpush2.bf16.msra.mxu0 0
      %477 = vmatprep.subr.bf16.mxu0 0
      %478 = vmatpush2.bf16.msra.mxu0 0
      %479 = vmatprep.subr.bf16.mxu0 0
      %480 = vmatpush2.bf16.msra.mxu0 0
      %481 = vmatprep.mubr.bf16.mxu0 0
      %482 = vmatmul.mubr.bf16.gmra.mxu0 %v399
      %v483 = vpop.f32.mrf.mxu0
      %v484 = vadd.f32 0.0, %v483
      %v485 = vpop.f32.mrf.mxu0
      %v486 = vpop.f32.mrf.mxu0
      %v487 = vadd.f32 0.0, %v486
      %v488 = vpop.f32.mrf.mxu0
      %489 = vdwg.mxu0
      %v506 = vunpack.c.l.b16 %v354
      %v507 = vunpack.c.l.b16 %v355
      %v508 = vunpack.c.l.b16 %v356
      %v509 = vunpack.c.l.b16 %v357
      %v510 = vunpack.c.l.b16 %v358
      %v511 = vunpack.c.l.b16 %v359
      %v512 = vunpack.c.l.b16 %v360
      %v513 = vunpack.c.l.b16 %v361
      %v514 = vunpack.c.l.b16 %v362
      %v515 = vunpack.c.l.b16 %v363
      %v516 = vunpack.c.l.b16 %v364
      %v517 = vunpack.c.l.b16 %v365
      %v518 = vunpack.c.l.b16 %v366
      %v519 = vunpack.c.l.b16 %v367
      %v520 = vunpack.c.l.b16 %v368
      %v521 = vunpack.c.l.b16 %v369
      %v522 = vpack.c.b16 %v507, %v506
      %v523 = vpack.c.b16 %v509, %v508
      %v524 = vpack.c.b16 %v511, %v510
      %v525 = vpack.c.b16 %v513, %v512
      %v526 = vpack.c.b16 %v515, %v514
      %v527 = vpack.c.b16 %v517, %v516
      %v528 = vpack.c.b16 %v519, %v518
      %v529 = vpack.c.b16 %v521, %v520
      %538 = vmatprep.subr.bf16.mxu0 0
      %539 = vmatpush1.bf16.msra.mxu0 %v529
      %540 = vmatprep.subr.bf16.mxu0 0
      %541 = vmatpush1.bf16.msra.mxu0 %v528
      %542 = vmatprep.subr.bf16.mxu0 0
      %543 = vmatpush1.bf16.msra.mxu0 %v527
      %544 = vmatprep.subr.bf16.mxu0 0
      %545 = vmatpush1.bf16.msra.mxu0 %v526
      %546 = vmatprep.subr.bf16.mxu0 0
      %547 = vmatpush1.bf16.msra.mxu0 %v525
      %548 = vmatprep.subr.bf16.mxu0 0
      %549 = vmatpush1.bf16.msra.mxu0 %v524
      %550 = vmatprep.subr.bf16.mxu0 0
      %551 = vmatpush1.bf16.msra.mxu0 %v523
      %552 = vmatprep.subr.bf16.mxu0 0
      %553 = vmatpush1.bf16.msra.mxu0 %v522
      %554 = vmatprep.subr.bf16.mxu0 0
      %555 = vmatpush2.bf16.msra.mxu0 0
      %556 = vmatprep.subr.bf16.mxu0 0
      %557 = vmatpush2.bf16.msra.mxu0 0
      %558 = vmatprep.subr.bf16.mxu0 0
      %559 = vmatpush2.bf16.msra.mxu0 0
      %560 = vmatprep.subr.bf16.mxu0 0
      %561 = vmatpush2.bf16.msra.mxu0 0
      %562 = vmatprep.subr.bf16.mxu0 0
      %563 = vmatpush2.bf16.msra.mxu0 0
      %564 = vmatprep.subr.bf16.mxu0 0
      %565 = vmatpush2.bf16.msra.mxu0 0
      %566 = vmatprep.subr.bf16.mxu0 0
      %567 = vmatpush2.bf16.msra.mxu0 0
      %568 = vmatprep.subr.bf16.mxu0 0
      %569 = vmatpush2.bf16.msra.mxu0 0
      %570 = vmatprep.mubr.bf16.mxu0 0
      %571 = vmatmul.mubr.bf16.gmra.mxu0 %v352
      %v572 = vpop.f32.mrf.mxu0
      %v573 = vadd.f32 %v484, %v572
      %v574 = vpop.f32.mrf.mxu0
      %v575 = vpop.f32.mrf.mxu0
      %v576 = vadd.f32 %v487, %v575
      %v577 = vpop.f32.mrf.mxu0
      %578 = vdwg.mxu0
      %s579 = scalar_lea.vmem %s2, 128
      %v580 = vld [vmem:[%s579] sm:$0xf]
      %v581 = vld [vmem:[%s579 + $0x4] sm:$0xf]
      %v582 = vld [vmem:[%s579 + $0x8] sm:$0xf]
      %v583 = vld [vmem:[%s579 + $0xc] sm:$0xf]
      %v584 = vld [vmem:[%s579 + $0x10] sm:$0xf]
      %v585 = vld [vmem:[%s579 + $0x14] sm:$0xf]
      %v586 = vld [vmem:[%s579 + $0x18] sm:$0xf]
      %v587 = vld [vmem:[%s579 + $0x1c] sm:$0xf]
      %v588 = vld [vmem:[%s579 + $0x20] sm:$0xf]
      %v589 = vld [vmem:[%s579 + $0x24] sm:$0xf]
      %v590 = vld [vmem:[%s579 + $0x28] sm:$0xf]
      %v591 = vld [vmem:[%s579 + $0x2c] sm:$0xf]
      %v592 = vld [vmem:[%s579 + $0x30] sm:$0xf]
      %v593 = vld [vmem:[%s579 + $0x34] sm:$0xf]
      %v594 = vld [vmem:[%s579 + $0x38] sm:$0xf]
      %v595 = vld [vmem:[%s579 + $0x3c] sm:$0xf]
      %vm598 = vcmask 1046528
      %v599 = vrot.slane %v352, 1
      %v600 = vrot.slane %v353, 1
      %v601 = vsel %vm598, %v599, %v600
      %v619 = vunpack.c.l.b16 %v580
      %v620 = vunpack.c.l.b16 %v581
      %v621 = vunpack.c.l.b16 %v582
      %v622 = vunpack.c.l.b16 %v583
      %v623 = vunpack.c.l.b16 %v584
      %v624 = vunpack.c.l.b16 %v585
      %v625 = vunpack.c.l.b16 %v586
      %v626 = vunpack.c.l.b16 %v587
      %v627 = vunpack.c.l.b16 %v588
      %v628 = vunpack.c.l.b16 %v589
      %v629 = vunpack.c.l.b16 %v590
      %v630 = vunpack.c.l.b16 %v591
      %v631 = vunpack.c.l.b16 %v592
      %v632 = vunpack.c.l.b16 %v593
      %v633 = vunpack.c.l.b16 %v594
      %v634 = vunpack.c.l.b16 %v595
      %v635 = vpack.c.b16 %v620, %v619
      %v636 = vpack.c.b16 %v622, %v621
      %v637 = vpack.c.b16 %v624, %v623
      %v638 = vpack.c.b16 %v626, %v625
      %v639 = vpack.c.b16 %v628, %v627
      %v640 = vpack.c.b16 %v630, %v629
      %v641 = vpack.c.b16 %v632, %v631
      %v642 = vpack.c.b16 %v634, %v633
      %651 = vmatprep.subr.bf16.mxu0 0
      %652 = vmatpush1.bf16.msra.mxu0 %v642
      %653 = vmatprep.subr.bf16.mxu0 0
      %654 = vmatpush1.bf16.msra.mxu0 %v641
      %655 = vmatprep.subr.bf16.mxu0 0
      %656 = vmatpush1.bf16.msra.mxu0 %v640
      %657 = vmatprep.subr.bf16.mxu0 0
      %658 = vmatpush1.bf16.msra.mxu0 %v639
      %659 = vmatprep.subr.bf16.mxu0 0
      %660 = vmatpush1.bf16.msra.mxu0 %v638
      %661 = vmatprep.subr.bf16.mxu0 0
      %662 = vmatpush1.bf16.msra.mxu0 %v637
      %663 = vmatprep.subr.bf16.mxu0 0
      %664 = vmatpush1.bf16.msra.mxu0 %v636
      %665 = vmatprep.subr.bf16.mxu0 0
      %666 = vmatpush1.bf16.msra.mxu0 %v635
      %667 = vmatprep.subr.bf16.mxu0 0
      %668 = vmatpush2.bf16.msra.mxu0 0
      %669 = vmatprep.subr.bf16.mxu0 0
      %670 = vmatpush2.bf16.msra.mxu0 0
      %671 = vmatprep.subr.bf16.mxu0 0
      %672 = vmatpush2.bf16.msra.mxu0 0
      %673 = vmatprep.subr.bf16.mxu0 0
      %674 = vmatpush2.bf16.msra.mxu0 0
      %675 = vmatprep.subr.bf16.mxu0 0
      %676 = vmatpush2.bf16.msra.mxu0 0
      %677 = vmatprep.subr.bf16.mxu0 0
      %678 = vmatpush2.bf16.msra.mxu0 0
      %679 = vmatprep.subr.bf16.mxu0 0
      %680 = vmatpush2.bf16.msra.mxu0 0
      %681 = vmatprep.subr.bf16.mxu0 0
      %682 = vmatpush2.bf16.msra.mxu0 0
      %683 = vmatprep.mubr.bf16.mxu0 0
      %684 = vmatmul.mubr.bf16.gmra.mxu0 %v601
      %v685 = vpop.f32.mrf.mxu0
      %v686 = vadd.f32 0.0, %v685
      %v687 = vpop.f32.mrf.mxu0
      %v688 = vpop.f32.mrf.mxu0
      %v689 = vadd.f32 0.0, %v688
      %v690 = vpop.f32.mrf.mxu0
      %691 = vdwg.mxu0
      %v692 = vadd.f32 %v573, %v686
      %v693 = vadd.f32 %v576, %v689
      %s694 = scalar_lea.vmem %s2, 192
      %v695 = vld [vmem:[%s694] sm:$0xf]
      %v696 = vld [vmem:[%s694 + $0x4] sm:$0xf]
      %v697 = vld [vmem:[%s694 + $0x8] sm:$0xf]
      %v698 = vld [vmem:[%s694 + $0xc] sm:$0xf]
      %v699 = vld [vmem:[%s694 + $0x10] sm:$0xf]
      %v700 = vld [vmem:[%s694 + $0x14] sm:$0xf]
      %v701 = vld [vmem:[%s694 + $0x18] sm:$0xf]
      %v702 = vld [vmem:[%s694 + $0x1c] sm:$0xf]
      %v703 = vld [vmem:[%s694 + $0x20] sm:$0xf]
      %v704 = vld [vmem:[%s694 + $0x24] sm:$0xf]
      %v705 = vld [vmem:[%s694 + $0x28] sm:$0xf]
      %v706 = vld [vmem:[%s694 + $0x2c] sm:$0xf]
      %v707 = vld [vmem:[%s694 + $0x30] sm:$0xf]
      %v708 = vld [vmem:[%s694 + $0x34] sm:$0xf]
      %v709 = vld [vmem:[%s694 + $0x38] sm:$0xf]
      %v710 = vld [vmem:[%s694 + $0x3c] sm:$0xf]
      %vm711 = vsmask.f32 6400
      %v712 = vrot.slane %v389, 1
      %v713 = vrot.slane %v391, 2
      %v714 = vor.u32 %v712, %v713
      %v715 = vshrl.u32 %v353, 16
      %v717 = vrot.slane %v715, 1
      %v718 = vrot.slane %v396, 2
      %v719 = vor.u32 %v717, %v718
      %v720 = vsel %vm711, %v714, %v719
      %v738 = vunpack.c.l.b16 %v695
      %v739 = vunpack.c.l.b16 %v696
      %v740 = vunpack.c.l.b16 %v697
      %v741 = vunpack.c.l.b16 %v698
      %v742 = vunpack.c.l.b16 %v699
      %v743 = vunpack.c.l.b16 %v700
      %v744 = vunpack.c.l.b16 %v701
      %v745 = vunpack.c.l.b16 %v702
      %v746 = vunpack.c.l.b16 %v703
      %v747 = vunpack.c.l.b16 %v704
      %v748 = vunpack.c.l.b16 %v705
      %v749 = vunpack.c.l.b16 %v706
      %v750 = vunpack.c.l.b16 %v707
      %v751 = vunpack.c.l.b16 %v708
      %v752 = vunpack.c.l.b16 %v709
      %v753 = vunpack.c.l.b16 %v710
      %v754 = vpack.c.b16 %v739, %v738
      %v755 = vpack.c.b16 %v741, %v740
      %v756 = vpack.c.b16 %v743, %v742
      %v757 = vpack.c.b16 %v745, %v744
      %v758 = vpack.c.b16 %v747, %v746
      %v759 = vpack.c.b16 %v749, %v748
      %v760 = vpack.c.b16 %v751, %v750
      %v761 = vpack.c.b16 %v753, %v752
      %770 = vmatprep.subr.bf16.mxu0 0
      %771 = vmatpush1.bf16.msra.mxu0 %v761
      %772 = vmatprep.subr.bf16.mxu0 0
      %773 = vmatpush1.bf16.msra.mxu0 %v760
      %774 = vmatprep.subr.bf16.mxu0 0
      %775 = vmatpush1.bf16.msra.mxu0 %v759
      %776 = vmatprep.subr.bf16.mxu0 0
      %777 = vmatpush1.bf16.msra.mxu0 %v758
      %778 = vmatprep.subr.bf16.mxu0 0
      %779 = vmatpush1.bf16.msra.mxu0 %v757
      %780 = vmatprep.subr.bf16.mxu0 0
      %781 = vmatpush1.bf16.msra.mxu0 %v756
      %782 = vmatprep.subr.bf16.mxu0 0
      %783 = vmatpush1.bf16.msra.mxu0 %v755
      %784 = vmatprep.subr.bf16.mxu0 0
      %785 = vmatpush1.bf16.msra.mxu0 %v754
      %786 = vmatprep.subr.bf16.mxu0 0
      %787 = vmatpush2.bf16.msra.mxu0 0
      %788 = vmatprep.subr.bf16.mxu0 0
      %789 = vmatpush2.bf16.msra.mxu0 0
      %790 = vmatprep.subr.bf16.mxu0 0
      %791 = vmatpush2.bf16.msra.mxu0 0
      %792 = vmatprep.subr.bf16.mxu0 0
      %793 = vmatpush2.bf16.msra.mxu0 0
      %794 = vmatprep.subr.bf16.mxu0 0
      %795 = vmatpush2.bf16.msra.mxu0 0
      %796 = vmatprep.subr.bf16.mxu0 0
      %797 = vmatpush2.bf16.msra.mxu0 0
      %798 = vmatprep.subr.bf16.mxu0 0
      %799 = vmatpush2.bf16.msra.mxu0 0
      %800 = vmatprep.subr.bf16.mxu0 0
      %801 = vmatpush2.bf16.msra.mxu0 0
      %802 = vmatprep.mubr.bf16.mxu0 0
      %803 = vmatmul.mubr.bf16.gmra.mxu0 %v720
      %v804 = vpop.f32.mrf.mxu0
      %v805 = vadd.f32 0.0, %v804
      %v806 = vpop.f32.mrf.mxu0
      %v807 = vpop.f32.mrf.mxu0
      %v808 = vadd.f32 0.0, %v807
      %v809 = vpop.f32.mrf.mxu0
      %810 = vdwg.mxu0
      %v811 = vadd.f32 %v692, %v805
      %v812 = vadd.f32 %v693, %v808
      %s813 = scalar_lea.vmem %s2, 256
      %v814 = vld [vmem:[%s813] sm:$0xf]
      %v815 = vld [vmem:[%s813 + $0x4] sm:$0xf]
      %v816 = vld [vmem:[%s813 + $0x8] sm:$0xf]
      %v817 = vld [vmem:[%s813 + $0xc] sm:$0xf]
      %v818 = vld [vmem:[%s813 + $0x10] sm:$0xf]
      %v819 = vld [vmem:[%s813 + $0x14] sm:$0xf]
      %v820 = vld [vmem:[%s813 + $0x18] sm:$0xf]
      %v821 = vld [vmem:[%s813 + $0x1c] sm:$0xf]
      %v822 = vld [vmem:[%s813 + $0x20] sm:$0xf]
      %v823 = vld [vmem:[%s813 + $0x24] sm:$0xf]
      %v824 = vld [vmem:[%s813 + $0x28] sm:$0xf]
      %v825 = vld [vmem:[%s813 + $0x2c] sm:$0xf]
      %v826 = vld [vmem:[%s813 + $0x30] sm:$0xf]
      %v827 = vld [vmem:[%s813 + $0x34] sm:$0xf]
      %v828 = vld [vmem:[%s813 + $0x38] sm:$0xf]
      %v829 = vld [vmem:[%s813 + $0x3c] sm:$0xf]
      %vm830 = vcmask 1045504
      %v831 = vrot.slane %v352, 2
      %v832 = vrot.slane %v353, 2
      %v833 = vsel %vm830, %v831, %v832
      %v851 = vunpack.c.l.b16 %v814
      %v852 = vunpack.c.l.b16 %v815
      %v853 = vunpack.c.l.b16 %v816
      %v854 = vunpack.c.l.b16 %v817
      %v855 = vunpack.c.l.b16 %v818
      %v856 = vunpack.c.l.b16 %v819
      %v857 = vunpack.c.l.b16 %v820
      %v858 = vunpack.c.l.b16 %v821
      %v859 = vunpack.c.l.b16 %v822
      %v860 = vunpack.c.l.b16 %v823
      %v861 = vunpack.c.l.b16 %v824
      %v862 = vunpack.c.l.b16 %v825
      %v863 = vunpack.c.l.b16 %v826
      %v864 = vunpack.c.l.b16 %v827
      %v865 = vunpack.c.l.b16 %v828
      %v866 = vunpack.c.l.b16 %v829
      %v867 = vpack.c.b16 %v852, %v851
      %v868 = vpack.c.b16 %v854, %v853
      %v869 = vpack.c.b16 %v856, %v855
      %v870 = vpack.c.b16 %v858, %v857
      %v871 = vpack.c.b16 %v860, %v859
      %v872 = vpack.c.b16 %v862, %v861
      %v873 = vpack.c.b16 %v864, %v863
      %v874 = vpack.c.b16 %v866, %v865
      %883 = vmatprep.subr.bf16.mxu0 0
      %884 = vmatpush1.bf16.msra.mxu0 %v874
      %885 = vmatprep.subr.bf16.mxu0 0
      %886 = vmatpush1.bf16.msra.mxu0 %v873
      %887 = vmatprep.subr.bf16.mxu0 0
      %888 = vmatpush1.bf16.msra.mxu0 %v872
      %889 = vmatprep.subr.bf16.mxu0 0
      %890 = vmatpush1.bf16.msra.mxu0 %v871
      %891 = vmatprep.subr.bf16.mxu0 0
      %892 = vmatpush1.bf16.msra.mxu0 %v870
      %893 = vmatprep.subr.bf16.mxu0 0
      %894 = vmatpush1.bf16.msra.mxu0 %v869
      %895 = vmatprep.subr.bf16.mxu0 0
      %896 = vmatpush1.bf16.msra.mxu0 %v868
      %897 = vmatprep.subr.bf16.mxu0 0
      %898 = vmatpush1.bf16.msra.mxu0 %v867
      %899 = vmatprep.subr.bf16.mxu0 0
      %900 = vmatpush2.bf16.msra.mxu0 0
      %901 = vmatprep.subr.bf16.mxu0 0
      %902 = vmatpush2.bf16.msra.mxu0 0
      %903 = vmatprep.subr.bf16.mxu0 0
      %904 = vmatpush2.bf16.msra.mxu0 0
      %905 = vmatprep.subr.bf16.mxu0 0
      %906 = vmatpush2.bf16.msra.mxu0 0
      %907 = vmatprep.subr.bf16.mxu0 0
      %908 = vmatpush2.bf16.msra.mxu0 0
      %909 = vmatprep.subr.bf16.mxu0 0
      %910 = vmatpush2.bf16.msra.mxu0 0
      %911 = vmatprep.subr.bf16.mxu0 0
      %912 = vmatpush2.bf16.msra.mxu0 0
      %913 = vmatprep.subr.bf16.mxu0 0
      %914 = vmatpush2.bf16.msra.mxu0 0
      %915 = vmatprep.mubr.bf16.mxu0 0
      %916 = vmatmul.mubr.bf16.gmra.mxu0 %v833
      %v917 = vpop.f32.mrf.mxu0
      %v918 = vadd.f32 0.0, %v917
      %v919 = vpop.f32.mrf.mxu0
      %v920 = vpop.f32.mrf.mxu0
      %v921 = vadd.f32 0.0, %v920
      %v922 = vpop.f32.mrf.mxu0
      %923 = vdwg.mxu0
      %v924 = vadd.f32 %v811, %v918
      %v925 = vadd.f32 %v812, %v921
      %v926 = vld [vmem:[%s3] sm:$0x1]
      %v928 = vlaneseq
      %v929 = vshrl.u32 %v928, 7
      %v930 = vsub.s32 0, %v929
      %v931 = vrot.slane %v926, %v930
      %v933 = vadd.f32 %v924, %v931
      %v934 = vadd.f32 %v925, %v931
      %v935 = vmax.f32 %v933, 0.0
      %v936 = vmax.f32 %v934, 0.0
      %v937 = vpack.c.bf16 %v936, %v935
      %v939 = vunpack.c.l.b16 %v937
      %v940 = vunpack.c.h.b16 %v937
      %v941 = vpack.c.b16 %v939, %v939
      %v942 = vpack.c.b16 %v940, %v940
      %945 = vst [vmem:[%s296] sm:$0xf] %v941
      %946 = vst [vmem:[%s296 + $0x4] sm:$0xf] %v942
      %s947 = sld [smem:[#allocation3 + %s26]]
      %v948 = vstv %s947
      %vm949 = vcmp.lt.s32.totalorder %v311, %v948
      %vm950 = vcmp.lt.s32.totalorder %v312, %v948
      %v951 = vsel %vm949, 1, 0
      %v952 = vsel %vm950, 1, 0
      %v953 = vcvt.s32.f32 %v951
      %v954 = vcvt.s32.f32 %v952
      %v955 = vmul.f32 %v935, %v953
      %v956 = vmul.f32 %v936, %v954
      %v957 = vadd.f32 %v955, %v956
      %v958 = vrot.slane %v957, 4
      %v959 = vadd.f32 %v957, %v958
      %v960 = vrot.slane %v959, 2
      %v961 = vadd.f32 %v959, %v960
      %v962 = vrot.slane %v961, 1
      %v963 = vadd.f32 %v961, %v962
      %964 = vst [vmem:[%s299] sm:$0x1] %v963
      %v965 = vmul.f32 %v955, %v935
      %v966 = vmul.f32 %v956, %v936
      %v967 = vadd.f32 %v965, %v966
      %v968 = vrot.slane %v967, 4
      %v969 = vadd.f32 %v967, %v968
      %v970 = vrot.slane %v969, 2
      %v971 = vadd.f32 %v969, %v970
      %v972 = vrot.slane %v971, 1
      %v973 = vadd.f32 %v971, %v972
      %974 = vst [vmem:[%s302] sm:$0x1] %v973
      %p975 = scmp.lt.s32.totalorder %s26, 3
      %s976 = scalar_select %p975, %s26, 3
      %s977 = smul.addr %s976, 2
      %s978 = smul.addr %s977, 4
      %s979 = scalar_lea.vmem %s6, %s978
      %p980 = scmp.lt.s32.totalorder %s26, 3
      %s981 = scalar_select %p980, %s26, 3
      %s982 = scalar_lea.vmem %s7, %s981
      %p983 = scmp.lt.s32.totalorder %s26, 3
      %s984 = scalar_select %p983, %s26, 3
      %s985 = scalar_lea.vmem %s8, %s984
      // Predicated region
      $region41: #{tdnn_nas_forward.13} parent=39 // pred_check
        %p986 = pneg %p154
      $region42: #{tdnn_nas_forward.13} parent=39 // pred_check_branch
        %988 = sbr.rel (%p986) target = $region44
      $region43: #{tdnn_nas_forward.13} parent=39 // pred_region
        _
      $region44: #{tdnn_nas_forward.13} parent=39 // pred_fallthru
        _
      // Predicated region
      $region45: #{tdnn_nas_forward.13} parent=39 // pred_check
        %p989 = pneg %p180
      $region46: #{tdnn_nas_forward.13} parent=39 // pred_check_branch
        %991 = sbr.rel (%p989) target = $region48
      $region47: #{tdnn_nas_forward.13} parent=39 // pred_region
        _
      $region48: #{tdnn_nas_forward.13} parent=39 // pred_fallthru
        _
      // Predicated region
      $region49: #{tdnn_nas_forward.13} parent=39 // pred_check
        %p992 = pneg %p206
      $region50: #{tdnn_nas_forward.13} parent=39 // pred_check_branch
        %994 = sbr.rel (%p992) target = $region52
      $region51: #{tdnn_nas_forward.13} parent=39 // pred_region
        _
      $region52: #{tdnn_nas_forward.13} parent=39 // pred_fallthru
        _
    $region40: #{tdnn_nas_forward.13} parent=5 // pred_fallthru
      _
    %p995 = scmp.le.s32.totalorder 2, %s21
    // Predicated region
    $region53: #{tdnn_nas_forward.13} parent=5 // pred_check
      %p996 = pneg %p995
    $region54: #{tdnn_nas_forward.13} parent=5 // pred_check_branch
      %998 = sbr.rel (%p996) target = $region56
    $region55: #{tdnn_nas_forward.13} parent=5 // pred_region
      %s999 = ssub.s32 %s21, 2
      // Predicated region
      $region57: #{tdnn_nas_forward.13} parent=55 // pred_check
        %p1000 = pneg %p160
      $region58: #{tdnn_nas_forward.13} parent=55 // pred_check_branch
        %1002 = sbr.rel (%p1000) target = $region60
      $region59: #{tdnn_nas_forward.13} parent=55 // pred_region
        %p1003 = scmp.lt.s32.totalorder %s27, 3
        %s1004 = scalar_select %p1003, %s27, 3
        %s1005 = smul.addr %s1004, 2
        %s1006 = smul.addr %s1005, 4
        %s1007 = scalar_lea.vmem %s6, %s1006
      $region60: #{tdnn_nas_forward.13} parent=55 // pred_fallthru
        _
      // Predicated region
      $region61: #{tdnn_nas_forward.13} parent=55 // pred_check
        %p1008 = pneg %p186
      $region62: #{tdnn_nas_forward.13} parent=55 // pred_check_branch
        %1010 = sbr.rel (%p1008) target = $region64
      $region63: #{tdnn_nas_forward.13} parent=55 // pred_region
        %p1011 = scmp.lt.s32.totalorder %s27, 3
        %s1012 = scalar_select %p1011, %s27, 3
        %s1013 = scalar_lea.vmem %s7, %s1012
      $region64: #{tdnn_nas_forward.13} parent=55 // pred_fallthru
        _
      // Predicated region
      $region65: #{tdnn_nas_forward.13} parent=55 // pred_check
        %p1014 = pneg %p212
      $region66: #{tdnn_nas_forward.13} parent=55 // pred_check_branch
        %1016 = sbr.rel (%p1014) target = $region68
      $region67: #{tdnn_nas_forward.13} parent=55 // pred_region
        %p1017 = scmp.lt.s32.totalorder %s27, 3
        %s1018 = scalar_select %p1017, %s27, 3
        %s1019 = scalar_lea.vmem %s8, %s1018
      $region68: #{tdnn_nas_forward.13} parent=55 // pred_fallthru
        _
    $region56: #{tdnn_nas_forward.13} parent=5 // pred_fallthru
      _
  $region6: #{tdnn_nas_forward.13} parent=0 // loop_footer
    %s25 = sadd.s32 1, %s21
  $region7: #{tdnn_nas_forward.13} parent=0 // loop_footer_branch
    %20 = sbr.rel target = $region3
  $region8: #{tdnn_nas_forward.13} parent=0 // loop_exit
    _

</llo_original>
